<compile_context>
chip_gen: v6e
topology: v6e:2x2x1
jax: 0.10.0
libtpu: 0.0.40
codegen_flags: <defaults>
</compile_context>

<pallas_src>
import functools

import jax
import jax.numpy as jnp
from jax.experimental import pallas as pl
from jax.experimental.pallas import tpu as pltpu


MFB_OUT = 1000                         # torch module: self.mfb_out
MFB_FACTOR = 5                         # torch module: self.mfb_factor
MFB_OUT_PAD = 1024                     # 1000 padded to a lane-aligned 128 multiple
MFB_DIM = MFB_OUT * MFB_FACTOR         # 5000 (original projection dim)
MFB_DIM_PAD = MFB_OUT_PAD * MFB_FACTOR  # 5120 (factor-major packed / padded)

GATE_PAD = 128                         # each LSTM gate gets its own 128-wide lane block
H_PAD = GATE_PAD                       # padded hidden width carried for h / c


def _round_up(x, m):
    return (x + m - 1) // m * m


# ----------------------------------------------------------------------------
# The single fused kernel (no grid): stacked LSTM -> avg pool -> MFB head.
#   x_ref   : (T*Bp, E)  all timesteps of the question embedding, batch padded
#   img_ref : (S, Bp, C) image features, spatial axis leading
#   weights : layer 0 (wih_t, whh_t, b) ; layers >=1 (wcat_t, b) ; wq/bq, wi/bi,
#             wp/bp  (all gate- / factor-packed, see make_params)
#   out_ref : (Bp, A_pad) softmax probabilities (padded vocab columns ~ 0)
# ----------------------------------------------------------------------------
def _mfb_fused_kernel(num_layers, T, Bp, x_ref, img_ref, *refs):
    Gp = GATE_PAD
    out_ref = refs[-1]
    w = refs[:-1]

    wih0_ref, whh0_ref, b0_ref = w[0], w[1], w[2]
    idx = 3
    wcat_refs, bl_refs = [], []
    for _ in range(num_layers - 1):
        wcat_refs.append(w[idx])
        bl_refs.append(w[idx + 1])
        idx += 2
    wq_ref, bq_ref, wi_ref, bi_ref, wp_ref, bp_ref = w[idx:idx + 6]

    f32 = jnp.float32
    wdt = wih0_ref.dtype

    # ---------------- stacked LSTM ----------------
    # Hoisted layer-0 input projection: ONE MXU matmul for all T timesteps.
    x = x_ref[...]
    gates_in0 = (
        jnp.dot(x.astype(wdt), wih0_ref[...], preferred_element_type=f32)
        + b0_ref[...]
    )                                                   # (T*Bp, 4*Gp)

    whh0 = whh0_ref[...]
    wcats = [r[...] for r in wcat_refs]                 # read weights once
    bls = [r[...] for r in bl_refs]

    def cell(gates, c_prev):
        # Whole-vreg, lane-aligned gate blocks (i, f, g, o — PyTorch order).
        i_g = jax.nn.sigmoid(gates[:, 0 * Gp:1 * Gp])
        f_g = jax.nn.sigmoid(gates[:, 1 * Gp:2 * Gp])
        g_g = jnp.tanh(gates[:, 2 * Gp:3 * Gp])
        o_g = jax.nn.sigmoid(gates[:, 3 * Gp:4 * Gp])
        c_new = f_g * c_prev + i_g * g_g
        h_new = o_g * jnp.tanh(c_new)
        # Padded gate columns are exactly 0 -> tanh(c_pad)=0 -> h_pad stays 0.
        return h_new, c_new

    h = [jnp.zeros((Bp, Gp), f32) for _ in range(num_layers)]
    c = [jnp.zeros((Bp, Gp), f32) for _ in range(num_layers)]

    # Fully-unrolled time loop (T static, small).  Per step: one whh matmul for
    # layer 0 and one fused [wih;whh] matmul per upper layer.
    for t in range(T):
        g0 = gates_in0[t * Bp:(t + 1) * Bp, :] + jnp.dot(
            h[0].astype(wdt), whh0, preferred_element_type=f32)
        h[0], c[0] = cell(g0, c[0])
        for l in range(1, num_layers):
            hh = jnp.concatenate([h[l - 1], h[l]], axis=1).astype(wdt)  # (Bp, 2*Gp)
            gl = jnp.dot(hh, wcats[l - 1], preferred_element_type=f32) + bls[l - 1]
            h[l], c[l] = cell(gl, c[l])

    q_last = h[num_layers - 1]            # (Bp, Gp); padded columns are zero

    # ---------------- global average pool ----------------
    # (S, Bp, C) -> (Bp, C): S plain leading-axis adds (pure VPU, no XLU).
    img = img_ref[...]
    S = img.shape[0]
    pooled = img[0]
    for s in range(1, S):
        pooled = pooled + img[s]
    pooled = pooled * (1.0 / S)

    # ---------------- MFB fusion head ----------------
    mdt = wq_ref.dtype
    q_proj = (jnp.dot(q_last.astype(mdt), wq_ref[...],
                      preferred_element_type=f32) + bq_ref[...])
    i_proj = (jnp.dot(pooled.astype(mdt), wi_ref[...],
                      preferred_element_type=f32) + bi_ref[...])
    p = q_proj * i_proj                   # (Bp, MFB_DIM_PAD), dropout == identity

    # Factor sum-pool (== torch.sum(view(-1,1,1000,5), dim=3)):
    # 4 static lane-aligned adds of 1024-wide factor blocks (no reshape+sum).
    acc = p[:, 0:MFB_OUT_PAD]
    for j in range(1, MFB_FACTOR):
        acc = acc + p[:, j * MFB_OUT_PAD:(j + 1) * MFB_OUT_PAD]

    # Signed square root: sqrt(relu(x)) - sqrt(relu(-x)).
    sq = jnp.sqrt(jnp.maximum(acc, 0.0)) - jnp.sqrt(jnp.maximum(-acc, 0.0))
    # L2 normalize per row (F.normalize, p=2, dim=1, eps=1e-12); padded
    # columns are exactly zero so they do not perturb the norm.
    ssq = jnp.sum(sq * sq, axis=1, keepdims=True)
    normed = sq * jax.lax.rsqrt(jnp.maximum(ssq, 1e-24))
    # Prediction + softmax (padded vocab columns carry a -1e30 bias).
    logits = (jnp.dot(normed.astype(wp_ref.dtype), wp_ref[...],
                      preferred_element_type=f32) + bp_ref[...])
    m = jnp.max(logits, axis=1, keepdims=True)
    e = jnp.exp(logits - m)
    out_ref[...] = e * pl.reciprocal(jnp.sum(e, axis=1, keepdims=True),
                                     approx=True)


def mfb_fused_call(x_flat, img, params):
    """x_flat: (T*Bp, E), img: (S, Bp, C) -> (Bp, A_pad) softmax probs."""
    num_layers = len(params["lstm"])
    Bp = img.shape[1]
    T = x_flat.shape[0] // Bp
    A_pad = params["wp_t"].shape[1]

    args = [x_flat, img]
    lp0 = params["lstm"][0]
    args += [lp0["wih_t"], lp0["whh_t"], lp0["b"]]
    for lp in params["lstm"][1:]:
        args += [lp["wcat_t"], lp["b"]]
    args += [params["wq_t"], params["bq"], params["wi_t"], params["bi"],
             params["wp_t"], params["bp"]]

    kernel = functools.partial(_mfb_fused_kernel, num_layers, T, Bp)
    # No grid: everything (inputs + ~2.5 MB of bf16 weights) lives in VMEM for
    # one invocation — weights are DMA'd exactly once, no pipeline overhead.
    # At production weight sizes (H=1024 / feat=2048), reintroduce a factor
    # grid with streamed wq/wi tiles and Buffered(1) invariant specs (v7x has
    # only 64 MiB VMEM); not needed at these shapes.
    return pl.pallas_call(
        kernel,
        out_shape=jax.ShapeDtypeStruct((Bp, A_pad), jnp.float32),
        compiler_params=pltpu.CompilerParams(
            vmem_limit_bytes=32 * 1024 * 1024),
    )(*args)


# ----------------------------------------------------------------------------
# Parameters.
#  * LSTM weights are gate-block packed: gate g (PyTorch i,f,g,o order) lives
#    in columns [g*128, g*128+H) of a 4*128-wide weight; h/c are carried
#    128-wide so all gate math is on unmasked lane-aligned tiles.  Layers >= 1
#    get a single fused [W_ih ; W_hh] (256, 512) weight.
#  * MFB projection weights/biases are factor-major column packed: packed
#    column j*1024 + k holds original output unit 5k + j (k < 1000); the
#    k in [1000, 1024) tail is zero.  Prediction rows / answer-vocab columns
#    padded likewise (padded vocab biases -1e30 so softmax ignores them).
#  * All large weights stored bf16; matmuls accumulate in f32.
# ----------------------------------------------------------------------------
def make_params(key, embedding_size, lstm_units, lstm_layers, feat_size,
                ans_vocab_size, mfb_weight_dtype=jnp.bfloat16,
                lstm_weight_dtype=jnp.bfloat16):
    keys = jax.random.split(key, 6 + 4 * lstm_layers)
    k = iter(keys)
    scale = 0.05
    H = lstm_units
    Gp = GATE_PAD

    def gate_pack_w(wmat, in_dim, in_pad, row_off):
        # wmat: (4H, in_dim) torch layout -> (in_pad, 4*Gp), transposed & packed.
        out = jnp.zeros((in_pad, 4 * Gp), jnp.float32)
        for g in range(4):
            out = out.at[row_off:row_off + in_dim, g * Gp:g * Gp + H].set(
                wmat[g * H:(g + 1) * H, :].T)
        return out

    def gate_pack_b(b):
        out = jnp.zeros((1, 4 * Gp), jnp.float32)
        for g in range(4):
            out = out.at[0, g * Gp:g * Gp + H].set(b[g * H:(g + 1) * H])
        return out

    params = {"lstm": []}
    in_size = embedding_size
    for l in range(lstm_layers):
        wih = scale * jax.random.normal(next(k), (4 * H, in_size), jnp.float32)
        whh = scale * jax.random.normal(next(k), (4 * H, H), jnp.float32)
        bih = scale * jax.random.normal(next(k), (4 * H,), jnp.float32)
        bhh = scale * jax.random.normal(next(k), (4 * H,), jnp.float32)
        b = gate_pack_b(bih + bhh)                      # (1, 4*Gp), f32
        if l == 0:
            params["lstm"].append({
                "wih_t": gate_pack_w(wih, in_size, in_size, 0).astype(lstm_weight_dtype),
                "whh_t": gate_pack_w(whh, H, H_PAD, 0).astype(lstm_weight_dtype),
                "b": b,
            })
        else:
            wcat = (gate_pack_w(wih, H, 2 * H_PAD, 0)
                    + gate_pack_w(whh, H, 2 * H_PAD, H_PAD))   # (2*H_PAD, 4*Gp)
            params["lstm"].append({
                "wcat_t": wcat.astype(lstm_weight_dtype),
                "b": b,
            })
        in_size = H

    def pack_proj(wmat, b, in_pad):
        # wmat: (5000, In) torch Linear weight, b: (5000,)
        wt = wmat.T                                              # (In, 5000)
        In = wt.shape[0]
        wt = wt.reshape(In, MFB_OUT, MFB_FACTOR).transpose(0, 2, 1)  # (In,5,1000)
        wt = jnp.pad(wt, ((0, in_pad - In), (0, 0), (0, MFB_OUT_PAD - MFB_OUT)))
        wt = wt.reshape(in_pad, MFB_DIM_PAD)
        bb = b.reshape(MFB_OUT, MFB_FACTOR).T                    # (5, 1000)
        bb = jnp.pad(bb, ((0, 0), (0, MFB_OUT_PAD - MFB_OUT))).reshape(1, -1)
        return wt.astype(mfb_weight_dtype), bb.astype(jnp.float32)

    wq = scale * jax.random.normal(next(k), (MFB_DIM, H), jnp.float32)
    bq = scale * jax.random.normal(next(k), (MFB_DIM,), jnp.float32)
    wi = scale * jax.random.normal(next(k), (MFB_DIM, feat_size), jnp.float32)
    bi = scale * jax.random.normal(next(k), (MFB_DIM,), jnp.float32)
    wp = scale * jax.random.normal(next(k), (ans_vocab_size, MFB_OUT), jnp.float32)
    bp = scale * jax.random.normal(next(k), (ans_vocab_size,), jnp.float32)

    params["wq_t"], params["bq"] = pack_proj(wq, bq, H_PAD)      # (128,5120),(1,5120)
    params["wi_t"], params["bi"] = pack_proj(wi, bi, feat_size)  # (F,5120),(1,5120)

    A_pad = _round_up(ans_vocab_size, 128)
    wp_t = jnp.pad(wp.T, ((0, MFB_OUT_PAD - MFB_OUT), (0, A_pad - ans_vocab_size)))
    bp_pad = jnp.pad(bp, (0, A_pad - ans_vocab_size), constant_values=-1e30)
    params["wp_t"] = wp_t.astype(mfb_weight_dtype)               # (1024, A_pad)
    params["bp"] = bp_pad.reshape(1, -1).astype(jnp.float32)     # (1, A_pad)
    return params


# ----------------------------------------------------------------------------
# Full model (tiny XLA glue + one fused kernel).
# ----------------------------------------------------------------------------
@functools.partial(jax.jit, static_argnames=("ans_vocab_size",))
def mfb_baseline_forward(params, ques_embed, img_feat, *, ans_vocab_size):
    B, T, E = ques_embed.shape
    _, Hs, Ws, C = img_feat.shape
    Bp = _round_up(B, 8)               # pad batch to a full f32 sublane tile

    # Question branch: (B,T,E) -> (T,Bp,E) -> flattened (T*Bp, E) for the
    # hoisted layer-0 input projection inside the fused kernel.
    x = jnp.transpose(ques_embed, (1, 0, 2)).astype(jnp.float32)
    if Bp != B:
        x = jnp.pad(x, ((0, 0), (0, Bp - B), (0, 0)))
    x = x.reshape(T * Bp, E)

    # Image branch: NHWC -> (S, Bp, C) so the in-kernel global pool is plain
    # leading-axis adds.  AvgPool2d(window, stride=1) is a global pool when
    # the window equals the spatial extent (the baseline configuration).
    # TODO(synk): sliding-window avg pool (window < spatial extent) is not
    # implemented; that case would need a spatial grid of pooled outputs.
    img = img_feat.reshape(B, Hs * Ws, C).astype(jnp.float32)
    if Bp != B:
        img = jnp.pad(img, ((0, Bp - B), (0, 0), (0, 0)))
    img = jnp.transpose(img, (1, 0, 2))                          # (S, Bp, C)

    pred = mfb_fused_call(x, img, params)                        # (Bp, A_pad)
    return pred[:B, :ans_vocab_size]


if __name__ == "__main__":
    # Small, module-consistent shapes.
    embedding_size = 32
    LSTM_units = 32
    LSTM_layers = 2
    feat_size = 64
    batch_size = 2
    ans_vocab_size = 128
    global_avg_pool_size = 4
    seq_len = 8

    key = jax.random.PRNGKey(0)
    kp, kq, ki = jax.random.split(key, 3)

    params = make_params(kp, embedding_size, LSTM_units, LSTM_layers,
                         feat_size, ans_vocab_size)

    ques_embed = jax.random.normal(
        kq, (batch_size, seq_len, embedding_size), jnp.float32)
    img_feat = jax.random.normal(
        ki, (batch_size, global_avg_pool_size, global_avg_pool_size, feat_size),
        jnp.float32)

    pred = mfb_baseline_forward(params, ques_embed, img_feat,
                                ans_vocab_size=ans_vocab_size)
    pred = jax.block_until_ready(pred)

    assert pred.shape == (batch_size, ans_vocab_size)
    assert bool(jnp.all(jnp.isfinite(pred)))
    # bf16 weights + approx-reciprocal softmax denominator => loose tolerance.
    assert bool(jnp.allclose(jnp.sum(pred, axis=1), 1.0, atol=1e-2))
    print("KERNEL_OK")
</pallas_src>

<mosaic_0001>
module attributes {stable_mosaic.version = 11 : i64} {
  func.func @_mfb_fused_kernel(%arg0: memref<64x32xf32, #tpu.memory_space<vmem>>, %arg1: memref<16x8x64xf32, #tpu.memory_space<vmem>>, %arg2: memref<32x512xbf16, #tpu.memory_space<vmem>>, %arg3: memref<128x512xbf16, #tpu.memory_space<vmem>>, %arg4: memref<1x512xf32, #tpu.memory_space<vmem>>, %arg5: memref<256x512xbf16, #tpu.memory_space<vmem>>, %arg6: memref<1x512xf32, #tpu.memory_space<vmem>>, %arg7: memref<128x5120xbf16, #tpu.memory_space<vmem>>, %arg8: memref<1x5120xf32, #tpu.memory_space<vmem>>, %arg9: memref<64x5120xbf16, #tpu.memory_space<vmem>>, %arg10: memref<1x5120xf32, #tpu.memory_space<vmem>>, %arg11: memref<1024x128xbf16, #tpu.memory_space<vmem>>, %arg12: memref<1x128xf32, #tpu.memory_space<vmem>>, %arg13: memref<8x128xf32, #tpu.memory_space<vmem>>) attributes {dimension_semantics = [], scalar_prefetch = 0 : i64, scratch_operands = 0 : i64, tpu.core_type = #tpu.core_type<tc>} {
    %c0 = arith.constant 0 : index
    %c0_0 = arith.constant 0 : index
    %0 = vector.load %arg0[%c0, %c0_0] : memref<64x32xf32, #tpu.memory_space<vmem>>, vector<64x32xf32>
    %1 = arith.truncf %0 : vector<64x32xf32> to vector<64x32xbf16>
    %c0_1 = arith.constant 0 : index
    %c0_2 = arith.constant 0 : index
    %2 = vector.load %arg2[%c0_1, %c0_2] : memref<32x512xbf16, #tpu.memory_space<vmem>>, vector<32x512xbf16>
    %cst = arith.constant dense<0.000000e+00> : vector<64x512xf32>
    %3 = tpu.matmul %1, %2, %cst {dimension_numbers = #tpu.dot_dimension_numbers<[1], [0], [0], [1], [0, 0, 1, 1], [], []>} : vector<64x32xbf16>, vector<32x512xbf16>, vector<64x512xf32> -> vector<64x512xf32>
    %c0_3 = arith.constant 0 : index
    %c0_4 = arith.constant 0 : index
    %4 = vector.load %arg4[%c0_3, %c0_4] : memref<1x512xf32, #tpu.memory_space<vmem>>, vector<1x512xf32>
    %5 = vector.broadcast %4 : vector<1x512xf32> to vector<64x512xf32>
    %6 = arith.addf %3, %5 : vector<64x512xf32>
    %c0_5 = arith.constant 0 : index
    %c0_6 = arith.constant 0 : index
    %7 = vector.load %arg3[%c0_5, %c0_6] : memref<128x512xbf16, #tpu.memory_space<vmem>>, vector<128x512xbf16>
    %c0_7 = arith.constant 0 : index
    %c0_8 = arith.constant 0 : index
    %8 = vector.load %arg5[%c0_7, %c0_8] : memref<256x512xbf16, #tpu.memory_space<vmem>>, vector<256x512xbf16>
    %c0_9 = arith.constant 0 : index
    %c0_10 = arith.constant 0 : index
    %9 = vector.load %arg6[%c0_9, %c0_10] : memref<1x512xf32, #tpu.memory_space<vmem>>, vector<1x512xf32>
    %cst_11 = arith.constant 0.000000e+00 : f32
    %10 = vector.broadcast %cst_11 : f32 to vector<8x128xf32>
    %cst_12 = arith.constant 0.000000e+00 : f32
    %11 = vector.broadcast %cst_12 : f32 to vector<8x128xf32>
    %cst_13 = arith.constant 0.000000e+00 : f32
    %12 = vector.broadcast %cst_13 : f32 to vector<8x128xf32>
    %cst_14 = arith.constant 0.000000e+00 : f32
    %13 = vector.broadcast %cst_14 : f32 to vector<8x128xf32>
    %14 = vector.extract_strided_slice %6 {offsets = [0, 0], sizes = [8, 512], strides = [1, 1]} : vector<64x512xf32> to vector<8x512xf32>
    %15 = arith.truncf %10 : vector<8x128xf32> to vector<8x128xbf16>
    %cst_15 = arith.constant dense<0.000000e+00> : vector<8x512xf32>
    %16 = tpu.matmul %15, %7, %cst_15 {dimension_numbers = #tpu.dot_dimension_numbers<[1], [0], [0], [1], [0, 0, 1, 1], [], []>} : vector<8x128xbf16>, vector<128x512xbf16>, vector<8x512xf32> -> vector<8x512xf32>
    %17 = arith.addf %14, %16 : vector<8x512xf32>
    %18 = vector.extract_strided_slice %17 {offsets = [0, 0], sizes = [8, 128], strides = [1, 1]} : vector<8x512xf32> to vector<8x128xf32>
    %19 = arith.negf %18 : vector<8x128xf32>
    %20 = math.exp %19 : vector<8x128xf32>
    %cst_16 = arith.constant 1.000000e+00 : f32
    %21 = vector.broadcast %cst_16 : f32 to vector<8x128xf32>
    %22 = arith.addf %21, %20 : vector<8x128xf32>
    %23 = arith.divf %21, %22 : vector<8x128xf32>
    %24 = vector.extract_strided_slice %17 {offsets = [0, 128], sizes = [8, 128], strides = [1, 1]} : vector<8x512xf32> to vector<8x128xf32>
    %25 = arith.negf %24 : vector<8x128xf32>
    %26 = math.exp %25 : vector<8x128xf32>
    %cst_17 = arith.constant 1.000000e+00 : f32
    %27 = vector.broadcast %cst_17 : f32 to vector<8x128xf32>
    %28 = arith.addf %27, %26 : vector<8x128xf32>
    %29 = arith.divf %27, %28 : vector<8x128xf32>
    %30 = vector.extract_strided_slice %17 {offsets = [0, 256], sizes = [8, 128], strides = [1, 1]} : vector<8x512xf32> to vector<8x128xf32>
    %31 = math.tanh %30 : vector<8x128xf32>
    %32 = vector.extract_strided_slice %17 {offsets = [0, 384], sizes = [8, 128], strides = [1, 1]} : vector<8x512xf32> to vector<8x128xf32>
    %33 = arith.negf %32 : vector<8x128xf32>
    %34 = math.exp %33 : vector<8x128xf32>
    %cst_18 = arith.constant 1.000000e+00 : f32
    %35 = vector.broadcast %cst_18 : f32 to vector<8x128xf32>
    %36 = arith.addf %35, %34 : vector<8x128xf32>
    %37 = arith.divf %35, %36 : vector<8x128xf32>
    %38 = arith.mulf %29, %12 : vector<8x128xf32>
    %39 = arith.mulf %23, %31 : vector<8x128xf32>
    %40 = arith.addf %38, %39 : vector<8x128xf32>
    %41 = math.tanh %40 : vector<8x128xf32>
    %42 = arith.mulf %37, %41 : vector<8x128xf32>
    %43 = tpu.concatenate %42, %11 in 1 : vector<8x128xf32>, vector<8x128xf32> -> vector<8x256xf32>
    %44 = arith.truncf %43 : vector<8x256xf32> to vector<8x256xbf16>
    %cst_19 = arith.constant dense<0.000000e+00> : vector<8x512xf32>
    %45 = tpu.matmul %44, %8, %cst_19 {dimension_numbers = #tpu.dot_dimension_numbers<[1], [0], [0], [1], [0, 0, 1, 1], [], []>} : vector<8x256xbf16>, vector<256x512xbf16>, vector<8x512xf32> -> vector<8x512xf32>
    %46 = vector.broadcast %9 : vector<1x512xf32> to vector<8x512xf32>
    %47 = arith.addf %45, %46 : vector<8x512xf32>
    %48 = vector.extract_strided_slice %47 {offsets = [0, 0], sizes = [8, 128], strides = [1, 1]} : vector<8x512xf32> to vector<8x128xf32>
    %49 = arith.negf %48 : vector<8x128xf32>
    %50 = math.exp %49 : vector<8x128xf32>
    %cst_20 = arith.constant 1.000000e+00 : f32
    %51 = vector.broadcast %cst_20 : f32 to vector<8x128xf32>
    %52 = arith.addf %51, %50 : vector<8x128xf32>
    %53 = arith.divf %51, %52 : vector<8x128xf32>
    %54 = vector.extract_strided_slice %47 {offsets = [0, 128], sizes = [8, 128], strides = [1, 1]} : vector<8x512xf32> to vector<8x128xf32>
    %55 = arith.negf %54 : vector<8x128xf32>
    %56 = math.exp %55 : vector<8x128xf32>
    %cst_21 = arith.constant 1.000000e+00 : f32
    %57 = vector.broadcast %cst_21 : f32 to vector<8x128xf32>
    %58 = arith.addf %57, %56 : vector<8x128xf32>
    %59 = arith.divf %57, %58 : vector<8x128xf32>
    %60 = vector.extract_strided_slice %47 {offsets = [0, 256], sizes = [8, 128], strides = [1, 1]} : vector<8x512xf32> to vector<8x128xf32>
    %61 = math.tanh %60 : vector<8x128xf32>
    %62 = vector.extract_strided_slice %47 {offsets = [0, 384], sizes = [8, 128], strides = [1, 1]} : vector<8x512xf32> to vector<8x128xf32>
    %63 = arith.negf %62 : vector<8x128xf32>
    %64 = math.exp %63 : vector<8x128xf32>
    %cst_22 = arith.constant 1.000000e+00 : f32
    %65 = vector.broadcast %cst_22 : f32 to vector<8x128xf32>
    %66 = arith.addf %65, %64 : vector<8x128xf32>
    %67 = arith.divf %65, %66 : vector<8x128xf32>
    %68 = arith.mulf %59, %13 : vector<8x128xf32>
    %69 = arith.mulf %53, %61 : vector<8x128xf32>
    %70 = arith.addf %68, %69 : vector<8x128xf32>
    %71 = math.tanh %70 : vector<8x128xf32>
    %72 = arith.mulf %67, %71 : vector<8x128xf32>
    %73 = vector.extract_strided_slice %6 {offsets = [8, 0], sizes = [8, 512], strides = [1, 1]} : vector<64x512xf32> to vector<8x512xf32>
    %74 = arith.truncf %42 : vector<8x128xf32> to vector<8x128xbf16>
    %cst_23 = arith.constant dense<0.000000e+00> : vector<8x512xf32>
    %75 = tpu.matmul %74, %7, %cst_23 {dimension_numbers = #tpu.dot_dimension_numbers<[1], [0], [0], [1], [0, 0, 1, 1], [], []>} : vector<8x128xbf16>, vector<128x512xbf16>, vector<8x512xf32> -> vector<8x512xf32>
    %76 = arith.addf %73, %75 : vector<8x512xf32>
    %77 = vector.extract_strided_slice %76 {offsets = [0, 0], sizes = [8, 128], strides = [1, 1]} : vector<8x512xf32> to vector<8x128xf32>
    %78 = arith.negf %77 : vector<8x128xf32>
    %79 = math.exp %78 : vector<8x128xf32>
    %cst_24 = arith.constant 1.000000e+00 : f32
    %80 = vector.broadcast %cst_24 : f32 to vector<8x128xf32>
    %81 = arith.addf %80, %79 : vector<8x128xf32>
    %82 = arith.divf %80, %81 : vector<8x128xf32>
    %83 = vector.extract_strided_slice %76 {offsets = [0, 128], sizes = [8, 128], strides = [1, 1]} : vector<8x512xf32> to vector<8x128xf32>
    %84 = arith.negf %83 : vector<8x128xf32>
    %85 = math.exp %84 : vector<8x128xf32>
    %cst_25 = arith.constant 1.000000e+00 : f32
    %86 = vector.broadcast %cst_25 : f32 to vector<8x128xf32>
    %87 = arith.addf %86, %85 : vector<8x128xf32>
    %88 = arith.divf %86, %87 : vector<8x128xf32>
    %89 = vector.extract_strided_slice %76 {offsets = [0, 256], sizes = [8, 128], strides = [1, 1]} : vector<8x512xf32> to vector<8x128xf32>
    %90 = math.tanh %89 : vector<8x128xf32>
    %91 = vector.extract_strided_slice %76 {offsets = [0, 384], sizes = [8, 128], strides = [1, 1]} : vector<8x512xf32> to vector<8x128xf32>
    %92 = arith.negf %91 : vector<8x128xf32>
    %93 = math.exp %92 : vector<8x128xf32>
    %cst_26 = arith.constant 1.000000e+00 : f32
    %94 = vector.broadcast %cst_26 : f32 to vector<8x128xf32>
    %95 = arith.addf %94, %93 : vector<8x128xf32>
    %96 = arith.divf %94, %95 : vector<8x128xf32>
    %97 = arith.mulf %88, %40 : vector<8x128xf32>
    %98 = arith.mulf %82, %90 : vector<8x128xf32>
    %99 = arith.addf %97, %98 : vector<8x128xf32>
    %100 = math.tanh %99 : vector<8x128xf32>
    %101 = arith.mulf %96, %100 : vector<8x128xf32>
    %102 = tpu.concatenate %101, %72 in 1 : vector<8x128xf32>, vector<8x128xf32> -> vector<8x256xf32>
    %103 = arith.truncf %102 : vector<8x256xf32> to vector<8x256xbf16>
    %cst_27 = arith.constant dense<0.000000e+00> : vector<8x512xf32>
    %104 = tpu.matmul %103, %8, %cst_27 {dimension_numbers = #tpu.dot_dimension_numbers<[1], [0], [0], [1], [0, 0, 1, 1], [], []>} : vector<8x256xbf16>, vector<256x512xbf16>, vector<8x512xf32> -> vector<8x512xf32>
    %105 = vector.broadcast %9 : vector<1x512xf32> to vector<8x512xf32>
    %106 = arith.addf %104, %105 : vector<8x512xf32>
    %107 = vector.extract_strided_slice %106 {offsets = [0, 0], sizes = [8, 128], strides = [1, 1]} : vector<8x512xf32> to vector<8x128xf32>
    %108 = arith.negf %107 : vector<8x128xf32>
    %109 = math.exp %108 : vector<8x128xf32>
    %cst_28 = arith.constant 1.000000e+00 : f32
    %110 = vector.broadcast %cst_28 : f32 to vector<8x128xf32>
    %111 = arith.addf %110, %109 : vector<8x128xf32>
    %112 = arith.divf %110, %111 : vector<8x128xf32>
    %113 = vector.extract_strided_slice %106 {offsets = [0, 128], sizes = [8, 128], strides = [1, 1]} : vector<8x512xf32> to vector<8x128xf32>
    %114 = arith.negf %113 : vector<8x128xf32>
    %115 = math.exp %114 : vector<8x128xf32>
    %cst_29 = arith.constant 1.000000e+00 : f32
    %116 = vector.broadcast %cst_29 : f32 to vector<8x128xf32>
    %117 = arith.addf %116, %115 : vector<8x128xf32>
    %118 = arith.divf %116, %117 : vector<8x128xf32>
    %119 = vector.extract_strided_slice %106 {offsets = [0, 256], sizes = [8, 128], strides = [1, 1]} : vector<8x512xf32> to vector<8x128xf32>
    %120 = math.tanh %119 : vector<8x128xf32>
    %121 = vector.extract_strided_slice %106 {offsets = [0, 384], sizes = [8, 128], strides = [1, 1]} : vector<8x512xf32> to vector<8x128xf32>
    %122 = arith.negf %121 : vector<8x128xf32>
    %123 = math.exp %122 : vector<8x128xf32>
    %cst_30 = arith.constant 1.000000e+00 : f32
    %124 = vector.broadcast %cst_30 : f32 to vector<8x128xf32>
    %125 = arith.addf %124, %123 : vector<8x128xf32>
    %126 = arith.divf %124, %125 : vector<8x128xf32>
    %127 = arith.mulf %118, %70 : vector<8x128xf32>
    %128 = arith.mulf %112, %120 : vector<8x128xf32>
    %129 = arith.addf %127, %128 : vector<8x128xf32>
    %130 = math.tanh %129 : vector<8x128xf32>
    %131 = arith.mulf %126, %130 : vector<8x128xf32>
    %132 = vector.extract_strided_slice %6 {offsets = [16, 0], sizes = [8, 512], strides = [1, 1]} : vector<64x512xf32> to vector<8x512xf32>
    %133 = arith.truncf %101 : vector<8x128xf32> to vector<8x128xbf16>
    %cst_31 = arith.constant dense<0.000000e+00> : vector<8x512xf32>
    %134 = tpu.matmul %133, %7, %cst_31 {dimension_numbers = #tpu.dot_dimension_numbers<[1], [0], [0], [1], [0, 0, 1, 1], [], []>} : vector<8x128xbf16>, vector<128x512xbf16>, vector<8x512xf32> -> vector<8x512xf32>
    %135 = arith.addf %132, %134 : vector<8x512xf32>
    %136 = vector.extract_strided_slice %135 {offsets = [0, 0], sizes = [8, 128], strides = [1, 1]} : vector<8x512xf32> to vector<8x128xf32>
    %137 = arith.negf %136 : vector<8x128xf32>
    %138 = math.exp %137 : vector<8x128xf32>
    %cst_32 = arith.constant 1.000000e+00 : f32
    %139 = vector.broadcast %cst_32 : f32 to vector<8x128xf32>
    %140 = arith.addf %139, %138 : vector<8x128xf32>
    %141 = arith.divf %139, %140 : vector<8x128xf32>
    %142 = vector.extract_strided_slice %135 {offsets = [0, 128], sizes = [8, 128], strides = [1, 1]} : vector<8x512xf32> to vector<8x128xf32>
    %143 = arith.negf %142 : vector<8x128xf32>
    %144 = math.exp %143 : vector<8x128xf32>
    %cst_33 = arith.constant 1.000000e+00 : f32
    %145 = vector.broadcast %cst_33 : f32 to vector<8x128xf32>
    %146 = arith.addf %145, %144 : vector<8x128xf32>
    %147 = arith.divf %145, %146 : vector<8x128xf32>
    %148 = vector.extract_strided_slice %135 {offsets = [0, 256], sizes = [8, 128], strides = [1, 1]} : vector<8x512xf32> to vector<8x128xf32>
    %149 = math.tanh %148 : vector<8x128xf32>
    %150 = vector.extract_strided_slice %135 {offsets = [0, 384], sizes = [8, 128], strides = [1, 1]} : vector<8x512xf32> to vector<8x128xf32>
    %151 = arith.negf %150 : vector<8x128xf32>
    %152 = math.exp %151 : vector<8x128xf32>
    %cst_34 = arith.constant 1.000000e+00 : f32
    %153 = vector.broadcast %cst_34 : f32 to vector<8x128xf32>
    %154 = arith.addf %153, %152 : vector<8x128xf32>
    %155 = arith.divf %153, %154 : vector<8x128xf32>
    %156 = arith.mulf %147, %99 : vector<8x128xf32>
    %157 = arith.mulf %141, %149 : vector<8x128xf32>
    %158 = arith.addf %156, %157 : vector<8x128xf32>
    %159 = math.tanh %158 : vector<8x128xf32>
    %160 = arith.mulf %155, %159 : vector<8x128xf32>
    %161 = tpu.concatenate %160, %131 in 1 : vector<8x128xf32>, vector<8x128xf32> -> vector<8x256xf32>
    %162 = arith.truncf %161 : vector<8x256xf32> to vector<8x256xbf16>
    %cst_35 = arith.constant dense<0.000000e+00> : vector<8x512xf32>
    %163 = tpu.matmul %162, %8, %cst_35 {dimension_numbers = #tpu.dot_dimension_numbers<[1], [0], [0], [1], [0, 0, 1, 1], [], []>} : vector<8x256xbf16>, vector<256x512xbf16>, vector<8x512xf32> -> vector<8x512xf32>
    %164 = vector.broadcast %9 : vector<1x512xf32> to vector<8x512xf32>
    %165 = arith.addf %163, %164 : vector<8x512xf32>
    %166 = vector.extract_strided_slice %165 {offsets = [0, 0], sizes = [8, 128], strides = [1, 1]} : vector<8x512xf32> to vector<8x128xf32>
    %167 = arith.negf %166 : vector<8x128xf32>
    %168 = math.exp %167 : vector<8x128xf32>
    %cst_36 = arith.constant 1.000000e+00 : f32
    %169 = vector.broadcast %cst_36 : f32 to vector<8x128xf32>
    %170 = arith.addf %169, %168 : vector<8x128xf32>
    %171 = arith.divf %169, %170 : vector<8x128xf32>
    %172 = vector.extract_strided_slice %165 {offsets = [0, 128], sizes = [8, 128], strides = [1, 1]} : vector<8x512xf32> to vector<8x128xf32>
    %173 = arith.negf %172 : vector<8x128xf32>
    %174 = math.exp %173 : vector<8x128xf32>
    %cst_37 = arith.constant 1.000000e+00 : f32
    %175 = vector.broadcast %cst_37 : f32 to vector<8x128xf32>
    %176 = arith.addf %175, %174 : vector<8x128xf32>
    %177 = arith.divf %175, %176 : vector<8x128xf32>
    %178 = vector.extract_strided_slice %165 {offsets = [0, 256], sizes = [8, 128], strides = [1, 1]} : vector<8x512xf32> to vector<8x128xf32>
    %179 = math.tanh %178 : vector<8x128xf32>
    %180 = vector.extract_strided_slice %165 {offsets = [0, 384], sizes = [8, 128], strides = [1, 1]} : vector<8x512xf32> to vector<8x128xf32>
    %181 = arith.negf %180 : vector<8x128xf32>
    %182 = math.exp %181 : vector<8x128xf32>
    %cst_38 = arith.constant 1.000000e+00 : f32
    %183 = vector.broadcast %cst_38 : f32 to vector<8x128xf32>
    %184 = arith.addf %183, %182 : vector<8x128xf32>
    %185 = arith.divf %183, %184 : vector<8x128xf32>
    %186 = arith.mulf %177, %129 : vector<8x128xf32>
    %187 = arith.mulf %171, %179 : vector<8x128xf32>
    %188 = arith.addf %186, %187 : vector<8x128xf32>
    %189 = math.tanh %188 : vector<8x128xf32>
    %190 = arith.mulf %185, %189 : vector<8x128xf32>
    %191 = vector.extract_strided_slice %6 {offsets = [24, 0], sizes = [8, 512], strides = [1, 1]} : vector<64x512xf32> to vector<8x512xf32>
    %192 = arith.truncf %160 : vector<8x128xf32> to vector<8x128xbf16>
    %cst_39 = arith.constant dense<0.000000e+00> : vector<8x512xf32>
    %193 = tpu.matmul %192, %7, %cst_39 {dimension_numbers = #tpu.dot_dimension_numbers<[1], [0], [0], [1], [0, 0, 1, 1], [], []>} : vector<8x128xbf16>, vector<128x512xbf16>, vector<8x512xf32> -> vector<8x512xf32>
    %194 = arith.addf %191, %193 : vector<8x512xf32>
    %195 = vector.extract_strided_slice %194 {offsets = [0, 0], sizes = [8, 128], strides = [1, 1]} : vector<8x512xf32> to vector<8x128xf32>
    %196 = arith.negf %195 : vector<8x128xf32>
    %197 = math.exp %196 : vector<8x128xf32>
    %cst_40 = arith.constant 1.000000e+00 : f32
    %198 = vector.broadcast %cst_40 : f32 to vector<8x128xf32>
    %199 = arith.addf %198, %197 : vector<8x128xf32>
    %200 = arith.divf %198, %199 : vector<8x128xf32>
    %201 = vector.extract_strided_slice %194 {offsets = [0, 128], sizes = [8, 128], strides = [1, 1]} : vector<8x512xf32> to vector<8x128xf32>
    %202 = arith.negf %201 : vector<8x128xf32>
    %203 = math.exp %202 : vector<8x128xf32>
    %cst_41 = arith.constant 1.000000e+00 : f32
    %204 = vector.broadcast %cst_41 : f32 to vector<8x128xf32>
    %205 = arith.addf %204, %203 : vector<8x128xf32>
    %206 = arith.divf %204, %205 : vector<8x128xf32>
    %207 = vector.extract_strided_slice %194 {offsets = [0, 256], sizes = [8, 128], strides = [1, 1]} : vector<8x512xf32> to vector<8x128xf32>
    %208 = math.tanh %207 : vector<8x128xf32>
    %209 = vector.extract_strided_slice %194 {offsets = [0, 384], sizes = [8, 128], strides = [1, 1]} : vector<8x512xf32> to vector<8x128xf32>
    %210 = arith.negf %209 : vector<8x128xf32>
    %211 = math.exp %210 : vector<8x128xf32>
    %cst_42 = arith.constant 1.000000e+00 : f32
    %212 = vector.broadcast %cst_42 : f32 to vector<8x128xf32>
    %213 = arith.addf %212, %211 : vector<8x128xf32>
    %214 = arith.divf %212, %213 : vector<8x128xf32>
    %215 = arith.mulf %206, %158 : vector<8x128xf32>
    %216 = arith.mulf %200, %208 : vector<8x128xf32>
    %217 = arith.addf %215, %216 : vector<8x128xf32>
    %218 = math.tanh %217 : vector<8x128xf32>
    %219 = arith.mulf %214, %218 : vector<8x128xf32>
    %220 = tpu.concatenate %219, %190 in 1 : vector<8x128xf32>, vector<8x128xf32> -> vector<8x256xf32>
    %221 = arith.truncf %220 : vector<8x256xf32> to vector<8x256xbf16>
    %cst_43 = arith.constant dense<0.000000e+00> : vector<8x512xf32>
    %222 = tpu.matmul %221, %8, %cst_43 {dimension_numbers = #tpu.dot_dimension_numbers<[1], [0], [0], [1], [0, 0, 1, 1], [], []>} : vector<8x256xbf16>, vector<256x512xbf16>, vector<8x512xf32> -> vector<8x512xf32>
    %223 = vector.broadcast %9 : vector<1x512xf32> to vector<8x512xf32>
    %224 = arith.addf %222, %223 : vector<8x512xf32>
    %225 = vector.extract_strided_slice %224 {offsets = [0, 0], sizes = [8, 128], strides = [1, 1]} : vector<8x512xf32> to vector<8x128xf32>
    %226 = arith.negf %225 : vector<8x128xf32>
    %227 = math.exp %226 : vector<8x128xf32>
    %cst_44 = arith.constant 1.000000e+00 : f32
    %228 = vector.broadcast %cst_44 : f32 to vector<8x128xf32>
    %229 = arith.addf %228, %227 : vector<8x128xf32>
    %230 = arith.divf %228, %229 : vector<8x128xf32>
    %231 = vector.extract_strided_slice %224 {offsets = [0, 128], sizes = [8, 128], strides = [1, 1]} : vector<8x512xf32> to vector<8x128xf32>
    %232 = arith.negf %231 : vector<8x128xf32>
    %233 = math.exp %232 : vector<8x128xf32>
    %cst_45 = arith.constant 1.000000e+00 : f32
    %234 = vector.broadcast %cst_45 : f32 to vector<8x128xf32>
    %235 = arith.addf %234, %233 : vector<8x128xf32>
    %236 = arith.divf %234, %235 : vector<8x128xf32>
    %237 = vector.extract_strided_slice %224 {offsets = [0, 256], sizes = [8, 128], strides = [1, 1]} : vector<8x512xf32> to vector<8x128xf32>
    %238 = math.tanh %237 : vector<8x128xf32>
    %239 = vector.extract_strided_slice %224 {offsets = [0, 384], sizes = [8, 128], strides = [1, 1]} : vector<8x512xf32> to vector<8x128xf32>
    %240 = arith.negf %239 : vector<8x128xf32>
    %241 = math.exp %240 : vector<8x128xf32>
    %cst_46 = arith.constant 1.000000e+00 : f32
    %242 = vector.broadcast %cst_46 : f32 to vector<8x128xf32>
    %243 = arith.addf %242, %241 : vector<8x128xf32>
    %244 = arith.divf %242, %243 : vector<8x128xf32>
    %245 = arith.mulf %236, %188 : vector<8x128xf32>
    %246 = arith.mulf %230, %238 : vector<8x128xf32>
    %247 = arith.addf %245, %246 : vector<8x128xf32>
    %248 = math.tanh %247 : vector<8x128xf32>
    %249 = arith.mulf %244, %248 : vector<8x128xf32>
    %250 = vector.extract_strided_slice %6 {offsets = [32, 0], sizes = [8, 512], strides = [1, 1]} : vector<64x512xf32> to vector<8x512xf32>
    %251 = arith.truncf %219 : vector<8x128xf32> to vector<8x128xbf16>
    %cst_47 = arith.constant dense<0.000000e+00> : vector<8x512xf32>
    %252 = tpu.matmul %251, %7, %cst_47 {dimension_numbers = #tpu.dot_dimension_numbers<[1], [0], [0], [1], [0, 0, 1, 1], [], []>} : vector<8x128xbf16>, vector<128x512xbf16>, vector<8x512xf32> -> vector<8x512xf32>
    %253 = arith.addf %250, %252 : vector<8x512xf32>
    %254 = vector.extract_strided_slice %253 {offsets = [0, 0], sizes = [8, 128], strides = [1, 1]} : vector<8x512xf32> to vector<8x128xf32>
    %255 = arith.negf %254 : vector<8x128xf32>
    %256 = math.exp %255 : vector<8x128xf32>
    %cst_48 = arith.constant 1.000000e+00 : f32
    %257 = vector.broadcast %cst_48 : f32 to vector<8x128xf32>
    %258 = arith.addf %257, %256 : vector<8x128xf32>
    %259 = arith.divf %257, %258 : vector<8x128xf32>
    %260 = vector.extract_strided_slice %253 {offsets = [0, 128], sizes = [8, 128], strides = [1, 1]} : vector<8x512xf32> to vector<8x128xf32>
    %261 = arith.negf %260 : vector<8x128xf32>
    %262 = math.exp %261 : vector<8x128xf32>
    %cst_49 = arith.constant 1.000000e+00 : f32
    %263 = vector.broadcast %cst_49 : f32 to vector<8x128xf32>
    %264 = arith.addf %263, %262 : vector<8x128xf32>
    %265 = arith.divf %263, %264 : vector<8x128xf32>
    %266 = vector.extract_strided_slice %253 {offsets = [0, 256], sizes = [8, 128], strides = [1, 1]} : vector<8x512xf32> to vector<8x128xf32>
    %267 = math.tanh %266 : vector<8x128xf32>
    %268 = vector.extract_strided_slice %253 {offsets = [0, 384], sizes = [8, 128], strides = [1, 1]} : vector<8x512xf32> to vector<8x128xf32>
    %269 = arith.negf %268 : vector<8x128xf32>
    %270 = math.exp %269 : vector<8x128xf32>
    %cst_50 = arith.constant 1.000000e+00 : f32
    %271 = vector.broadcast %cst_50 : f32 to vector<8x128xf32>
    %272 = arith.addf %271, %270 : vector<8x128xf32>
    %273 = arith.divf %271, %272 : vector<8x128xf32>
    %274 = arith.mulf %265, %217 : vector<8x128xf32>
    %275 = arith.mulf %259, %267 : vector<8x128xf32>
    %276 = arith.addf %274, %275 : vector<8x128xf32>
    %277 = math.tanh %276 : vector<8x128xf32>
    %278 = arith.mulf %273, %277 : vector<8x128xf32>
    %279 = tpu.concatenate %278, %249 in 1 : vector<8x128xf32>, vector<8x128xf32> -> vector<8x256xf32>
    %280 = arith.truncf %279 : vector<8x256xf32> to vector<8x256xbf16>
    %cst_51 = arith.constant dense<0.000000e+00> : vector<8x512xf32>
    %281 = tpu.matmul %280, %8, %cst_51 {dimension_numbers = #tpu.dot_dimension_numbers<[1], [0], [0], [1], [0, 0, 1, 1], [], []>} : vector<8x256xbf16>, vector<256x512xbf16>, vector<8x512xf32> -> vector<8x512xf32>
    %282 = vector.broadcast %9 : vector<1x512xf32> to vector<8x512xf32>
    %283 = arith.addf %281, %282 : vector<8x512xf32>
    %284 = vector.extract_strided_slice %283 {offsets = [0, 0], sizes = [8, 128], strides = [1, 1]} : vector<8x512xf32> to vector<8x128xf32>
    %285 = arith.negf %284 : vector<8x128xf32>
    %286 = math.exp %285 : vector<8x128xf32>
    %cst_52 = arith.constant 1.000000e+00 : f32
    %287 = vector.broadcast %cst_52 : f32 to vector<8x128xf32>
    %288 = arith.addf %287, %286 : vector<8x128xf32>
    %289 = arith.divf %287, %288 : vector<8x128xf32>
    %290 = vector.extract_strided_slice %283 {offsets = [0, 128], sizes = [8, 128], strides = [1, 1]} : vector<8x512xf32> to vector<8x128xf32>
    %291 = arith.negf %290 : vector<8x128xf32>
    %292 = math.exp %291 : vector<8x128xf32>
    %cst_53 = arith.constant 1.000000e+00 : f32
    %293 = vector.broadcast %cst_53 : f32 to vector<8x128xf32>
    %294 = arith.addf %293, %292 : vector<8x128xf32>
    %295 = arith.divf %293, %294 : vector<8x128xf32>
    %296 = vector.extract_strided_slice %283 {offsets = [0, 256], sizes = [8, 128], strides = [1, 1]} : vector<8x512xf32> to vector<8x128xf32>
    %297 = math.tanh %296 : vector<8x128xf32>
    %298 = vector.extract_strided_slice %283 {offsets = [0, 384], sizes = [8, 128], strides = [1, 1]} : vector<8x512xf32> to vector<8x128xf32>
    %299 = arith.negf %298 : vector<8x128xf32>
    %300 = math.exp %299 : vector<8x128xf32>
    %cst_54 = arith.constant 1.000000e+00 : f32
    %301 = vector.broadcast %cst_54 : f32 to vector<8x128xf32>
    %302 = arith.addf %301, %300 : vector<8x128xf32>
    %303 = arith.divf %301, %302 : vector<8x128xf32>
    %304 = arith.mulf %295, %247 : vector<8x128xf32>
    %305 = arith.mulf %289, %297 : vector<8x128xf32>
    %306 = arith.addf %304, %305 : vector<8x128xf32>
    %307 = math.tanh %306 : vector<8x128xf32>
    %308 = arith.mulf %303, %307 : vector<8x128xf32>
    %309 = vector.extract_strided_slice %6 {offsets = [40, 0], sizes = [8, 512], strides = [1, 1]} : vector<64x512xf32> to vector<8x512xf32>
    %310 = arith.truncf %278 : vector<8x128xf32> to vector<8x128xbf16>
    %cst_55 = arith.constant dense<0.000000e+00> : vector<8x512xf32>
    %311 = tpu.matmul %310, %7, %cst_55 {dimension_numbers = #tpu.dot_dimension_numbers<[1], [0], [0], [1], [0, 0, 1, 1], [], []>} : vector<8x128xbf16>, vector<128x512xbf16>, vector<8x512xf32> -> vector<8x512xf32>
    %312 = arith.addf %309, %311 : vector<8x512xf32>
    %313 = vector.extract_strided_slice %312 {offsets = [0, 0], sizes = [8, 128], strides = [1, 1]} : vector<8x512xf32> to vector<8x128xf32>
    %314 = arith.negf %313 : vector<8x128xf32>
    %315 = math.exp %314 : vector<8x128xf32>
    %cst_56 = arith.constant 1.000000e+00 : f32
    %316 = vector.broadcast %cst_56 : f32 to vector<8x128xf32>
    %317 = arith.addf %316, %315 : vector<8x128xf32>
    %318 = arith.divf %316, %317 : vector<8x128xf32>
    %319 = vector.extract_strided_slice %312 {offsets = [0, 128], sizes = [8, 128], strides = [1, 1]} : vector<8x512xf32> to vector<8x128xf32>
    %320 = arith.negf %319 : vector<8x128xf32>
    %321 = math.exp %320 : vector<8x128xf32>
    %cst_57 = arith.constant 1.000000e+00 : f32
    %322 = vector.broadcast %cst_57 : f32 to vector<8x128xf32>
    %323 = arith.addf %322, %321 : vector<8x128xf32>
    %324 = arith.divf %322, %323 : vector<8x128xf32>
    %325 = vector.extract_strided_slice %312 {offsets = [0, 256], sizes = [8, 128], strides = [1, 1]} : vector<8x512xf32> to vector<8x128xf32>
    %326 = math.tanh %325 : vector<8x128xf32>
    %327 = vector.extract_strided_slice %312 {offsets = [0, 384], sizes = [8, 128], strides = [1, 1]} : vector<8x512xf32> to vector<8x128xf32>
    %328 = arith.negf %327 : vector<8x128xf32>
    %329 = math.exp %328 : vector<8x128xf32>
    %cst_58 = arith.constant 1.000000e+00 : f32
    %330 = vector.broadcast %cst_58 : f32 to vector<8x128xf32>
    %331 = arith.addf %330, %329 : vector<8x128xf32>
    %332 = arith.divf %330, %331 : vector<8x128xf32>
    %333 = arith.mulf %324, %276 : vector<8x128xf32>
    %334 = arith.mulf %318, %326 : vector<8x128xf32>
    %335 = arith.addf %333, %334 : vector<8x128xf32>
    %336 = math.tanh %335 : vector<8x128xf32>
    %337 = arith.mulf %332, %336 : vector<8x128xf32>
    %338 = tpu.concatenate %337, %308 in 1 : vector<8x128xf32>, vector<8x128xf32> -> vector<8x256xf32>
    %339 = arith.truncf %338 : vector<8x256xf32> to vector<8x256xbf16>
    %cst_59 = arith.constant dense<0.000000e+00> : vector<8x512xf32>
    %340 = tpu.matmul %339, %8, %cst_59 {dimension_numbers = #tpu.dot_dimension_numbers<[1], [0], [0], [1], [0, 0, 1, 1], [], []>} : vector<8x256xbf16>, vector<256x512xbf16>, vector<8x512xf32> -> vector<8x512xf32>
    %341 = vector.broadcast %9 : vector<1x512xf32> to vector<8x512xf32>
    %342 = arith.addf %340, %341 : vector<8x512xf32>
    %343 = vector.extract_strided_slice %342 {offsets = [0, 0], sizes = [8, 128], strides = [1, 1]} : vector<8x512xf32> to vector<8x128xf32>
    %344 = arith.negf %343 : vector<8x128xf32>
    %345 = math.exp %344 : vector<8x128xf32>
    %cst_60 = arith.constant 1.000000e+00 : f32
    %346 = vector.broadcast %cst_60 : f32 to vector<8x128xf32>
    %347 = arith.addf %346, %345 : vector<8x128xf32>
    %348 = arith.divf %346, %347 : vector<8x128xf32>
    %349 = vector.extract_strided_slice %342 {offsets = [0, 128], sizes = [8, 128], strides = [1, 1]} : vector<8x512xf32> to vector<8x128xf32>
    %350 = arith.negf %349 : vector<8x128xf32>
    %351 = math.exp %350 : vector<8x128xf32>
    %cst_61 = arith.constant 1.000000e+00 : f32
    %352 = vector.broadcast %cst_61 : f32 to vector<8x128xf32>
    %353 = arith.addf %352, %351 : vector<8x128xf32>
    %354 = arith.divf %352, %353 : vector<8x128xf32>
    %355 = vector.extract_strided_slice %342 {offsets = [0, 256], sizes = [8, 128], strides = [1, 1]} : vector<8x512xf32> to vector<8x128xf32>
    %356 = math.tanh %355 : vector<8x128xf32>
    %357 = vector.extract_strided_slice %342 {offsets = [0, 384], sizes = [8, 128], strides = [1, 1]} : vector<8x512xf32> to vector<8x128xf32>
    %358 = arith.negf %357 : vector<8x128xf32>
    %359 = math.exp %358 : vector<8x128xf32>
    %cst_62 = arith.constant 1.000000e+00 : f32
    %360 = vector.broadcast %cst_62 : f32 to vector<8x128xf32>
    %361 = arith.addf %360, %359 : vector<8x128xf32>
    %362 = arith.divf %360, %361 : vector<8x128xf32>
    %363 = arith.mulf %354, %306 : vector<8x128xf32>
    %364 = arith.mulf %348, %356 : vector<8x128xf32>
    %365 = arith.addf %363, %364 : vector<8x128xf32>
    %366 = math.tanh %365 : vector<8x128xf32>
    %367 = arith.mulf %362, %366 : vector<8x128xf32>
    %368 = vector.extract_strided_slice %6 {offsets = [48, 0], sizes = [8, 512], strides = [1, 1]} : vector<64x512xf32> to vector<8x512xf32>
    %369 = arith.truncf %337 : vector<8x128xf32> to vector<8x128xbf16>
    %cst_63 = arith.constant dense<0.000000e+00> : vector<8x512xf32>
    %370 = tpu.matmul %369, %7, %cst_63 {dimension_numbers = #tpu.dot_dimension_numbers<[1], [0], [0], [1], [0, 0, 1, 1], [], []>} : vector<8x128xbf16>, vector<128x512xbf16>, vector<8x512xf32> -> vector<8x512xf32>
    %371 = arith.addf %368, %370 : vector<8x512xf32>
    %372 = vector.extract_strided_slice %371 {offsets = [0, 0], sizes = [8, 128], strides = [1, 1]} : vector<8x512xf32> to vector<8x128xf32>
    %373 = arith.negf %372 : vector<8x128xf32>
    %374 = math.exp %373 : vector<8x128xf32>
    %cst_64 = arith.constant 1.000000e+00 : f32
    %375 = vector.broadcast %cst_64 : f32 to vector<8x128xf32>
    %376 = arith.addf %375, %374 : vector<8x128xf32>
    %377 = arith.divf %375, %376 : vector<8x128xf32>
    %378 = vector.extract_strided_slice %371 {offsets = [0, 128], sizes = [8, 128], strides = [1, 1]} : vector<8x512xf32> to vector<8x128xf32>
    %379 = arith.negf %378 : vector<8x128xf32>
    %380 = math.exp %379 : vector<8x128xf32>
    %cst_65 = arith.constant 1.000000e+00 : f32
    %381 = vector.broadcast %cst_65 : f32 to vector<8x128xf32>
    %382 = arith.addf %381, %380 : vector<8x128xf32>
    %383 = arith.divf %381, %382 : vector<8x128xf32>
    %384 = vector.extract_strided_slice %371 {offsets = [0, 256], sizes = [8, 128], strides = [1, 1]} : vector<8x512xf32> to vector<8x128xf32>
    %385 = math.tanh %384 : vector<8x128xf32>
    %386 = vector.extract_strided_slice %371 {offsets = [0, 384], sizes = [8, 128], strides = [1, 1]} : vector<8x512xf32> to vector<8x128xf32>
    %387 = arith.negf %386 : vector<8x128xf32>
    %388 = math.exp %387 : vector<8x128xf32>
    %cst_66 = arith.constant 1.000000e+00 : f32
    %389 = vector.broadcast %cst_66 : f32 to vector<8x128xf32>
    %390 = arith.addf %389, %388 : vector<8x128xf32>
    %391 = arith.divf %389, %390 : vector<8x128xf32>
    %392 = arith.mulf %383, %335 : vector<8x128xf32>
    %393 = arith.mulf %377, %385 : vector<8x128xf32>
    %394 = arith.addf %392, %393 : vector<8x128xf32>
    %395 = math.tanh %394 : vector<8x128xf32>
    %396 = arith.mulf %391, %395 : vector<8x128xf32>
    %397 = tpu.concatenate %396, %367 in 1 : vector<8x128xf32>, vector<8x128xf32> -> vector<8x256xf32>
    %398 = arith.truncf %397 : vector<8x256xf32> to vector<8x256xbf16>
    %cst_67 = arith.constant dense<0.000000e+00> : vector<8x512xf32>
    %399 = tpu.matmul %398, %8, %cst_67 {dimension_numbers = #tpu.dot_dimension_numbers<[1], [0], [0], [1], [0, 0, 1, 1], [], []>} : vector<8x256xbf16>, vector<256x512xbf16>, vector<8x512xf32> -> vector<8x512xf32>
    %400 = vector.broadcast %9 : vector<1x512xf32> to vector<8x512xf32>
    %401 = arith.addf %399, %400 : vector<8x512xf32>
    %402 = vector.extract_strided_slice %401 {offsets = [0, 0], sizes = [8, 128], strides = [1, 1]} : vector<8x512xf32> to vector<8x128xf32>
    %403 = arith.negf %402 : vector<8x128xf32>
    %404 = math.exp %403 : vector<8x128xf32>
    %cst_68 = arith.constant 1.000000e+00 : f32
    %405 = vector.broadcast %cst_68 : f32 to vector<8x128xf32>
    %406 = arith.addf %405, %404 : vector<8x128xf32>
    %407 = arith.divf %405, %406 : vector<8x128xf32>
    %408 = vector.extract_strided_slice %401 {offsets = [0, 128], sizes = [8, 128], strides = [1, 1]} : vector<8x512xf32> to vector<8x128xf32>
    %409 = arith.negf %408 : vector<8x128xf32>
    %410 = math.exp %409 : vector<8x128xf32>
    %cst_69 = arith.constant 1.000000e+00 : f32
    %411 = vector.broadcast %cst_69 : f32 to vector<8x128xf32>
    %412 = arith.addf %411, %410 : vector<8x128xf32>
    %413 = arith.divf %411, %412 : vector<8x128xf32>
    %414 = vector.extract_strided_slice %401 {offsets = [0, 256], sizes = [8, 128], strides = [1, 1]} : vector<8x512xf32> to vector<8x128xf32>
    %415 = math.tanh %414 : vector<8x128xf32>
    %416 = vector.extract_strided_slice %401 {offsets = [0, 384], sizes = [8, 128], strides = [1, 1]} : vector<8x512xf32> to vector<8x128xf32>
    %417 = arith.negf %416 : vector<8x128xf32>
    %418 = math.exp %417 : vector<8x128xf32>
    %cst_70 = arith.constant 1.000000e+00 : f32
    %419 = vector.broadcast %cst_70 : f32 to vector<8x128xf32>
    %420 = arith.addf %419, %418 : vector<8x128xf32>
    %421 = arith.divf %419, %420 : vector<8x128xf32>
    %422 = arith.mulf %413, %365 : vector<8x128xf32>
    %423 = arith.mulf %407, %415 : vector<8x128xf32>
    %424 = arith.addf %422, %423 : vector<8x128xf32>
    %425 = math.tanh %424 : vector<8x128xf32>
    %426 = arith.mulf %421, %425 : vector<8x128xf32>
    %427 = vector.extract_strided_slice %6 {offsets = [56, 0], sizes = [8, 512], strides = [1, 1]} : vector<64x512xf32> to vector<8x512xf32>
    %428 = arith.truncf %396 : vector<8x128xf32> to vector<8x128xbf16>
    %cst_71 = arith.constant dense<0.000000e+00> : vector<8x512xf32>
    %429 = tpu.matmul %428, %7, %cst_71 {dimension_numbers = #tpu.dot_dimension_numbers<[1], [0], [0], [1], [0, 0, 1, 1], [], []>} : vector<8x128xbf16>, vector<128x512xbf16>, vector<8x512xf32> -> vector<8x512xf32>
    %430 = arith.addf %427, %429 : vector<8x512xf32>
    %431 = vector.extract_strided_slice %430 {offsets = [0, 0], sizes = [8, 128], strides = [1, 1]} : vector<8x512xf32> to vector<8x128xf32>
    %432 = arith.negf %431 : vector<8x128xf32>
    %433 = math.exp %432 : vector<8x128xf32>
    %cst_72 = arith.constant 1.000000e+00 : f32
    %434 = vector.broadcast %cst_72 : f32 to vector<8x128xf32>
    %435 = arith.addf %434, %433 : vector<8x128xf32>
    %436 = arith.divf %434, %435 : vector<8x128xf32>
    %437 = vector.extract_strided_slice %430 {offsets = [0, 128], sizes = [8, 128], strides = [1, 1]} : vector<8x512xf32> to vector<8x128xf32>
    %438 = arith.negf %437 : vector<8x128xf32>
    %439 = math.exp %438 : vector<8x128xf32>
    %cst_73 = arith.constant 1.000000e+00 : f32
    %440 = vector.broadcast %cst_73 : f32 to vector<8x128xf32>
    %441 = arith.addf %440, %439 : vector<8x128xf32>
    %442 = arith.divf %440, %441 : vector<8x128xf32>
    %443 = vector.extract_strided_slice %430 {offsets = [0, 256], sizes = [8, 128], strides = [1, 1]} : vector<8x512xf32> to vector<8x128xf32>
    %444 = math.tanh %443 : vector<8x128xf32>
    %445 = vector.extract_strided_slice %430 {offsets = [0, 384], sizes = [8, 128], strides = [1, 1]} : vector<8x512xf32> to vector<8x128xf32>
    %446 = arith.negf %445 : vector<8x128xf32>
    %447 = math.exp %446 : vector<8x128xf32>
    %cst_74 = arith.constant 1.000000e+00 : f32
    %448 = vector.broadcast %cst_74 : f32 to vector<8x128xf32>
    %449 = arith.addf %448, %447 : vector<8x128xf32>
    %450 = arith.divf %448, %449 : vector<8x128xf32>
    %451 = arith.mulf %442, %394 : vector<8x128xf32>
    %452 = arith.mulf %436, %444 : vector<8x128xf32>
    %453 = arith.addf %451, %452 : vector<8x128xf32>
    %454 = math.tanh %453 : vector<8x128xf32>
    %455 = arith.mulf %450, %454 : vector<8x128xf32>
    %456 = tpu.concatenate %455, %426 in 1 : vector<8x128xf32>, vector<8x128xf32> -> vector<8x256xf32>
    %457 = arith.truncf %456 : vector<8x256xf32> to vector<8x256xbf16>
    %cst_75 = arith.constant dense<0.000000e+00> : vector<8x512xf32>
    %458 = tpu.matmul %457, %8, %cst_75 {dimension_numbers = #tpu.dot_dimension_numbers<[1], [0], [0], [1], [0, 0, 1, 1], [], []>} : vector<8x256xbf16>, vector<256x512xbf16>, vector<8x512xf32> -> vector<8x512xf32>
    %459 = vector.broadcast %9 : vector<1x512xf32> to vector<8x512xf32>
    %460 = arith.addf %458, %459 : vector<8x512xf32>
    %461 = vector.extract_strided_slice %460 {offsets = [0, 0], sizes = [8, 128], strides = [1, 1]} : vector<8x512xf32> to vector<8x128xf32>
    %462 = arith.negf %461 : vector<8x128xf32>
    %463 = math.exp %462 : vector<8x128xf32>
    %cst_76 = arith.constant 1.000000e+00 : f32
    %464 = vector.broadcast %cst_76 : f32 to vector<8x128xf32>
    %465 = arith.addf %464, %463 : vector<8x128xf32>
    %466 = arith.divf %464, %465 : vector<8x128xf32>
    %467 = vector.extract_strided_slice %460 {offsets = [0, 128], sizes = [8, 128], strides = [1, 1]} : vector<8x512xf32> to vector<8x128xf32>
    %468 = arith.negf %467 : vector<8x128xf32>
    %469 = math.exp %468 : vector<8x128xf32>
    %cst_77 = arith.constant 1.000000e+00 : f32
    %470 = vector.broadcast %cst_77 : f32 to vector<8x128xf32>
    %471 = arith.addf %470, %469 : vector<8x128xf32>
    %472 = arith.divf %470, %471 : vector<8x128xf32>
    %473 = vector.extract_strided_slice %460 {offsets = [0, 256], sizes = [8, 128], strides = [1, 1]} : vector<8x512xf32> to vector<8x128xf32>
    %474 = math.tanh %473 : vector<8x128xf32>
    %475 = vector.extract_strided_slice %460 {offsets = [0, 384], sizes = [8, 128], strides = [1, 1]} : vector<8x512xf32> to vector<8x128xf32>
    %476 = arith.negf %475 : vector<8x128xf32>
    %477 = math.exp %476 : vector<8x128xf32>
    %cst_78 = arith.constant 1.000000e+00 : f32
    %478 = vector.broadcast %cst_78 : f32 to vector<8x128xf32>
    %479 = arith.addf %478, %477 : vector<8x128xf32>
    %480 = arith.divf %478, %479 : vector<8x128xf32>
    %481 = arith.mulf %472, %424 : vector<8x128xf32>
    %482 = arith.mulf %466, %474 : vector<8x128xf32>
    %483 = arith.addf %481, %482 : vector<8x128xf32>
    %484 = math.tanh %483 : vector<8x128xf32>
    %485 = arith.mulf %480, %484 : vector<8x128xf32>
    %c0_79 = arith.constant 0 : index
    %c0_80 = arith.constant 0 : index
    %c0_81 = arith.constant 0 : index
    %486 = vector.load %arg1[%c0_79, %c0_80, %c0_81] : memref<16x8x64xf32, #tpu.memory_space<vmem>>, vector<16x8x64xf32>
    %487 = vector.extract_strided_slice %486 {offsets = [0, 0, 0], sizes = [1, 8, 64], strides = [1, 1, 1]} : vector<16x8x64xf32> to vector<1x8x64xf32>
    %488 = vector.shape_cast %487 : vector<1x8x64xf32> to vector<8x64xf32>
    %489 = vector.extract_strided_slice %486 {offsets = [1, 0, 0], sizes = [1, 8, 64], strides = [1, 1, 1]} : vector<16x8x64xf32> to vector<1x8x64xf32>
    %490 = vector.shape_cast %489 : vector<1x8x64xf32> to vector<8x64xf32>
    %491 = arith.addf %488, %490 : vector<8x64xf32>
    %492 = vector.extract_strided_slice %486 {offsets = [2, 0, 0], sizes = [1, 8, 64], strides = [1, 1, 1]} : vector<16x8x64xf32> to vector<1x8x64xf32>
    %493 = vector.shape_cast %492 : vector<1x8x64xf32> to vector<8x64xf32>
    %494 = arith.addf %491, %493 : vector<8x64xf32>
    %495 = vector.extract_strided_slice %486 {offsets = [3, 0, 0], sizes = [1, 8, 64], strides = [1, 1, 1]} : vector<16x8x64xf32> to vector<1x8x64xf32>
    %496 = vector.shape_cast %495 : vector<1x8x64xf32> to vector<8x64xf32>
    %497 = arith.addf %494, %496 : vector<8x64xf32>
    %498 = vector.extract_strided_slice %486 {offsets = [4, 0, 0], sizes = [1, 8, 64], strides = [1, 1, 1]} : vector<16x8x64xf32> to vector<1x8x64xf32>
    %499 = vector.shape_cast %498 : vector<1x8x64xf32> to vector<8x64xf32>
    %500 = arith.addf %497, %499 : vector<8x64xf32>
    %501 = vector.extract_strided_slice %486 {offsets = [5, 0, 0], sizes = [1, 8, 64], strides = [1, 1, 1]} : vector<16x8x64xf32> to vector<1x8x64xf32>
    %502 = vector.shape_cast %501 : vector<1x8x64xf32> to vector<8x64xf32>
    %503 = arith.addf %500, %502 : vector<8x64xf32>
    %504 = vector.extract_strided_slice %486 {offsets = [6, 0, 0], sizes = [1, 8, 64], strides = [1, 1, 1]} : vector<16x8x64xf32> to vector<1x8x64xf32>
    %505 = vector.shape_cast %504 : vector<1x8x64xf32> to vector<8x64xf32>
    %506 = arith.addf %503, %505 : vector<8x64xf32>
    %507 = vector.extract_strided_slice %486 {offsets = [7, 0, 0], sizes = [1, 8, 64], strides = [1, 1, 1]} : vector<16x8x64xf32> to vector<1x8x64xf32>
    %508 = vector.shape_cast %507 : vector<1x8x64xf32> to vector<8x64xf32>
    %509 = arith.addf %506, %508 : vector<8x64xf32>
    %510 = vector.extract_strided_slice %486 {offsets = [8, 0, 0], sizes = [1, 8, 64], strides = [1, 1, 1]} : vector<16x8x64xf32> to vector<1x8x64xf32>
    %511 = vector.shape_cast %510 : vector<1x8x64xf32> to vector<8x64xf32>
    %512 = arith.addf %509, %511 : vector<8x64xf32>
    %513 = vector.extract_strided_slice %486 {offsets = [9, 0, 0], sizes = [1, 8, 64], strides = [1, 1, 1]} : vector<16x8x64xf32> to vector<1x8x64xf32>
    %514 = vector.shape_cast %513 : vector<1x8x64xf32> to vector<8x64xf32>
    %515 = arith.addf %512, %514 : vector<8x64xf32>
    %516 = vector.extract_strided_slice %486 {offsets = [10, 0, 0], sizes = [1, 8, 64], strides = [1, 1, 1]} : vector<16x8x64xf32> to vector<1x8x64xf32>
    %517 = vector.shape_cast %516 : vector<1x8x64xf32> to vector<8x64xf32>
    %518 = arith.addf %515, %517 : vector<8x64xf32>
    %519 = vector.extract_strided_slice %486 {offsets = [11, 0, 0], sizes = [1, 8, 64], strides = [1, 1, 1]} : vector<16x8x64xf32> to vector<1x8x64xf32>
    %520 = vector.shape_cast %519 : vector<1x8x64xf32> to vector<8x64xf32>
    %521 = arith.addf %518, %520 : vector<8x64xf32>
    %522 = vector.extract_strided_slice %486 {offsets = [12, 0, 0], sizes = [1, 8, 64], strides = [1, 1, 1]} : vector<16x8x64xf32> to vector<1x8x64xf32>
    %523 = vector.shape_cast %522 : vector<1x8x64xf32> to vector<8x64xf32>
    %524 = arith.addf %521, %523 : vector<8x64xf32>
    %525 = vector.extract_strided_slice %486 {offsets = [13, 0, 0], sizes = [1, 8, 64], strides = [1, 1, 1]} : vector<16x8x64xf32> to vector<1x8x64xf32>
    %526 = vector.shape_cast %525 : vector<1x8x64xf32> to vector<8x64xf32>
    %527 = arith.addf %524, %526 : vector<8x64xf32>
    %528 = vector.extract_strided_slice %486 {offsets = [14, 0, 0], sizes = [1, 8, 64], strides = [1, 1, 1]} : vector<16x8x64xf32> to vector<1x8x64xf32>
    %529 = vector.shape_cast %528 : vector<1x8x64xf32> to vector<8x64xf32>
    %530 = arith.addf %527, %529 : vector<8x64xf32>
    %531 = vector.extract_strided_slice %486 {offsets = [15, 0, 0], sizes = [1, 8, 64], strides = [1, 1, 1]} : vector<16x8x64xf32> to vector<1x8x64xf32>
    %532 = vector.shape_cast %531 : vector<1x8x64xf32> to vector<8x64xf32>
    %533 = arith.addf %530, %532 : vector<8x64xf32>
    %cst_82 = arith.constant 6.250000e-02 : f32
    %534 = vector.broadcast %cst_82 : f32 to vector<8x64xf32>
    %535 = arith.mulf %533, %534 : vector<8x64xf32>
    %536 = arith.truncf %485 : vector<8x128xf32> to vector<8x128xbf16>
    %c0_83 = arith.constant 0 : index
    %c0_84 = arith.constant 0 : index
    %537 = vector.load %arg7[%c0_83, %c0_84] : memref<128x5120xbf16, #tpu.memory_space<vmem>>, vector<128x5120xbf16>
    %cst_85 = arith.constant dense<0.000000e+00> : vector<8x5120xf32>
    %538 = tpu.matmul %536, %537, %cst_85 {dimension_numbers = #tpu.dot_dimension_numbers<[1], [0], [0], [1], [0, 0, 1, 1], [], []>} : vector<8x128xbf16>, vector<128x5120xbf16>, vector<8x5120xf32> -> vector<8x5120xf32>
    %c0_86 = arith.constant 0 : index
    %c0_87 = arith.constant 0 : index
    %539 = vector.load %arg8[%c0_86, %c0_87] : memref<1x5120xf32, #tpu.memory_space<vmem>>, vector<1x5120xf32>
    %540 = vector.broadcast %539 : vector<1x5120xf32> to vector<8x5120xf32>
    %541 = arith.addf %538, %540 : vector<8x5120xf32>
    %542 = arith.truncf %535 : vector<8x64xf32> to vector<8x64xbf16>
    %c0_88 = arith.constant 0 : index
    %c0_89 = arith.constant 0 : index
    %543 = vector.load %arg9[%c0_88, %c0_89] : memref<64x5120xbf16, #tpu.memory_space<vmem>>, vector<64x5120xbf16>
    %cst_90 = arith.constant dense<0.000000e+00> : vector<8x5120xf32>
    %544 = tpu.matmul %542, %543, %cst_90 {dimension_numbers = #tpu.dot_dimension_numbers<[1], [0], [0], [1], [0, 0, 1, 1], [], []>} : vector<8x64xbf16>, vector<64x5120xbf16>, vector<8x5120xf32> -> vector<8x5120xf32>
    %c0_91 = arith.constant 0 : index
    %c0_92 = arith.constant 0 : index
    %545 = vector.load %arg10[%c0_91, %c0_92] : memref<1x5120xf32, #tpu.memory_space<vmem>>, vector<1x5120xf32>
    %546 = vector.broadcast %545 : vector<1x5120xf32> to vector<8x5120xf32>
    %547 = arith.addf %544, %546 : vector<8x5120xf32>
    %548 = arith.mulf %541, %547 : vector<8x5120xf32>
    %549 = vector.extract_strided_slice %548 {offsets = [0, 0], sizes = [8, 1024], strides = [1, 1]} : vector<8x5120xf32> to vector<8x1024xf32>
    %550 = vector.extract_strided_slice %548 {offsets = [0, 1024], sizes = [8, 1024], strides = [1, 1]} : vector<8x5120xf32> to vector<8x1024xf32>
    %551 = arith.addf %549, %550 : vector<8x1024xf32>
    %552 = vector.extract_strided_slice %548 {offsets = [0, 2048], sizes = [8, 1024], strides = [1, 1]} : vector<8x5120xf32> to vector<8x1024xf32>
    %553 = arith.addf %551, %552 : vector<8x1024xf32>
    %554 = vector.extract_strided_slice %548 {offsets = [0, 3072], sizes = [8, 1024], strides = [1, 1]} : vector<8x5120xf32> to vector<8x1024xf32>
    %555 = arith.addf %553, %554 : vector<8x1024xf32>
    %556 = vector.extract_strided_slice %548 {offsets = [0, 4096], sizes = [8, 1024], strides = [1, 1]} : vector<8x5120xf32> to vector<8x1024xf32>
    %557 = arith.addf %555, %556 : vector<8x1024xf32>
    %cst_93 = arith.constant 0.000000e+00 : f32
    %558 = vector.broadcast %cst_93 : f32 to vector<8x1024xf32>
    %559 = arith.maximumf %557, %558 : vector<8x1024xf32>
    %560 = math.sqrt %559 : vector<8x1024xf32>
    %cst_94 = arith.constant 0.000000e+00 : f32
    %561 = vector.broadcast %cst_94 : f32 to vector<8x1024xf32>
    %562 = arith.subf %561, %557 : vector<8x1024xf32>
    %cst_95 = arith.constant 0.000000e+00 : f32
    %563 = vector.broadcast %cst_95 : f32 to vector<8x1024xf32>
    %564 = arith.maximumf %562, %563 : vector<8x1024xf32>
    %565 = math.sqrt %564 : vector<8x1024xf32>
    %566 = arith.subf %560, %565 : vector<8x1024xf32>
    %567 = arith.mulf %566, %566 : vector<8x1024xf32>
    %cst_96 = arith.constant dense<0.000000e+00> : vector<8xf32>
    %568 = vector.multi_reduction <add>, %567, %cst_96 [1] : vector<8x1024xf32> to vector<8xf32>
    %569 = vector.shape_cast %568 : vector<8xf32> to vector<8x1xf32>
    %cst_97 = arith.constant 1.000000e-24 : f32
    %570 = vector.broadcast %cst_97 : f32 to vector<8x1xf32>
    %571 = arith.maximumf %569, %570 : vector<8x1xf32>
    %572 = math.rsqrt %571 : vector<8x1xf32>
    %573 = vector.broadcast %572 : vector<8x1xf32> to vector<8x1024xf32>
    %574 = arith.mulf %566, %573 : vector<8x1024xf32>
    %575 = arith.truncf %574 : vector<8x1024xf32> to vector<8x1024xbf16>
    %c0_98 = arith.constant 0 : index
    %c0_99 = arith.constant 0 : index
    %576 = vector.load %arg11[%c0_98, %c0_99] : memref<1024x128xbf16, #tpu.memory_space<vmem>>, vector<1024x128xbf16>
    %cst_100 = arith.constant dense<0.000000e+00> : vector<8x128xf32>
    %577 = tpu.matmul %575, %576, %cst_100 {dimension_numbers = #tpu.dot_dimension_numbers<[1], [0], [0], [1], [0, 0, 1, 1], [], []>} : vector<8x1024xbf16>, vector<1024x128xbf16>, vector<8x128xf32> -> vector<8x128xf32>
    %c0_101 = arith.constant 0 : index
    %c0_102 = arith.constant 0 : index
    %578 = vector.load %arg12[%c0_101, %c0_102] : memref<1x128xf32, #tpu.memory_space<vmem>>, vector<1x128xf32>
    %579 = vector.broadcast %578 : vector<1x128xf32> to vector<8x128xf32>
    %580 = arith.addf %577, %579 : vector<8x128xf32>
    %cst_103 = arith.constant dense<0xFF800000> : vector<8xf32>
    %581 = vector.multi_reduction <maximumf>, %580, %cst_103 [1] : vector<8x128xf32> to vector<8xf32>
    %582 = vector.shape_cast %581 : vector<8xf32> to vector<8x1xf32>
    %583 = vector.broadcast %582 : vector<8x1xf32> to vector<8x128xf32>
    %584 = arith.subf %580, %583 : vector<8x128xf32>
    %585 = math.exp %584 : vector<8x128xf32>
    %cst_104 = arith.constant dense<0.000000e+00> : vector<8xf32>
    %586 = vector.multi_reduction <add>, %585, %cst_104 [1] : vector<8x128xf32> to vector<8xf32>
    %587 = vector.shape_cast %586 : vector<8xf32> to vector<8x1xf32>
    %588 = tpu.reciprocal %587 {approx = true} : vector<8x1xf32> -> vector<8x1xf32>
    %589 = vector.broadcast %588 : vector<8x1xf32> to vector<8x128xf32>
    %590 = arith.mulf %585, %589 : vector<8x128xf32>
    %c0_105 = arith.constant 0 : index
    %c0_106 = arith.constant 0 : index
    %591 = vector.load %arg13[%c0_105, %c0_106] : memref<8x128xf32, #tpu.memory_space<vmem>>, vector<8x128xf32>
    tpu.vector_store %arg13[%c0_105, %c0_106], %590 {strides = array<i32>} : memref<8x128xf32, #tpu.memory_space<vmem>>, vector<8x128xf32>,
    return
  }
}

</mosaic_0001>

<llo_original>
// kernel: mfb_baseline_forward.1
$region0: #{mfb_baseline_forward.1}
  #allocation0 [shape = 'u32[]', space=smem, size = 0x4, offset = 0x4, fixed_abs, tag = 'smem constant byte address 0x4 - core index']
  #allocation1 [shape = 'u32[144,128]{1,0:T(1,128)}', space=vmem, size = 0x12000, scoped, tag = 'internal scratch']
  %s0 = inlined_call_operand.vmem [shape: f32[64,32], index: 0, kind: input, shape index: {}]
  %s1 = inlined_call_operand.vmem [shape: f32[16,8,64], index: 1, kind: input, shape index: {}]
  %s2 = inlined_call_operand.hbm [shape: bf16[32,512], index: 2, kind: input, shape index: {}]
  %s3 = inlined_call_operand.hbm [shape: bf16[128,512], index: 3, kind: input, shape index: {}]
  %s4 = inlined_call_operand.hbm [shape: f32[1,512], index: 4, kind: input, shape index: {}]
  %s5 = inlined_call_operand.hbm [shape: bf16[256,512], index: 5, kind: input, shape index: {}]
  %s6 = inlined_call_operand.hbm [shape: f32[1,512], index: 6, kind: input, shape index: {}]
  %s7 = inlined_call_operand.hbm [shape: bf16[128,5120], index: 7, kind: input, shape index: {}]
  %s8 = inlined_call_operand.hbm [shape: f32[1,5120], index: 8, kind: input, shape index: {}]
  %s9 = inlined_call_operand.hbm [shape: bf16[64,5120], index: 9, kind: input, shape index: {}]
  %s10 = inlined_call_operand.hbm [shape: f32[1,5120], index: 10, kind: input, shape index: {}]
  %s11 = inlined_call_operand.hbm [shape: bf16[1024,128], index: 11, kind: input, shape index: {}]
  %s12 = inlined_call_operand.hbm [shape: f32[1,128], index: 12, kind: input, shape index: {}]
  %s13 = inlined_call_operand.vmem [shape: f32[8,128], index: 13, kind: output, shape index: {}]
  %s14 = sld [smem:[#allocation0]]
  $region106: #{mfb_baseline_forward.1} parent=0
    _
  %s16 = ssub.s32 1, %s14
  %s17 = scalar_select 0, %s16, %s14
  $region1: #{mfb_baseline_forward.1} parent=0
    #allocation2 [shape = 'u8[32768]{0}', space=vmem, size = 0x8000, scoped, tag = 'input window, operand 2, single buffered']
    #allocation3 [shape = 's32[1]{0}', space=sflag, size = 0x4, scoped, tag = 'scoped memory for mfb_baseline_forward.1']
    #allocation4 [shape = 'u8[131072]{0}', space=vmem, size = 0x20000, scoped, tag = 'input window, operand 3, single buffered']
    #allocation5 [shape = 's32[1]{0}', space=sflag, size = 0x4, scoped, tag = 'scoped memory for mfb_baseline_forward.1']
    #allocation6 [shape = 'u8[2048]{0}', space=vmem, size = 0x800, scoped, tag = 'input window, operand 4, single buffered']
    #allocation7 [shape = 'u8[262144]{0}', space=vmem, size = 0x40000, scoped, tag = 'input window, operand 5, single buffered']
    #allocation8 [shape = 's32[1]{0}', space=sflag, size = 0x4, scoped, tag = 'scoped memory for mfb_baseline_forward.1']
    #allocation9 [shape = 'u8[2048]{0}', space=vmem, size = 0x800, scoped, tag = 'input window, operand 6, single buffered']
    #allocation10 [shape = 'u8[1310720]{0}', space=vmem, size = 0x140000, scoped, tag = 'input window, operand 7, single buffered']
    #allocation11 [shape = 's32[1]{0}', space=sflag, size = 0x4, scoped, tag = 'scoped memory for mfb_baseline_forward.1']
    #allocation12 [shape = 'u8[20480]{0}', space=vmem, size = 0x5000, scoped, tag = 'input window, operand 8, single buffered']
    #allocation13 [shape = 'u8[655360]{0}', space=vmem, size = 0xa0000, scoped, tag = 'input window, operand 9, single buffered']
    #allocation14 [shape = 's32[1]{0}', space=sflag, size = 0x4, scoped, tag = 'scoped memory for mfb_baseline_forward.1']
    #allocation15 [shape = 'u8[20480]{0}', space=vmem, size = 0x5000, scoped, tag = 'input window, operand 10, single buffered']
    #allocation16 [shape = 'u8[262144]{0}', space=vmem, size = 0x40000, scoped, tag = 'input window, operand 11, single buffered']
    #allocation17 [shape = 's32[1]{0}', space=sflag, size = 0x4, scoped, tag = 'scoped memory for mfb_baseline_forward.1']
    #allocation18 [shape = 'u8[512]{0}', space=vmem, size = 0x400, scoped, tag = 'input window, operand 12, single buffered']
    %18 = vsyncpa [#allocation3], 0
    %19 = vsyncpa [#allocation5], 0
    %20 = vsyncpa [#allocation8], 0
    %21 = vsyncpa [#allocation11], 0
    %22 = vsyncpa [#allocation14], 0
    %23 = vsyncpa [#allocation17], 0
    // Predicated region
    $region2: #{mfb_baseline_forward.1} parent=1 // pred_check
      _
    $region3: #{mfb_baseline_forward.1} parent=1 // pred_check_branch
      %25 = sbr.rel (0) target = $region5
    $region4: #{mfb_baseline_forward.1} parent=1 // pred_region
      _
    $region5: #{mfb_baseline_forward.1} parent=1 // pred_fallthru
      _
    // Predicated region
    $region6: #{mfb_baseline_forward.1} parent=1 // pred_check
      _
    $region7: #{mfb_baseline_forward.1} parent=1 // pred_check_branch
      %27 = sbr.rel (0) target = $region9
    $region8: #{mfb_baseline_forward.1} parent=1 // pred_region
      _
    $region9: #{mfb_baseline_forward.1} parent=1 // pred_fallthru
      _
    // Predicated region
    $region10: #{mfb_baseline_forward.1} parent=1 // pred_check
      _
    $region11: #{mfb_baseline_forward.1} parent=1 // pred_check_branch
      %29 = sbr.rel (0) target = $region13
    $region12: #{mfb_baseline_forward.1} parent=1 // pred_region
      %s31 = ssub.s32 1024, 1024
      %32 = vsyncadd [#allocation3], %s31
      %s33 = sshll.u32 [#allocation2], 4
      %s34 = int_to_ptr.vmem [resolvable:$true] %s33
      %39 = dma.hbm_to_vmem [thread:$0]  %s2, 1024, %s34, [#allocation3], 256, 256, 16
    $region13: #{mfb_baseline_forward.1} parent=1 // pred_fallthru
      _
    // Predicated region
    $region14: #{mfb_baseline_forward.1} parent=1 // pred_check
      _
    $region15: #{mfb_baseline_forward.1} parent=1 // pred_check_branch
      %41 = sbr.rel (0) target = $region17
    $region16: #{mfb_baseline_forward.1} parent=1 // pred_region
      %s43 = ssub.s32 4096, 4096
      %44 = vsyncadd [#allocation5], %s43
      %s45 = sshll.u32 [#allocation4], 4
      %s46 = int_to_ptr.vmem [resolvable:$true] %s45
      %51 = dma.hbm_to_vmem [thread:$0]  %s3, 4096, %s46, [#allocation5], 256, 256, 16
    $region17: #{mfb_baseline_forward.1} parent=1 // pred_fallthru
      _
    // Predicated region
    $region18: #{mfb_baseline_forward.1} parent=1 // pred_check
      _
    $region19: #{mfb_baseline_forward.1} parent=1 // pred_check_branch
      %53 = sbr.rel (0) target = $region21
    $region20: #{mfb_baseline_forward.1} parent=1 // pred_region
      %s55 = ssub.s32 64, 64
      %56 = vsyncadd [#allocation5], %s55
      %s58 = sshll.u32 [#allocation6], 4
      %s59 = int_to_ptr.vmem [resolvable:$true] %s58
      %61 = dma.hbm_to_vmem [thread:$0]  %s4, 64, %s59, [#allocation5]
    $region21: #{mfb_baseline_forward.1} parent=1 // pred_fallthru
      _
    // Predicated region
    $region22: #{mfb_baseline_forward.1} parent=1 // pred_check
      _
    $region23: #{mfb_baseline_forward.1} parent=1 // pred_check_branch
      %63 = sbr.rel (0) target = $region25
    $region24: #{mfb_baseline_forward.1} parent=1 // pred_region
      %s65 = ssub.s32 8192, 8192
      %66 = vsyncadd [#allocation8], %s65
      %s67 = sshll.u32 [#allocation7], 4
      %s68 = int_to_ptr.vmem [resolvable:$true] %s67
      %73 = dma.hbm_to_vmem [thread:$0]  %s5, 8192, %s68, [#allocation8], 256, 256, 16
    $region25: #{mfb_baseline_forward.1} parent=1 // pred_fallthru
      _
    // Predicated region
    $region26: #{mfb_baseline_forward.1} parent=1 // pred_check
      _
    $region27: #{mfb_baseline_forward.1} parent=1 // pred_check_branch
      %75 = sbr.rel (0) target = $region29
    $region28: #{mfb_baseline_forward.1} parent=1 // pred_region
      %s77 = ssub.s32 64, 64
      %78 = vsyncadd [#allocation8], %s77
      %s80 = sshll.u32 [#allocation9], 4
      %s81 = int_to_ptr.vmem [resolvable:$true] %s80
      %83 = dma.hbm_to_vmem [thread:$0]  %s6, 64, %s81, [#allocation8]
    $region29: #{mfb_baseline_forward.1} parent=1 // pred_fallthru
      _
    // Predicated region
    $region30: #{mfb_baseline_forward.1} parent=1 // pred_check
      _
    $region31: #{mfb_baseline_forward.1} parent=1 // pred_check_branch
      %85 = sbr.rel (0) target = $region33
    $region32: #{mfb_baseline_forward.1} parent=1 // pred_region
      %s87 = ssub.s32 40960, 40960
      %88 = vsyncadd [#allocation11], %s87
      %s89 = sshll.u32 [#allocation10], 4
      %s90 = int_to_ptr.vmem [resolvable:$true] %s89
      %95 = dma.hbm_to_vmem [thread:$0]  %s7, 40960, %s90, [#allocation11], 2560, 2560, 160
    $region33: #{mfb_baseline_forward.1} parent=1 // pred_fallthru
      _
    // Predicated region
    $region34: #{mfb_baseline_forward.1} parent=1 // pred_check
      _
    $region35: #{mfb_baseline_forward.1} parent=1 // pred_check_branch
      %97 = sbr.rel (0) target = $region37
    $region36: #{mfb_baseline_forward.1} parent=1 // pred_region
      %s99 = ssub.s32 640, 640
      %100 = vsyncadd [#allocation11], %s99
      %s102 = sshll.u32 [#allocation12], 4
      %s103 = int_to_ptr.vmem [resolvable:$true] %s102
      %105 = dma.hbm_to_vmem [thread:$0]  %s8, 640, %s103, [#allocation11]
    $region37: #{mfb_baseline_forward.1} parent=1 // pred_fallthru
      _
    // Predicated region
    $region38: #{mfb_baseline_forward.1} parent=1 // pred_check
      _
    $region39: #{mfb_baseline_forward.1} parent=1 // pred_check_branch
      %107 = sbr.rel (0) target = $region41
    $region40: #{mfb_baseline_forward.1} parent=1 // pred_region
      %s109 = ssub.s32 20480, 20480
      %110 = vsyncadd [#allocation14], %s109
      %s111 = sshll.u32 [#allocation13], 4
      %s112 = int_to_ptr.vmem [resolvable:$true] %s111
      %117 = dma.hbm_to_vmem [thread:$0]  %s9, 20480, %s112, [#allocation14], 2560, 2560, 160
    $region41: #{mfb_baseline_forward.1} parent=1 // pred_fallthru
      _
    // Predicated region
    $region42: #{mfb_baseline_forward.1} parent=1 // pred_check
      _
    $region43: #{mfb_baseline_forward.1} parent=1 // pred_check_branch
      %119 = sbr.rel (0) target = $region45
    $region44: #{mfb_baseline_forward.1} parent=1 // pred_region
      %s121 = ssub.s32 640, 640
      %122 = vsyncadd [#allocation14], %s121
      %s124 = sshll.u32 [#allocation15], 4
      %s125 = int_to_ptr.vmem [resolvable:$true] %s124
      %127 = dma.hbm_to_vmem [thread:$0]  %s10, 640, %s125, [#allocation14]
    $region45: #{mfb_baseline_forward.1} parent=1 // pred_fallthru
      _
    // Predicated region
    $region46: #{mfb_baseline_forward.1} parent=1 // pred_check
      _
    $region47: #{mfb_baseline_forward.1} parent=1 // pred_check_branch
      %129 = sbr.rel (0) target = $region49
    $region48: #{mfb_baseline_forward.1} parent=1 // pred_region
      %s131 = ssub.s32 8192, 8192
      %132 = vsyncadd [#allocation17], %s131
      %s133 = sshll.u32 [#allocation16], 4
      %s134 = int_to_ptr.vmem [resolvable:$true] %s133
      %139 = dma.hbm_to_vmem [thread:$0]  %s11, 8192, %s134, [#allocation17], 64, 64, 4
    $region49: #{mfb_baseline_forward.1} parent=1 // pred_fallthru
      _
    // Predicated region
    $region50: #{mfb_baseline_forward.1} parent=1 // pred_check
      _
    $region51: #{mfb_baseline_forward.1} parent=1 // pred_check_branch
      %141 = sbr.rel (0) target = $region53
    $region52: #{mfb_baseline_forward.1} parent=1 // pred_region
      %s143 = ssub.s32 16, 16
      %144 = vsyncadd [#allocation17], %s143
      %s146 = sshll.u32 [#allocation18], 4
      %s147 = int_to_ptr.vmem [resolvable:$true] %s146
      %149 = dma.hbm_to_vmem [thread:$0]  %s12, 16, %s147, [#allocation17]
    $region53: #{mfb_baseline_forward.1} parent=1 // pred_fallthru
      _
    // Predicated region
    $region54: #{mfb_baseline_forward.1} parent=1 // pred_check
      _
    $region55: #{mfb_baseline_forward.1} parent=1 // pred_check_branch
      %151 = sbr.rel (0) target = $region57
    $region56: #{mfb_baseline_forward.1} parent=1 // pred_region
      %152 = dma.done [#allocation3], 1024
    $region57: #{mfb_baseline_forward.1} parent=1 // pred_fallthru
      _
    // Predicated region
    $region58: #{mfb_baseline_forward.1} parent=1 // pred_check
      _
    $region59: #{mfb_baseline_forward.1} parent=1 // pred_check_branch
      %154 = sbr.rel (0) target = $region61
    $region60: #{mfb_baseline_forward.1} parent=1 // pred_region
      %155 = dma.done [#allocation5], 4096
    $region61: #{mfb_baseline_forward.1} parent=1 // pred_fallthru
      _
    // Predicated region
    $region62: #{mfb_baseline_forward.1} parent=1 // pred_check
      _
    $region63: #{mfb_baseline_forward.1} parent=1 // pred_check_branch
      %157 = sbr.rel (0) target = $region65
    $region64: #{mfb_baseline_forward.1} parent=1 // pred_region
      %158 = dma.done [#allocation5], 64
    $region65: #{mfb_baseline_forward.1} parent=1 // pred_fallthru
      _
    // Predicated region
    $region66: #{mfb_baseline_forward.1} parent=1 // pred_check
      _
    $region67: #{mfb_baseline_forward.1} parent=1 // pred_check_branch
      %160 = sbr.rel (0) target = $region69
    $region68: #{mfb_baseline_forward.1} parent=1 // pred_region
      %161 = dma.done [#allocation8], 8192
    $region69: #{mfb_baseline_forward.1} parent=1 // pred_fallthru
      _
    // Predicated region
    $region70: #{mfb_baseline_forward.1} parent=1 // pred_check
      _
    $region71: #{mfb_baseline_forward.1} parent=1 // pred_check_branch
      %163 = sbr.rel (0) target = $region73
    $region72: #{mfb_baseline_forward.1} parent=1 // pred_region
      %164 = dma.done [#allocation8], 64
    $region73: #{mfb_baseline_forward.1} parent=1 // pred_fallthru
      _
    // Predicated region
    $region74: #{mfb_baseline_forward.1} parent=1 // pred_check
      _
    $region75: #{mfb_baseline_forward.1} parent=1 // pred_check_branch
      %166 = sbr.rel (0) target = $region77
    $region76: #{mfb_baseline_forward.1} parent=1 // pred_region
      %167 = dma.done [#allocation11], 40960
    $region77: #{mfb_baseline_forward.1} parent=1 // pred_fallthru
      _
    // Predicated region
    $region78: #{mfb_baseline_forward.1} parent=1 // pred_check
      _
    $region79: #{mfb_baseline_forward.1} parent=1 // pred_check_branch
      %169 = sbr.rel (0) target = $region81
    $region80: #{mfb_baseline_forward.1} parent=1 // pred_region
      %170 = dma.done [#allocation11], 640
    $region81: #{mfb_baseline_forward.1} parent=1 // pred_fallthru
      _
    // Predicated region
    $region82: #{mfb_baseline_forward.1} parent=1 // pred_check
      _
    $region83: #{mfb_baseline_forward.1} parent=1 // pred_check_branch
      %172 = sbr.rel (0) target = $region85
    $region84: #{mfb_baseline_forward.1} parent=1 // pred_region
      %173 = dma.done [#allocation14], 20480
    $region85: #{mfb_baseline_forward.1} parent=1 // pred_fallthru
      _
    // Predicated region
    $region86: #{mfb_baseline_forward.1} parent=1 // pred_check
      _
    $region87: #{mfb_baseline_forward.1} parent=1 // pred_check_branch
      %175 = sbr.rel (0) target = $region89
    $region88: #{mfb_baseline_forward.1} parent=1 // pred_region
      %176 = dma.done [#allocation14], 640
    $region89: #{mfb_baseline_forward.1} parent=1 // pred_fallthru
      _
    // Predicated region
    $region90: #{mfb_baseline_forward.1} parent=1 // pred_check
      _
    $region91: #{mfb_baseline_forward.1} parent=1 // pred_check_branch
      %178 = sbr.rel (0) target = $region93
    $region92: #{mfb_baseline_forward.1} parent=1 // pred_region
      %179 = dma.done [#allocation17], 8192
    $region93: #{mfb_baseline_forward.1} parent=1 // pred_fallthru
      _
    // Predicated region
    $region94: #{mfb_baseline_forward.1} parent=1 // pred_check
      _
    $region95: #{mfb_baseline_forward.1} parent=1 // pred_check_branch
      %181 = sbr.rel (0) target = $region97
    $region96: #{mfb_baseline_forward.1} parent=1 // pred_region
      %182 = dma.done [#allocation17], 16
    $region97: #{mfb_baseline_forward.1} parent=1 // pred_fallthru
      _
    %v184 = vld [vmem:[%s0] sm:$0xff]
    %v185 = vld [vmem:[%s0 + $0x8] sm:$0xff]
    %v186 = vld [vmem:[%s0 + $0x10] sm:$0xff]
    %v187 = vld [vmem:[%s0 + $0x18] sm:$0xff]
    %v188 = vld [vmem:[%s0 + $0x20] sm:$0xff]
    %v189 = vld [vmem:[%s0 + $0x28] sm:$0xff]
    %v190 = vld [vmem:[%s0 + $0x30] sm:$0xff]
    %v191 = vld [vmem:[%s0 + $0x38] sm:$0xff]
    %v192 = vpack.c.bf16 %v185, %v184
    %v193 = vpack.c.bf16 %v187, %v186
    %v194 = vpack.c.bf16 %v189, %v188
    %v195 = vpack.c.bf16 %v191, %v190
    %v196 = vld [vmem:[#allocation2] sm:$0xff]
    %v197 = vld [vmem:[#allocation2 + $0x8] sm:$0xff]
    %v198 = vld [vmem:[#allocation2 + $0x10] sm:$0xff]
    %v199 = vld [vmem:[#allocation2 + $0x18] sm:$0xff]
    %v200 = vld [vmem:[#allocation2 + $0x20] sm:$0xff]
    %v201 = vld [vmem:[#allocation2 + $0x28] sm:$0xff]
    %v202 = vld [vmem:[#allocation2 + $0x30] sm:$0xff]
    %v203 = vld [vmem:[#allocation2 + $0x38] sm:$0xff]
    %v204 = vld [vmem:[#allocation6] sm:$0xf]
    %v206 = vlaneseq
    %v207 = vshrl.u32 %v206, 7
    %v208 = vsub.s32 0, %v207
    %v209 = vrot.slane %v204, %v208
    %v210 = vlaneseq
    %v211 = vshrl.u32 %v210, 7
    %v212 = vsub.s32 1, %v211
    %v213 = vrot.slane %v204, %v212
    %v214 = vlaneseq
    %v215 = vshrl.u32 %v214, 7
    %v216 = vsub.s32 2, %v215
    %v217 = vrot.slane %v204, %v216
    %v218 = vlaneseq
    %v219 = vshrl.u32 %v218, 7
    %v220 = vsub.s32 3, %v219
    %v221 = vrot.slane %v204, %v220
    %v234 = vunpack.c.l.b16 %v196
    %v235 = vunpack.c.h.b16 %v196
    %v236 = vunpack.c.l.b16 %v197
    %v237 = vunpack.c.h.b16 %v197
    %v238 = vunpack.c.l.b16 %v198
    %v239 = vunpack.c.h.b16 %v198
    %v240 = vunpack.c.l.b16 %v199
    %v241 = vunpack.c.h.b16 %v199
    %v242 = vunpack.c.l.b16 %v200
    %v243 = vunpack.c.h.b16 %v200
    %v244 = vunpack.c.l.b16 %v201
    %v245 = vunpack.c.h.b16 %v201
    %v246 = vunpack.c.l.b16 %v202
    %v247 = vunpack.c.h.b16 %v202
    %v248 = vunpack.c.l.b16 %v203
    %v249 = vunpack.c.h.b16 %v203
    %v250 = vpack.c.b16 %v238, %v234
    %v251 = vpack.c.b16 %v239, %v235
    %v252 = vpack.c.b16 %v240, %v236
    %v253 = vpack.c.b16 %v241, %v237
    %v254 = vpack.c.b16 %v246, %v242
    %v255 = vpack.c.b16 %v247, %v243
    %v256 = vpack.c.b16 %v248, %v244
    %v257 = vpack.c.b16 %v249, %v245
    %vm266 = vcmask 261120
    %v268 = vsel %vm266, %v192, 0
    %v271 = vsel %vm266, %v193, 0
    %v274 = vsel %vm266, %v194, 0
    %v277 = vsel %vm266, %v195, 0
    %279 = vmatprep.subr.bf16.mxu0 0
    %280 = vmatpush1.bf16.msra.mxu0 0
    %281 = vmatprep.subr.bf16.mxu0 0
    %282 = vmatpush1.bf16.msra.mxu0 0
    %283 = vmatprep.subr.bf16.mxu0 0
    %284 = vmatpush1.bf16.msra.mxu0 0
    %285 = vmatprep.subr.bf16.mxu0 0
    %286 = vmatpush1.bf16.msra.mxu0 0
    %287 = vmatprep.subr.bf16.mxu0 0
    %288 = vmatpush1.bf16.msra.mxu0 0
    %289 = vmatprep.subr.bf16.mxu0 0
    %290 = vmatpush1.bf16.msra.mxu0 0
    %291 = vmatprep.subr.bf16.mxu0 %v255
    %292 = vmatpush1.bf16.msra.mxu0 %v254
    %293 = vmatprep.subr.bf16.mxu0 %v251
    %294 = vmatpush1.bf16.msra.mxu0 %v250
    %295 = vmatprep.subr.bf16.mxu0 0
    %296 = vmatpush2.bf16.msra.mxu0 0
    %297 = vmatprep.subr.bf16.mxu0 0
    %298 = vmatpush2.bf16.msra.mxu0 0
    %299 = vmatprep.subr.bf16.mxu0 0
    %300 = vmatpush2.bf16.msra.mxu0 0
    %301 = vmatprep.subr.bf16.mxu0 0
    %302 = vmatpush2.bf16.msra.mxu0 0
    %303 = vmatprep.subr.bf16.mxu0 0
    %304 = vmatpush2.bf16.msra.mxu0 0
    %305 = vmatprep.subr.bf16.mxu0 0
    %306 = vmatpush2.bf16.msra.mxu0 0
    %307 = vmatprep.subr.bf16.mxu0 0
    %308 = vmatpush2.bf16.msra.mxu0 0
    %309 = vmatprep.subr.bf16.mxu0 0
    %310 = vmatpush2.bf16.msra.mxu0 0
    %311 = vmatprep.mubr.bf16.mxu0 0
    %312 = vmatmul.mubr.bf16.gmra.mxu0 %v268
    %v313 = vpop.f32.mrf.mxu0
    %v314 = vadd.f32 %v209, %v313
    %v315 = vpop.f32.mrf.mxu0
    %v316 = vadd.f32 %v213, %v315
    %v317 = vpop.f32.mrf.mxu0
    %v318 = vadd.f32 %v209, %v317
    %v319 = vpop.f32.mrf.mxu0
    %v320 = vadd.f32 %v213, %v319
    %321 = vmatprep.mubr.bf16.mxu0 0
    %322 = vmatmul.mubr.bf16.gmra.mxu0 %v271
    %v323 = vpop.f32.mrf.mxu0
    %v324 = vadd.f32 %v209, %v323
    %v325 = vpop.f32.mrf.mxu0
    %v326 = vadd.f32 %v213, %v325
    %v327 = vpop.f32.mrf.mxu0
    %v328 = vadd.f32 %v209, %v327
    %v329 = vpop.f32.mrf.mxu0
    %v330 = vadd.f32 %v213, %v329
    %331 = vmatprep.mubr.bf16.mxu0 0
    %332 = vmatmul.mubr.bf16.gmra.mxu0 %v274
    %v333 = vpop.f32.mrf.mxu0
    %v334 = vadd.f32 %v209, %v333
    %v335 = vpop.f32.mrf.mxu0
    %v336 = vadd.f32 %v213, %v335
    %v337 = vpop.f32.mrf.mxu0
    %v338 = vadd.f32 %v209, %v337
    %v339 = vpop.f32.mrf.mxu0
    %v340 = vadd.f32 %v213, %v339
    %341 = vmatprep.mubr.bf16.mxu0 0
    %342 = vmatmul.mubr.bf16.gmra.mxu0 %v277
    %v343 = vpop.f32.mrf.mxu0
    %v344 = vadd.f32 %v209, %v343
    %v345 = vpop.f32.mrf.mxu0
    %v346 = vadd.f32 %v213, %v345
    %v347 = vpop.f32.mrf.mxu0
    %v348 = vadd.f32 %v209, %v347
    %v349 = vpop.f32.mrf.mxu0
    %v350 = vadd.f32 %v213, %v349
    %351 = vdwg.mxu0
    %352 = vmatprep.subr.bf16.mxu0 0
    %353 = vmatpush1.bf16.msra.mxu0 0
    %354 = vmatprep.subr.bf16.mxu0 0
    %355 = vmatpush1.bf16.msra.mxu0 0
    %356 = vmatprep.subr.bf16.mxu0 0
    %357 = vmatpush1.bf16.msra.mxu0 0
    %358 = vmatprep.subr.bf16.mxu0 0
    %359 = vmatpush1.bf16.msra.mxu0 0
    %360 = vmatprep.subr.bf16.mxu0 0
    %361 = vmatpush1.bf16.msra.mxu0 0
    %362 = vmatprep.subr.bf16.mxu0 0
    %363 = vmatpush1.bf16.msra.mxu0 0
    %364 = vmatprep.subr.bf16.mxu0 %v257
    %365 = vmatpush1.bf16.msra.mxu0 %v256
    %366 = vmatprep.subr.bf16.mxu0 %v253
    %367 = vmatpush1.bf16.msra.mxu0 %v252
    %368 = vmatprep.subr.bf16.mxu0 0
    %369 = vmatpush2.bf16.msra.mxu0 0
    %370 = vmatprep.subr.bf16.mxu0 0
    %371 = vmatpush2.bf16.msra.mxu0 0
    %372 = vmatprep.subr.bf16.mxu0 0
    %373 = vmatpush2.bf16.msra.mxu0 0
    %374 = vmatprep.subr.bf16.mxu0 0
    %375 = vmatpush2.bf16.msra.mxu0 0
    %376 = vmatprep.subr.bf16.mxu0 0
    %377 = vmatpush2.bf16.msra.mxu0 0
    %378 = vmatprep.subr.bf16.mxu0 0
    %379 = vmatpush2.bf16.msra.mxu0 0
    %380 = vmatprep.subr.bf16.mxu0 0
    %381 = vmatpush2.bf16.msra.mxu0 0
    %382 = vmatprep.subr.bf16.mxu0 0
    %383 = vmatpush2.bf16.msra.mxu0 0
    %384 = vmatprep.mubr.bf16.mxu0 0
    %385 = vmatmul.mubr.bf16.gmra.mxu0 %v268
    %v386 = vpop.f32.mrf.mxu0
    %v387 = vadd.f32 %v217, %v386
    %v388 = vpop.f32.mrf.mxu0
    %v389 = vadd.f32 %v221, %v388
    %v390 = vpop.f32.mrf.mxu0
    %v391 = vadd.f32 %v217, %v390
    %v392 = vpop.f32.mrf.mxu0
    %v393 = vadd.f32 %v221, %v392
    %394 = vmatprep.mubr.bf16.mxu0 0
    %395 = vmatmul.mubr.bf16.gmra.mxu0 %v271
    %v396 = vpop.f32.mrf.mxu0
    %v397 = vadd.f32 %v217, %v396
    %v398 = vpop.f32.mrf.mxu0
    %v399 = vadd.f32 %v221, %v398
    %v400 = vpop.f32.mrf.mxu0
    %v401 = vadd.f32 %v217, %v400
    %v402 = vpop.f32.mrf.mxu0
    %v403 = vadd.f32 %v221, %v402
    %404 = vmatprep.mubr.bf16.mxu0 0
    %405 = vmatmul.mubr.bf16.gmra.mxu0 %v274
    %v406 = vpop.f32.mrf.mxu0
    %v407 = vadd.f32 %v217, %v406
    %v408 = vpop.f32.mrf.mxu0
    %v409 = vadd.f32 %v221, %v408
    %v410 = vpop.f32.mrf.mxu0
    %v411 = vadd.f32 %v217, %v410
    %v412 = vpop.f32.mrf.mxu0
    %v413 = vadd.f32 %v221, %v412
    %414 = vmatprep.mubr.bf16.mxu0 0
    %415 = vmatmul.mubr.bf16.gmra.mxu0 %v277
    %v416 = vpop.f32.mrf.mxu0
    %v417 = vadd.f32 %v217, %v416
    %v418 = vpop.f32.mrf.mxu0
    %v419 = vadd.f32 %v221, %v418
    %v420 = vpop.f32.mrf.mxu0
    %v421 = vadd.f32 %v217, %v420
    %v422 = vpop.f32.mrf.mxu0
    %v423 = vadd.f32 %v221, %v422
    %424 = vdwg.mxu0
    %v425 = vld [vmem:[#allocation4] sm:$0xff]
    %v426 = vld [vmem:[#allocation4 + $0x8] sm:$0xff]
    %v427 = vld [vmem:[#allocation4 + $0x10] sm:$0xff]
    %v428 = vld [vmem:[#allocation4 + $0x18] sm:$0xff]
    %v429 = vld [vmem:[#allocation4 + $0x20] sm:$0xff]
    %v430 = vld [vmem:[#allocation4 + $0x28] sm:$0xff]
    %v431 = vld [vmem:[#allocation4 + $0x30] sm:$0xff]
    %v432 = vld [vmem:[#allocation4 + $0x38] sm:$0xff]
    %v433 = vld [vmem:[#allocation4 + $0x40] sm:$0xff]
    %v434 = vld [vmem:[#allocation4 + $0x48] sm:$0xff]
    %v435 = vld [vmem:[#allocation4 + $0x50] sm:$0xff]
    %v436 = vld [vmem:[#allocation4 + $0x58] sm:$0xff]
    %v437 = vld [vmem:[#allocation4 + $0x60] sm:$0xff]
    %v438 = vld [vmem:[#allocation4 + $0x68] sm:$0xff]
    %v439 = vld [vmem:[#allocation4 + $0x70] sm:$0xff]
    %v440 = vld [vmem:[#allocation4 + $0x78] sm:$0xff]
    %v441 = vld [vmem:[#allocation4 + $0x80] sm:$0xff]
    %v442 = vld [vmem:[#allocation4 + $0x88] sm:$0xff]
    %v443 = vld [vmem:[#allocation4 + $0x90] sm:$0xff]
    %v444 = vld [vmem:[#allocation4 + $0x98] sm:$0xff]
    %v445 = vld [vmem:[#allocation4 + $0xa0] sm:$0xff]
    %v446 = vld [vmem:[#allocation4 + $0xa8] sm:$0xff]
    %v447 = vld [vmem:[#allocation4 + $0xb0] sm:$0xff]
    %v448 = vld [vmem:[#allocation4 + $0xb8] sm:$0xff]
    %v449 = vld [vmem:[#allocation4 + $0xc0] sm:$0xff]
    %v450 = vld [vmem:[#allocation4 + $0xc8] sm:$0xff]
    %v451 = vld [vmem:[#allocation4 + $0xd0] sm:$0xff]
    %v452 = vld [vmem:[#allocation4 + $0xd8] sm:$0xff]
    %v453 = vld [vmem:[#allocation4 + $0xe0] sm:$0xff]
    %v454 = vld [vmem:[#allocation4 + $0xe8] sm:$0xff]
    %v455 = vld [vmem:[#allocation4 + $0xf0] sm:$0xff]
    %v456 = vld [vmem:[#allocation4 + $0xf8] sm:$0xff]
    %v457 = vld [vmem:[#allocation7] sm:$0xff]
    %v458 = vld [vmem:[#allocation7 + $0x8] sm:$0xff]
    %v459 = vld [vmem:[#allocation7 + $0x10] sm:$0xff]
    %v460 = vld [vmem:[#allocation7 + $0x18] sm:$0xff]
    %v461 = vld [vmem:[#allocation7 + $0x20] sm:$0xff]
    %v462 = vld [vmem:[#allocation7 + $0x28] sm:$0xff]
    %v463 = vld [vmem:[#allocation7 + $0x30] sm:$0xff]
    %v464 = vld [vmem:[#allocation7 + $0x38] sm:$0xff]
    %v465 = vld [vmem:[#allocation7 + $0x40] sm:$0xff]
    %v466 = vld [vmem:[#allocation7 + $0x48] sm:$0xff]
    %v467 = vld [vmem:[#allocation7 + $0x50] sm:$0xff]
    %v468 = vld [vmem:[#allocation7 + $0x58] sm:$0xff]
    %v469 = vld [vmem:[#allocation7 + $0x60] sm:$0xff]
    %v470 = vld [vmem:[#allocation7 + $0x68] sm:$0xff]
    %v471 = vld [vmem:[#allocation7 + $0x70] sm:$0xff]
    %v472 = vld [vmem:[#allocation7 + $0x78] sm:$0xff]
    %v473 = vld [vmem:[#allocation7 + $0x80] sm:$0xff]
    %v474 = vld [vmem:[#allocation7 + $0x88] sm:$0xff]
    %v475 = vld [vmem:[#allocation7 + $0x90] sm:$0xff]
    %v476 = vld [vmem:[#allocation7 + $0x98] sm:$0xff]
    %v477 = vld [vmem:[#allocation7 + $0xa0] sm:$0xff]
    %v478 = vld [vmem:[#allocation7 + $0xa8] sm:$0xff]
    %v479 = vld [vmem:[#allocation7 + $0xb0] sm:$0xff]
    %v480 = vld [vmem:[#allocation7 + $0xb8] sm:$0xff]
    %v481 = vld [vmem:[#allocation7 + $0xc0] sm:$0xff]
    %v482 = vld [vmem:[#allocation7 + $0xc8] sm:$0xff]
    %v483 = vld [vmem:[#allocation7 + $0xd0] sm:$0xff]
    %v484 = vld [vmem:[#allocation7 + $0xd8] sm:$0xff]
    %v485 = vld [vmem:[#allocation7 + $0xe0] sm:$0xff]
    %v486 = vld [vmem:[#allocation7 + $0xe8] sm:$0xff]
    %v487 = vld [vmem:[#allocation7 + $0xf0] sm:$0xff]
    %v488 = vld [vmem:[#allocation7 + $0xf8] sm:$0xff]
    %v489 = vld [vmem:[#allocation7 + $0x100] sm:$0xff]
    %v490 = vld [vmem:[#allocation7 + $0x108] sm:$0xff]
    %v491 = vld [vmem:[#allocation7 + $0x110] sm:$0xff]
    %v492 = vld [vmem:[#allocation7 + $0x118] sm:$0xff]
    %v493 = vld [vmem:[#allocation7 + $0x120] sm:$0xff]
    %v494 = vld [vmem:[#allocation7 + $0x128] sm:$0xff]
    %v495 = vld [vmem:[#allocation7 + $0x130] sm:$0xff]
    %v496 = vld [vmem:[#allocation7 + $0x138] sm:$0xff]
    %v497 = vld [vmem:[#allocation7 + $0x140] sm:$0xff]
    %v498 = vld [vmem:[#allocation7 + $0x148] sm:$0xff]
    %v499 = vld [vmem:[#allocation7 + $0x150] sm:$0xff]
    %v500 = vld [vmem:[#allocation7 + $0x158] sm:$0xff]
    %v501 = vld [vmem:[#allocation7 + $0x160] sm:$0xff]
    %v502 = vld [vmem:[#allocation7 + $0x168] sm:$0xff]
    %v503 = vld [vmem:[#allocation7 + $0x170] sm:$0xff]
    %v504 = vld [vmem:[#allocation7 + $0x178] sm:$0xff]
    %v505 = vld [vmem:[#allocation7 + $0x180] sm:$0xff]
    %v506 = vld [vmem:[#allocation7 + $0x188] sm:$0xff]
    %v507 = vld [vmem:[#allocation7 + $0x190] sm:$0xff]
    %v508 = vld [vmem:[#allocation7 + $0x198] sm:$0xff]
    %v509 = vld [vmem:[#allocation7 + $0x1a0] sm:$0xff]
    %v510 = vld [vmem:[#allocation7 + $0x1a8] sm:$0xff]
    %v511 = vld [vmem:[#allocation7 + $0x1b0] sm:$0xff]
    %v512 = vld [vmem:[#allocation7 + $0x1b8] sm:$0xff]
    %v513 = vld [vmem:[#allocation7 + $0x1c0] sm:$0xff]
    %v514 = vld [vmem:[#allocation7 + $0x1c8] sm:$0xff]
    %v515 = vld [vmem:[#allocation7 + $0x1d0] sm:$0xff]
    %v516 = vld [vmem:[#allocation7 + $0x1d8] sm:$0xff]
    %v517 = vld [vmem:[#allocation7 + $0x1e0] sm:$0xff]
    %v518 = vld [vmem:[#allocation7 + $0x1e8] sm:$0xff]
    %v519 = vld [vmem:[#allocation7 + $0x1f0] sm:$0xff]
    %v520 = vld [vmem:[#allocation7 + $0x1f8] sm:$0xff]
    %v521 = vld [vmem:[#allocation9] sm:$0xf]
    %v554 = vunpack.c.l.b16 %v425
    %v555 = vunpack.c.h.b16 %v425
    %v556 = vunpack.c.l.b16 %v426
    %v557 = vunpack.c.h.b16 %v426
    %v558 = vunpack.c.l.b16 %v427
    %v559 = vunpack.c.h.b16 %v427
    %v560 = vunpack.c.l.b16 %v428
    %v561 = vunpack.c.h.b16 %v428
    %v562 = vunpack.c.l.b16 %v429
    %v563 = vunpack.c.h.b16 %v429
    %v564 = vunpack.c.l.b16 %v430
    %v565 = vunpack.c.h.b16 %v430
    %v566 = vunpack.c.l.b16 %v431
    %v567 = vunpack.c.h.b16 %v431
    %v568 = vunpack.c.l.b16 %v432
    %v569 = vunpack.c.h.b16 %v432
    %v570 = vunpack.c.l.b16 %v433
    %v571 = vunpack.c.h.b16 %v433
    %v572 = vunpack.c.l.b16 %v434
    %v573 = vunpack.c.h.b16 %v434
    %v574 = vunpack.c.l.b16 %v435
    %v575 = vunpack.c.h.b16 %v435
    %v576 = vunpack.c.l.b16 %v436
    %v577 = vunpack.c.h.b16 %v436
    %v578 = vunpack.c.l.b16 %v437
    %v579 = vunpack.c.h.b16 %v437
    %v580 = vunpack.c.l.b16 %v438
    %v581 = vunpack.c.h.b16 %v438
    %v582 = vunpack.c.l.b16 %v439
    %v583 = vunpack.c.h.b16 %v439
    %v584 = vunpack.c.l.b16 %v440
    %v585 = vunpack.c.h.b16 %v440
    %v586 = vunpack.c.l.b16 %v441
    %v587 = vunpack.c.h.b16 %v441
    %v588 = vunpack.c.l.b16 %v442
    %v589 = vunpack.c.h.b16 %v442
    %v590 = vunpack.c.l.b16 %v443
    %v591 = vunpack.c.h.b16 %v443
    %v592 = vunpack.c.l.b16 %v444
    %v593 = vunpack.c.h.b16 %v444
    %v594 = vunpack.c.l.b16 %v445
    %v595 = vunpack.c.h.b16 %v445
    %v596 = vunpack.c.l.b16 %v446
    %v597 = vunpack.c.h.b16 %v446
    %v598 = vunpack.c.l.b16 %v447
    %v599 = vunpack.c.h.b16 %v447
    %v600 = vunpack.c.l.b16 %v448
    %v601 = vunpack.c.h.b16 %v448
    %v602 = vunpack.c.l.b16 %v449
    %v603 = vunpack.c.h.b16 %v449
    %v604 = vunpack.c.l.b16 %v450
    %v605 = vunpack.c.h.b16 %v450
    %v606 = vunpack.c.l.b16 %v451
    %v607 = vunpack.c.h.b16 %v451
    %v608 = vunpack.c.l.b16 %v452
    %v609 = vunpack.c.h.b16 %v452
    %v610 = vunpack.c.l.b16 %v453
    %v611 = vunpack.c.h.b16 %v453
    %v612 = vunpack.c.l.b16 %v454
    %v613 = vunpack.c.h.b16 %v454
    %v614 = vunpack.c.l.b16 %v455
    %v615 = vunpack.c.h.b16 %v455
    %v616 = vunpack.c.l.b16 %v456
    %v617 = vunpack.c.h.b16 %v456
    %v618 = vpack.c.b16 %v558, %v554
    %v619 = vpack.c.b16 %v559, %v555
    %v620 = vpack.c.b16 %v560, %v556
    %v621 = vpack.c.b16 %v561, %v557
    %v622 = vpack.c.b16 %v566, %v562
    %v623 = vpack.c.b16 %v567, %v563
    %v624 = vpack.c.b16 %v568, %v564
    %v625 = vpack.c.b16 %v569, %v565
    %v626 = vpack.c.b16 %v574, %v570
    %v627 = vpack.c.b16 %v575, %v571
    %v628 = vpack.c.b16 %v576, %v572
    %v629 = vpack.c.b16 %v577, %v573
    %v630 = vpack.c.b16 %v582, %v578
    %v631 = vpack.c.b16 %v583, %v579
    %v632 = vpack.c.b16 %v584, %v580
    %v633 = vpack.c.b16 %v585, %v581
    %v634 = vpack.c.b16 %v590, %v586
    %v635 = vpack.c.b16 %v591, %v587
    %v636 = vpack.c.b16 %v592, %v588
    %v637 = vpack.c.b16 %v593, %v589
    %v638 = vpack.c.b16 %v598, %v594
    %v639 = vpack.c.b16 %v599, %v595
    %v640 = vpack.c.b16 %v600, %v596
    %v641 = vpack.c.b16 %v601, %v597
    %v642 = vpack.c.b16 %v606, %v602
    %v643 = vpack.c.b16 %v607, %v603
    %v644 = vpack.c.b16 %v608, %v604
    %v645 = vpack.c.b16 %v609, %v605
    %v646 = vpack.c.b16 %v614, %v610
    %v647 = vpack.c.b16 %v615, %v611
    %v648 = vpack.c.b16 %v616, %v612
    %v649 = vpack.c.b16 %v617, %v613
    %682 = vmatprep.subr.bf16.mxu0 %v647
    %683 = vmatpush1.bf16.msra.mxu0 %v646
    %684 = vmatprep.subr.bf16.mxu0 %v643
    %685 = vmatpush1.bf16.msra.mxu0 %v642
    %686 = vmatprep.subr.bf16.mxu0 %v639
    %687 = vmatpush1.bf16.msra.mxu0 %v638
    %688 = vmatprep.subr.bf16.mxu0 %v635
    %689 = vmatpush1.bf16.msra.mxu0 %v634
    %690 = vmatprep.subr.bf16.mxu0 %v631
    %691 = vmatpush1.bf16.msra.mxu0 %v630
    %692 = vmatprep.subr.bf16.mxu0 %v627
    %693 = vmatpush1.bf16.msra.mxu0 %v626
    %694 = vmatprep.subr.bf16.mxu0 %v623
    %695 = vmatpush1.bf16.msra.mxu0 %v622
    %696 = vmatprep.subr.bf16.mxu0 %v619
    %697 = vmatpush1.bf16.msra.mxu0 %v618
    %698 = vmatprep.subr.bf16.mxu0 0
    %699 = vmatpush2.bf16.msra.mxu0 0
    %700 = vmatprep.subr.bf16.mxu0 0
    %701 = vmatpush2.bf16.msra.mxu0 0
    %702 = vmatprep.subr.bf16.mxu0 0
    %703 = vmatpush2.bf16.msra.mxu0 0
    %704 = vmatprep.subr.bf16.mxu0 0
    %705 = vmatpush2.bf16.msra.mxu0 0
    %706 = vmatprep.subr.bf16.mxu0 0
    %707 = vmatpush2.bf16.msra.mxu0 0
    %708 = vmatprep.subr.bf16.mxu0 0
    %709 = vmatpush2.bf16.msra.mxu0 0
    %710 = vmatprep.subr.bf16.mxu0 0
    %711 = vmatpush2.bf16.msra.mxu0 0
    %712 = vmatprep.subr.bf16.mxu0 0
    %713 = vmatpush2.bf16.msra.mxu0 0
    %714 = vmatprep.mubr.bf16.mxu0 0
    %715 = vmatmul.mubr.bf16.gmra.mxu0 0
    %v716 = vpop.f32.mrf.mxu0
    %v717 = vadd.f32 0.0, %v716
    %v718 = vpop.f32.mrf.mxu0
    %v719 = vadd.f32 0.0, %v718
    %v720 = vpop.f32.mrf.mxu0
    %v721 = vpop.f32.mrf.mxu0
    %722 = vdwg.mxu0
    %723 = vmatprep.subr.bf16.mxu0 %v649
    %724 = vmatpush1.bf16.msra.mxu0 %v648
    %725 = vmatprep.subr.bf16.mxu0 %v645
    %726 = vmatpush1.bf16.msra.mxu0 %v644
    %727 = vmatprep.subr.bf16.mxu0 %v641
    %728 = vmatpush1.bf16.msra.mxu0 %v640
    %729 = vmatprep.subr.bf16.mxu0 %v637
    %730 = vmatpush1.bf16.msra.mxu0 %v636
    %731 = vmatprep.subr.bf16.mxu0 %v633
    %732 = vmatpush1.bf16.msra.mxu0 %v632
    %733 = vmatprep.subr.bf16.mxu0 %v629
    %734 = vmatpush1.bf16.msra.mxu0 %v628
    %735 = vmatprep.subr.bf16.mxu0 %v625
    %736 = vmatpush1.bf16.msra.mxu0 %v624
    %737 = vmatprep.subr.bf16.mxu0 %v621
    %738 = vmatpush1.bf16.msra.mxu0 %v620
    %739 = vmatprep.subr.bf16.mxu0 0
    %740 = vmatpush2.bf16.msra.mxu0 0
    %741 = vmatprep.subr.bf16.mxu0 0
    %742 = vmatpush2.bf16.msra.mxu0 0
    %743 = vmatprep.subr.bf16.mxu0 0
    %744 = vmatpush2.bf16.msra.mxu0 0
    %745 = vmatprep.subr.bf16.mxu0 0
    %746 = vmatpush2.bf16.msra.mxu0 0
    %747 = vmatprep.subr.bf16.mxu0 0
    %748 = vmatpush2.bf16.msra.mxu0 0
    %749 = vmatprep.subr.bf16.mxu0 0
    %750 = vmatpush2.bf16.msra.mxu0 0
    %751 = vmatprep.subr.bf16.mxu0 0
    %752 = vmatpush2.bf16.msra.mxu0 0
    %753 = vmatprep.subr.bf16.mxu0 0
    %754 = vmatpush2.bf16.msra.mxu0 0
    %755 = vmatprep.mubr.bf16.mxu0 0
    %756 = vmatmul.mubr.bf16.gmra.mxu0 0
    %v757 = vpop.f32.mrf.mxu0
    %v758 = vadd.f32 0.0, %v757
    %v759 = vpop.f32.mrf.mxu0
    %v760 = vadd.f32 0.0, %v759
    %v761 = vpop.f32.mrf.mxu0
    %v762 = vpop.f32.mrf.mxu0
    %763 = vdwg.mxu0
    %v764 = vadd.f32 %v314, %v717
    %v765 = vadd.f32 %v316, %v719
    %v766 = vadd.f32 %v387, %v758
    %v767 = vadd.f32 %v389, %v760
    %v768 = vxor.u32 %v764, 2147483648
    %v769 = vmul.f32 %v768, 1.442695
    %v770 = vpow.pop %v769
    %v771 = vadd.f32 %v770, 1.0
    %v772 = vrcp.pop %v771
    %v773 = vmul.f32 1.0, %v772
    %v774 = vxor.u32 %v765, 2147483648
    %v775 = vmul.f32 %v774, 1.442695
    %v776 = vpow.pop %v775
    %v777 = vadd.f32 %v776, 1.0
    %v778 = vrcp.pop %v777
    %v779 = vmul.f32 1.0, %v778
    %v780 = vtanh.pop %v766
    %v781 = vxor.u32 %v767, 2147483648
    %v782 = vmul.f32 %v781, 1.442695
    %v783 = vpow.pop %v782
    %v784 = vadd.f32 %v783, 1.0
    %v785 = vrcp.pop %v784
    %v786 = vmul.f32 1.0, %v785
    %v787 = vmul.f32 %v779, 0.0
    %v788 = vmul.f32 %v773, %v780
    %v789 = vadd.f32 %v787, %v788
    %v790 = vtanh.pop %v789
    %v791 = vmul.f32 %v786, %v790
    %v792 = vpack.c.bf16 %v791, %v791
    %v793 = vpack.c.bf16 0.0, 0.0
    %v795 = vlaneseq
    %v796 = vshrl.u32 %v795, 7
    %v797 = vsub.s32 0, %v796
    %v798 = vrot.slane %v521, %v797
    %v799 = vlaneseq
    %v800 = vshrl.u32 %v799, 7
    %v801 = vsub.s32 1, %v800
    %v802 = vrot.slane %v521, %v801
    %v803 = vlaneseq
    %v804 = vshrl.u32 %v803, 7
    %v805 = vsub.s32 2, %v804
    %v806 = vrot.slane %v521, %v805
    %v807 = vlaneseq
    %v808 = vshrl.u32 %v807, 7
    %v809 = vsub.s32 3, %v808
    %v810 = vrot.slane %v521, %v809
    %v879 = vunpack.c.l.b16 %v457
    %v880 = vunpack.c.h.b16 %v457
    %v881 = vunpack.c.l.b16 %v458
    %v882 = vunpack.c.h.b16 %v458
    %v883 = vunpack.c.l.b16 %v459
    %v884 = vunpack.c.h.b16 %v459
    %v885 = vunpack.c.l.b16 %v460
    %v886 = vunpack.c.h.b16 %v460
    %v887 = vunpack.c.l.b16 %v461
    %v888 = vunpack.c.h.b16 %v461
    %v889 = vunpack.c.l.b16 %v462
    %v890 = vunpack.c.h.b16 %v462
    %v891 = vunpack.c.l.b16 %v463
    %v892 = vunpack.c.h.b16 %v463
    %v893 = vunpack.c.l.b16 %v464
    %v894 = vunpack.c.h.b16 %v464
    %v895 = vunpack.c.l.b16 %v465
    %v896 = vunpack.c.h.b16 %v465
    %v897 = vunpack.c.l.b16 %v466
    %v898 = vunpack.c.h.b16 %v466
    %v899 = vunpack.c.l.b16 %v467
    %v900 = vunpack.c.h.b16 %v467
    %v901 = vunpack.c.l.b16 %v468
    %v902 = vunpack.c.h.b16 %v468
    %v903 = vunpack.c.l.b16 %v469
    %v904 = vunpack.c.h.b16 %v469
    %v905 = vunpack.c.l.b16 %v470
    %v906 = vunpack.c.h.b16 %v470
    %v907 = vunpack.c.l.b16 %v471
    %v908 = vunpack.c.h.b16 %v471
    %v909 = vunpack.c.l.b16 %v472
    %v910 = vunpack.c.h.b16 %v472
    %v911 = vunpack.c.l.b16 %v473
    %v912 = vunpack.c.h.b16 %v473
    %v913 = vunpack.c.l.b16 %v474
    %v914 = vunpack.c.h.b16 %v474
    %v915 = vunpack.c.l.b16 %v475
    %v916 = vunpack.c.h.b16 %v475
    %v917 = vunpack.c.l.b16 %v476
    %v918 = vunpack.c.h.b16 %v476
    %v919 = vunpack.c.l.b16 %v477
    %v920 = vunpack.c.h.b16 %v477
    %v921 = vunpack.c.l.b16 %v478
    %v922 = vunpack.c.h.b16 %v478
    %v923 = vunpack.c.l.b16 %v479
    %v924 = vunpack.c.h.b16 %v479
    %v925 = vunpack.c.l.b16 %v480
    %v926 = vunpack.c.h.b16 %v480
    %v927 = vunpack.c.l.b16 %v481
    %v928 = vunpack.c.h.b16 %v481
    %v929 = vunpack.c.l.b16 %v482
    %v930 = vunpack.c.h.b16 %v482
    %v931 = vunpack.c.l.b16 %v483
    %v932 = vunpack.c.h.b16 %v483
    %v933 = vunpack.c.l.b16 %v484
    %v934 = vunpack.c.h.b16 %v484
    %v935 = vunpack.c.l.b16 %v485
    %v936 = vunpack.c.h.b16 %v485
    %v937 = vunpack.c.l.b16 %v486
    %v938 = vunpack.c.h.b16 %v486
    %v939 = vunpack.c.l.b16 %v487
    %v940 = vunpack.c.h.b16 %v487
    %v941 = vunpack.c.l.b16 %v488
    %v942 = vunpack.c.h.b16 %v488
    %v943 = vunpack.c.l.b16 %v489
    %v944 = vunpack.c.h.b16 %v489
    %v945 = vunpack.c.l.b16 %v490
    %v946 = vunpack.c.h.b16 %v490
    %v947 = vunpack.c.l.b16 %v491
    %v948 = vunpack.c.h.b16 %v491
    %v949 = vunpack.c.l.b16 %v492
    %v950 = vunpack.c.h.b16 %v492
    %v951 = vunpack.c.l.b16 %v493
    %v952 = vunpack.c.h.b16 %v493
    %v953 = vunpack.c.l.b16 %v494
    %v954 = vunpack.c.h.b16 %v494
    %v955 = vunpack.c.l.b16 %v495
    %v956 = vunpack.c.h.b16 %v495
    %v957 = vunpack.c.l.b16 %v496
    %v958 = vunpack.c.h.b16 %v496
    %v959 = vunpack.c.l.b16 %v497
    %v960 = vunpack.c.h.b16 %v497
    %v961 = vunpack.c.l.b16 %v498
    %v962 = vunpack.c.h.b16 %v498
    %v963 = vunpack.c.l.b16 %v499
    %v964 = vunpack.c.h.b16 %v499
    %v965 = vunpack.c.l.b16 %v500
    %v966 = vunpack.c.h.b16 %v500
    %v967 = vunpack.c.l.b16 %v501
    %v968 = vunpack.c.h.b16 %v501
    %v969 = vunpack.c.l.b16 %v502
    %v970 = vunpack.c.h.b16 %v502
    %v971 = vunpack.c.l.b16 %v503
    %v972 = vunpack.c.h.b16 %v503
    %v973 = vunpack.c.l.b16 %v504
    %v974 = vunpack.c.h.b16 %v504
    %v975 = vunpack.c.l.b16 %v505
    %v976 = vunpack.c.h.b16 %v505
    %v977 = vunpack.c.l.b16 %v506
    %v978 = vunpack.c.h.b16 %v506
    %v979 = vunpack.c.l.b16 %v507
    %v980 = vunpack.c.h.b16 %v507
    %v981 = vunpack.c.l.b16 %v508
    %v982 = vunpack.c.h.b16 %v508
    %v983 = vunpack.c.l.b16 %v509
    %v984 = vunpack.c.h.b16 %v509
    %v985 = vunpack.c.l.b16 %v510
    %v986 = vunpack.c.h.b16 %v510
    %v987 = vunpack.c.l.b16 %v511
    %v988 = vunpack.c.h.b16 %v511
    %v989 = vunpack.c.l.b16 %v512
    %v990 = vunpack.c.h.b16 %v512
    %v991 = vunpack.c.l.b16 %v513
    %v992 = vunpack.c.h.b16 %v513
    %v993 = vunpack.c.l.b16 %v514
    %v994 = vunpack.c.h.b16 %v514
    %v995 = vunpack.c.l.b16 %v515
    %v996 = vunpack.c.h.b16 %v515
    %v997 = vunpack.c.l.b16 %v516
    %v998 = vunpack.c.h.b16 %v516
    %v999 = vunpack.c.l.b16 %v517
    %v1000 = vunpack.c.h.b16 %v517
    %v1001 = vunpack.c.l.b16 %v518
    %v1002 = vunpack.c.h.b16 %v518
    %v1003 = vunpack.c.l.b16 %v519
    %v1004 = vunpack.c.h.b16 %v519
    %v1005 = vunpack.c.l.b16 %v520
    %v1006 = vunpack.c.h.b16 %v520
    %v1007 = vpack.c.b16 %v883, %v879
    %v1008 = vpack.c.b16 %v884, %v880
    %v1009 = vpack.c.b16 %v885, %v881
    %v1010 = vpack.c.b16 %v886, %v882
    %v1011 = vpack.c.b16 %v891, %v887
    %v1012 = vpack.c.b16 %v892, %v888
    %v1013 = vpack.c.b16 %v893, %v889
    %v1014 = vpack.c.b16 %v894, %v890
    %v1015 = vpack.c.b16 %v899, %v895
    %v1016 = vpack.c.b16 %v900, %v896
    %v1017 = vpack.c.b16 %v901, %v897
    %v1018 = vpack.c.b16 %v902, %v898
    %v1019 = vpack.c.b16 %v907, %v903
    %v1020 = vpack.c.b16 %v908, %v904
    %v1021 = vpack.c.b16 %v909, %v905
    %v1022 = vpack.c.b16 %v910, %v906
    %v1023 = vpack.c.b16 %v915, %v911
    %v1024 = vpack.c.b16 %v916, %v912
    %v1025 = vpack.c.b16 %v917, %v913
    %v1026 = vpack.c.b16 %v918, %v914
    %v1027 = vpack.c.b16 %v923, %v919
    %v1028 = vpack.c.b16 %v924, %v920
    %v1029 = vpack.c.b16 %v925, %v921
    %v1030 = vpack.c.b16 %v926, %v922
    %v1031 = vpack.c.b16 %v931, %v927
    %v1032 = vpack.c.b16 %v932, %v928
    %v1033 = vpack.c.b16 %v933, %v929
    %v1034 = vpack.c.b16 %v934, %v930
    %v1035 = vpack.c.b16 %v939, %v935
    %v1036 = vpack.c.b16 %v940, %v936
    %v1037 = vpack.c.b16 %v941, %v937
    %v1038 = vpack.c.b16 %v942, %v938
    %v1039 = vpack.c.b16 %v947, %v943
    %v1040 = vpack.c.b16 %v948, %v944
    %v1041 = vpack.c.b16 %v949, %v945
    %v1042 = vpack.c.b16 %v950, %v946
    %v1043 = vpack.c.b16 %v955, %v951
    %v1044 = vpack.c.b16 %v956, %v952
    %v1045 = vpack.c.b16 %v957, %v953
    %v1046 = vpack.c.b16 %v958, %v954
    %v1047 = vpack.c.b16 %v963, %v959
    %v1048 = vpack.c.b16 %v964, %v960
    %v1049 = vpack.c.b16 %v965, %v961
    %v1050 = vpack.c.b16 %v966, %v962
    %v1051 = vpack.c.b16 %v971, %v967
    %v1052 = vpack.c.b16 %v972, %v968
    %v1053 = vpack.c.b16 %v973, %v969
    %v1054 = vpack.c.b16 %v974, %v970
    %v1055 = vpack.c.b16 %v979, %v975
    %v1056 = vpack.c.b16 %v980, %v976
    %v1057 = vpack.c.b16 %v981, %v977
    %v1058 = vpack.c.b16 %v982, %v978
    %v1059 = vpack.c.b16 %v987, %v983
    %v1060 = vpack.c.b16 %v988, %v984
    %v1061 = vpack.c.b16 %v989, %v985
    %v1062 = vpack.c.b16 %v990, %v986
    %v1063 = vpack.c.b16 %v995, %v991
    %v1064 = vpack.c.b16 %v996, %v992
    %v1065 = vpack.c.b16 %v997, %v993
    %v1066 = vpack.c.b16 %v998, %v994
    %v1067 = vpack.c.b16 %v1003, %v999
    %v1068 = vpack.c.b16 %v1004, %v1000
    %v1069 = vpack.c.b16 %v1005, %v1001
    %v1070 = vpack.c.b16 %v1006, %v1002
    %1135 = vmatprep.subr.bf16.mxu0 %v1036
    %1136 = vmatpush1.bf16.msra.mxu0 %v1035
    %1137 = vmatprep.subr.bf16.mxu0 %v1032
    %1138 = vmatpush1.bf16.msra.mxu0 %v1031
    %1139 = vmatprep.subr.bf16.mxu0 %v1028
    %1140 = vmatpush1.bf16.msra.mxu0 %v1027
    %1141 = vmatprep.subr.bf16.mxu0 %v1024
    %1142 = vmatpush1.bf16.msra.mxu0 %v1023
    %1143 = vmatprep.subr.bf16.mxu0 %v1020
    %1144 = vmatpush1.bf16.msra.mxu0 %v1019
    %1145 = vmatprep.subr.bf16.mxu0 %v1016
    %1146 = vmatpush1.bf16.msra.mxu0 %v1015
    %1147 = vmatprep.subr.bf16.mxu0 %v1012
    %1148 = vmatpush1.bf16.msra.mxu0 %v1011
    %1149 = vmatprep.subr.bf16.mxu0 %v1008
    %1150 = vmatpush1.bf16.msra.mxu0 %v1007
    %1151 = vmatprep.subr.bf16.mxu0 %v1068
    %1152 = vmatpush2.bf16.msra.mxu0 %v1067
    %1153 = vmatprep.subr.bf16.mxu0 %v1064
    %1154 = vmatpush2.bf16.msra.mxu0 %v1063
    %1155 = vmatprep.subr.bf16.mxu0 %v1060
    %1156 = vmatpush2.bf16.msra.mxu0 %v1059
    %1157 = vmatprep.subr.bf16.mxu0 %v1056
    %1158 = vmatpush2.bf16.msra.mxu0 %v1055
    %1159 = vmatprep.subr.bf16.mxu0 %v1052
    %1160 = vmatpush2.bf16.msra.mxu0 %v1051
    %1161 = vmatprep.subr.bf16.mxu0 %v1048
    %1162 = vmatpush2.bf16.msra.mxu0 %v1047
    %1163 = vmatprep.subr.bf16.mxu0 %v1044
    %1164 = vmatpush2.bf16.msra.mxu0 %v1043
    %1165 = vmatprep.subr.bf16.mxu0 %v1040
    %1166 = vmatpush2.bf16.msra.mxu0 %v1039
    %1167 = vmatprep.mubr.bf16.mxu0 %v793
    %1168 = vmatmul.mubr.bf16.gmra.mxu0 %v792
    %v1169 = vpop.f32.mrf.mxu0
    %v1170 = vadd.f32 %v798, %v1169
    %v1171 = vpop.f32.mrf.mxu0
    %v1172 = vadd.f32 %v802, %v1171
    %v1173 = vpop.f32.mrf.mxu0
    %v1174 = vpop.f32.mrf.mxu0
    %1175 = vdwg.mxu0
    %1176 = vmatprep.subr.bf16.mxu0 %v1038
    %1177 = vmatpush1.bf16.msra.mxu0 %v1037
    %1178 = vmatprep.subr.bf16.mxu0 %v1034
    %1179 = vmatpush1.bf16.msra.mxu0 %v1033
    %1180 = vmatprep.subr.bf16.mxu0 %v1030
    %1181 = vmatpush1.bf16.msra.mxu0 %v1029
    %1182 = vmatprep.subr.bf16.mxu0 %v1026
    %1183 = vmatpush1.bf16.msra.mxu0 %v1025
    %1184 = vmatprep.subr.bf16.mxu0 %v1022
    %1185 = vmatpush1.bf16.msra.mxu0 %v1021
    %1186 = vmatprep.subr.bf16.mxu0 %v1018
    %1187 = vmatpush1.bf16.msra.mxu0 %v1017
    %1188 = vmatprep.subr.bf16.mxu0 %v1014
    %1189 = vmatpush1.bf16.msra.mxu0 %v1013
    %1190 = vmatprep.subr.bf16.mxu0 %v1010
    %1191 = vmatpush1.bf16.msra.mxu0 %v1009
    %1192 = vmatprep.subr.bf16.mxu0 %v1070
    %1193 = vmatpush2.bf16.msra.mxu0 %v1069
    %1194 = vmatprep.subr.bf16.mxu0 %v1066
    %1195 = vmatpush2.bf16.msra.mxu0 %v1065
    %1196 = vmatprep.subr.bf16.mxu0 %v1062
    %1197 = vmatpush2.bf16.msra.mxu0 %v1061
    %1198 = vmatprep.subr.bf16.mxu0 %v1058
    %1199 = vmatpush2.bf16.msra.mxu0 %v1057
    %1200 = vmatprep.subr.bf16.mxu0 %v1054
    %1201 = vmatpush2.bf16.msra.mxu0 %v1053
    %1202 = vmatprep.subr.bf16.mxu0 %v1050
    %1203 = vmatpush2.bf16.msra.mxu0 %v1049
    %1204 = vmatprep.subr.bf16.mxu0 %v1046
    %1205 = vmatpush2.bf16.msra.mxu0 %v1045
    %1206 = vmatprep.subr.bf16.mxu0 %v1042
    %1207 = vmatpush2.bf16.msra.mxu0 %v1041
    %1208 = vmatprep.mubr.bf16.mxu0 %v793
    %1209 = vmatmul.mubr.bf16.gmra.mxu0 %v792
    %v1210 = vpop.f32.mrf.mxu0
    %v1211 = vadd.f32 %v806, %v1210
    %v1212 = vpop.f32.mrf.mxu0
    %v1213 = vadd.f32 %v810, %v1212
    %v1214 = vpop.f32.mrf.mxu0
    %v1215 = vpop.f32.mrf.mxu0
    %1216 = vdwg.mxu0
    %v1217 = vxor.u32 %v1170, 2147483648
    %v1218 = vmul.f32 %v1217, 1.442695
    %v1219 = vpow.pop %v1218
    %v1220 = vadd.f32 %v1219, 1.0
    %v1221 = vrcp.pop %v1220
    %v1222 = vmul.f32 1.0, %v1221
    %v1223 = vxor.u32 %v1172, 2147483648
    %v1224 = vmul.f32 %v1223, 1.442695
    %v1225 = vpow.pop %v1224
    %v1226 = vadd.f32 %v1225, 1.0
    %v1227 = vrcp.pop %v1226
    %v1228 = vmul.f32 1.0, %v1227
    %v1229 = vtanh.pop %v1211
    %v1230 = vxor.u32 %v1213, 2147483648
    %v1231 = vmul.f32 %v1230, 1.442695
    %v1232 = vpow.pop %v1231
    %v1233 = vadd.f32 %v1232, 1.0
    %v1234 = vrcp.pop %v1233
    %v1235 = vmul.f32 1.0, %v1234
    %v1236 = vmul.f32 %v1228, 0.0
    %v1237 = vmul.f32 %v1222, %v1229
    %v1238 = vadd.f32 %v1236, %v1237
    %v1239 = vtanh.pop %v1238
    %v1240 = vmul.f32 %v1235, %v1239
    %1241 = vmatprep.subr.bf16.mxu0 %v647
    %1242 = vmatpush1.bf16.msra.mxu0 %v646
    %1243 = vmatprep.subr.bf16.mxu0 %v643
    %1244 = vmatpush1.bf16.msra.mxu0 %v642
    %1245 = vmatprep.subr.bf16.mxu0 %v639
    %1246 = vmatpush1.bf16.msra.mxu0 %v638
    %1247 = vmatprep.subr.bf16.mxu0 %v635
    %1248 = vmatpush1.bf16.msra.mxu0 %v634
    %1249 = vmatprep.subr.bf16.mxu0 %v631
    %1250 = vmatpush1.bf16.msra.mxu0 %v630
    %1251 = vmatprep.subr.bf16.mxu0 %v627
    %1252 = vmatpush1.bf16.msra.mxu0 %v626
    %1253 = vmatprep.subr.bf16.mxu0 %v623
    %1254 = vmatpush1.bf16.msra.mxu0 %v622
    %1255 = vmatprep.subr.bf16.mxu0 %v619
    %1256 = vmatpush1.bf16.msra.mxu0 %v618
    %1257 = vmatprep.subr.bf16.mxu0 0
    %1258 = vmatpush2.bf16.msra.mxu0 0
    %1259 = vmatprep.subr.bf16.mxu0 0
    %1260 = vmatpush2.bf16.msra.mxu0 0
    %1261 = vmatprep.subr.bf16.mxu0 0
    %1262 = vmatpush2.bf16.msra.mxu0 0
    %1263 = vmatprep.subr.bf16.mxu0 0
    %1264 = vmatpush2.bf16.msra.mxu0 0
    %1265 = vmatprep.subr.bf16.mxu0 0
    %1266 = vmatpush2.bf16.msra.mxu0 0
    %1267 = vmatprep.subr.bf16.mxu0 0
    %1268 = vmatpush2.bf16.msra.mxu0 0
    %1269 = vmatprep.subr.bf16.mxu0 0
    %1270 = vmatpush2.bf16.msra.mxu0 0
    %1271 = vmatprep.subr.bf16.mxu0 0
    %1272 = vmatpush2.bf16.msra.mxu0 0
    %1273 = vmatprep.mubr.bf16.mxu0 0
    %1274 = vmatmul.mubr.bf16.gmra.mxu0 %v792
    %v1275 = vpop.f32.mrf.mxu0
    %v1276 = vadd.f32 0.0, %v1275
    %v1277 = vpop.f32.mrf.mxu0
    %v1278 = vadd.f32 0.0, %v1277
    %v1279 = vpop.f32.mrf.mxu0
    %v1280 = vpop.f32.mrf.mxu0
    %1281 = vdwg.mxu0
    %1282 = vmatprep.subr.bf16.mxu0 %v649
    %1283 = vmatpush1.bf16.msra.mxu0 %v648
    %1284 = vmatprep.subr.bf16.mxu0 %v645
    %1285 = vmatpush1.bf16.msra.mxu0 %v644
    %1286 = vmatprep.subr.bf16.mxu0 %v641
    %1287 = vmatpush1.bf16.msra.mxu0 %v640
    %1288 = vmatprep.subr.bf16.mxu0 %v637
    %1289 = vmatpush1.bf16.msra.mxu0 %v636
    %1290 = vmatprep.subr.bf16.mxu0 %v633
    %1291 = vmatpush1.bf16.msra.mxu0 %v632
    %1292 = vmatprep.subr.bf16.mxu0 %v629
    %1293 = vmatpush1.bf16.msra.mxu0 %v628
    %1294 = vmatprep.subr.bf16.mxu0 %v625
    %1295 = vmatpush1.bf16.msra.mxu0 %v624
    %1296 = vmatprep.subr.bf16.mxu0 %v621
    %1297 = vmatpush1.bf16.msra.mxu0 %v620
    %1298 = vmatprep.subr.bf16.mxu0 0
    %1299 = vmatpush2.bf16.msra.mxu0 0
    %1300 = vmatprep.subr.bf16.mxu0 0
    %1301 = vmatpush2.bf16.msra.mxu0 0
    %1302 = vmatprep.subr.bf16.mxu0 0
    %1303 = vmatpush2.bf16.msra.mxu0 0
    %1304 = vmatprep.subr.bf16.mxu0 0
    %1305 = vmatpush2.bf16.msra.mxu0 0
    %1306 = vmatprep.subr.bf16.mxu0 0
    %1307 = vmatpush2.bf16.msra.mxu0 0
    %1308 = vmatprep.subr.bf16.mxu0 0
    %1309 = vmatpush2.bf16.msra.mxu0 0
    %1310 = vmatprep.subr.bf16.mxu0 0
    %1311 = vmatpush2.bf16.msra.mxu0 0
    %1312 = vmatprep.subr.bf16.mxu0 0
    %1313 = vmatpush2.bf16.msra.mxu0 0
    %1314 = vmatprep.mubr.bf16.mxu0 0
    %1315 = vmatmul.mubr.bf16.gmra.mxu0 %v792
    %v1316 = vpop.f32.mrf.mxu0
    %v1317 = vadd.f32 0.0, %v1316
    %v1318 = vpop.f32.mrf.mxu0
    %v1319 = vadd.f32 0.0, %v1318
    %v1320 = vpop.f32.mrf.mxu0
    %v1321 = vpop.f32.mrf.mxu0
    %1322 = vdwg.mxu0
    %v1323 = vadd.f32 %v318, %v1276
    %v1324 = vadd.f32 %v320, %v1278
    %v1325 = vadd.f32 %v391, %v1317
    %v1326 = vadd.f32 %v393, %v1319
    %v1327 = vxor.u32 %v1323, 2147483648
    %v1328 = vmul.f32 %v1327, 1.442695
    %v1329 = vpow.pop %v1328
    %v1330 = vadd.f32 %v1329, 1.0
    %v1331 = vrcp.pop %v1330
    %v1332 = vmul.f32 1.0, %v1331
    %v1333 = vxor.u32 %v1324, 2147483648
    %v1334 = vmul.f32 %v1333, 1.442695
    %v1335 = vpow.pop %v1334
    %v1336 = vadd.f32 %v1335, 1.0
    %v1337 = vrcp.pop %v1336
    %v1338 = vmul.f32 1.0, %v1337
    %v1339 = vtanh.pop %v1325
    %v1340 = vxor.u32 %v1326, 2147483648
    %v1341 = vmul.f32 %v1340, 1.442695
    %v1342 = vpow.pop %v1341
    %v1343 = vadd.f32 %v1342, 1.0
    %v1344 = vrcp.pop %v1343
    %v1345 = vmul.f32 1.0, %v1344
    %v1346 = vmul.f32 %v1338, %v789
    %v1347 = vmul.f32 %v1332, %v1339
    %v1348 = vadd.f32 %v1346, %v1347
    %v1349 = vtanh.pop %v1348
    %v1350 = vmul.f32 %v1345, %v1349
    %v1351 = vpack.c.bf16 %v1350, %v1350
    %v1352 = vpack.c.bf16 %v1240, %v1240
    %1353 = vmatprep.subr.bf16.mxu0 %v1036
    %1354 = vmatpush1.bf16.msra.mxu0 %v1035
    %1355 = vmatprep.subr.bf16.mxu0 %v1032
    %1356 = vmatpush1.bf16.msra.mxu0 %v1031
    %1357 = vmatprep.subr.bf16.mxu0 %v1028
    %1358 = vmatpush1.bf16.msra.mxu0 %v1027
    %1359 = vmatprep.subr.bf16.mxu0 %v1024
    %1360 = vmatpush1.bf16.msra.mxu0 %v1023
    %1361 = vmatprep.subr.bf16.mxu0 %v1020
    %1362 = vmatpush1.bf16.msra.mxu0 %v1019
    %1363 = vmatprep.subr.bf16.mxu0 %v1016
    %1364 = vmatpush1.bf16.msra.mxu0 %v1015
    %1365 = vmatprep.subr.bf16.mxu0 %v1012
    %1366 = vmatpush1.bf16.msra.mxu0 %v1011
    %1367 = vmatprep.subr.bf16.mxu0 %v1008
    %1368 = vmatpush1.bf16.msra.mxu0 %v1007
    %1369 = vmatprep.subr.bf16.mxu0 %v1068
    %1370 = vmatpush2.bf16.msra.mxu0 %v1067
    %1371 = vmatprep.subr.bf16.mxu0 %v1064
    %1372 = vmatpush2.bf16.msra.mxu0 %v1063
    %1373 = vmatprep.subr.bf16.mxu0 %v1060
    %1374 = vmatpush2.bf16.msra.mxu0 %v1059
    %1375 = vmatprep.subr.bf16.mxu0 %v1056
    %1376 = vmatpush2.bf16.msra.mxu0 %v1055
    %1377 = vmatprep.subr.bf16.mxu0 %v1052
    %1378 = vmatpush2.bf16.msra.mxu0 %v1051
    %1379 = vmatprep.subr.bf16.mxu0 %v1048
    %1380 = vmatpush2.bf16.msra.mxu0 %v1047
    %1381 = vmatprep.subr.bf16.mxu0 %v1044
    %1382 = vmatpush2.bf16.msra.mxu0 %v1043
    %1383 = vmatprep.subr.bf16.mxu0 %v1040
    %1384 = vmatpush2.bf16.msra.mxu0 %v1039
    %1385 = vmatprep.mubr.bf16.mxu0 %v1352
    %1386 = vmatmul.mubr.bf16.gmra.mxu0 %v1351
    %v1387 = vpop.f32.mrf.mxu0
    %v1388 = vadd.f32 %v798, %v1387
    %v1389 = vpop.f32.mrf.mxu0
    %v1390 = vadd.f32 %v802, %v1389
    %v1391 = vpop.f32.mrf.mxu0
    %v1392 = vpop.f32.mrf.mxu0
    %1393 = vdwg.mxu0
    %1394 = vmatprep.subr.bf16.mxu0 %v1038
    %1395 = vmatpush1.bf16.msra.mxu0 %v1037
    %1396 = vmatprep.subr.bf16.mxu0 %v1034
    %1397 = vmatpush1.bf16.msra.mxu0 %v1033
    %1398 = vmatprep.subr.bf16.mxu0 %v1030
    %1399 = vmatpush1.bf16.msra.mxu0 %v1029
    %1400 = vmatprep.subr.bf16.mxu0 %v1026
    %1401 = vmatpush1.bf16.msra.mxu0 %v1025
    %1402 = vmatprep.subr.bf16.mxu0 %v1022
    %1403 = vmatpush1.bf16.msra.mxu0 %v1021
    %1404 = vmatprep.subr.bf16.mxu0 %v1018
    %1405 = vmatpush1.bf16.msra.mxu0 %v1017
    %1406 = vmatprep.subr.bf16.mxu0 %v1014
    %1407 = vmatpush1.bf16.msra.mxu0 %v1013
    %1408 = vmatprep.subr.bf16.mxu0 %v1010
    %1409 = vmatpush1.bf16.msra.mxu0 %v1009
    %1410 = vmatprep.subr.bf16.mxu0 %v1070
    %1411 = vmatpush2.bf16.msra.mxu0 %v1069
    %1412 = vmatprep.subr.bf16.mxu0 %v1066
    %1413 = vmatpush2.bf16.msra.mxu0 %v1065
    %1414 = vmatprep.subr.bf16.mxu0 %v1062
    %1415 = vmatpush2.bf16.msra.mxu0 %v1061
    %1416 = vmatprep.subr.bf16.mxu0 %v1058
    %1417 = vmatpush2.bf16.msra.mxu0 %v1057
    %1418 = vmatprep.subr.bf16.mxu0 %v1054
    %1419 = vmatpush2.bf16.msra.mxu0 %v1053
    %1420 = vmatprep.subr.bf16.mxu0 %v1050
    %1421 = vmatpush2.bf16.msra.mxu0 %v1049
    %1422 = vmatprep.subr.bf16.mxu0 %v1046
    %1423 = vmatpush2.bf16.msra.mxu0 %v1045
    %1424 = vmatprep.subr.bf16.mxu0 %v1042
    %1425 = vmatpush2.bf16.msra.mxu0 %v1041
    %1426 = vmatprep.mubr.bf16.mxu0 %v1352
    %1427 = vmatmul.mubr.bf16.gmra.mxu0 %v1351
    %v1428 = vpop.f32.mrf.mxu0
    %v1429 = vadd.f32 %v806, %v1428
    %v1430 = vpop.f32.mrf.mxu0
    %v1431 = vadd.f32 %v810, %v1430
    %v1432 = vpop.f32.mrf.mxu0
    %v1433 = vpop.f32.mrf.mxu0
    %1434 = vdwg.mxu0
    %v1435 = vxor.u32 %v1388, 2147483648
    %v1436 = vmul.f32 %v1435, 1.442695
    %v1437 = vpow.pop %v1436
    %v1438 = vadd.f32 %v1437, 1.0
    %v1439 = vrcp.pop %v1438
    %v1440 = vmul.f32 1.0, %v1439
    %v1441 = vxor.u32 %v1390, 2147483648
    %v1442 = vmul.f32 %v1441, 1.442695
    %v1443 = vpow.pop %v1442
    %v1444 = vadd.f32 %v1443, 1.0
    %v1445 = vrcp.pop %v1444
    %v1446 = vmul.f32 1.0, %v1445
    %v1447 = vtanh.pop %v1429
    %v1448 = vxor.u32 %v1431, 2147483648
    %v1449 = vmul.f32 %v1448, 1.442695
    %v1450 = vpow.pop %v1449
    %v1451 = vadd.f32 %v1450, 1.0
    %v1452 = vrcp.pop %v1451
    %v1453 = vmul.f32 1.0, %v1452
    %v1454 = vmul.f32 %v1446, %v1238
    %v1455 = vmul.f32 %v1440, %v1447
    %v1456 = vadd.f32 %v1454, %v1455
    %v1457 = vtanh.pop %v1456
    %v1458 = vmul.f32 %v1453, %v1457
    %1459 = vmatprep.subr.bf16.mxu0 %v647
    %1460 = vmatpush1.bf16.msra.mxu0 %v646
    %1461 = vmatprep.subr.bf16.mxu0 %v643
    %1462 = vmatpush1.bf16.msra.mxu0 %v642
    %1463 = vmatprep.subr.bf16.mxu0 %v639
    %1464 = vmatpush1.bf16.msra.mxu0 %v638
    %1465 = vmatprep.subr.bf16.mxu0 %v635
    %1466 = vmatpush1.bf16.msra.mxu0 %v634
    %1467 = vmatprep.subr.bf16.mxu0 %v631
    %1468 = vmatpush1.bf16.msra.mxu0 %v630
    %1469 = vmatprep.subr.bf16.mxu0 %v627
    %1470 = vmatpush1.bf16.msra.mxu0 %v626
    %1471 = vmatprep.subr.bf16.mxu0 %v623
    %1472 = vmatpush1.bf16.msra.mxu0 %v622
    %1473 = vmatprep.subr.bf16.mxu0 %v619
    %1474 = vmatpush1.bf16.msra.mxu0 %v618
    %1475 = vmatprep.subr.bf16.mxu0 0
    %1476 = vmatpush2.bf16.msra.mxu0 0
    %1477 = vmatprep.subr.bf16.mxu0 0
    %1478 = vmatpush2.bf16.msra.mxu0 0
    %1479 = vmatprep.subr.bf16.mxu0 0
    %1480 = vmatpush2.bf16.msra.mxu0 0
    %1481 = vmatprep.subr.bf16.mxu0 0
    %1482 = vmatpush2.bf16.msra.mxu0 0
    %1483 = vmatprep.subr.bf16.mxu0 0
    %1484 = vmatpush2.bf16.msra.mxu0 0
    %1485 = vmatprep.subr.bf16.mxu0 0
    %1486 = vmatpush2.bf16.msra.mxu0 0
    %1487 = vmatprep.subr.bf16.mxu0 0
    %1488 = vmatpush2.bf16.msra.mxu0 0
    %1489 = vmatprep.subr.bf16.mxu0 0
    %1490 = vmatpush2.bf16.msra.mxu0 0
    %1491 = vmatprep.mubr.bf16.mxu0 0
    %1492 = vmatmul.mubr.bf16.gmra.mxu0 %v1351
    %v1493 = vpop.f32.mrf.mxu0
    %v1494 = vadd.f32 0.0, %v1493
    %v1495 = vpop.f32.mrf.mxu0
    %v1496 = vadd.f32 0.0, %v1495
    %v1497 = vpop.f32.mrf.mxu0
    %v1498 = vpop.f32.mrf.mxu0
    %1499 = vdwg.mxu0
    %1500 = vmatprep.subr.bf16.mxu0 %v649
    %1501 = vmatpush1.bf16.msra.mxu0 %v648
    %1502 = vmatprep.subr.bf16.mxu0 %v645
    %1503 = vmatpush1.bf16.msra.mxu0 %v644
    %1504 = vmatprep.subr.bf16.mxu0 %v641
    %1505 = vmatpush1.bf16.msra.mxu0 %v640
    %1506 = vmatprep.subr.bf16.mxu0 %v637
    %1507 = vmatpush1.bf16.msra.mxu0 %v636
    %1508 = vmatprep.subr.bf16.mxu0 %v633
    %1509 = vmatpush1.bf16.msra.mxu0 %v632
    %1510 = vmatprep.subr.bf16.mxu0 %v629
    %1511 = vmatpush1.bf16.msra.mxu0 %v628
    %1512 = vmatprep.subr.bf16.mxu0 %v625
    %1513 = vmatpush1.bf16.msra.mxu0 %v624
    %1514 = vmatprep.subr.bf16.mxu0 %v621
    %1515 = vmatpush1.bf16.msra.mxu0 %v620
    %1516 = vmatprep.subr.bf16.mxu0 0
    %1517 = vmatpush2.bf16.msra.mxu0 0
    %1518 = vmatprep.subr.bf16.mxu0 0
    %1519 = vmatpush2.bf16.msra.mxu0 0
    %1520 = vmatprep.subr.bf16.mxu0 0
    %1521 = vmatpush2.bf16.msra.mxu0 0
    %1522 = vmatprep.subr.bf16.mxu0 0
    %1523 = vmatpush2.bf16.msra.mxu0 0
    %1524 = vmatprep.subr.bf16.mxu0 0
    %1525 = vmatpush2.bf16.msra.mxu0 0
    %1526 = vmatprep.subr.bf16.mxu0 0
    %1527 = vmatpush2.bf16.msra.mxu0 0
    %1528 = vmatprep.subr.bf16.mxu0 0
    %1529 = vmatpush2.bf16.msra.mxu0 0
    %1530 = vmatprep.subr.bf16.mxu0 0
    %1531 = vmatpush2.bf16.msra.mxu0 0
    %1532 = vmatprep.mubr.bf16.mxu0 0
    %1533 = vmatmul.mubr.bf16.gmra.mxu0 %v1351
    %v1534 = vpop.f32.mrf.mxu0
    %v1535 = vadd.f32 0.0, %v1534
    %v1536 = vpop.f32.mrf.mxu0
    %v1537 = vadd.f32 0.0, %v1536
    %v1538 = vpop.f32.mrf.mxu0
    %v1539 = vpop.f32.mrf.mxu0
    %1540 = vdwg.mxu0
    %v1541 = vadd.f32 %v324, %v1494
    %v1542 = vadd.f32 %v326, %v1496
    %v1543 = vadd.f32 %v397, %v1535
    %v1544 = vadd.f32 %v399, %v1537
    %v1545 = vxor.u32 %v1541, 2147483648
    %v1546 = vmul.f32 %v1545, 1.442695
    %v1547 = vpow.pop %v1546
    %v1548 = vadd.f32 %v1547, 1.0
    %v1549 = vrcp.pop %v1548
    %v1550 = vmul.f32 1.0, %v1549
    %v1551 = vxor.u32 %v1542, 2147483648
    %v1552 = vmul.f32 %v1551, 1.442695
    %v1553 = vpow.pop %v1552
    %v1554 = vadd.f32 %v1553, 1.0
    %v1555 = vrcp.pop %v1554
    %v1556 = vmul.f32 1.0, %v1555
    %v1557 = vtanh.pop %v1543
    %v1558 = vxor.u32 %v1544, 2147483648
    %v1559 = vmul.f32 %v1558, 1.442695
    %v1560 = vpow.pop %v1559
    %v1561 = vadd.f32 %v1560, 1.0
    %v1562 = vrcp.pop %v1561
    %v1563 = vmul.f32 1.0, %v1562
    %v1564 = vmul.f32 %v1556, %v1348
    %v1565 = vmul.f32 %v1550, %v1557
    %v1566 = vadd.f32 %v1564, %v1565
    %v1567 = vtanh.pop %v1566
    %v1568 = vmul.f32 %v1563, %v1567
    %v1569 = vpack.c.bf16 %v1568, %v1568
    %v1570 = vpack.c.bf16 %v1458, %v1458
    %1571 = vmatprep.subr.bf16.mxu0 %v1036
    %1572 = vmatpush1.bf16.msra.mxu0 %v1035
    %1573 = vmatprep.subr.bf16.mxu0 %v1032
    %1574 = vmatpush1.bf16.msra.mxu0 %v1031
    %1575 = vmatprep.subr.bf16.mxu0 %v1028
    %1576 = vmatpush1.bf16.msra.mxu0 %v1027
    %1577 = vmatprep.subr.bf16.mxu0 %v1024
    %1578 = vmatpush1.bf16.msra.mxu0 %v1023
    %1579 = vmatprep.subr.bf16.mxu0 %v1020
    %1580 = vmatpush1.bf16.msra.mxu0 %v1019
    %1581 = vmatprep.subr.bf16.mxu0 %v1016
    %1582 = vmatpush1.bf16.msra.mxu0 %v1015
    %1583 = vmatprep.subr.bf16.mxu0 %v1012
    %1584 = vmatpush1.bf16.msra.mxu0 %v1011
    %1585 = vmatprep.subr.bf16.mxu0 %v1008
    %1586 = vmatpush1.bf16.msra.mxu0 %v1007
    %1587 = vmatprep.subr.bf16.mxu0 %v1068
    %1588 = vmatpush2.bf16.msra.mxu0 %v1067
    %1589 = vmatprep.subr.bf16.mxu0 %v1064
    %1590 = vmatpush2.bf16.msra.mxu0 %v1063
    %1591 = vmatprep.subr.bf16.mxu0 %v1060
    %1592 = vmatpush2.bf16.msra.mxu0 %v1059
    %1593 = vmatprep.subr.bf16.mxu0 %v1056
    %1594 = vmatpush2.bf16.msra.mxu0 %v1055
    %1595 = vmatprep.subr.bf16.mxu0 %v1052
    %1596 = vmatpush2.bf16.msra.mxu0 %v1051
    %1597 = vmatprep.subr.bf16.mxu0 %v1048
    %1598 = vmatpush2.bf16.msra.mxu0 %v1047
    %1599 = vmatprep.subr.bf16.mxu0 %v1044
    %1600 = vmatpush2.bf16.msra.mxu0 %v1043
    %1601 = vmatprep.subr.bf16.mxu0 %v1040
    %1602 = vmatpush2.bf16.msra.mxu0 %v1039
    %1603 = vmatprep.mubr.bf16.mxu0 %v1570
    %1604 = vmatmul.mubr.bf16.gmra.mxu0 %v1569
    %v1605 = vpop.f32.mrf.mxu0
    %v1606 = vadd.f32 %v798, %v1605
    %v1607 = vpop.f32.mrf.mxu0
    %v1608 = vadd.f32 %v802, %v1607
    %v1609 = vpop.f32.mrf.mxu0
    %v1610 = vpop.f32.mrf.mxu0
    %1611 = vdwg.mxu0
    %1612 = vmatprep.subr.bf16.mxu0 %v1038
    %1613 = vmatpush1.bf16.msra.mxu0 %v1037
    %1614 = vmatprep.subr.bf16.mxu0 %v1034
    %1615 = vmatpush1.bf16.msra.mxu0 %v1033
    %1616 = vmatprep.subr.bf16.mxu0 %v1030
    %1617 = vmatpush1.bf16.msra.mxu0 %v1029
    %1618 = vmatprep.subr.bf16.mxu0 %v1026
    %1619 = vmatpush1.bf16.msra.mxu0 %v1025
    %1620 = vmatprep.subr.bf16.mxu0 %v1022
    %1621 = vmatpush1.bf16.msra.mxu0 %v1021
    %1622 = vmatprep.subr.bf16.mxu0 %v1018
    %1623 = vmatpush1.bf16.msra.mxu0 %v1017
    %1624 = vmatprep.subr.bf16.mxu0 %v1014
    %1625 = vmatpush1.bf16.msra.mxu0 %v1013
    %1626 = vmatprep.subr.bf16.mxu0 %v1010
    %1627 = vmatpush1.bf16.msra.mxu0 %v1009
    %1628 = vmatprep.subr.bf16.mxu0 %v1070
    %1629 = vmatpush2.bf16.msra.mxu0 %v1069
    %1630 = vmatprep.subr.bf16.mxu0 %v1066
    %1631 = vmatpush2.bf16.msra.mxu0 %v1065
    %1632 = vmatprep.subr.bf16.mxu0 %v1062
    %1633 = vmatpush2.bf16.msra.mxu0 %v1061
    %1634 = vmatprep.subr.bf16.mxu0 %v1058
    %1635 = vmatpush2.bf16.msra.mxu0 %v1057
    %1636 = vmatprep.subr.bf16.mxu0 %v1054
    %1637 = vmatpush2.bf16.msra.mxu0 %v1053
    %1638 = vmatprep.subr.bf16.mxu0 %v1050
    %1639 = vmatpush2.bf16.msra.mxu0 %v1049
    %1640 = vmatprep.subr.bf16.mxu0 %v1046
    %1641 = vmatpush2.bf16.msra.mxu0 %v1045
    %1642 = vmatprep.subr.bf16.mxu0 %v1042
    %1643 = vmatpush2.bf16.msra.mxu0 %v1041
    %1644 = vmatprep.mubr.bf16.mxu0 %v1570
    %1645 = vmatmul.mubr.bf16.gmra.mxu0 %v1569
    %v1646 = vpop.f32.mrf.mxu0
    %v1647 = vadd.f32 %v806, %v1646
    %v1648 = vpop.f32.mrf.mxu0
    %v1649 = vadd.f32 %v810, %v1648
    %v1650 = vpop.f32.mrf.mxu0
    %v1651 = vpop.f32.mrf.mxu0
    %1652 = vdwg.mxu0
    %v1653 = vxor.u32 %v1606, 2147483648
    %v1654 = vmul.f32 %v1653, 1.442695
    %v1655 = vpow.pop %v1654
    %v1656 = vadd.f32 %v1655, 1.0
    %v1657 = vrcp.pop %v1656
    %v1658 = vmul.f32 1.0, %v1657
    %v1659 = vxor.u32 %v1608, 2147483648
    %v1660 = vmul.f32 %v1659, 1.442695
    %v1661 = vpow.pop %v1660
    %v1662 = vadd.f32 %v1661, 1.0
    %v1663 = vrcp.pop %v1662
    %v1664 = vmul.f32 1.0, %v1663
    %v1665 = vtanh.pop %v1647
    %v1666 = vxor.u32 %v1649, 2147483648
    %v1667 = vmul.f32 %v1666, 1.442695
    %v1668 = vpow.pop %v1667
    %v1669 = vadd.f32 %v1668, 1.0
    %v1670 = vrcp.pop %v1669
    %v1671 = vmul.f32 1.0, %v1670
    %v1672 = vmul.f32 %v1664, %v1456
    %v1673 = vmul.f32 %v1658, %v1665
    %v1674 = vadd.f32 %v1672, %v1673
    %v1675 = vtanh.pop %v1674
    %v1676 = vmul.f32 %v1671, %v1675
    %1677 = vmatprep.subr.bf16.mxu0 %v647
    %1678 = vmatpush1.bf16.msra.mxu0 %v646
    %1679 = vmatprep.subr.bf16.mxu0 %v643
    %1680 = vmatpush1.bf16.msra.mxu0 %v642
    %1681 = vmatprep.subr.bf16.mxu0 %v639
    %1682 = vmatpush1.bf16.msra.mxu0 %v638
    %1683 = vmatprep.subr.bf16.mxu0 %v635
    %1684 = vmatpush1.bf16.msra.mxu0 %v634
    %1685 = vmatprep.subr.bf16.mxu0 %v631
    %1686 = vmatpush1.bf16.msra.mxu0 %v630
    %1687 = vmatprep.subr.bf16.mxu0 %v627
    %1688 = vmatpush1.bf16.msra.mxu0 %v626
    %1689 = vmatprep.subr.bf16.mxu0 %v623
    %1690 = vmatpush1.bf16.msra.mxu0 %v622
    %1691 = vmatprep.subr.bf16.mxu0 %v619
    %1692 = vmatpush1.bf16.msra.mxu0 %v618
    %1693 = vmatprep.subr.bf16.mxu0 0
    %1694 = vmatpush2.bf16.msra.mxu0 0
    %1695 = vmatprep.subr.bf16.mxu0 0
    %1696 = vmatpush2.bf16.msra.mxu0 0
    %1697 = vmatprep.subr.bf16.mxu0 0
    %1698 = vmatpush2.bf16.msra.mxu0 0
    %1699 = vmatprep.subr.bf16.mxu0 0
    %1700 = vmatpush2.bf16.msra.mxu0 0
    %1701 = vmatprep.subr.bf16.mxu0 0
    %1702 = vmatpush2.bf16.msra.mxu0 0
    %1703 = vmatprep.subr.bf16.mxu0 0
    %1704 = vmatpush2.bf16.msra.mxu0 0
    %1705 = vmatprep.subr.bf16.mxu0 0
    %1706 = vmatpush2.bf16.msra.mxu0 0
    %1707 = vmatprep.subr.bf16.mxu0 0
    %1708 = vmatpush2.bf16.msra.mxu0 0
    %1709 = vmatprep.mubr.bf16.mxu0 0
    %1710 = vmatmul.mubr.bf16.gmra.mxu0 %v1569
    %v1711 = vpop.f32.mrf.mxu0
    %v1712 = vadd.f32 0.0, %v1711
    %v1713 = vpop.f32.mrf.mxu0
    %v1714 = vadd.f32 0.0, %v1713
    %v1715 = vpop.f32.mrf.mxu0
    %v1716 = vpop.f32.mrf.mxu0
    %1717 = vdwg.mxu0
    %1718 = vmatprep.subr.bf16.mxu0 %v649
    %1719 = vmatpush1.bf16.msra.mxu0 %v648
    %1720 = vmatprep.subr.bf16.mxu0 %v645
    %1721 = vmatpush1.bf16.msra.mxu0 %v644
    %1722 = vmatprep.subr.bf16.mxu0 %v641
    %1723 = vmatpush1.bf16.msra.mxu0 %v640
    %1724 = vmatprep.subr.bf16.mxu0 %v637
    %1725 = vmatpush1.bf16.msra.mxu0 %v636
    %1726 = vmatprep.subr.bf16.mxu0 %v633
    %1727 = vmatpush1.bf16.msra.mxu0 %v632
    %1728 = vmatprep.subr.bf16.mxu0 %v629
    %1729 = vmatpush1.bf16.msra.mxu0 %v628
    %1730 = vmatprep.subr.bf16.mxu0 %v625
    %1731 = vmatpush1.bf16.msra.mxu0 %v624
    %1732 = vmatprep.subr.bf16.mxu0 %v621
    %1733 = vmatpush1.bf16.msra.mxu0 %v620
    %1734 = vmatprep.subr.bf16.mxu0 0
    %1735 = vmatpush2.bf16.msra.mxu0 0
    %1736 = vmatprep.subr.bf16.mxu0 0
    %1737 = vmatpush2.bf16.msra.mxu0 0
    %1738 = vmatprep.subr.bf16.mxu0 0
    %1739 = vmatpush2.bf16.msra.mxu0 0
    %1740 = vmatprep.subr.bf16.mxu0 0
    %1741 = vmatpush2.bf16.msra.mxu0 0
    %1742 = vmatprep.subr.bf16.mxu0 0
    %1743 = vmatpush2.bf16.msra.mxu0 0
    %1744 = vmatprep.subr.bf16.mxu0 0
    %1745 = vmatpush2.bf16.msra.mxu0 0
    %1746 = vmatprep.subr.bf16.mxu0 0
    %1747 = vmatpush2.bf16.msra.mxu0 0
    %1748 = vmatprep.subr.bf16.mxu0 0
    %1749 = vmatpush2.bf16.msra.mxu0 0
    %1750 = vmatprep.mubr.bf16.mxu0 0
    %1751 = vmatmul.mubr.bf16.gmra.mxu0 %v1569
    %v1752 = vpop.f32.mrf.mxu0
    %v1753 = vadd.f32 0.0, %v1752
    %v1754 = vpop.f32.mrf.mxu0
    %v1755 = vadd.f32 0.0, %v1754
    %v1756 = vpop.f32.mrf.mxu0
    %v1757 = vpop.f32.mrf.mxu0
    %1758 = vdwg.mxu0
    %v1759 = vadd.f32 %v328, %v1712
    %v1760 = vadd.f32 %v330, %v1714
    %v1761 = vadd.f32 %v401, %v1753
    %v1762 = vadd.f32 %v403, %v1755
    %v1763 = vxor.u32 %v1759, 2147483648
    %v1764 = vmul.f32 %v1763, 1.442695
    %v1765 = vpow.pop %v1764
    %v1766 = vadd.f32 %v1765, 1.0
    %v1767 = vrcp.pop %v1766
    %v1768 = vmul.f32 1.0, %v1767
    %v1769 = vxor.u32 %v1760, 2147483648
    %v1770 = vmul.f32 %v1769, 1.442695
    %v1771 = vpow.pop %v1770
    %v1772 = vadd.f32 %v1771, 1.0
    %v1773 = vrcp.pop %v1772
    %v1774 = vmul.f32 1.0, %v1773
    %v1775 = vtanh.pop %v1761
    %v1776 = vxor.u32 %v1762, 2147483648
    %v1777 = vmul.f32 %v1776, 1.442695
    %v1778 = vpow.pop %v1777
    %v1779 = vadd.f32 %v1778, 1.0
    %v1780 = vrcp.pop %v1779
    %v1781 = vmul.f32 1.0, %v1780
    %v1782 = vmul.f32 %v1774, %v1566
    %v1783 = vmul.f32 %v1768, %v1775
    %v1784 = vadd.f32 %v1782, %v1783
    %v1785 = vtanh.pop %v1784
    %v1786 = vmul.f32 %v1781, %v1785
    %v1787 = vpack.c.bf16 %v1786, %v1786
    %v1788 = vpack.c.bf16 %v1676, %v1676
    %1789 = vmatprep.subr.bf16.mxu0 %v1036
    %1790 = vmatpush1.bf16.msra.mxu0 %v1035
    %1791 = vmatprep.subr.bf16.mxu0 %v1032
    %1792 = vmatpush1.bf16.msra.mxu0 %v1031
    %1793 = vmatprep.subr.bf16.mxu0 %v1028
    %1794 = vmatpush1.bf16.msra.mxu0 %v1027
    %1795 = vmatprep.subr.bf16.mxu0 %v1024
    %1796 = vmatpush1.bf16.msra.mxu0 %v1023
    %1797 = vmatprep.subr.bf16.mxu0 %v1020
    %1798 = vmatpush1.bf16.msra.mxu0 %v1019
    %1799 = vmatprep.subr.bf16.mxu0 %v1016
    %1800 = vmatpush1.bf16.msra.mxu0 %v1015
    %1801 = vmatprep.subr.bf16.mxu0 %v1012
    %1802 = vmatpush1.bf16.msra.mxu0 %v1011
    %1803 = vmatprep.subr.bf16.mxu0 %v1008
    %1804 = vmatpush1.bf16.msra.mxu0 %v1007
    %1805 = vmatprep.subr.bf16.mxu0 %v1068
    %1806 = vmatpush2.bf16.msra.mxu0 %v1067
    %1807 = vmatprep.subr.bf16.mxu0 %v1064
    %1808 = vmatpush2.bf16.msra.mxu0 %v1063
    %1809 = vmatprep.subr.bf16.mxu0 %v1060
    %1810 = vmatpush2.bf16.msra.mxu0 %v1059
    %1811 = vmatprep.subr.bf16.mxu0 %v1056
    %1812 = vmatpush2.bf16.msra.mxu0 %v1055
    %1813 = vmatprep.subr.bf16.mxu0 %v1052
    %1814 = vmatpush2.bf16.msra.mxu0 %v1051
    %1815 = vmatprep.subr.bf16.mxu0 %v1048
    %1816 = vmatpush2.bf16.msra.mxu0 %v1047
    %1817 = vmatprep.subr.bf16.mxu0 %v1044
    %1818 = vmatpush2.bf16.msra.mxu0 %v1043
    %1819 = vmatprep.subr.bf16.mxu0 %v1040
    %1820 = vmatpush2.bf16.msra.mxu0 %v1039
    %1821 = vmatprep.mubr.bf16.mxu0 %v1788
    %1822 = vmatmul.mubr.bf16.gmra.mxu0 %v1787
    %v1823 = vpop.f32.mrf.mxu0
    %v1824 = vadd.f32 %v798, %v1823
    %v1825 = vpop.f32.mrf.mxu0
    %v1826 = vadd.f32 %v802, %v1825
    %v1827 = vpop.f32.mrf.mxu0
    %v1828 = vpop.f32.mrf.mxu0
    %1829 = vdwg.mxu0
    %1830 = vmatprep.subr.bf16.mxu0 %v1038
    %1831 = vmatpush1.bf16.msra.mxu0 %v1037
    %1832 = vmatprep.subr.bf16.mxu0 %v1034
    %1833 = vmatpush1.bf16.msra.mxu0 %v1033
    %1834 = vmatprep.subr.bf16.mxu0 %v1030
    %1835 = vmatpush1.bf16.msra.mxu0 %v1029
    %1836 = vmatprep.subr.bf16.mxu0 %v1026
    %1837 = vmatpush1.bf16.msra.mxu0 %v1025
    %1838 = vmatprep.subr.bf16.mxu0 %v1022
    %1839 = vmatpush1.bf16.msra.mxu0 %v1021
    %1840 = vmatprep.subr.bf16.mxu0 %v1018
    %1841 = vmatpush1.bf16.msra.mxu0 %v1017
    %1842 = vmatprep.subr.bf16.mxu0 %v1014
    %1843 = vmatpush1.bf16.msra.mxu0 %v1013
    %1844 = vmatprep.subr.bf16.mxu0 %v1010
    %1845 = vmatpush1.bf16.msra.mxu0 %v1009
    %1846 = vmatprep.subr.bf16.mxu0 %v1070
    %1847 = vmatpush2.bf16.msra.mxu0 %v1069
    %1848 = vmatprep.subr.bf16.mxu0 %v1066
    %1849 = vmatpush2.bf16.msra.mxu0 %v1065
    %1850 = vmatprep.subr.bf16.mxu0 %v1062
    %1851 = vmatpush2.bf16.msra.mxu0 %v1061
    %1852 = vmatprep.subr.bf16.mxu0 %v1058
    %1853 = vmatpush2.bf16.msra.mxu0 %v1057
    %1854 = vmatprep.subr.bf16.mxu0 %v1054
    %1855 = vmatpush2.bf16.msra.mxu0 %v1053
    %1856 = vmatprep.subr.bf16.mxu0 %v1050
    %1857 = vmatpush2.bf16.msra.mxu0 %v1049
    %1858 = vmatprep.subr.bf16.mxu0 %v1046
    %1859 = vmatpush2.bf16.msra.mxu0 %v1045
    %1860 = vmatprep.subr.bf16.mxu0 %v1042
    %1861 = vmatpush2.bf16.msra.mxu0 %v1041
    %1862 = vmatprep.mubr.bf16.mxu0 %v1788
    %1863 = vmatmul.mubr.bf16.gmra.mxu0 %v1787
    %v1864 = vpop.f32.mrf.mxu0
    %v1865 = vadd.f32 %v806, %v1864
    %v1866 = vpop.f32.mrf.mxu0
    %v1867 = vadd.f32 %v810, %v1866
    %v1868 = vpop.f32.mrf.mxu0
    %v1869 = vpop.f32.mrf.mxu0
    %1870 = vdwg.mxu0
    %v1871 = vxor.u32 %v1824, 2147483648
    %v1872 = vmul.f32 %v1871, 1.442695
    %v1873 = vpow.pop %v1872
    %v1874 = vadd.f32 %v1873, 1.0
    %v1875 = vrcp.pop %v1874
    %v1876 = vmul.f32 1.0, %v1875
    %v1877 = vxor.u32 %v1826, 2147483648
    %v1878 = vmul.f32 %v1877, 1.442695
    %v1879 = vpow.pop %v1878
    %v1880 = vadd.f32 %v1879, 1.0
    %v1881 = vrcp.pop %v1880
    %v1882 = vmul.f32 1.0, %v1881
    %v1883 = vtanh.pop %v1865
    %v1884 = vxor.u32 %v1867, 2147483648
    %v1885 = vmul.f32 %v1884, 1.442695
    %v1886 = vpow.pop %v1885
    %v1887 = vadd.f32 %v1886, 1.0
    %v1888 = vrcp.pop %v1887
    %v1889 = vmul.f32 1.0, %v1888
    %v1890 = vmul.f32 %v1882, %v1674
    %v1891 = vmul.f32 %v1876, %v1883
    %v1892 = vadd.f32 %v1890, %v1891
    %v1893 = vtanh.pop %v1892
    %v1894 = vmul.f32 %v1889, %v1893
    %1895 = vmatprep.subr.bf16.mxu0 %v647
    %1896 = vmatpush1.bf16.msra.mxu0 %v646
    %1897 = vmatprep.subr.bf16.mxu0 %v643
    %1898 = vmatpush1.bf16.msra.mxu0 %v642
    %1899 = vmatprep.subr.bf16.mxu0 %v639
    %1900 = vmatpush1.bf16.msra.mxu0 %v638
    %1901 = vmatprep.subr.bf16.mxu0 %v635
    %1902 = vmatpush1.bf16.msra.mxu0 %v634
    %1903 = vmatprep.subr.bf16.mxu0 %v631
    %1904 = vmatpush1.bf16.msra.mxu0 %v630
    %1905 = vmatprep.subr.bf16.mxu0 %v627
    %1906 = vmatpush1.bf16.msra.mxu0 %v626
    %1907 = vmatprep.subr.bf16.mxu0 %v623
    %1908 = vmatpush1.bf16.msra.mxu0 %v622
    %1909 = vmatprep.subr.bf16.mxu0 %v619
    %1910 = vmatpush1.bf16.msra.mxu0 %v618
    %1911 = vmatprep.subr.bf16.mxu0 0
    %1912 = vmatpush2.bf16.msra.mxu0 0
    %1913 = vmatprep.subr.bf16.mxu0 0
    %1914 = vmatpush2.bf16.msra.mxu0 0
    %1915 = vmatprep.subr.bf16.mxu0 0
    %1916 = vmatpush2.bf16.msra.mxu0 0
    %1917 = vmatprep.subr.bf16.mxu0 0
    %1918 = vmatpush2.bf16.msra.mxu0 0
    %1919 = vmatprep.subr.bf16.mxu0 0
    %1920 = vmatpush2.bf16.msra.mxu0 0
    %1921 = vmatprep.subr.bf16.mxu0 0
    %1922 = vmatpush2.bf16.msra.mxu0 0
    %1923 = vmatprep.subr.bf16.mxu0 0
    %1924 = vmatpush2.bf16.msra.mxu0 0
    %1925 = vmatprep.subr.bf16.mxu0 0
    %1926 = vmatpush2.bf16.msra.mxu0 0
    %1927 = vmatprep.mubr.bf16.mxu0 0
    %1928 = vmatmul.mubr.bf16.gmra.mxu0 %v1787
    %v1929 = vpop.f32.mrf.mxu0
    %v1930 = vadd.f32 0.0, %v1929
    %v1931 = vpop.f32.mrf.mxu0
    %v1932 = vadd.f32 0.0, %v1931
    %v1933 = vpop.f32.mrf.mxu0
    %v1934 = vpop.f32.mrf.mxu0
    %1935 = vdwg.mxu0
    %1936 = vmatprep.subr.bf16.mxu0 %v649
    %1937 = vmatpush1.bf16.msra.mxu0 %v648
    %1938 = vmatprep.subr.bf16.mxu0 %v645
    %1939 = vmatpush1.bf16.msra.mxu0 %v644
    %1940 = vmatprep.subr.bf16.mxu0 %v641
    %1941 = vmatpush1.bf16.msra.mxu0 %v640
    %1942 = vmatprep.subr.bf16.mxu0 %v637
    %1943 = vmatpush1.bf16.msra.mxu0 %v636
    %1944 = vmatprep.subr.bf16.mxu0 %v633
    %1945 = vmatpush1.bf16.msra.mxu0 %v632
    %1946 = vmatprep.subr.bf16.mxu0 %v629
    %1947 = vmatpush1.bf16.msra.mxu0 %v628
    %1948 = vmatprep.subr.bf16.mxu0 %v625
    %1949 = vmatpush1.bf16.msra.mxu0 %v624
    %1950 = vmatprep.subr.bf16.mxu0 %v621
    %1951 = vmatpush1.bf16.msra.mxu0 %v620
    %1952 = vmatprep.subr.bf16.mxu0 0
    %1953 = vmatpush2.bf16.msra.mxu0 0
    %1954 = vmatprep.subr.bf16.mxu0 0
    %1955 = vmatpush2.bf16.msra.mxu0 0
    %1956 = vmatprep.subr.bf16.mxu0 0
    %1957 = vmatpush2.bf16.msra.mxu0 0
    %1958 = vmatprep.subr.bf16.mxu0 0
    %1959 = vmatpush2.bf16.msra.mxu0 0
    %1960 = vmatprep.subr.bf16.mxu0 0
    %1961 = vmatpush2.bf16.msra.mxu0 0
    %1962 = vmatprep.subr.bf16.mxu0 0
    %1963 = vmatpush2.bf16.msra.mxu0 0
    %1964 = vmatprep.subr.bf16.mxu0 0
    %1965 = vmatpush2.bf16.msra.mxu0 0
    %1966 = vmatprep.subr.bf16.mxu0 0
    %1967 = vmatpush2.bf16.msra.mxu0 0
    %1968 = vmatprep.mubr.bf16.mxu0 0
    %1969 = vmatmul.mubr.bf16.gmra.mxu0 %v1787
    %v1970 = vpop.f32.mrf.mxu0
    %v1971 = vadd.f32 0.0, %v1970
    %v1972 = vpop.f32.mrf.mxu0
    %v1973 = vadd.f32 0.0, %v1972
    %v1974 = vpop.f32.mrf.mxu0
    %v1975 = vpop.f32.mrf.mxu0
    %1976 = vdwg.mxu0
    %v1977 = vadd.f32 %v334, %v1930
    %v1978 = vadd.f32 %v336, %v1932
    %v1979 = vadd.f32 %v407, %v1971
    %v1980 = vadd.f32 %v409, %v1973
    %v1981 = vxor.u32 %v1977, 2147483648
    %v1982 = vmul.f32 %v1981, 1.442695
    %v1983 = vpow.pop %v1982
    %v1984 = vadd.f32 %v1983, 1.0
    %v1985 = vrcp.pop %v1984
    %v1986 = vmul.f32 1.0, %v1985
    %v1987 = vxor.u32 %v1978, 2147483648
    %v1988 = vmul.f32 %v1987, 1.442695
    %v1989 = vpow.pop %v1988
    %v1990 = vadd.f32 %v1989, 1.0
    %v1991 = vrcp.pop %v1990
    %v1992 = vmul.f32 1.0, %v1991
    %v1993 = vtanh.pop %v1979
    %v1994 = vxor.u32 %v1980, 2147483648
    %v1995 = vmul.f32 %v1994, 1.442695
    %v1996 = vpow.pop %v1995
    %v1997 = vadd.f32 %v1996, 1.0
    %v1998 = vrcp.pop %v1997
    %v1999 = vmul.f32 1.0, %v1998
    %v2000 = vmul.f32 %v1992, %v1784
    %v2001 = vmul.f32 %v1986, %v1993
    %v2002 = vadd.f32 %v2000, %v2001
    %v2003 = vtanh.pop %v2002
    %v2004 = vmul.f32 %v1999, %v2003
    %v2005 = vpack.c.bf16 %v2004, %v2004
    %v2006 = vpack.c.bf16 %v1894, %v1894
    %2007 = vmatprep.subr.bf16.mxu0 %v1036
    %2008 = vmatpush1.bf16.msra.mxu0 %v1035
    %2009 = vmatprep.subr.bf16.mxu0 %v1032
    %2010 = vmatpush1.bf16.msra.mxu0 %v1031
    %2011 = vmatprep.subr.bf16.mxu0 %v1028
    %2012 = vmatpush1.bf16.msra.mxu0 %v1027
    %2013 = vmatprep.subr.bf16.mxu0 %v1024
    %2014 = vmatpush1.bf16.msra.mxu0 %v1023
    %2015 = vmatprep.subr.bf16.mxu0 %v1020
    %2016 = vmatpush1.bf16.msra.mxu0 %v1019
    %2017 = vmatprep.subr.bf16.mxu0 %v1016
    %2018 = vmatpush1.bf16.msra.mxu0 %v1015
    %2019 = vmatprep.subr.bf16.mxu0 %v1012
    %2020 = vmatpush1.bf16.msra.mxu0 %v1011
    %2021 = vmatprep.subr.bf16.mxu0 %v1008
    %2022 = vmatpush1.bf16.msra.mxu0 %v1007
    %2023 = vmatprep.subr.bf16.mxu0 %v1068
    %2024 = vmatpush2.bf16.msra.mxu0 %v1067
    %2025 = vmatprep.subr.bf16.mxu0 %v1064
    %2026 = vmatpush2.bf16.msra.mxu0 %v1063
    %2027 = vmatprep.subr.bf16.mxu0 %v1060
    %2028 = vmatpush2.bf16.msra.mxu0 %v1059
    %2029 = vmatprep.subr.bf16.mxu0 %v1056
    %2030 = vmatpush2.bf16.msra.mxu0 %v1055
    %2031 = vmatprep.subr.bf16.mxu0 %v1052
    %2032 = vmatpush2.bf16.msra.mxu0 %v1051
    %2033 = vmatprep.subr.bf16.mxu0 %v1048
    %2034 = vmatpush2.bf16.msra.mxu0 %v1047
    %2035 = vmatprep.subr.bf16.mxu0 %v1044
    %2036 = vmatpush2.bf16.msra.mxu0 %v1043
    %2037 = vmatprep.subr.bf16.mxu0 %v1040
    %2038 = vmatpush2.bf16.msra.mxu0 %v1039
    %2039 = vmatprep.mubr.bf16.mxu0 %v2006
    %2040 = vmatmul.mubr.bf16.gmra.mxu0 %v2005
    %v2041 = vpop.f32.mrf.mxu0
    %v2042 = vadd.f32 %v798, %v2041
    %v2043 = vpop.f32.mrf.mxu0
    %v2044 = vadd.f32 %v802, %v2043
    %v2045 = vpop.f32.mrf.mxu0
    %v2046 = vpop.f32.mrf.mxu0
    %2047 = vdwg.mxu0
    %2048 = vmatprep.subr.bf16.mxu0 %v1038
    %2049 = vmatpush1.bf16.msra.mxu0 %v1037
    %2050 = vmatprep.subr.bf16.mxu0 %v1034
    %2051 = vmatpush1.bf16.msra.mxu0 %v1033
    %2052 = vmatprep.subr.bf16.mxu0 %v1030
    %2053 = vmatpush1.bf16.msra.mxu0 %v1029
    %2054 = vmatprep.subr.bf16.mxu0 %v1026
    %2055 = vmatpush1.bf16.msra.mxu0 %v1025
    %2056 = vmatprep.subr.bf16.mxu0 %v1022
    %2057 = vmatpush1.bf16.msra.mxu0 %v1021
    %2058 = vmatprep.subr.bf16.mxu0 %v1018
    %2059 = vmatpush1.bf16.msra.mxu0 %v1017
    %2060 = vmatprep.subr.bf16.mxu0 %v1014
    %2061 = vmatpush1.bf16.msra.mxu0 %v1013
    %2062 = vmatprep.subr.bf16.mxu0 %v1010
    %2063 = vmatpush1.bf16.msra.mxu0 %v1009
    %2064 = vmatprep.subr.bf16.mxu0 %v1070
    %2065 = vmatpush2.bf16.msra.mxu0 %v1069
    %2066 = vmatprep.subr.bf16.mxu0 %v1066
    %2067 = vmatpush2.bf16.msra.mxu0 %v1065
    %2068 = vmatprep.subr.bf16.mxu0 %v1062
    %2069 = vmatpush2.bf16.msra.mxu0 %v1061
    %2070 = vmatprep.subr.bf16.mxu0 %v1058
    %2071 = vmatpush2.bf16.msra.mxu0 %v1057
    %2072 = vmatprep.subr.bf16.mxu0 %v1054
    %2073 = vmatpush2.bf16.msra.mxu0 %v1053
    %2074 = vmatprep.subr.bf16.mxu0 %v1050
    %2075 = vmatpush2.bf16.msra.mxu0 %v1049
    %2076 = vmatprep.subr.bf16.mxu0 %v1046
    %2077 = vmatpush2.bf16.msra.mxu0 %v1045
    %2078 = vmatprep.subr.bf16.mxu0 %v1042
    %2079 = vmatpush2.bf16.msra.mxu0 %v1041
    %2080 = vmatprep.mubr.bf16.mxu0 %v2006
    %2081 = vmatmul.mubr.bf16.gmra.mxu0 %v2005
    %v2082 = vpop.f32.mrf.mxu0
    %v2083 = vadd.f32 %v806, %v2082
    %v2084 = vpop.f32.mrf.mxu0
    %v2085 = vadd.f32 %v810, %v2084
    %v2086 = vpop.f32.mrf.mxu0
    %v2087 = vpop.f32.mrf.mxu0
    %2088 = vdwg.mxu0
    %v2089 = vxor.u32 %v2042, 2147483648
    %v2090 = vmul.f32 %v2089, 1.442695
    %v2091 = vpow.pop %v2090
    %v2092 = vadd.f32 %v2091, 1.0
    %v2093 = vrcp.pop %v2092
    %v2094 = vmul.f32 1.0, %v2093
    %v2095 = vxor.u32 %v2044, 2147483648
    %v2096 = vmul.f32 %v2095, 1.442695
    %v2097 = vpow.pop %v2096
    %v2098 = vadd.f32 %v2097, 1.0
    %v2099 = vrcp.pop %v2098
    %v2100 = vmul.f32 1.0, %v2099
    %v2101 = vtanh.pop %v2083
    %v2102 = vxor.u32 %v2085, 2147483648
    %v2103 = vmul.f32 %v2102, 1.442695
    %v2104 = vpow.pop %v2103
    %v2105 = vadd.f32 %v2104, 1.0
    %v2106 = vrcp.pop %v2105
    %v2107 = vmul.f32 1.0, %v2106
    %v2108 = vmul.f32 %v2100, %v1892
    %v2109 = vmul.f32 %v2094, %v2101
    %v2110 = vadd.f32 %v2108, %v2109
    %v2111 = vtanh.pop %v2110
    %v2112 = vmul.f32 %v2107, %v2111
    %2113 = vmatprep.subr.bf16.mxu0 %v647
    %2114 = vmatpush1.bf16.msra.mxu0 %v646
    %2115 = vmatprep.subr.bf16.mxu0 %v643
    %2116 = vmatpush1.bf16.msra.mxu0 %v642
    %2117 = vmatprep.subr.bf16.mxu0 %v639
    %2118 = vmatpush1.bf16.msra.mxu0 %v638
    %2119 = vmatprep.subr.bf16.mxu0 %v635
    %2120 = vmatpush1.bf16.msra.mxu0 %v634
    %2121 = vmatprep.subr.bf16.mxu0 %v631
    %2122 = vmatpush1.bf16.msra.mxu0 %v630
    %2123 = vmatprep.subr.bf16.mxu0 %v627
    %2124 = vmatpush1.bf16.msra.mxu0 %v626
    %2125 = vmatprep.subr.bf16.mxu0 %v623
    %2126 = vmatpush1.bf16.msra.mxu0 %v622
    %2127 = vmatprep.subr.bf16.mxu0 %v619
    %2128 = vmatpush1.bf16.msra.mxu0 %v618
    %2129 = vmatprep.subr.bf16.mxu0 0
    %2130 = vmatpush2.bf16.msra.mxu0 0
    %2131 = vmatprep.subr.bf16.mxu0 0
    %2132 = vmatpush2.bf16.msra.mxu0 0
    %2133 = vmatprep.subr.bf16.mxu0 0
    %2134 = vmatpush2.bf16.msra.mxu0 0
    %2135 = vmatprep.subr.bf16.mxu0 0
    %2136 = vmatpush2.bf16.msra.mxu0 0
    %2137 = vmatprep.subr.bf16.mxu0 0
    %2138 = vmatpush2.bf16.msra.mxu0 0
    %2139 = vmatprep.subr.bf16.mxu0 0
    %2140 = vmatpush2.bf16.msra.mxu0 0
    %2141 = vmatprep.subr.bf16.mxu0 0
    %2142 = vmatpush2.bf16.msra.mxu0 0
    %2143 = vmatprep.subr.bf16.mxu0 0
    %2144 = vmatpush2.bf16.msra.mxu0 0
    %2145 = vmatprep.mubr.bf16.mxu0 0
    %2146 = vmatmul.mubr.bf16.gmra.mxu0 %v2005
    %v2147 = vpop.f32.mrf.mxu0
    %v2148 = vadd.f32 0.0, %v2147
    %v2149 = vpop.f32.mrf.mxu0
    %v2150 = vadd.f32 0.0, %v2149
    %v2151 = vpop.f32.mrf.mxu0
    %v2152 = vpop.f32.mrf.mxu0
    %2153 = vdwg.mxu0
    %2154 = vmatprep.subr.bf16.mxu0 %v649
    %2155 = vmatpush1.bf16.msra.mxu0 %v648
    %2156 = vmatprep.subr.bf16.mxu0 %v645
    %2157 = vmatpush1.bf16.msra.mxu0 %v644
    %2158 = vmatprep.subr.bf16.mxu0 %v641
    %2159 = vmatpush1.bf16.msra.mxu0 %v640
    %2160 = vmatprep.subr.bf16.mxu0 %v637
    %2161 = vmatpush1.bf16.msra.mxu0 %v636
    %2162 = vmatprep.subr.bf16.mxu0 %v633
    %2163 = vmatpush1.bf16.msra.mxu0 %v632
    %2164 = vmatprep.subr.bf16.mxu0 %v629
    %2165 = vmatpush1.bf16.msra.mxu0 %v628
    %2166 = vmatprep.subr.bf16.mxu0 %v625
    %2167 = vmatpush1.bf16.msra.mxu0 %v624
    %2168 = vmatprep.subr.bf16.mxu0 %v621
    %2169 = vmatpush1.bf16.msra.mxu0 %v620
    %2170 = vmatprep.subr.bf16.mxu0 0
    %2171 = vmatpush2.bf16.msra.mxu0 0
    %2172 = vmatprep.subr.bf16.mxu0 0
    %2173 = vmatpush2.bf16.msra.mxu0 0
    %2174 = vmatprep.subr.bf16.mxu0 0
    %2175 = vmatpush2.bf16.msra.mxu0 0
    %2176 = vmatprep.subr.bf16.mxu0 0
    %2177 = vmatpush2.bf16.msra.mxu0 0
    %2178 = vmatprep.subr.bf16.mxu0 0
    %2179 = vmatpush2.bf16.msra.mxu0 0
    %2180 = vmatprep.subr.bf16.mxu0 0
    %2181 = vmatpush2.bf16.msra.mxu0 0
    %2182 = vmatprep.subr.bf16.mxu0 0
    %2183 = vmatpush2.bf16.msra.mxu0 0
    %2184 = vmatprep.subr.bf16.mxu0 0
    %2185 = vmatpush2.bf16.msra.mxu0 0
    %2186 = vmatprep.mubr.bf16.mxu0 0
    %2187 = vmatmul.mubr.bf16.gmra.mxu0 %v2005
    %v2188 = vpop.f32.mrf.mxu0
    %v2189 = vadd.f32 0.0, %v2188
    %v2190 = vpop.f32.mrf.mxu0
    %v2191 = vadd.f32 0.0, %v2190
    %v2192 = vpop.f32.mrf.mxu0
    %v2193 = vpop.f32.mrf.mxu0
    %2194 = vdwg.mxu0
    %v2195 = vadd.f32 %v338, %v2148
    %v2196 = vadd.f32 %v340, %v2150
    %v2197 = vadd.f32 %v411, %v2189
    %v2198 = vadd.f32 %v413, %v2191
    %v2199 = vxor.u32 %v2195, 2147483648
    %v2200 = vmul.f32 %v2199, 1.442695
    %v2201 = vpow.pop %v2200
    %v2202 = vadd.f32 %v2201, 1.0
    %v2203 = vrcp.pop %v2202
    %v2204 = vmul.f32 1.0, %v2203
    %v2205 = vxor.u32 %v2196, 2147483648
    %v2206 = vmul.f32 %v2205, 1.442695
    %v2207 = vpow.pop %v2206
    %v2208 = vadd.f32 %v2207, 1.0
    %v2209 = vrcp.pop %v2208
    %v2210 = vmul.f32 1.0, %v2209
    %v2211 = vtanh.pop %v2197
    %v2212 = vxor.u32 %v2198, 2147483648
    %v2213 = vmul.f32 %v2212, 1.442695
    %v2214 = vpow.pop %v2213
    %v2215 = vadd.f32 %v2214, 1.0
    %v2216 = vrcp.pop %v2215
    %v2217 = vmul.f32 1.0, %v2216
    %v2218 = vmul.f32 %v2210, %v2002
    %v2219 = vmul.f32 %v2204, %v2211
    %v2220 = vadd.f32 %v2218, %v2219
    %v2221 = vtanh.pop %v2220
    %v2222 = vmul.f32 %v2217, %v2221
    %v2223 = vpack.c.bf16 %v2222, %v2222
    %v2224 = vpack.c.bf16 %v2112, %v2112
    %2225 = vmatprep.subr.bf16.mxu0 %v1036
    %2226 = vmatpush1.bf16.msra.mxu0 %v1035
    %2227 = vmatprep.subr.bf16.mxu0 %v1032
    %2228 = vmatpush1.bf16.msra.mxu0 %v1031
    %2229 = vmatprep.subr.bf16.mxu0 %v1028
    %2230 = vmatpush1.bf16.msra.mxu0 %v1027
    %2231 = vmatprep.subr.bf16.mxu0 %v1024
    %2232 = vmatpush1.bf16.msra.mxu0 %v1023
    %2233 = vmatprep.subr.bf16.mxu0 %v1020
    %2234 = vmatpush1.bf16.msra.mxu0 %v1019
    %2235 = vmatprep.subr.bf16.mxu0 %v1016
    %2236 = vmatpush1.bf16.msra.mxu0 %v1015
    %2237 = vmatprep.subr.bf16.mxu0 %v1012
    %2238 = vmatpush1.bf16.msra.mxu0 %v1011
    %2239 = vmatprep.subr.bf16.mxu0 %v1008
    %2240 = vmatpush1.bf16.msra.mxu0 %v1007
    %2241 = vmatprep.subr.bf16.mxu0 %v1068
    %2242 = vmatpush2.bf16.msra.mxu0 %v1067
    %2243 = vmatprep.subr.bf16.mxu0 %v1064
    %2244 = vmatpush2.bf16.msra.mxu0 %v1063
    %2245 = vmatprep.subr.bf16.mxu0 %v1060
    %2246 = vmatpush2.bf16.msra.mxu0 %v1059
    %2247 = vmatprep.subr.bf16.mxu0 %v1056
    %2248 = vmatpush2.bf16.msra.mxu0 %v1055
    %2249 = vmatprep.subr.bf16.mxu0 %v1052
    %2250 = vmatpush2.bf16.msra.mxu0 %v1051
    %2251 = vmatprep.subr.bf16.mxu0 %v1048
    %2252 = vmatpush2.bf16.msra.mxu0 %v1047
    %2253 = vmatprep.subr.bf16.mxu0 %v1044
    %2254 = vmatpush2.bf16.msra.mxu0 %v1043
    %2255 = vmatprep.subr.bf16.mxu0 %v1040
    %2256 = vmatpush2.bf16.msra.mxu0 %v1039
    %2257 = vmatprep.mubr.bf16.mxu0 %v2224
    %2258 = vmatmul.mubr.bf16.gmra.mxu0 %v2223
    %v2259 = vpop.f32.mrf.mxu0
    %v2260 = vadd.f32 %v798, %v2259
    %v2261 = vpop.f32.mrf.mxu0
    %v2262 = vadd.f32 %v802, %v2261
    %v2263 = vpop.f32.mrf.mxu0
    %v2264 = vpop.f32.mrf.mxu0
    %2265 = vdwg.mxu0
    %2266 = vmatprep.subr.bf16.mxu0 %v1038
    %2267 = vmatpush1.bf16.msra.mxu0 %v1037
    %2268 = vmatprep.subr.bf16.mxu0 %v1034
    %2269 = vmatpush1.bf16.msra.mxu0 %v1033
    %2270 = vmatprep.subr.bf16.mxu0 %v1030
    %2271 = vmatpush1.bf16.msra.mxu0 %v1029
    %2272 = vmatprep.subr.bf16.mxu0 %v1026
    %2273 = vmatpush1.bf16.msra.mxu0 %v1025
    %2274 = vmatprep.subr.bf16.mxu0 %v1022
    %2275 = vmatpush1.bf16.msra.mxu0 %v1021
    %2276 = vmatprep.subr.bf16.mxu0 %v1018
    %2277 = vmatpush1.bf16.msra.mxu0 %v1017
    %2278 = vmatprep.subr.bf16.mxu0 %v1014
    %2279 = vmatpush1.bf16.msra.mxu0 %v1013
    %2280 = vmatprep.subr.bf16.mxu0 %v1010
    %2281 = vmatpush1.bf16.msra.mxu0 %v1009
    %2282 = vmatprep.subr.bf16.mxu0 %v1070
    %2283 = vmatpush2.bf16.msra.mxu0 %v1069
    %2284 = vmatprep.subr.bf16.mxu0 %v1066
    %2285 = vmatpush2.bf16.msra.mxu0 %v1065
    %2286 = vmatprep.subr.bf16.mxu0 %v1062
    %2287 = vmatpush2.bf16.msra.mxu0 %v1061
    %2288 = vmatprep.subr.bf16.mxu0 %v1058
    %2289 = vmatpush2.bf16.msra.mxu0 %v1057
    %2290 = vmatprep.subr.bf16.mxu0 %v1054
    %2291 = vmatpush2.bf16.msra.mxu0 %v1053
    %2292 = vmatprep.subr.bf16.mxu0 %v1050
    %2293 = vmatpush2.bf16.msra.mxu0 %v1049
    %2294 = vmatprep.subr.bf16.mxu0 %v1046
    %2295 = vmatpush2.bf16.msra.mxu0 %v1045
    %2296 = vmatprep.subr.bf16.mxu0 %v1042
    %2297 = vmatpush2.bf16.msra.mxu0 %v1041
    %2298 = vmatprep.mubr.bf16.mxu0 %v2224
    %2299 = vmatmul.mubr.bf16.gmra.mxu0 %v2223
    %v2300 = vpop.f32.mrf.mxu0
    %v2301 = vadd.f32 %v806, %v2300
    %v2302 = vpop.f32.mrf.mxu0
    %v2303 = vadd.f32 %v810, %v2302
    %v2304 = vpop.f32.mrf.mxu0
    %v2305 = vpop.f32.mrf.mxu0
    %2306 = vdwg.mxu0
    %v2307 = vxor.u32 %v2260, 2147483648
    %v2308 = vmul.f32 %v2307, 1.442695
    %v2309 = vpow.pop %v2308
    %v2310 = vadd.f32 %v2309, 1.0
    %v2311 = vrcp.pop %v2310
    %v2312 = vmul.f32 1.0, %v2311
    %v2313 = vxor.u32 %v2262, 2147483648
    %v2314 = vmul.f32 %v2313, 1.442695
    %v2315 = vpow.pop %v2314
    %v2316 = vadd.f32 %v2315, 1.0
    %v2317 = vrcp.pop %v2316
    %v2318 = vmul.f32 1.0, %v2317
    %v2319 = vtanh.pop %v2301
    %v2320 = vxor.u32 %v2303, 2147483648
    %v2321 = vmul.f32 %v2320, 1.442695
    %v2322 = vpow.pop %v2321
    %v2323 = vadd.f32 %v2322, 1.0
    %v2324 = vrcp.pop %v2323
    %v2325 = vmul.f32 1.0, %v2324
    %v2326 = vmul.f32 %v2318, %v2110
    %v2327 = vmul.f32 %v2312, %v2319
    %v2328 = vadd.f32 %v2326, %v2327
    %v2329 = vtanh.pop %v2328
    %v2330 = vmul.f32 %v2325, %v2329
    %2331 = vmatprep.subr.bf16.mxu0 %v647
    %2332 = vmatpush1.bf16.msra.mxu0 %v646
    %2333 = vmatprep.subr.bf16.mxu0 %v643
    %2334 = vmatpush1.bf16.msra.mxu0 %v642
    %2335 = vmatprep.subr.bf16.mxu0 %v639
    %2336 = vmatpush1.bf16.msra.mxu0 %v638
    %2337 = vmatprep.subr.bf16.mxu0 %v635
    %2338 = vmatpush1.bf16.msra.mxu0 %v634
    %2339 = vmatprep.subr.bf16.mxu0 %v631
    %2340 = vmatpush1.bf16.msra.mxu0 %v630
    %2341 = vmatprep.subr.bf16.mxu0 %v627
    %2342 = vmatpush1.bf16.msra.mxu0 %v626
    %2343 = vmatprep.subr.bf16.mxu0 %v623
    %2344 = vmatpush1.bf16.msra.mxu0 %v622
    %2345 = vmatprep.subr.bf16.mxu0 %v619
    %2346 = vmatpush1.bf16.msra.mxu0 %v618
    %2347 = vmatprep.subr.bf16.mxu0 0
    %2348 = vmatpush2.bf16.msra.mxu0 0
    %2349 = vmatprep.subr.bf16.mxu0 0
    %2350 = vmatpush2.bf16.msra.mxu0 0
    %2351 = vmatprep.subr.bf16.mxu0 0
    %2352 = vmatpush2.bf16.msra.mxu0 0
    %2353 = vmatprep.subr.bf16.mxu0 0
    %2354 = vmatpush2.bf16.msra.mxu0 0
    %2355 = vmatprep.subr.bf16.mxu0 0
    %2356 = vmatpush2.bf16.msra.mxu0 0
    %2357 = vmatprep.subr.bf16.mxu0 0
    %2358 = vmatpush2.bf16.msra.mxu0 0
    %2359 = vmatprep.subr.bf16.mxu0 0
    %2360 = vmatpush2.bf16.msra.mxu0 0
    %2361 = vmatprep.subr.bf16.mxu0 0
    %2362 = vmatpush2.bf16.msra.mxu0 0
    %2363 = vmatprep.mubr.bf16.mxu0 0
    %2364 = vmatmul.mubr.bf16.gmra.mxu0 %v2223
    %v2365 = vpop.f32.mrf.mxu0
    %v2366 = vadd.f32 0.0, %v2365
    %v2367 = vpop.f32.mrf.mxu0
    %v2368 = vadd.f32 0.0, %v2367
    %v2369 = vpop.f32.mrf.mxu0
    %v2370 = vpop.f32.mrf.mxu0
    %2371 = vdwg.mxu0
    %2372 = vmatprep.subr.bf16.mxu0 %v649
    %2373 = vmatpush1.bf16.msra.mxu0 %v648
    %2374 = vmatprep.subr.bf16.mxu0 %v645
    %2375 = vmatpush1.bf16.msra.mxu0 %v644
    %2376 = vmatprep.subr.bf16.mxu0 %v641
    %2377 = vmatpush1.bf16.msra.mxu0 %v640
    %2378 = vmatprep.subr.bf16.mxu0 %v637
    %2379 = vmatpush1.bf16.msra.mxu0 %v636
    %2380 = vmatprep.subr.bf16.mxu0 %v633
    %2381 = vmatpush1.bf16.msra.mxu0 %v632
    %2382 = vmatprep.subr.bf16.mxu0 %v629
    %2383 = vmatpush1.bf16.msra.mxu0 %v628
    %2384 = vmatprep.subr.bf16.mxu0 %v625
    %2385 = vmatpush1.bf16.msra.mxu0 %v624
    %2386 = vmatprep.subr.bf16.mxu0 %v621
    %2387 = vmatpush1.bf16.msra.mxu0 %v620
    %2388 = vmatprep.subr.bf16.mxu0 0
    %2389 = vmatpush2.bf16.msra.mxu0 0
    %2390 = vmatprep.subr.bf16.mxu0 0
    %2391 = vmatpush2.bf16.msra.mxu0 0
    %2392 = vmatprep.subr.bf16.mxu0 0
    %2393 = vmatpush2.bf16.msra.mxu0 0
    %2394 = vmatprep.subr.bf16.mxu0 0
    %2395 = vmatpush2.bf16.msra.mxu0 0
    %2396 = vmatprep.subr.bf16.mxu0 0
    %2397 = vmatpush2.bf16.msra.mxu0 0
    %2398 = vmatprep.subr.bf16.mxu0 0
    %2399 = vmatpush2.bf16.msra.mxu0 0
    %2400 = vmatprep.subr.bf16.mxu0 0
    %2401 = vmatpush2.bf16.msra.mxu0 0
    %2402 = vmatprep.subr.bf16.mxu0 0
    %2403 = vmatpush2.bf16.msra.mxu0 0
    %2404 = vmatprep.mubr.bf16.mxu0 0
    %2405 = vmatmul.mubr.bf16.gmra.mxu0 %v2223
    %v2406 = vpop.f32.mrf.mxu0
    %v2407 = vadd.f32 0.0, %v2406
    %v2408 = vpop.f32.mrf.mxu0
    %v2409 = vadd.f32 0.0, %v2408
    %v2410 = vpop.f32.mrf.mxu0
    %v2411 = vpop.f32.mrf.mxu0
    %2412 = vdwg.mxu0
    %v2413 = vadd.f32 %v344, %v2366
    %v2414 = vadd.f32 %v346, %v2368
    %v2415 = vadd.f32 %v417, %v2407
    %v2416 = vadd.f32 %v419, %v2409
    %v2417 = vxor.u32 %v2413, 2147483648
    %v2418 = vmul.f32 %v2417, 1.442695
    %v2419 = vpow.pop %v2418
    %v2420 = vadd.f32 %v2419, 1.0
    %v2421 = vrcp.pop %v2420
    %v2422 = vmul.f32 1.0, %v2421
    %v2423 = vxor.u32 %v2414, 2147483648
    %v2424 = vmul.f32 %v2423, 1.442695
    %v2425 = vpow.pop %v2424
    %v2426 = vadd.f32 %v2425, 1.0
    %v2427 = vrcp.pop %v2426
    %v2428 = vmul.f32 1.0, %v2427
    %v2429 = vtanh.pop %v2415
    %v2430 = vxor.u32 %v2416, 2147483648
    %v2431 = vmul.f32 %v2430, 1.442695
    %v2432 = vpow.pop %v2431
    %v2433 = vadd.f32 %v2432, 1.0
    %v2434 = vrcp.pop %v2433
    %v2435 = vmul.f32 1.0, %v2434
    %v2436 = vmul.f32 %v2428, %v2220
    %v2437 = vmul.f32 %v2422, %v2429
    %v2438 = vadd.f32 %v2436, %v2437
    %v2439 = vtanh.pop %v2438
    %v2440 = vmul.f32 %v2435, %v2439
    %v2441 = vpack.c.bf16 %v2440, %v2440
    %v2442 = vpack.c.bf16 %v2330, %v2330
    %2443 = vmatprep.subr.bf16.mxu0 %v1036
    %2444 = vmatpush1.bf16.msra.mxu0 %v1035
    %2445 = vmatprep.subr.bf16.mxu0 %v1032
    %2446 = vmatpush1.bf16.msra.mxu0 %v1031
    %2447 = vmatprep.subr.bf16.mxu0 %v1028
    %2448 = vmatpush1.bf16.msra.mxu0 %v1027
    %2449 = vmatprep.subr.bf16.mxu0 %v1024
    %2450 = vmatpush1.bf16.msra.mxu0 %v1023
    %2451 = vmatprep.subr.bf16.mxu0 %v1020
    %2452 = vmatpush1.bf16.msra.mxu0 %v1019
    %2453 = vmatprep.subr.bf16.mxu0 %v1016
    %2454 = vmatpush1.bf16.msra.mxu0 %v1015
    %2455 = vmatprep.subr.bf16.mxu0 %v1012
    %2456 = vmatpush1.bf16.msra.mxu0 %v1011
    %2457 = vmatprep.subr.bf16.mxu0 %v1008
    %2458 = vmatpush1.bf16.msra.mxu0 %v1007
    %2459 = vmatprep.subr.bf16.mxu0 %v1068
    %2460 = vmatpush2.bf16.msra.mxu0 %v1067
    %2461 = vmatprep.subr.bf16.mxu0 %v1064
    %2462 = vmatpush2.bf16.msra.mxu0 %v1063
    %2463 = vmatprep.subr.bf16.mxu0 %v1060
    %2464 = vmatpush2.bf16.msra.mxu0 %v1059
    %2465 = vmatprep.subr.bf16.mxu0 %v1056
    %2466 = vmatpush2.bf16.msra.mxu0 %v1055
    %2467 = vmatprep.subr.bf16.mxu0 %v1052
    %2468 = vmatpush2.bf16.msra.mxu0 %v1051
    %2469 = vmatprep.subr.bf16.mxu0 %v1048
    %2470 = vmatpush2.bf16.msra.mxu0 %v1047
    %2471 = vmatprep.subr.bf16.mxu0 %v1044
    %2472 = vmatpush2.bf16.msra.mxu0 %v1043
    %2473 = vmatprep.subr.bf16.mxu0 %v1040
    %2474 = vmatpush2.bf16.msra.mxu0 %v1039
    %2475 = vmatprep.mubr.bf16.mxu0 %v2442
    %2476 = vmatmul.mubr.bf16.gmra.mxu0 %v2441
    %v2477 = vpop.f32.mrf.mxu0
    %v2478 = vadd.f32 %v798, %v2477
    %v2479 = vpop.f32.mrf.mxu0
    %v2480 = vadd.f32 %v802, %v2479
    %v2481 = vpop.f32.mrf.mxu0
    %v2482 = vpop.f32.mrf.mxu0
    %2483 = vdwg.mxu0
    %2484 = vmatprep.subr.bf16.mxu0 %v1038
    %2485 = vmatpush1.bf16.msra.mxu0 %v1037
    %2486 = vmatprep.subr.bf16.mxu0 %v1034
    %2487 = vmatpush1.bf16.msra.mxu0 %v1033
    %2488 = vmatprep.subr.bf16.mxu0 %v1030
    %2489 = vmatpush1.bf16.msra.mxu0 %v1029
    %2490 = vmatprep.subr.bf16.mxu0 %v1026
    %2491 = vmatpush1.bf16.msra.mxu0 %v1025
    %2492 = vmatprep.subr.bf16.mxu0 %v1022
    %2493 = vmatpush1.bf16.msra.mxu0 %v1021
    %2494 = vmatprep.subr.bf16.mxu0 %v1018
    %2495 = vmatpush1.bf16.msra.mxu0 %v1017
    %2496 = vmatprep.subr.bf16.mxu0 %v1014
    %2497 = vmatpush1.bf16.msra.mxu0 %v1013
    %2498 = vmatprep.subr.bf16.mxu0 %v1010
    %2499 = vmatpush1.bf16.msra.mxu0 %v1009
    %2500 = vmatprep.subr.bf16.mxu0 %v1070
    %2501 = vmatpush2.bf16.msra.mxu0 %v1069
    %2502 = vmatprep.subr.bf16.mxu0 %v1066
    %2503 = vmatpush2.bf16.msra.mxu0 %v1065
    %2504 = vmatprep.subr.bf16.mxu0 %v1062
    %2505 = vmatpush2.bf16.msra.mxu0 %v1061
    %2506 = vmatprep.subr.bf16.mxu0 %v1058
    %2507 = vmatpush2.bf16.msra.mxu0 %v1057
    %2508 = vmatprep.subr.bf16.mxu0 %v1054
    %2509 = vmatpush2.bf16.msra.mxu0 %v1053
    %2510 = vmatprep.subr.bf16.mxu0 %v1050
    %2511 = vmatpush2.bf16.msra.mxu0 %v1049
    %2512 = vmatprep.subr.bf16.mxu0 %v1046
    %2513 = vmatpush2.bf16.msra.mxu0 %v1045
    %2514 = vmatprep.subr.bf16.mxu0 %v1042
    %2515 = vmatpush2.bf16.msra.mxu0 %v1041
    %2516 = vmatprep.mubr.bf16.mxu0 %v2442
    %2517 = vmatmul.mubr.bf16.gmra.mxu0 %v2441
    %v2518 = vpop.f32.mrf.mxu0
    %v2519 = vadd.f32 %v806, %v2518
    %v2520 = vpop.f32.mrf.mxu0
    %v2521 = vadd.f32 %v810, %v2520
    %v2522 = vpop.f32.mrf.mxu0
    %v2523 = vpop.f32.mrf.mxu0
    %2524 = vdwg.mxu0
    %v2525 = vxor.u32 %v2478, 2147483648
    %v2526 = vmul.f32 %v2525, 1.442695
    %v2527 = vpow.pop %v2526
    %v2528 = vadd.f32 %v2527, 1.0
    %v2529 = vrcp.pop %v2528
    %v2530 = vmul.f32 1.0, %v2529
    %v2531 = vxor.u32 %v2480, 2147483648
    %v2532 = vmul.f32 %v2531, 1.442695
    %v2533 = vpow.pop %v2532
    %v2534 = vadd.f32 %v2533, 1.0
    %v2535 = vrcp.pop %v2534
    %v2536 = vmul.f32 1.0, %v2535
    %v2537 = vtanh.pop %v2519
    %v2538 = vxor.u32 %v2521, 2147483648
    %v2539 = vmul.f32 %v2538, 1.442695
    %v2540 = vpow.pop %v2539
    %v2541 = vadd.f32 %v2540, 1.0
    %v2542 = vrcp.pop %v2541
    %v2543 = vmul.f32 1.0, %v2542
    %v2544 = vmul.f32 %v2536, %v2328
    %v2545 = vmul.f32 %v2530, %v2537
    %v2546 = vadd.f32 %v2544, %v2545
    %v2547 = vtanh.pop %v2546
    %v2548 = vmul.f32 %v2543, %v2547
    %2549 = vmatprep.subr.bf16.mxu0 %v647
    %2550 = vmatpush1.bf16.msra.mxu0 %v646
    %2551 = vmatprep.subr.bf16.mxu0 %v643
    %2552 = vmatpush1.bf16.msra.mxu0 %v642
    %2553 = vmatprep.subr.bf16.mxu0 %v639
    %2554 = vmatpush1.bf16.msra.mxu0 %v638
    %2555 = vmatprep.subr.bf16.mxu0 %v635
    %2556 = vmatpush1.bf16.msra.mxu0 %v634
    %2557 = vmatprep.subr.bf16.mxu0 %v631
    %2558 = vmatpush1.bf16.msra.mxu0 %v630
    %2559 = vmatprep.subr.bf16.mxu0 %v627
    %2560 = vmatpush1.bf16.msra.mxu0 %v626
    %2561 = vmatprep.subr.bf16.mxu0 %v623
    %2562 = vmatpush1.bf16.msra.mxu0 %v622
    %2563 = vmatprep.subr.bf16.mxu0 %v619
    %2564 = vmatpush1.bf16.msra.mxu0 %v618
    %2565 = vmatprep.subr.bf16.mxu0 0
    %2566 = vmatpush2.bf16.msra.mxu0 0
    %2567 = vmatprep.subr.bf16.mxu0 0
    %2568 = vmatpush2.bf16.msra.mxu0 0
    %2569 = vmatprep.subr.bf16.mxu0 0
    %2570 = vmatpush2.bf16.msra.mxu0 0
    %2571 = vmatprep.subr.bf16.mxu0 0
    %2572 = vmatpush2.bf16.msra.mxu0 0
    %2573 = vmatprep.subr.bf16.mxu0 0
    %2574 = vmatpush2.bf16.msra.mxu0 0
    %2575 = vmatprep.subr.bf16.mxu0 0
    %2576 = vmatpush2.bf16.msra.mxu0 0
    %2577 = vmatprep.subr.bf16.mxu0 0
    %2578 = vmatpush2.bf16.msra.mxu0 0
    %2579 = vmatprep.subr.bf16.mxu0 0
    %2580 = vmatpush2.bf16.msra.mxu0 0
    %2581 = vmatprep.mubr.bf16.mxu0 0
    %2582 = vmatmul.mubr.bf16.gmra.mxu0 %v2441
    %v2583 = vpop.f32.mrf.mxu0
    %v2584 = vadd.f32 0.0, %v2583
    %v2585 = vpop.f32.mrf.mxu0
    %v2586 = vadd.f32 0.0, %v2585
    %v2587 = vpop.f32.mrf.mxu0
    %v2588 = vpop.f32.mrf.mxu0
    %2589 = vdwg.mxu0
    %2590 = vmatprep.subr.bf16.mxu0 %v649
    %2591 = vmatpush1.bf16.msra.mxu0 %v648
    %2592 = vmatprep.subr.bf16.mxu0 %v645
    %2593 = vmatpush1.bf16.msra.mxu0 %v644
    %2594 = vmatprep.subr.bf16.mxu0 %v641
    %2595 = vmatpush1.bf16.msra.mxu0 %v640
    %2596 = vmatprep.subr.bf16.mxu0 %v637
    %2597 = vmatpush1.bf16.msra.mxu0 %v636
    %2598 = vmatprep.subr.bf16.mxu0 %v633
    %2599 = vmatpush1.bf16.msra.mxu0 %v632
    %2600 = vmatprep.subr.bf16.mxu0 %v629
    %2601 = vmatpush1.bf16.msra.mxu0 %v628
    %2602 = vmatprep.subr.bf16.mxu0 %v625
    %2603 = vmatpush1.bf16.msra.mxu0 %v624
    %2604 = vmatprep.subr.bf16.mxu0 %v621
    %2605 = vmatpush1.bf16.msra.mxu0 %v620
    %2606 = vmatprep.subr.bf16.mxu0 0
    %2607 = vmatpush2.bf16.msra.mxu0 0
    %2608 = vmatprep.subr.bf16.mxu0 0
    %2609 = vmatpush2.bf16.msra.mxu0 0
    %2610 = vmatprep.subr.bf16.mxu0 0
    %2611 = vmatpush2.bf16.msra.mxu0 0
    %2612 = vmatprep.subr.bf16.mxu0 0
    %2613 = vmatpush2.bf16.msra.mxu0 0
    %2614 = vmatprep.subr.bf16.mxu0 0
    %2615 = vmatpush2.bf16.msra.mxu0 0
    %2616 = vmatprep.subr.bf16.mxu0 0
    %2617 = vmatpush2.bf16.msra.mxu0 0
    %2618 = vmatprep.subr.bf16.mxu0 0
    %2619 = vmatpush2.bf16.msra.mxu0 0
    %2620 = vmatprep.subr.bf16.mxu0 0
    %2621 = vmatpush2.bf16.msra.mxu0 0
    %2622 = vmatprep.mubr.bf16.mxu0 0
    %2623 = vmatmul.mubr.bf16.gmra.mxu0 %v2441
    %v2624 = vpop.f32.mrf.mxu0
    %v2625 = vadd.f32 0.0, %v2624
    %v2626 = vpop.f32.mrf.mxu0
    %v2627 = vadd.f32 0.0, %v2626
    %v2628 = vpop.f32.mrf.mxu0
    %v2629 = vpop.f32.mrf.mxu0
    %2630 = vdwg.mxu0
    %v2631 = vadd.f32 %v348, %v2584
    %v2632 = vadd.f32 %v350, %v2586
    %v2633 = vadd.f32 %v421, %v2625
    %v2634 = vadd.f32 %v423, %v2627
    %v2635 = vxor.u32 %v2631, 2147483648
    %v2636 = vmul.f32 %v2635, 1.442695
    %v2637 = vpow.pop %v2636
    %v2638 = vadd.f32 %v2637, 1.0
    %v2639 = vrcp.pop %v2638
    %v2640 = vmul.f32 1.0, %v2639
    %v2641 = vxor.u32 %v2632, 2147483648
    %v2642 = vmul.f32 %v2641, 1.442695
    %v2643 = vpow.pop %v2642
    %v2644 = vadd.f32 %v2643, 1.0
    %v2645 = vrcp.pop %v2644
    %v2646 = vmul.f32 1.0, %v2645
    %v2647 = vtanh.pop %v2633
    %v2648 = vxor.u32 %v2634, 2147483648
    %v2649 = vmul.f32 %v2648, 1.442695
    %v2650 = vpow.pop %v2649
    %v2651 = vadd.f32 %v2650, 1.0
    %v2652 = vrcp.pop %v2651
    %v2653 = vmul.f32 1.0, %v2652
    %v2654 = vmul.f32 %v2646, %v2438
    %v2655 = vmul.f32 %v2640, %v2647
    %v2656 = vadd.f32 %v2654, %v2655
    %v2657 = vtanh.pop %v2656
    %v2658 = vmul.f32 %v2653, %v2657
    %v2659 = vpack.c.bf16 %v2658, %v2658
    %v2660 = vpack.c.bf16 %v2548, %v2548
    %2661 = vmatprep.subr.bf16.mxu0 %v1036
    %2662 = vmatpush1.bf16.msra.mxu0 %v1035
    %2663 = vmatprep.subr.bf16.mxu0 %v1032
    %2664 = vmatpush1.bf16.msra.mxu0 %v1031
    %2665 = vmatprep.subr.bf16.mxu0 %v1028
    %2666 = vmatpush1.bf16.msra.mxu0 %v1027
    %2667 = vmatprep.subr.bf16.mxu0 %v1024
    %2668 = vmatpush1.bf16.msra.mxu0 %v1023
    %2669 = vmatprep.subr.bf16.mxu0 %v1020
    %2670 = vmatpush1.bf16.msra.mxu0 %v1019
    %2671 = vmatprep.subr.bf16.mxu0 %v1016
    %2672 = vmatpush1.bf16.msra.mxu0 %v1015
    %2673 = vmatprep.subr.bf16.mxu0 %v1012
    %2674 = vmatpush1.bf16.msra.mxu0 %v1011
    %2675 = vmatprep.subr.bf16.mxu0 %v1008
    %2676 = vmatpush1.bf16.msra.mxu0 %v1007
    %2677 = vmatprep.subr.bf16.mxu0 %v1068
    %2678 = vmatpush2.bf16.msra.mxu0 %v1067
    %2679 = vmatprep.subr.bf16.mxu0 %v1064
    %2680 = vmatpush2.bf16.msra.mxu0 %v1063
    %2681 = vmatprep.subr.bf16.mxu0 %v1060
    %2682 = vmatpush2.bf16.msra.mxu0 %v1059
    %2683 = vmatprep.subr.bf16.mxu0 %v1056
    %2684 = vmatpush2.bf16.msra.mxu0 %v1055
    %2685 = vmatprep.subr.bf16.mxu0 %v1052
    %2686 = vmatpush2.bf16.msra.mxu0 %v1051
    %2687 = vmatprep.subr.bf16.mxu0 %v1048
    %2688 = vmatpush2.bf16.msra.mxu0 %v1047
    %2689 = vmatprep.subr.bf16.mxu0 %v1044
    %2690 = vmatpush2.bf16.msra.mxu0 %v1043
    %2691 = vmatprep.subr.bf16.mxu0 %v1040
    %2692 = vmatpush2.bf16.msra.mxu0 %v1039
    %2693 = vmatprep.mubr.bf16.mxu0 %v2660
    %2694 = vmatmul.mubr.bf16.gmra.mxu0 %v2659
    %v2695 = vpop.f32.mrf.mxu0
    %v2696 = vadd.f32 %v798, %v2695
    %v2697 = vpop.f32.mrf.mxu0
    %v2698 = vadd.f32 %v802, %v2697
    %v2699 = vpop.f32.mrf.mxu0
    %v2700 = vpop.f32.mrf.mxu0
    %2701 = vdwg.mxu0
    %2702 = vmatprep.subr.bf16.mxu0 %v1038
    %2703 = vmatpush1.bf16.msra.mxu0 %v1037
    %2704 = vmatprep.subr.bf16.mxu0 %v1034
    %2705 = vmatpush1.bf16.msra.mxu0 %v1033
    %2706 = vmatprep.subr.bf16.mxu0 %v1030
    %2707 = vmatpush1.bf16.msra.mxu0 %v1029
    %2708 = vmatprep.subr.bf16.mxu0 %v1026
    %2709 = vmatpush1.bf16.msra.mxu0 %v1025
    %2710 = vmatprep.subr.bf16.mxu0 %v1022
    %2711 = vmatpush1.bf16.msra.mxu0 %v1021
    %2712 = vmatprep.subr.bf16.mxu0 %v1018
    %2713 = vmatpush1.bf16.msra.mxu0 %v1017
    %2714 = vmatprep.subr.bf16.mxu0 %v1014
    %2715 = vmatpush1.bf16.msra.mxu0 %v1013
    %2716 = vmatprep.subr.bf16.mxu0 %v1010
    %2717 = vmatpush1.bf16.msra.mxu0 %v1009
    %2718 = vmatprep.subr.bf16.mxu0 %v1070
    %2719 = vmatpush2.bf16.msra.mxu0 %v1069
    %2720 = vmatprep.subr.bf16.mxu0 %v1066
    %2721 = vmatpush2.bf16.msra.mxu0 %v1065
    %2722 = vmatprep.subr.bf16.mxu0 %v1062
    %2723 = vmatpush2.bf16.msra.mxu0 %v1061
    %2724 = vmatprep.subr.bf16.mxu0 %v1058
    %2725 = vmatpush2.bf16.msra.mxu0 %v1057
    %2726 = vmatprep.subr.bf16.mxu0 %v1054
    %2727 = vmatpush2.bf16.msra.mxu0 %v1053
    %2728 = vmatprep.subr.bf16.mxu0 %v1050
    %2729 = vmatpush2.bf16.msra.mxu0 %v1049
    %2730 = vmatprep.subr.bf16.mxu0 %v1046
    %2731 = vmatpush2.bf16.msra.mxu0 %v1045
    %2732 = vmatprep.subr.bf16.mxu0 %v1042
    %2733 = vmatpush2.bf16.msra.mxu0 %v1041
    %2734 = vmatprep.mubr.bf16.mxu0 %v2660
    %2735 = vmatmul.mubr.bf16.gmra.mxu0 %v2659
    %v2736 = vpop.f32.mrf.mxu0
    %v2737 = vadd.f32 %v806, %v2736
    %v2738 = vpop.f32.mrf.mxu0
    %v2739 = vadd.f32 %v810, %v2738
    %v2740 = vpop.f32.mrf.mxu0
    %v2741 = vpop.f32.mrf.mxu0
    %2742 = vdwg.mxu0
    %v2743 = vxor.u32 %v2696, 2147483648
    %v2744 = vmul.f32 %v2743, 1.442695
    %v2745 = vpow.pop %v2744
    %v2746 = vadd.f32 %v2745, 1.0
    %v2747 = vrcp.pop %v2746
    %v2748 = vmul.f32 1.0, %v2747
    %v2749 = vxor.u32 %v2698, 2147483648
    %v2750 = vmul.f32 %v2749, 1.442695
    %v2751 = vpow.pop %v2750
    %v2752 = vadd.f32 %v2751, 1.0
    %v2753 = vrcp.pop %v2752
    %v2754 = vmul.f32 1.0, %v2753
    %v2755 = vtanh.pop %v2737
    %v2756 = vxor.u32 %v2739, 2147483648
    %v2757 = vmul.f32 %v2756, 1.442695
    %v2758 = vpow.pop %v2757
    %v2759 = vadd.f32 %v2758, 1.0
    %v2760 = vrcp.pop %v2759
    %v2761 = vmul.f32 1.0, %v2760
    %v2762 = vmul.f32 %v2754, %v2546
    %v2763 = vmul.f32 %v2748, %v2755
    %v2764 = vadd.f32 %v2762, %v2763
    %v2765 = vtanh.pop %v2764
    %v2766 = vmul.f32 %v2761, %v2765
    %v2767 = vld [vmem:[%s1] sm:$0xff]
    %v2768 = vld [vmem:[%s1 + $0x8] sm:$0xff]
    %v2769 = vld [vmem:[%s1 + $0x10] sm:$0xff]
    %v2770 = vld [vmem:[%s1 + $0x18] sm:$0xff]
    %v2771 = vld [vmem:[%s1 + $0x20] sm:$0xff]
    %v2772 = vld [vmem:[%s1 + $0x28] sm:$0xff]
    %v2773 = vld [vmem:[%s1 + $0x30] sm:$0xff]
    %v2774 = vld [vmem:[%s1 + $0x38] sm:$0xff]
    %v2775 = vld [vmem:[%s1 + $0x40] sm:$0xff]
    %v2776 = vld [vmem:[%s1 + $0x48] sm:$0xff]
    %v2777 = vld [vmem:[%s1 + $0x50] sm:$0xff]
    %v2778 = vld [vmem:[%s1 + $0x58] sm:$0xff]
    %v2779 = vld [vmem:[%s1 + $0x60] sm:$0xff]
    %v2780 = vld [vmem:[%s1 + $0x68] sm:$0xff]
    %v2781 = vld [vmem:[%s1 + $0x70] sm:$0xff]
    %v2782 = vld [vmem:[%s1 + $0x78] sm:$0xff]
    %v2783 = vadd.f32 %v2767, %v2768
    %v2784 = vadd.f32 %v2783, %v2769
    %v2785 = vadd.f32 %v2784, %v2770
    %v2786 = vadd.f32 %v2785, %v2771
    %v2787 = vadd.f32 %v2786, %v2772
    %v2788 = vadd.f32 %v2787, %v2773
    %v2789 = vadd.f32 %v2788, %v2774
    %v2790 = vadd.f32 %v2789, %v2775
    %v2791 = vadd.f32 %v2790, %v2776
    %v2792 = vadd.f32 %v2791, %v2777
    %v2793 = vadd.f32 %v2792, %v2778
    %v2794 = vadd.f32 %v2793, %v2779
    %v2795 = vadd.f32 %v2794, %v2780
    %v2796 = vadd.f32 %v2795, %v2781
    %v2797 = vadd.f32 %v2796, %v2782
    %v2798 = vmul.f32 %v2797, 0.0625
    %v2799 = vpack.c.bf16 %v2766, %v2766
    %v2800 = vld [vmem:[#allocation10] sm:$0xff]
    %v2801 = vld [vmem:[#allocation10 + $0x8] sm:$0xff]
    %v2802 = vld [vmem:[#allocation10 + $0x10] sm:$0xff]
    %v2803 = vld [vmem:[#allocation10 + $0x18] sm:$0xff]
    %v2804 = vld [vmem:[#allocation10 + $0x20] sm:$0xff]
    %v2805 = vld [vmem:[#allocation10 + $0x28] sm:$0xff]
    %v2806 = vld [vmem:[#allocation10 + $0x30] sm:$0xff]
    %v2807 = vld [vmem:[#allocation10 + $0x38] sm:$0xff]
    %v2808 = vld [vmem:[#allocation10 + $0x40] sm:$0xff]
    %v2809 = vld [vmem:[#allocation10 + $0x48] sm:$0xff]
    %v2810 = vld [vmem:[#allocation10 + $0x50] sm:$0xff]
    %v2811 = vld [vmem:[#allocation10 + $0x58] sm:$0xff]
    %v2812 = vld [vmem:[#allocation10 + $0x60] sm:$0xff]
    %v2813 = vld [vmem:[#allocation10 + $0x68] sm:$0xff]
    %v2814 = vld [vmem:[#allocation10 + $0x70] sm:$0xff]
    %v2815 = vld [vmem:[#allocation10 + $0x78] sm:$0xff]
    %v2816 = vld [vmem:[#allocation10 + $0x80] sm:$0xff]
    %v2817 = vld [vmem:[#allocation10 + $0x88] sm:$0xff]
    %v2818 = vld [vmem:[#allocation10 + $0x90] sm:$0xff]
    %v2819 = vld [vmem:[#allocation10 + $0x98] sm:$0xff]
    %v2820 = vld [vmem:[#allocation10 + $0xa0] sm:$0xff]
    %v2821 = vld [vmem:[#allocation10 + $0xa8] sm:$0xff]
    %v2822 = vld [vmem:[#allocation10 + $0xb0] sm:$0xff]
    %v2823 = vld [vmem:[#allocation10 + $0xb8] sm:$0xff]
    %v2824 = vld [vmem:[#allocation10 + $0xc0] sm:$0xff]
    %v2825 = vld [vmem:[#allocation10 + $0xc8] sm:$0xff]
    %v2826 = vld [vmem:[#allocation10 + $0xd0] sm:$0xff]
    %v2827 = vld [vmem:[#allocation10 + $0xd8] sm:$0xff]
    %v2828 = vld [vmem:[#allocation10 + $0xe0] sm:$0xff]
    %v2829 = vld [vmem:[#allocation10 + $0xe8] sm:$0xff]
    %v2830 = vld [vmem:[#allocation10 + $0xf0] sm:$0xff]
    %v2831 = vld [vmem:[#allocation10 + $0xf8] sm:$0xff]
    %v2832 = vld [vmem:[#allocation10 + $0x100] sm:$0xff]
    %v2833 = vld [vmem:[#allocation10 + $0x108] sm:$0xff]
    %v2834 = vld [vmem:[#allocation10 + $0x110] sm:$0xff]
    %v2835 = vld [vmem:[#allocation10 + $0x118] sm:$0xff]
    %v2836 = vld [vmem:[#allocation10 + $0x120] sm:$0xff]
    %v2837 = vld [vmem:[#allocation10 + $0x128] sm:$0xff]
    %v2838 = vld [vmem:[#allocation10 + $0x130] sm:$0xff]
    %v2839 = vld [vmem:[#allocation10 + $0x138] sm:$0xff]
    %v2840 = vld [vmem:[#allocation10 + $0x140] sm:$0xff]
    %v2841 = vld [vmem:[#allocation10 + $0x148] sm:$0xff]
    %v2842 = vld [vmem:[#allocation10 + $0x150] sm:$0xff]
    %v2843 = vld [vmem:[#allocation10 + $0x158] sm:$0xff]
    %v2844 = vld [vmem:[#allocation10 + $0x160] sm:$0xff]
    %v2845 = vld [vmem:[#allocation10 + $0x168] sm:$0xff]
    %v2846 = vld [vmem:[#allocation10 + $0x170] sm:$0xff]
    %v2847 = vld [vmem:[#allocation10 + $0x178] sm:$0xff]
    %v2848 = vld [vmem:[#allocation10 + $0x180] sm:$0xff]
    %v2849 = vld [vmem:[#allocation10 + $0x188] sm:$0xff]
    %v2850 = vld [vmem:[#allocation10 + $0x190] sm:$0xff]
    %v2851 = vld [vmem:[#allocation10 + $0x198] sm:$0xff]
    %v2852 = vld [vmem:[#allocation10 + $0x1a0] sm:$0xff]
    %v2853 = vld [vmem:[#allocation10 + $0x1a8] sm:$0xff]
    %v2854 = vld [vmem:[#allocation10 + $0x1b0] sm:$0xff]
    %v2855 = vld [vmem:[#allocation10 + $0x1b8] sm:$0xff]
    %v2856 = vld [vmem:[#allocation10 + $0x1c0] sm:$0xff]
    %v2857 = vld [vmem:[#allocation10 + $0x1c8] sm:$0xff]
    %v2858 = vld [vmem:[#allocation10 + $0x1d0] sm:$0xff]
    %v2859 = vld [vmem:[#allocation10 + $0x1d8] sm:$0xff]
    %v2860 = vld [vmem:[#allocation10 + $0x1e0] sm:$0xff]
    %v2861 = vld [vmem:[#allocation10 + $0x1e8] sm:$0xff]
    %v2862 = vld [vmem:[#allocation10 + $0x1f0] sm:$0xff]
    %v2863 = vld [vmem:[#allocation10 + $0x1f8] sm:$0xff]
    %v2864 = vld [vmem:[#allocation10 + $0x200] sm:$0xff]
    %v2865 = vld [vmem:[#allocation10 + $0x208] sm:$0xff]
    %v2866 = vld [vmem:[#allocation10 + $0x210] sm:$0xff]
    %v2867 = vld [vmem:[#allocation10 + $0x218] sm:$0xff]
    %v2868 = vld [vmem:[#allocation10 + $0x220] sm:$0xff]
    %v2869 = vld [vmem:[#allocation10 + $0x228] sm:$0xff]
    %v2870 = vld [vmem:[#allocation10 + $0x230] sm:$0xff]
    %v2871 = vld [vmem:[#allocation10 + $0x238] sm:$0xff]
    %v2872 = vld [vmem:[#allocation10 + $0x240] sm:$0xff]
    %v2873 = vld [vmem:[#allocation10 + $0x248] sm:$0xff]
    %v2874 = vld [vmem:[#allocation10 + $0x250] sm:$0xff]
    %v2875 = vld [vmem:[#allocation10 + $0x258] sm:$0xff]
    %v2876 = vld [vmem:[#allocation10 + $0x260] sm:$0xff]
    %v2877 = vld [vmem:[#allocation10 + $0x268] sm:$0xff]
    %v2878 = vld [vmem:[#allocation10 + $0x270] sm:$0xff]
    %v2879 = vld [vmem:[#allocation10 + $0x278] sm:$0xff]
    %v2880 = vld [vmem:[#allocation10 + $0x280] sm:$0xff]
    %v2881 = vld [vmem:[#allocation10 + $0x288] sm:$0xff]
    %v2882 = vld [vmem:[#allocation10 + $0x290] sm:$0xff]
    %v2883 = vld [vmem:[#allocation10 + $0x298] sm:$0xff]
    %v2884 = vld [vmem:[#allocation10 + $0x2a0] sm:$0xff]
    %v2885 = vld [vmem:[#allocation10 + $0x2a8] sm:$0xff]
    %v2886 = vld [vmem:[#allocation10 + $0x2b0] sm:$0xff]
    %v2887 = vld [vmem:[#allocation10 + $0x2b8] sm:$0xff]
    %v2888 = vld [vmem:[#allocation10 + $0x2c0] sm:$0xff]
    %v2889 = vld [vmem:[#allocation10 + $0x2c8] sm:$0xff]
    %v2890 = vld [vmem:[#allocation10 + $0x2d0] sm:$0xff]
    %v2891 = vld [vmem:[#allocation10 + $0x2d8] sm:$0xff]
    %v2892 = vld [vmem:[#allocation10 + $0x2e0] sm:$0xff]
    %v2893 = vld [vmem:[#allocation10 + $0x2e8] sm:$0xff]
    %v2894 = vld [vmem:[#allocation10 + $0x2f0] sm:$0xff]
    %v2895 = vld [vmem:[#allocation10 + $0x2f8] sm:$0xff]
    %v2896 = vld [vmem:[#allocation10 + $0x300] sm:$0xff]
    %v2897 = vld [vmem:[#allocation10 + $0x308] sm:$0xff]
    %v2898 = vld [vmem:[#allocation10 + $0x310] sm:$0xff]
    %v2899 = vld [vmem:[#allocation10 + $0x318] sm:$0xff]
    %v2900 = vld [vmem:[#allocation10 + $0x320] sm:$0xff]
    %v2901 = vld [vmem:[#allocation10 + $0x328] sm:$0xff]
    %v2902 = vld [vmem:[#allocation10 + $0x330] sm:$0xff]
    %v2903 = vld [vmem:[#allocation10 + $0x338] sm:$0xff]
    %v2904 = vld [vmem:[#allocation10 + $0x340] sm:$0xff]
    %v2905 = vld [vmem:[#allocation10 + $0x348] sm:$0xff]
    %v2906 = vld [vmem:[#allocation10 + $0x350] sm:$0xff]
    %v2907 = vld [vmem:[#allocation10 + $0x358] sm:$0xff]
    %v2908 = vld [vmem:[#allocation10 + $0x360] sm:$0xff]
    %v2909 = vld [vmem:[#allocation10 + $0x368] sm:$0xff]
    %v2910 = vld [vmem:[#allocation10 + $0x370] sm:$0xff]
    %v2911 = vld [vmem:[#allocation10 + $0x378] sm:$0xff]
    %v2912 = vld [vmem:[#allocation10 + $0x380] sm:$0xff]
    %v2913 = vld [vmem:[#allocation10 + $0x388] sm:$0xff]
    %v2914 = vld [vmem:[#allocation10 + $0x390] sm:$0xff]
    %v2915 = vld [vmem:[#allocation10 + $0x398] sm:$0xff]
    %v2916 = vld [vmem:[#allocation10 + $0x3a0] sm:$0xff]
    %v2917 = vld [vmem:[#allocation10 + $0x3a8] sm:$0xff]
    %v2918 = vld [vmem:[#allocation10 + $0x3b0] sm:$0xff]
    %v2919 = vld [vmem:[#allocation10 + $0x3b8] sm:$0xff]
    %v2920 = vld [vmem:[#allocation10 + $0x3c0] sm:$0xff]
    %v2921 = vld [vmem:[#allocation10 + $0x3c8] sm:$0xff]
    %v2922 = vld [vmem:[#allocation10 + $0x3d0] sm:$0xff]
    %v2923 = vld [vmem:[#allocation10 + $0x3d8] sm:$0xff]
    %v2924 = vld [vmem:[#allocation10 + $0x3e0] sm:$0xff]
    %v2925 = vld [vmem:[#allocation10 + $0x3e8] sm:$0xff]
    %v2926 = vld [vmem:[#allocation10 + $0x3f0] sm:$0xff]
    %v2927 = vld [vmem:[#allocation10 + $0x3f8] sm:$0xff]
    %v2928 = vld [vmem:[#allocation10 + $0x400] sm:$0xff]
    %v2929 = vld [vmem:[#allocation10 + $0x408] sm:$0xff]
    %v2930 = vld [vmem:[#allocation10 + $0x410] sm:$0xff]
    %v2931 = vld [vmem:[#allocation10 + $0x418] sm:$0xff]
    %v2932 = vld [vmem:[#allocation10 + $0x420] sm:$0xff]
    %v2933 = vld [vmem:[#allocation10 + $0x428] sm:$0xff]
    %v2934 = vld [vmem:[#allocation10 + $0x430] sm:$0xff]
    %v2935 = vld [vmem:[#allocation10 + $0x438] sm:$0xff]
    %v2936 = vld [vmem:[#allocation10 + $0x440] sm:$0xff]
    %v2937 = vld [vmem:[#allocation10 + $0x448] sm:$0xff]
    %v2938 = vld [vmem:[#allocation10 + $0x450] sm:$0xff]
    %v2939 = vld [vmem:[#allocation10 + $0x458] sm:$0xff]
    %v2940 = vld [vmem:[#allocation10 + $0x460] sm:$0xff]
    %v2941 = vld [vmem:[#allocation10 + $0x468] sm:$0xff]
    %v2942 = vld [vmem:[#allocation10 + $0x470] sm:$0xff]
    %v2943 = vld [vmem:[#allocation10 + $0x478] sm:$0xff]
    %v2944 = vld [vmem:[#allocation10 + $0x480] sm:$0xff]
    %v2945 = vld [vmem:[#allocation10 + $0x488] sm:$0xff]
    %v2946 = vld [vmem:[#allocation10 + $0x490] sm:$0xff]
    %v2947 = vld [vmem:[#allocation10 + $0x498] sm:$0xff]
    %v2948 = vld [vmem:[#allocation10 + $0x4a0] sm:$0xff]
    %v2949 = vld [vmem:[#allocation10 + $0x4a8] sm:$0xff]
    %v2950 = vld [vmem:[#allocation10 + $0x4b0] sm:$0xff]
    %v2951 = vld [vmem:[#allocation10 + $0x4b8] sm:$0xff]
    %v2952 = vld [vmem:[#allocation10 + $0x4c0] sm:$0xff]
    %v2953 = vld [vmem:[#allocation10 + $0x4c8] sm:$0xff]
    %v2954 = vld [vmem:[#allocation10 + $0x4d0] sm:$0xff]
    %v2955 = vld [vmem:[#allocation10 + $0x4d8] sm:$0xff]
    %v2956 = vld [vmem:[#allocation10 + $0x4e0] sm:$0xff]
    %v2957 = vld [vmem:[#allocation10 + $0x4e8] sm:$0xff]
    %v2958 = vld [vmem:[#allocation10 + $0x4f0] sm:$0xff]
    %v2959 = vld [vmem:[#allocation10 + $0x4f8] sm:$0xff]
    %v2960 = vld [vmem:[#allocation10 + $0x500] sm:$0xff]
    %v2961 = vld [vmem:[#allocation10 + $0x508] sm:$0xff]
    %v2962 = vld [vmem:[#allocation10 + $0x510] sm:$0xff]
    %v2963 = vld [vmem:[#allocation10 + $0x518] sm:$0xff]
    %v2964 = vld [vmem:[#allocation10 + $0x520] sm:$0xff]
    %v2965 = vld [vmem:[#allocation10 + $0x528] sm:$0xff]
    %v2966 = vld [vmem:[#allocation10 + $0x530] sm:$0xff]
    %v2967 = vld [vmem:[#allocation10 + $0x538] sm:$0xff]
    %v2968 = vld [vmem:[#allocation10 + $0x540] sm:$0xff]
    %v2969 = vld [vmem:[#allocation10 + $0x548] sm:$0xff]
    %v2970 = vld [vmem:[#allocation10 + $0x550] sm:$0xff]
    %v2971 = vld [vmem:[#allocation10 + $0x558] sm:$0xff]
    %v2972 = vld [vmem:[#allocation10 + $0x560] sm:$0xff]
    %v2973 = vld [vmem:[#allocation10 + $0x568] sm:$0xff]
    %v2974 = vld [vmem:[#allocation10 + $0x570] sm:$0xff]
    %v2975 = vld [vmem:[#allocation10 + $0x578] sm:$0xff]
    %v2976 = vld [vmem:[#allocation10 + $0x580] sm:$0xff]
    %v2977 = vld [vmem:[#allocation10 + $0x588] sm:$0xff]
    %v2978 = vld [vmem:[#allocation10 + $0x590] sm:$0xff]
    %v2979 = vld [vmem:[#allocation10 + $0x598] sm:$0xff]
    %v2980 = vld [vmem:[#allocation10 + $0x5a0] sm:$0xff]
    %v2981 = vld [vmem:[#allocation10 + $0x5a8] sm:$0xff]
    %v2982 = vld [vmem:[#allocation10 + $0x5b0] sm:$0xff]
    %v2983 = vld [vmem:[#allocation10 + $0x5b8] sm:$0xff]
    %v2984 = vld [vmem:[#allocation10 + $0x5c0] sm:$0xff]
    %v2985 = vld [vmem:[#allocation10 + $0x5c8] sm:$0xff]
    %v2986 = vld [vmem:[#allocation10 + $0x5d0] sm:$0xff]
    %v2987 = vld [vmem:[#allocation10 + $0x5d8] sm:$0xff]
    %v2988 = vld [vmem:[#allocation10 + $0x5e0] sm:$0xff]
    %v2989 = vld [vmem:[#allocation10 + $0x5e8] sm:$0xff]
    %v2990 = vld [vmem:[#allocation10 + $0x5f0] sm:$0xff]
    %v2991 = vld [vmem:[#allocation10 + $0x5f8] sm:$0xff]
    %v2992 = vld [vmem:[#allocation10 + $0x600] sm:$0xff]
    %v2993 = vld [vmem:[#allocation10 + $0x608] sm:$0xff]
    %v2994 = vld [vmem:[#allocation10 + $0x610] sm:$0xff]
    %v2995 = vld [vmem:[#allocation10 + $0x618] sm:$0xff]
    %v2996 = vld [vmem:[#allocation10 + $0x620] sm:$0xff]
    %v2997 = vld [vmem:[#allocation10 + $0x628] sm:$0xff]
    %v2998 = vld [vmem:[#allocation10 + $0x630] sm:$0xff]
    %v2999 = vld [vmem:[#allocation10 + $0x638] sm:$0xff]
    %v3000 = vld [vmem:[#allocation10 + $0x640] sm:$0xff]
    %v3001 = vld [vmem:[#allocation10 + $0x648] sm:$0xff]
    %v3002 = vld [vmem:[#allocation10 + $0x650] sm:$0xff]
    %v3003 = vld [vmem:[#allocation10 + $0x658] sm:$0xff]
    %v3004 = vld [vmem:[#allocation10 + $0x660] sm:$0xff]
    %v3005 = vld [vmem:[#allocation10 + $0x668] sm:$0xff]
    %v3006 = vld [vmem:[#allocation10 + $0x670] sm:$0xff]
    %v3007 = vld [vmem:[#allocation10 + $0x678] sm:$0xff]
    %v3008 = vld [vmem:[#allocation10 + $0x680] sm:$0xff]
    %v3009 = vld [vmem:[#allocation10 + $0x688] sm:$0xff]
    %v3010 = vld [vmem:[#allocation10 + $0x690] sm:$0xff]
    %v3011 = vld [vmem:[#allocation10 + $0x698] sm:$0xff]
    %v3012 = vld [vmem:[#allocation10 + $0x6a0] sm:$0xff]
    %v3013 = vld [vmem:[#allocation10 + $0x6a8] sm:$0xff]
    %v3014 = vld [vmem:[#allocation10 + $0x6b0] sm:$0xff]
    %v3015 = vld [vmem:[#allocation10 + $0x6b8] sm:$0xff]
    %v3016 = vld [vmem:[#allocation10 + $0x6c0] sm:$0xff]
    %v3017 = vld [vmem:[#allocation10 + $0x6c8] sm:$0xff]
    %v3018 = vld [vmem:[#allocation10 + $0x6d0] sm:$0xff]
    %v3019 = vld [vmem:[#allocation10 + $0x6d8] sm:$0xff]
    %v3020 = vld [vmem:[#allocation10 + $0x6e0] sm:$0xff]
    %v3021 = vld [vmem:[#allocation10 + $0x6e8] sm:$0xff]
    %v3022 = vld [vmem:[#allocation10 + $0x6f0] sm:$0xff]
    %v3023 = vld [vmem:[#allocation10 + $0x6f8] sm:$0xff]
    %v3024 = vld [vmem:[#allocation10 + $0x700] sm:$0xff]
    %v3025 = vld [vmem:[#allocation10 + $0x708] sm:$0xff]
    %v3026 = vld [vmem:[#allocation10 + $0x710] sm:$0xff]
    %v3027 = vld [vmem:[#allocation10 + $0x718] sm:$0xff]
    %v3028 = vld [vmem:[#allocation10 + $0x720] sm:$0xff]
    %v3029 = vld [vmem:[#allocation10 + $0x728] sm:$0xff]
    %v3030 = vld [vmem:[#allocation10 + $0x730] sm:$0xff]
    %v3031 = vld [vmem:[#allocation10 + $0x738] sm:$0xff]
    %v3032 = vld [vmem:[#allocation10 + $0x740] sm:$0xff]
    %v3033 = vld [vmem:[#allocation10 + $0x748] sm:$0xff]
    %v3034 = vld [vmem:[#allocation10 + $0x750] sm:$0xff]
    %v3035 = vld [vmem:[#allocation10 + $0x758] sm:$0xff]
    %v3036 = vld [vmem:[#allocation10 + $0x760] sm:$0xff]
    %v3037 = vld [vmem:[#allocation10 + $0x768] sm:$0xff]
    %v3038 = vld [vmem:[#allocation10 + $0x770] sm:$0xff]
    %v3039 = vld [vmem:[#allocation10 + $0x778] sm:$0xff]
    %v3040 = vld [vmem:[#allocation10 + $0x780] sm:$0xff]
    %v3041 = vld [vmem:[#allocation10 + $0x788] sm:$0xff]
    %v3042 = vld [vmem:[#allocation10 + $0x790] sm:$0xff]
    %v3043 = vld [vmem:[#allocation10 + $0x798] sm:$0xff]
    %v3044 = vld [vmem:[#allocation10 + $0x7a0] sm:$0xff]
    %v3045 = vld [vmem:[#allocation10 + $0x7a8] sm:$0xff]
    %v3046 = vld [vmem:[#allocation10 + $0x7b0] sm:$0xff]
    %v3047 = vld [vmem:[#allocation10 + $0x7b8] sm:$0xff]
    %v3048 = vld [vmem:[#allocation10 + $0x7c0] sm:$0xff]
    %v3049 = vld [vmem:[#allocation10 + $0x7c8] sm:$0xff]
    %v3050 = vld [vmem:[#allocation10 + $0x7d0] sm:$0xff]
    %v3051 = vld [vmem:[#allocation10 + $0x7d8] sm:$0xff]
    %v3052 = vld [vmem:[#allocation10 + $0x7e0] sm:$0xff]
    %v3053 = vld [vmem:[#allocation10 + $0x7e8] sm:$0xff]
    %v3054 = vld [vmem:[#allocation10 + $0x7f0] sm:$0xff]
    %v3055 = vld [vmem:[#allocation10 + $0x7f8] sm:$0xff]
    %v3056 = vld [vmem:[#allocation10 + $0x800] sm:$0xff]
    %v3057 = vld [vmem:[#allocation10 + $0x808] sm:$0xff]
    %v3058 = vld [vmem:[#allocation10 + $0x810] sm:$0xff]
    %v3059 = vld [vmem:[#allocation10 + $0x818] sm:$0xff]
    %v3060 = vld [vmem:[#allocation10 + $0x820] sm:$0xff]
    %v3061 = vld [vmem:[#allocation10 + $0x828] sm:$0xff]
    %v3062 = vld [vmem:[#allocation10 + $0x830] sm:$0xff]
    %v3063 = vld [vmem:[#allocation10 + $0x838] sm:$0xff]
    %v3064 = vld [vmem:[#allocation10 + $0x840] sm:$0xff]
    %v3065 = vld [vmem:[#allocation10 + $0x848] sm:$0xff]
    %v3066 = vld [vmem:[#allocation10 + $0x850] sm:$0xff]
    %v3067 = vld [vmem:[#allocation10 + $0x858] sm:$0xff]
    %v3068 = vld [vmem:[#allocation10 + $0x860] sm:$0xff]
    %v3069 = vld [vmem:[#allocation10 + $0x868] sm:$0xff]
    %v3070 = vld [vmem:[#allocation10 + $0x870] sm:$0xff]
    %v3071 = vld [vmem:[#allocation10 + $0x878] sm:$0xff]
    %v3072 = vld [vmem:[#allocation10 + $0x880] sm:$0xff]
    %v3073 = vld [vmem:[#allocation10 + $0x888] sm:$0xff]
    %v3074 = vld [vmem:[#allocation10 + $0x890] sm:$0xff]
    %v3075 = vld [vmem:[#allocation10 + $0x898] sm:$0xff]
    %v3076 = vld [vmem:[#allocation10 + $0x8a0] sm:$0xff]
    %v3077 = vld [vmem:[#allocation10 + $0x8a8] sm:$0xff]
    %v3078 = vld [vmem:[#allocation10 + $0x8b0] sm:$0xff]
    %v3079 = vld [vmem:[#allocation10 + $0x8b8] sm:$0xff]
    %v3080 = vld [vmem:[#allocation10 + $0x8c0] sm:$0xff]
    %v3081 = vld [vmem:[#allocation10 + $0x8c8] sm:$0xff]
    %v3082 = vld [vmem:[#allocation10 + $0x8d0] sm:$0xff]
    %v3083 = vld [vmem:[#allocation10 + $0x8d8] sm:$0xff]
    %v3084 = vld [vmem:[#allocation10 + $0x8e0] sm:$0xff]
    %v3085 = vld [vmem:[#allocation10 + $0x8e8] sm:$0xff]
    %v3086 = vld [vmem:[#allocation10 + $0x8f0] sm:$0xff]
    %v3087 = vld [vmem:[#allocation10 + $0x8f8] sm:$0xff]
    %v3088 = vld [vmem:[#allocation10 + $0x900] sm:$0xff]
    %v3089 = vld [vmem:[#allocation10 + $0x908] sm:$0xff]
    %v3090 = vld [vmem:[#allocation10 + $0x910] sm:$0xff]
    %v3091 = vld [vmem:[#allocation10 + $0x918] sm:$0xff]
    %v3092 = vld [vmem:[#allocation10 + $0x920] sm:$0xff]
    %v3093 = vld [vmem:[#allocation10 + $0x928] sm:$0xff]
    %v3094 = vld [vmem:[#allocation10 + $0x930] sm:$0xff]
    %v3095 = vld [vmem:[#allocation10 + $0x938] sm:$0xff]
    %v3096 = vld [vmem:[#allocation10 + $0x940] sm:$0xff]
    %v3097 = vld [vmem:[#allocation10 + $0x948] sm:$0xff]
    %v3098 = vld [vmem:[#allocation10 + $0x950] sm:$0xff]
    %v3099 = vld [vmem:[#allocation10 + $0x958] sm:$0xff]
    %v3100 = vld [vmem:[#allocation10 + $0x960] sm:$0xff]
    %v3101 = vld [vmem:[#allocation10 + $0x968] sm:$0xff]
    %v3102 = vld [vmem:[#allocation10 + $0x970] sm:$0xff]
    %v3103 = vld [vmem:[#allocation10 + $0x978] sm:$0xff]
    %v3104 = vld [vmem:[#allocation10 + $0x980] sm:$0xff]
    %v3105 = vld [vmem:[#allocation10 + $0x988] sm:$0xff]
    %v3106 = vld [vmem:[#allocation10 + $0x990] sm:$0xff]
    %v3107 = vld [vmem:[#allocation10 + $0x998] sm:$0xff]
    %v3108 = vld [vmem:[#allocation10 + $0x9a0] sm:$0xff]
    %v3109 = vld [vmem:[#allocation10 + $0x9a8] sm:$0xff]
    %v3110 = vld [vmem:[#allocation10 + $0x9b0] sm:$0xff]
    %v3111 = vld [vmem:[#allocation10 + $0x9b8] sm:$0xff]
    %v3112 = vld [vmem:[#allocation10 + $0x9c0] sm:$0xff]
    %v3113 = vld [vmem:[#allocation10 + $0x9c8] sm:$0xff]
    %v3114 = vld [vmem:[#allocation10 + $0x9d0] sm:$0xff]
    %v3115 = vld [vmem:[#allocation10 + $0x9d8] sm:$0xff]
    %v3116 = vld [vmem:[#allocation10 + $0x9e0] sm:$0xff]
    %v3117 = vld [vmem:[#allocation10 + $0x9e8] sm:$0xff]
    %v3118 = vld [vmem:[#allocation10 + $0x9f0] sm:$0xff]
    %v3119 = vld [vmem:[#allocation10 + $0x9f8] sm:$0xff]
    %v3120 = vld [vmem:[#allocation12] sm:$0xff]
    %v3121 = vld [vmem:[#allocation12 + $0x8] sm:$0xff]
    %v3122 = vld [vmem:[#allocation12 + $0x10] sm:$0xff]
    %v3123 = vld [vmem:[#allocation12 + $0x18] sm:$0xff]
    %v3124 = vld [vmem:[#allocation12 + $0x20] sm:$0xff]
    %v3130 = vlaneseq
    %v3131 = vshrl.u32 %v3130, 7
    %v3132 = vsub.s32 0, %v3131
    %v3133 = vrot.slane %v3120, %v3132
    %v3134 = vlaneseq
    %v3135 = vshrl.u32 %v3134, 7
    %v3136 = vsub.s32 1, %v3135
    %v3137 = vrot.slane %v3120, %v3136
    %v3138 = vlaneseq
    %v3139 = vshrl.u32 %v3138, 7
    %v3140 = vsub.s32 2, %v3139
    %v3141 = vrot.slane %v3120, %v3140
    %v3142 = vlaneseq
    %v3143 = vshrl.u32 %v3142, 7
    %v3144 = vsub.s32 3, %v3143
    %v3145 = vrot.slane %v3120, %v3144
    %v3146 = vlaneseq
    %v3147 = vshrl.u32 %v3146, 7
    %v3148 = vsub.s32 4, %v3147
    %v3149 = vrot.slane %v3120, %v3148
    %v3150 = vlaneseq
    %v3151 = vshrl.u32 %v3150, 7
    %v3152 = vsub.s32 5, %v3151
    %v3153 = vrot.slane %v3120, %v3152
    %v3154 = vlaneseq
    %v3155 = vshrl.u32 %v3154, 7
    %v3156 = vsub.s32 6, %v3155
    %v3157 = vrot.slane %v3120, %v3156
    %v3158 = vlaneseq
    %v3159 = vshrl.u32 %v3158, 7
    %v3160 = vsub.s32 7, %v3159
    %v3161 = vrot.slane %v3120, %v3160
    %v3162 = vlaneseq
    %v3163 = vshrl.u32 %v3162, 7
    %v3164 = vsub.s32 0, %v3163
    %v3165 = vrot.slane %v3121, %v3164
    %v3166 = vlaneseq
    %v3167 = vshrl.u32 %v3166, 7
    %v3168 = vsub.s32 1, %v3167
    %v3169 = vrot.slane %v3121, %v3168
    %v3170 = vlaneseq
    %v3171 = vshrl.u32 %v3170, 7
    %v3172 = vsub.s32 2, %v3171
    %v3173 = vrot.slane %v3121, %v3172
    %v3174 = vlaneseq
    %v3175 = vshrl.u32 %v3174, 7
    %v3176 = vsub.s32 3, %v3175
    %v3177 = vrot.slane %v3121, %v3176
    %v3178 = vlaneseq
    %v3179 = vshrl.u32 %v3178, 7
    %v3180 = vsub.s32 4, %v3179
    %v3181 = vrot.slane %v3121, %v3180
    %v3182 = vlaneseq
    %v3183 = vshrl.u32 %v3182, 7
    %v3184 = vsub.s32 5, %v3183
    %v3185 = vrot.slane %v3121, %v3184
    %v3186 = vlaneseq
    %v3187 = vshrl.u32 %v3186, 7
    %v3188 = vsub.s32 6, %v3187
    %v3189 = vrot.slane %v3121, %v3188
    %v3190 = vlaneseq
    %v3191 = vshrl.u32 %v3190, 7
    %v3192 = vsub.s32 7, %v3191
    %v3193 = vrot.slane %v3121, %v3192
    %v3194 = vlaneseq
    %v3195 = vshrl.u32 %v3194, 7
    %v3196 = vsub.s32 0, %v3195
    %v3197 = vrot.slane %v3122, %v3196
    %v3198 = vlaneseq
    %v3199 = vshrl.u32 %v3198, 7
    %v3200 = vsub.s32 1, %v3199
    %v3201 = vrot.slane %v3122, %v3200
    %v3202 = vlaneseq
    %v3203 = vshrl.u32 %v3202, 7
    %v3204 = vsub.s32 2, %v3203
    %v3205 = vrot.slane %v3122, %v3204
    %v3206 = vlaneseq
    %v3207 = vshrl.u32 %v3206, 7
    %v3208 = vsub.s32 3, %v3207
    %v3209 = vrot.slane %v3122, %v3208
    %v3210 = vlaneseq
    %v3211 = vshrl.u32 %v3210, 7
    %v3212 = vsub.s32 4, %v3211
    %v3213 = vrot.slane %v3122, %v3212
    %v3214 = vlaneseq
    %v3215 = vshrl.u32 %v3214, 7
    %v3216 = vsub.s32 5, %v3215
    %v3217 = vrot.slane %v3122, %v3216
    %v3218 = vlaneseq
    %v3219 = vshrl.u32 %v3218, 7
    %v3220 = vsub.s32 6, %v3219
    %v3221 = vrot.slane %v3122, %v3220
    %v3222 = vlaneseq
    %v3223 = vshrl.u32 %v3222, 7
    %v3224 = vsub.s32 7, %v3223
    %v3225 = vrot.slane %v3122, %v3224
    %v3226 = vlaneseq
    %v3227 = vshrl.u32 %v3226, 7
    %v3228 = vsub.s32 0, %v3227
    %v3229 = vrot.slane %v3123, %v3228
    %v3230 = vlaneseq
    %v3231 = vshrl.u32 %v3230, 7
    %v3232 = vsub.s32 1, %v3231
    %v3233 = vrot.slane %v3123, %v3232
    %v3234 = vlaneseq
    %v3235 = vshrl.u32 %v3234, 7
    %v3236 = vsub.s32 2, %v3235
    %v3237 = vrot.slane %v3123, %v3236
    %v3238 = vlaneseq
    %v3239 = vshrl.u32 %v3238, 7
    %v3240 = vsub.s32 3, %v3239
    %v3241 = vrot.slane %v3123, %v3240
    %v3242 = vlaneseq
    %v3243 = vshrl.u32 %v3242, 7
    %v3244 = vsub.s32 4, %v3243
    %v3245 = vrot.slane %v3123, %v3244
    %v3246 = vlaneseq
    %v3247 = vshrl.u32 %v3246, 7
    %v3248 = vsub.s32 5, %v3247
    %v3249 = vrot.slane %v3123, %v3248
    %v3250 = vlaneseq
    %v3251 = vshrl.u32 %v3250, 7
    %v3252 = vsub.s32 6, %v3251
    %v3253 = vrot.slane %v3123, %v3252
    %v3254 = vlaneseq
    %v3255 = vshrl.u32 %v3254, 7
    %v3256 = vsub.s32 7, %v3255
    %v3257 = vrot.slane %v3123, %v3256
    %v3258 = vlaneseq
    %v3259 = vshrl.u32 %v3258, 7
    %v3260 = vsub.s32 0, %v3259
    %v3261 = vrot.slane %v3124, %v3260
    %v3262 = vlaneseq
    %v3263 = vshrl.u32 %v3262, 7
    %v3264 = vsub.s32 1, %v3263
    %v3265 = vrot.slane %v3124, %v3264
    %v3266 = vlaneseq
    %v3267 = vshrl.u32 %v3266, 7
    %v3268 = vsub.s32 2, %v3267
    %v3269 = vrot.slane %v3124, %v3268
    %v3270 = vlaneseq
    %v3271 = vshrl.u32 %v3270, 7
    %v3272 = vsub.s32 3, %v3271
    %v3273 = vrot.slane %v3124, %v3272
    %v3274 = vlaneseq
    %v3275 = vshrl.u32 %v3274, 7
    %v3276 = vsub.s32 4, %v3275
    %v3277 = vrot.slane %v3124, %v3276
    %v3278 = vlaneseq
    %v3279 = vshrl.u32 %v3278, 7
    %v3280 = vsub.s32 5, %v3279
    %v3281 = vrot.slane %v3124, %v3280
    %v3282 = vlaneseq
    %v3283 = vshrl.u32 %v3282, 7
    %v3284 = vsub.s32 6, %v3283
    %v3285 = vrot.slane %v3124, %v3284
    %v3286 = vlaneseq
    %v3287 = vshrl.u32 %v3286, 7
    %v3288 = vsub.s32 7, %v3287
    %v3289 = vrot.slane %v3124, %v3288
    %v3650 = vunpack.c.l.b16 %v2800
    %v3651 = vunpack.c.h.b16 %v2800
    %v3652 = vunpack.c.l.b16 %v2801
    %v3653 = vunpack.c.h.b16 %v2801
    %v3654 = vunpack.c.l.b16 %v2802
    %v3655 = vunpack.c.h.b16 %v2802
    %v3656 = vunpack.c.l.b16 %v2803
    %v3657 = vunpack.c.h.b16 %v2803
    %v3658 = vunpack.c.l.b16 %v2804
    %v3659 = vunpack.c.h.b16 %v2804
    %v3660 = vunpack.c.l.b16 %v2805
    %v3661 = vunpack.c.h.b16 %v2805
    %v3662 = vunpack.c.l.b16 %v2806
    %v3663 = vunpack.c.h.b16 %v2806
    %v3664 = vunpack.c.l.b16 %v2807
    %v3665 = vunpack.c.h.b16 %v2807
    %v3666 = vunpack.c.l.b16 %v2808
    %v3667 = vunpack.c.h.b16 %v2808
    %v3668 = vunpack.c.l.b16 %v2809
    %v3669 = vunpack.c.h.b16 %v2809
    %v3670 = vunpack.c.l.b16 %v2810
    %v3671 = vunpack.c.h.b16 %v2810
    %v3672 = vunpack.c.l.b16 %v2811
    %v3673 = vunpack.c.h.b16 %v2811
    %v3674 = vunpack.c.l.b16 %v2812
    %v3675 = vunpack.c.h.b16 %v2812
    %v3676 = vunpack.c.l.b16 %v2813
    %v3677 = vunpack.c.h.b16 %v2813
    %v3678 = vunpack.c.l.b16 %v2814
    %v3679 = vunpack.c.h.b16 %v2814
    %v3680 = vunpack.c.l.b16 %v2815
    %v3681 = vunpack.c.h.b16 %v2815
    %v3682 = vunpack.c.l.b16 %v2816
    %v3683 = vunpack.c.h.b16 %v2816
    %v3684 = vunpack.c.l.b16 %v2817
    %v3685 = vunpack.c.h.b16 %v2817
    %v3686 = vunpack.c.l.b16 %v2818
    %v3687 = vunpack.c.h.b16 %v2818
    %v3688 = vunpack.c.l.b16 %v2819
    %v3689 = vunpack.c.h.b16 %v2819
    %v3690 = vunpack.c.l.b16 %v2820
    %v3691 = vunpack.c.h.b16 %v2820
    %v3692 = vunpack.c.l.b16 %v2821
    %v3693 = vunpack.c.h.b16 %v2821
    %v3694 = vunpack.c.l.b16 %v2822
    %v3695 = vunpack.c.h.b16 %v2822
    %v3696 = vunpack.c.l.b16 %v2823
    %v3697 = vunpack.c.h.b16 %v2823
    %v3698 = vunpack.c.l.b16 %v2824
    %v3699 = vunpack.c.h.b16 %v2824
    %v3700 = vunpack.c.l.b16 %v2825
    %v3701 = vunpack.c.h.b16 %v2825
    %v3702 = vunpack.c.l.b16 %v2826
    %v3703 = vunpack.c.h.b16 %v2826
    %v3704 = vunpack.c.l.b16 %v2827
    %v3705 = vunpack.c.h.b16 %v2827
    %v3706 = vunpack.c.l.b16 %v2828
    %v3707 = vunpack.c.h.b16 %v2828
    %v3708 = vunpack.c.l.b16 %v2829
    %v3709 = vunpack.c.h.b16 %v2829
    %v3710 = vunpack.c.l.b16 %v2830
    %v3711 = vunpack.c.h.b16 %v2830
    %v3712 = vunpack.c.l.b16 %v2831
    %v3713 = vunpack.c.h.b16 %v2831
    %v3714 = vunpack.c.l.b16 %v2832
    %v3715 = vunpack.c.h.b16 %v2832
    %v3716 = vunpack.c.l.b16 %v2833
    %v3717 = vunpack.c.h.b16 %v2833
    %v3718 = vunpack.c.l.b16 %v2834
    %v3719 = vunpack.c.h.b16 %v2834
    %v3720 = vunpack.c.l.b16 %v2835
    %v3721 = vunpack.c.h.b16 %v2835
    %v3722 = vunpack.c.l.b16 %v2836
    %v3723 = vunpack.c.h.b16 %v2836
    %v3724 = vunpack.c.l.b16 %v2837
    %v3725 = vunpack.c.h.b16 %v2837
    %v3726 = vunpack.c.l.b16 %v2838
    %v3727 = vunpack.c.h.b16 %v2838
    %v3728 = vunpack.c.l.b16 %v2839
    %v3729 = vunpack.c.h.b16 %v2839
    %v3730 = vunpack.c.l.b16 %v2840
    %v3731 = vunpack.c.h.b16 %v2840
    %v3732 = vunpack.c.l.b16 %v2841
    %v3733 = vunpack.c.h.b16 %v2841
    %v3734 = vunpack.c.l.b16 %v2842
    %v3735 = vunpack.c.h.b16 %v2842
    %v3736 = vunpack.c.l.b16 %v2843
    %v3737 = vunpack.c.h.b16 %v2843
    %v3738 = vunpack.c.l.b16 %v2844
    %v3739 = vunpack.c.h.b16 %v2844
    %v3740 = vunpack.c.l.b16 %v2845
    %v3741 = vunpack.c.h.b16 %v2845
    %v3742 = vunpack.c.l.b16 %v2846
    %v3743 = vunpack.c.h.b16 %v2846
    %v3744 = vunpack.c.l.b16 %v2847
    %v3745 = vunpack.c.h.b16 %v2847
    %v3746 = vunpack.c.l.b16 %v2848
    %v3747 = vunpack.c.h.b16 %v2848
    %v3748 = vunpack.c.l.b16 %v2849
    %v3749 = vunpack.c.h.b16 %v2849
    %v3750 = vunpack.c.l.b16 %v2850
    %v3751 = vunpack.c.h.b16 %v2850
    %v3752 = vunpack.c.l.b16 %v2851
    %v3753 = vunpack.c.h.b16 %v2851
    %v3754 = vunpack.c.l.b16 %v2852
    %v3755 = vunpack.c.h.b16 %v2852
    %v3756 = vunpack.c.l.b16 %v2853
    %v3757 = vunpack.c.h.b16 %v2853
    %v3758 = vunpack.c.l.b16 %v2854
    %v3759 = vunpack.c.h.b16 %v2854
    %v3760 = vunpack.c.l.b16 %v2855
    %v3761 = vunpack.c.h.b16 %v2855
    %v3762 = vunpack.c.l.b16 %v2856
    %v3763 = vunpack.c.h.b16 %v2856
    %v3764 = vunpack.c.l.b16 %v2857
    %v3765 = vunpack.c.h.b16 %v2857
    %v3766 = vunpack.c.l.b16 %v2858
    %v3767 = vunpack.c.h.b16 %v2858
    %v3768 = vunpack.c.l.b16 %v2859
    %v3769 = vunpack.c.h.b16 %v2859
    %v3770 = vunpack.c.l.b16 %v2860
    %v3771 = vunpack.c.h.b16 %v2860
    %v3772 = vunpack.c.l.b16 %v2861
    %v3773 = vunpack.c.h.b16 %v2861
    %v3774 = vunpack.c.l.b16 %v2862
    %v3775 = vunpack.c.h.b16 %v2862
    %v3776 = vunpack.c.l.b16 %v2863
    %v3777 = vunpack.c.h.b16 %v2863
    %v3778 = vunpack.c.l.b16 %v2864
    %v3779 = vunpack.c.h.b16 %v2864
    %v3780 = vunpack.c.l.b16 %v2865
    %v3781 = vunpack.c.h.b16 %v2865
    %v3782 = vunpack.c.l.b16 %v2866
    %v3783 = vunpack.c.h.b16 %v2866
    %v3784 = vunpack.c.l.b16 %v2867
    %v3785 = vunpack.c.h.b16 %v2867
    %v3786 = vunpack.c.l.b16 %v2868
    %v3787 = vunpack.c.h.b16 %v2868
    %v3788 = vunpack.c.l.b16 %v2869
    %v3789 = vunpack.c.h.b16 %v2869
    %v3790 = vunpack.c.l.b16 %v2870
    %v3791 = vunpack.c.h.b16 %v2870
    %v3792 = vunpack.c.l.b16 %v2871
    %v3793 = vunpack.c.h.b16 %v2871
    %v3794 = vunpack.c.l.b16 %v2872
    %v3795 = vunpack.c.h.b16 %v2872
    %v3796 = vunpack.c.l.b16 %v2873
    %v3797 = vunpack.c.h.b16 %v2873
    %v3798 = vunpack.c.l.b16 %v2874
    %v3799 = vunpack.c.h.b16 %v2874
    %v3800 = vunpack.c.l.b16 %v2875
    %v3801 = vunpack.c.h.b16 %v2875
    %v3802 = vunpack.c.l.b16 %v2876
    %v3803 = vunpack.c.h.b16 %v2876
    %v3804 = vunpack.c.l.b16 %v2877
    %v3805 = vunpack.c.h.b16 %v2877
    %v3806 = vunpack.c.l.b16 %v2878
    %v3807 = vunpack.c.h.b16 %v2878
    %v3808 = vunpack.c.l.b16 %v2879
    %v3809 = vunpack.c.h.b16 %v2879
    %v3810 = vunpack.c.l.b16 %v2880
    %v3811 = vunpack.c.h.b16 %v2880
    %v3812 = vunpack.c.l.b16 %v2881
    %v3813 = vunpack.c.h.b16 %v2881
    %v3814 = vunpack.c.l.b16 %v2882
    %v3815 = vunpack.c.h.b16 %v2882
    %v3816 = vunpack.c.l.b16 %v2883
    %v3817 = vunpack.c.h.b16 %v2883
    %v3818 = vunpack.c.l.b16 %v2884
    %v3819 = vunpack.c.h.b16 %v2884
    %v3820 = vunpack.c.l.b16 %v2885
    %v3821 = vunpack.c.h.b16 %v2885
    %v3822 = vunpack.c.l.b16 %v2886
    %v3823 = vunpack.c.h.b16 %v2886
    %v3824 = vunpack.c.l.b16 %v2887
    %v3825 = vunpack.c.h.b16 %v2887
    %v3826 = vunpack.c.l.b16 %v2888
    %v3827 = vunpack.c.h.b16 %v2888
    %v3828 = vunpack.c.l.b16 %v2889
    %v3829 = vunpack.c.h.b16 %v2889
    %v3830 = vunpack.c.l.b16 %v2890
    %v3831 = vunpack.c.h.b16 %v2890
    %v3832 = vunpack.c.l.b16 %v2891
    %v3833 = vunpack.c.h.b16 %v2891
    %v3834 = vunpack.c.l.b16 %v2892
    %v3835 = vunpack.c.h.b16 %v2892
    %v3836 = vunpack.c.l.b16 %v2893
    %v3837 = vunpack.c.h.b16 %v2893
    %v3838 = vunpack.c.l.b16 %v2894
    %v3839 = vunpack.c.h.b16 %v2894
    %v3840 = vunpack.c.l.b16 %v2895
    %v3841 = vunpack.c.h.b16 %v2895
    %v3842 = vunpack.c.l.b16 %v2896
    %v3843 = vunpack.c.h.b16 %v2896
    %v3844 = vunpack.c.l.b16 %v2897
    %v3845 = vunpack.c.h.b16 %v2897
    %v3846 = vunpack.c.l.b16 %v2898
    %v3847 = vunpack.c.h.b16 %v2898
    %v3848 = vunpack.c.l.b16 %v2899
    %v3849 = vunpack.c.h.b16 %v2899
    %v3850 = vunpack.c.l.b16 %v2900
    %v3851 = vunpack.c.h.b16 %v2900
    %v3852 = vunpack.c.l.b16 %v2901
    %v3853 = vunpack.c.h.b16 %v2901
    %v3854 = vunpack.c.l.b16 %v2902
    %v3855 = vunpack.c.h.b16 %v2902
    %v3856 = vunpack.c.l.b16 %v2903
    %v3857 = vunpack.c.h.b16 %v2903
    %v3858 = vunpack.c.l.b16 %v2904
    %v3859 = vunpack.c.h.b16 %v2904
    %v3860 = vunpack.c.l.b16 %v2905
    %v3861 = vunpack.c.h.b16 %v2905
    %v3862 = vunpack.c.l.b16 %v2906
    %v3863 = vunpack.c.h.b16 %v2906
    %v3864 = vunpack.c.l.b16 %v2907
    %v3865 = vunpack.c.h.b16 %v2907
    %v3866 = vunpack.c.l.b16 %v2908
    %v3867 = vunpack.c.h.b16 %v2908
    %v3868 = vunpack.c.l.b16 %v2909
    %v3869 = vunpack.c.h.b16 %v2909
    %v3870 = vunpack.c.l.b16 %v2910
    %v3871 = vunpack.c.h.b16 %v2910
    %v3872 = vunpack.c.l.b16 %v2911
    %v3873 = vunpack.c.h.b16 %v2911
    %v3874 = vunpack.c.l.b16 %v2912
    %v3875 = vunpack.c.h.b16 %v2912
    %v3876 = vunpack.c.l.b16 %v2913
    %v3877 = vunpack.c.h.b16 %v2913
    %v3878 = vunpack.c.l.b16 %v2914
    %v3879 = vunpack.c.h.b16 %v2914
    %v3880 = vunpack.c.l.b16 %v2915
    %v3881 = vunpack.c.h.b16 %v2915
    %v3882 = vunpack.c.l.b16 %v2916
    %v3883 = vunpack.c.h.b16 %v2916
    %v3884 = vunpack.c.l.b16 %v2917
    %v3885 = vunpack.c.h.b16 %v2917
    %v3886 = vunpack.c.l.b16 %v2918
    %v3887 = vunpack.c.h.b16 %v2918
    %v3888 = vunpack.c.l.b16 %v2919
    %v3889 = vunpack.c.h.b16 %v2919
    %v3890 = vunpack.c.l.b16 %v2920
    %v3891 = vunpack.c.h.b16 %v2920
    %v3892 = vunpack.c.l.b16 %v2921
    %v3893 = vunpack.c.h.b16 %v2921
    %v3894 = vunpack.c.l.b16 %v2922
    %v3895 = vunpack.c.h.b16 %v2922
    %v3896 = vunpack.c.l.b16 %v2923
    %v3897 = vunpack.c.h.b16 %v2923
    %v3898 = vunpack.c.l.b16 %v2924
    %v3899 = vunpack.c.h.b16 %v2924
    %v3900 = vunpack.c.l.b16 %v2925
    %v3901 = vunpack.c.h.b16 %v2925
    %v3902 = vunpack.c.l.b16 %v2926
    %v3903 = vunpack.c.h.b16 %v2926
    %v3904 = vunpack.c.l.b16 %v2927
    %v3905 = vunpack.c.h.b16 %v2927
    %v3906 = vunpack.c.l.b16 %v2928
    %v3907 = vunpack.c.h.b16 %v2928
    %v3908 = vunpack.c.l.b16 %v2929
    %v3909 = vunpack.c.h.b16 %v2929
    %v3910 = vunpack.c.l.b16 %v2930
    %v3911 = vunpack.c.h.b16 %v2930
    %v3912 = vunpack.c.l.b16 %v2931
    %v3913 = vunpack.c.h.b16 %v2931
    %v3914 = vunpack.c.l.b16 %v2932
    %v3915 = vunpack.c.h.b16 %v2932
    %v3916 = vunpack.c.l.b16 %v2933
    %v3917 = vunpack.c.h.b16 %v2933
    %v3918 = vunpack.c.l.b16 %v2934
    %v3919 = vunpack.c.h.b16 %v2934
    %v3920 = vunpack.c.l.b16 %v2935
    %v3921 = vunpack.c.h.b16 %v2935
    %v3922 = vunpack.c.l.b16 %v2936
    %v3923 = vunpack.c.h.b16 %v2936
    %v3924 = vunpack.c.l.b16 %v2937
    %v3925 = vunpack.c.h.b16 %v2937
    %v3926 = vunpack.c.l.b16 %v2938
    %v3927 = vunpack.c.h.b16 %v2938
    %v3928 = vunpack.c.l.b16 %v2939
    %v3929 = vunpack.c.h.b16 %v2939
    %v3930 = vunpack.c.l.b16 %v2940
    %v3931 = vunpack.c.h.b16 %v2940
    %v3932 = vunpack.c.l.b16 %v2941
    %v3933 = vunpack.c.h.b16 %v2941
    %v3934 = vunpack.c.l.b16 %v2942
    %v3935 = vunpack.c.h.b16 %v2942
    %v3936 = vunpack.c.l.b16 %v2943
    %v3937 = vunpack.c.h.b16 %v2943
    %v3938 = vunpack.c.l.b16 %v2944
    %v3939 = vunpack.c.h.b16 %v2944
    %v3940 = vunpack.c.l.b16 %v2945
    %v3941 = vunpack.c.h.b16 %v2945
    %v3942 = vunpack.c.l.b16 %v2946
    %v3943 = vunpack.c.h.b16 %v2946
    %v3944 = vunpack.c.l.b16 %v2947
    %v3945 = vunpack.c.h.b16 %v2947
    %v3946 = vunpack.c.l.b16 %v2948
    %v3947 = vunpack.c.h.b16 %v2948
    %v3948 = vunpack.c.l.b16 %v2949
    %v3949 = vunpack.c.h.b16 %v2949
    %v3950 = vunpack.c.l.b16 %v2950
    %v3951 = vunpack.c.h.b16 %v2950
    %v3952 = vunpack.c.l.b16 %v2951
    %v3953 = vunpack.c.h.b16 %v2951
    %v3954 = vunpack.c.l.b16 %v2952
    %v3955 = vunpack.c.h.b16 %v2952
    %v3956 = vunpack.c.l.b16 %v2953
    %v3957 = vunpack.c.h.b16 %v2953
    %v3958 = vunpack.c.l.b16 %v2954
    %v3959 = vunpack.c.h.b16 %v2954
    %v3960 = vunpack.c.l.b16 %v2955
    %v3961 = vunpack.c.h.b16 %v2955
    %v3962 = vunpack.c.l.b16 %v2956
    %v3963 = vunpack.c.h.b16 %v2956
    %v3964 = vunpack.c.l.b16 %v2957
    %v3965 = vunpack.c.h.b16 %v2957
    %v3966 = vunpack.c.l.b16 %v2958
    %v3967 = vunpack.c.h.b16 %v2958
    %v3968 = vunpack.c.l.b16 %v2959
    %v3969 = vunpack.c.h.b16 %v2959
    %v3970 = vunpack.c.l.b16 %v2960
    %v3971 = vunpack.c.h.b16 %v2960
    %v3972 = vunpack.c.l.b16 %v2961
    %v3973 = vunpack.c.h.b16 %v2961
    %v3974 = vunpack.c.l.b16 %v2962
    %v3975 = vunpack.c.h.b16 %v2962
    %v3976 = vunpack.c.l.b16 %v2963
    %v3977 = vunpack.c.h.b16 %v2963
    %v3978 = vunpack.c.l.b16 %v2964
    %v3979 = vunpack.c.h.b16 %v2964
    %v3980 = vunpack.c.l.b16 %v2965
    %v3981 = vunpack.c.h.b16 %v2965
    %v3982 = vunpack.c.l.b16 %v2966
    %v3983 = vunpack.c.h.b16 %v2966
    %v3984 = vunpack.c.l.b16 %v2967
    %v3985 = vunpack.c.h.b16 %v2967
    %v3986 = vunpack.c.l.b16 %v2968
    %v3987 = vunpack.c.h.b16 %v2968
    %v3988 = vunpack.c.l.b16 %v2969
    %v3989 = vunpack.c.h.b16 %v2969
    %v3990 = vunpack.c.l.b16 %v2970
    %v3991 = vunpack.c.h.b16 %v2970
    %v3992 = vunpack.c.l.b16 %v2971
    %v3993 = vunpack.c.h.b16 %v2971
    %v3994 = vunpack.c.l.b16 %v2972
    %v3995 = vunpack.c.h.b16 %v2972
    %v3996 = vunpack.c.l.b16 %v2973
    %v3997 = vunpack.c.h.b16 %v2973
    %v3998 = vunpack.c.l.b16 %v2974
    %v3999 = vunpack.c.h.b16 %v2974
    %v4000 = vunpack.c.l.b16 %v2975
    %v4001 = vunpack.c.h.b16 %v2975
    %v4002 = vunpack.c.l.b16 %v2976
    %v4003 = vunpack.c.h.b16 %v2976
    %v4004 = vunpack.c.l.b16 %v2977
    %v4005 = vunpack.c.h.b16 %v2977
    %v4006 = vunpack.c.l.b16 %v2978
    %v4007 = vunpack.c.h.b16 %v2978
    %v4008 = vunpack.c.l.b16 %v2979
    %v4009 = vunpack.c.h.b16 %v2979
    %v4010 = vunpack.c.l.b16 %v2980
    %v4011 = vunpack.c.h.b16 %v2980
    %v4012 = vunpack.c.l.b16 %v2981
    %v4013 = vunpack.c.h.b16 %v2981
    %v4014 = vunpack.c.l.b16 %v2982
    %v4015 = vunpack.c.h.b16 %v2982
    %v4016 = vunpack.c.l.b16 %v2983
    %v4017 = vunpack.c.h.b16 %v2983
    %v4018 = vunpack.c.l.b16 %v2984
    %v4019 = vunpack.c.h.b16 %v2984
    %v4020 = vunpack.c.l.b16 %v2985
    %v4021 = vunpack.c.h.b16 %v2985
    %v4022 = vunpack.c.l.b16 %v2986
    %v4023 = vunpack.c.h.b16 %v2986
    %v4024 = vunpack.c.l.b16 %v2987
    %v4025 = vunpack.c.h.b16 %v2987
    %v4026 = vunpack.c.l.b16 %v2988
    %v4027 = vunpack.c.h.b16 %v2988
    %v4028 = vunpack.c.l.b16 %v2989
    %v4029 = vunpack.c.h.b16 %v2989
    %v4030 = vunpack.c.l.b16 %v2990
    %v4031 = vunpack.c.h.b16 %v2990
    %v4032 = vunpack.c.l.b16 %v2991
    %v4033 = vunpack.c.h.b16 %v2991
    %v4034 = vunpack.c.l.b16 %v2992
    %v4035 = vunpack.c.h.b16 %v2992
    %v4036 = vunpack.c.l.b16 %v2993
    %v4037 = vunpack.c.h.b16 %v2993
    %v4038 = vunpack.c.l.b16 %v2994
    %v4039 = vunpack.c.h.b16 %v2994
    %v4040 = vunpack.c.l.b16 %v2995
    %v4041 = vunpack.c.h.b16 %v2995
    %v4042 = vunpack.c.l.b16 %v2996
    %v4043 = vunpack.c.h.b16 %v2996
    %v4044 = vunpack.c.l.b16 %v2997
    %v4045 = vunpack.c.h.b16 %v2997
    %v4046 = vunpack.c.l.b16 %v2998
    %v4047 = vunpack.c.h.b16 %v2998
    %v4048 = vunpack.c.l.b16 %v2999
    %v4049 = vunpack.c.h.b16 %v2999
    %v4050 = vunpack.c.l.b16 %v3000
    %v4051 = vunpack.c.h.b16 %v3000
    %v4052 = vunpack.c.l.b16 %v3001
    %v4053 = vunpack.c.h.b16 %v3001
    %v4054 = vunpack.c.l.b16 %v3002
    %v4055 = vunpack.c.h.b16 %v3002
    %v4056 = vunpack.c.l.b16 %v3003
    %v4057 = vunpack.c.h.b16 %v3003
    %v4058 = vunpack.c.l.b16 %v3004
    %v4059 = vunpack.c.h.b16 %v3004
    %v4060 = vunpack.c.l.b16 %v3005
    %v4061 = vunpack.c.h.b16 %v3005
    %v4062 = vunpack.c.l.b16 %v3006
    %v4063 = vunpack.c.h.b16 %v3006
    %v4064 = vunpack.c.l.b16 %v3007
    %v4065 = vunpack.c.h.b16 %v3007
    %v4066 = vunpack.c.l.b16 %v3008
    %v4067 = vunpack.c.h.b16 %v3008
    %v4068 = vunpack.c.l.b16 %v3009
    %v4069 = vunpack.c.h.b16 %v3009
    %v4070 = vunpack.c.l.b16 %v3010
    %v4071 = vunpack.c.h.b16 %v3010
    %v4072 = vunpack.c.l.b16 %v3011
    %v4073 = vunpack.c.h.b16 %v3011
    %v4074 = vunpack.c.l.b16 %v3012
    %v4075 = vunpack.c.h.b16 %v3012
    %v4076 = vunpack.c.l.b16 %v3013
    %v4077 = vunpack.c.h.b16 %v3013
    %v4078 = vunpack.c.l.b16 %v3014
    %v4079 = vunpack.c.h.b16 %v3014
    %v4080 = vunpack.c.l.b16 %v3015
    %v4081 = vunpack.c.h.b16 %v3015
    %v4082 = vunpack.c.l.b16 %v3016
    %v4083 = vunpack.c.h.b16 %v3016
    %v4084 = vunpack.c.l.b16 %v3017
    %v4085 = vunpack.c.h.b16 %v3017
    %v4086 = vunpack.c.l.b16 %v3018
    %v4087 = vunpack.c.h.b16 %v3018
    %v4088 = vunpack.c.l.b16 %v3019
    %v4089 = vunpack.c.h.b16 %v3019
    %v4090 = vunpack.c.l.b16 %v3020
    %v4091 = vunpack.c.h.b16 %v3020
    %v4092 = vunpack.c.l.b16 %v3021
    %v4093 = vunpack.c.h.b16 %v3021
    %v4094 = vunpack.c.l.b16 %v3022
    %v4095 = vunpack.c.h.b16 %v3022
    %v4096 = vunpack.c.l.b16 %v3023
    %v4097 = vunpack.c.h.b16 %v3023
    %v4098 = vunpack.c.l.b16 %v3024
    %v4099 = vunpack.c.h.b16 %v3024
    %v4100 = vunpack.c.l.b16 %v3025
    %v4101 = vunpack.c.h.b16 %v3025
    %v4102 = vunpack.c.l.b16 %v3026
    %v4103 = vunpack.c.h.b16 %v3026
    %v4104 = vunpack.c.l.b16 %v3027
    %v4105 = vunpack.c.h.b16 %v3027
    %v4106 = vunpack.c.l.b16 %v3028
    %v4107 = vunpack.c.h.b16 %v3028
    %v4108 = vunpack.c.l.b16 %v3029
    %v4109 = vunpack.c.h.b16 %v3029
    %v4110 = vunpack.c.l.b16 %v3030
    %v4111 = vunpack.c.h.b16 %v3030
    %v4112 = vunpack.c.l.b16 %v3031
    %v4113 = vunpack.c.h.b16 %v3031
    %v4114 = vunpack.c.l.b16 %v3032
    %v4115 = vunpack.c.h.b16 %v3032
    %v4116 = vunpack.c.l.b16 %v3033
    %v4117 = vunpack.c.h.b16 %v3033
    %v4118 = vunpack.c.l.b16 %v3034
    %v4119 = vunpack.c.h.b16 %v3034
    %v4120 = vunpack.c.l.b16 %v3035
    %v4121 = vunpack.c.h.b16 %v3035
    %v4122 = vunpack.c.l.b16 %v3036
    %v4123 = vunpack.c.h.b16 %v3036
    %v4124 = vunpack.c.l.b16 %v3037
    %v4125 = vunpack.c.h.b16 %v3037
    %v4126 = vunpack.c.l.b16 %v3038
    %v4127 = vunpack.c.h.b16 %v3038
    %v4128 = vunpack.c.l.b16 %v3039
    %v4129 = vunpack.c.h.b16 %v3039
    %v4130 = vunpack.c.l.b16 %v3040
    %v4131 = vunpack.c.h.b16 %v3040
    %v4132 = vunpack.c.l.b16 %v3041
    %v4133 = vunpack.c.h.b16 %v3041
    %v4134 = vunpack.c.l.b16 %v3042
    %v4135 = vunpack.c.h.b16 %v3042
    %v4136 = vunpack.c.l.b16 %v3043
    %v4137 = vunpack.c.h.b16 %v3043
    %v4138 = vunpack.c.l.b16 %v3044
    %v4139 = vunpack.c.h.b16 %v3044
    %v4140 = vunpack.c.l.b16 %v3045
    %v4141 = vunpack.c.h.b16 %v3045
    %v4142 = vunpack.c.l.b16 %v3046
    %v4143 = vunpack.c.h.b16 %v3046
    %v4144 = vunpack.c.l.b16 %v3047
    %v4145 = vunpack.c.h.b16 %v3047
    %v4146 = vunpack.c.l.b16 %v3048
    %v4147 = vunpack.c.h.b16 %v3048
    %v4148 = vunpack.c.l.b16 %v3049
    %v4149 = vunpack.c.h.b16 %v3049
    %v4150 = vunpack.c.l.b16 %v3050
    %v4151 = vunpack.c.h.b16 %v3050
    %v4152 = vunpack.c.l.b16 %v3051
    %v4153 = vunpack.c.h.b16 %v3051
    %v4154 = vunpack.c.l.b16 %v3052
    %v4155 = vunpack.c.h.b16 %v3052
    %v4156 = vunpack.c.l.b16 %v3053
    %v4157 = vunpack.c.h.b16 %v3053
    %v4158 = vunpack.c.l.b16 %v3054
    %v4159 = vunpack.c.h.b16 %v3054
    %v4160 = vunpack.c.l.b16 %v3055
    %v4161 = vunpack.c.h.b16 %v3055
    %v4162 = vunpack.c.l.b16 %v3056
    %v4163 = vunpack.c.h.b16 %v3056
    %v4164 = vunpack.c.l.b16 %v3057
    %v4165 = vunpack.c.h.b16 %v3057
    %v4166 = vunpack.c.l.b16 %v3058
    %v4167 = vunpack.c.h.b16 %v3058
    %v4168 = vunpack.c.l.b16 %v3059
    %v4169 = vunpack.c.h.b16 %v3059
    %v4170 = vunpack.c.l.b16 %v3060
    %v4171 = vunpack.c.h.b16 %v3060
    %v4172 = vunpack.c.l.b16 %v3061
    %v4173 = vunpack.c.h.b16 %v3061
    %v4174 = vunpack.c.l.b16 %v3062
    %v4175 = vunpack.c.h.b16 %v3062
    %v4176 = vunpack.c.l.b16 %v3063
    %v4177 = vunpack.c.h.b16 %v3063
    %v4178 = vunpack.c.l.b16 %v3064
    %v4179 = vunpack.c.h.b16 %v3064
    %v4180 = vunpack.c.l.b16 %v3065
    %v4181 = vunpack.c.h.b16 %v3065
    %v4182 = vunpack.c.l.b16 %v3066
    %v4183 = vunpack.c.h.b16 %v3066
    %v4184 = vunpack.c.l.b16 %v3067
    %v4185 = vunpack.c.h.b16 %v3067
    %v4186 = vunpack.c.l.b16 %v3068
    %v4187 = vunpack.c.h.b16 %v3068
    %v4188 = vunpack.c.l.b16 %v3069
    %v4189 = vunpack.c.h.b16 %v3069
    %v4190 = vunpack.c.l.b16 %v3070
    %v4191 = vunpack.c.h.b16 %v3070
    %v4192 = vunpack.c.l.b16 %v3071
    %v4193 = vunpack.c.h.b16 %v3071
    %v4194 = vunpack.c.l.b16 %v3072
    %v4195 = vunpack.c.h.b16 %v3072
    %v4196 = vunpack.c.l.b16 %v3073
    %v4197 = vunpack.c.h.b16 %v3073
    %v4198 = vunpack.c.l.b16 %v3074
    %v4199 = vunpack.c.h.b16 %v3074
    %v4200 = vunpack.c.l.b16 %v3075
    %v4201 = vunpack.c.h.b16 %v3075
    %v4202 = vunpack.c.l.b16 %v3076
    %v4203 = vunpack.c.h.b16 %v3076
    %v4204 = vunpack.c.l.b16 %v3077
    %v4205 = vunpack.c.h.b16 %v3077
    %v4206 = vunpack.c.l.b16 %v3078
    %v4207 = vunpack.c.h.b16 %v3078
    %v4208 = vunpack.c.l.b16 %v3079
    %v4209 = vunpack.c.h.b16 %v3079
    %v4210 = vunpack.c.l.b16 %v3080
    %v4211 = vunpack.c.h.b16 %v3080
    %v4212 = vunpack.c.l.b16 %v3081
    %v4213 = vunpack.c.h.b16 %v3081
    %v4214 = vunpack.c.l.b16 %v3082
    %v4215 = vunpack.c.h.b16 %v3082
    %v4216 = vunpack.c.l.b16 %v3083
    %v4217 = vunpack.c.h.b16 %v3083
    %v4218 = vunpack.c.l.b16 %v3084
    %v4219 = vunpack.c.h.b16 %v3084
    %v4220 = vunpack.c.l.b16 %v3085
    %v4221 = vunpack.c.h.b16 %v3085
    %v4222 = vunpack.c.l.b16 %v3086
    %v4223 = vunpack.c.h.b16 %v3086
    %v4224 = vunpack.c.l.b16 %v3087
    %v4225 = vunpack.c.h.b16 %v3087
    %v4226 = vunpack.c.l.b16 %v3088
    %v4227 = vunpack.c.h.b16 %v3088
    %v4228 = vunpack.c.l.b16 %v3089
    %v4229 = vunpack.c.h.b16 %v3089
    %v4230 = vunpack.c.l.b16 %v3090
    %v4231 = vunpack.c.h.b16 %v3090
    %v4232 = vunpack.c.l.b16 %v3091
    %v4233 = vunpack.c.h.b16 %v3091
    %v4234 = vunpack.c.l.b16 %v3092
    %v4235 = vunpack.c.h.b16 %v3092
    %v4236 = vunpack.c.l.b16 %v3093
    %v4237 = vunpack.c.h.b16 %v3093
    %v4238 = vunpack.c.l.b16 %v3094
    %v4239 = vunpack.c.h.b16 %v3094
    %v4240 = vunpack.c.l.b16 %v3095
    %v4241 = vunpack.c.h.b16 %v3095
    %v4242 = vunpack.c.l.b16 %v3096
    %v4243 = vunpack.c.h.b16 %v3096
    %v4244 = vunpack.c.l.b16 %v3097
    %v4245 = vunpack.c.h.b16 %v3097
    %v4246 = vunpack.c.l.b16 %v3098
    %v4247 = vunpack.c.h.b16 %v3098
    %v4248 = vunpack.c.l.b16 %v3099
    %v4249 = vunpack.c.h.b16 %v3099
    %v4250 = vunpack.c.l.b16 %v3100
    %v4251 = vunpack.c.h.b16 %v3100
    %v4252 = vunpack.c.l.b16 %v3101
    %v4253 = vunpack.c.h.b16 %v3101
    %v4254 = vunpack.c.l.b16 %v3102
    %v4255 = vunpack.c.h.b16 %v3102
    %v4256 = vunpack.c.l.b16 %v3103
    %v4257 = vunpack.c.h.b16 %v3103
    %v4258 = vunpack.c.l.b16 %v3104
    %v4259 = vunpack.c.h.b16 %v3104
    %v4260 = vunpack.c.l.b16 %v3105
    %v4261 = vunpack.c.h.b16 %v3105
    %v4262 = vunpack.c.l.b16 %v3106
    %v4263 = vunpack.c.h.b16 %v3106
    %v4264 = vunpack.c.l.b16 %v3107
    %v4265 = vunpack.c.h.b16 %v3107
    %v4266 = vunpack.c.l.b16 %v3108
    %v4267 = vunpack.c.h.b16 %v3108
    %v4268 = vunpack.c.l.b16 %v3109
    %v4269 = vunpack.c.h.b16 %v3109
    %v4270 = vunpack.c.l.b16 %v3110
    %v4271 = vunpack.c.h.b16 %v3110
    %v4272 = vunpack.c.l.b16 %v3111
    %v4273 = vunpack.c.h.b16 %v3111
    %v4274 = vunpack.c.l.b16 %v3112
    %v4275 = vunpack.c.h.b16 %v3112
    %v4276 = vunpack.c.l.b16 %v3113
    %v4277 = vunpack.c.h.b16 %v3113
    %v4278 = vunpack.c.l.b16 %v3114
    %v4279 = vunpack.c.h.b16 %v3114
    %v4280 = vunpack.c.l.b16 %v3115
    %v4281 = vunpack.c.h.b16 %v3115
    %v4282 = vunpack.c.l.b16 %v3116
    %v4283 = vunpack.c.h.b16 %v3116
    %v4284 = vunpack.c.l.b16 %v3117
    %v4285 = vunpack.c.h.b16 %v3117
    %v4286 = vunpack.c.l.b16 %v3118
    %v4287 = vunpack.c.h.b16 %v3118
    %v4288 = vunpack.c.l.b16 %v3119
    %v4289 = vunpack.c.h.b16 %v3119
    %v4290 = vpack.c.b16 %v3690, %v3650
    %v4291 = vpack.c.b16 %v3691, %v3651
    %v4292 = vpack.c.b16 %v3692, %v3652
    %v4293 = vpack.c.b16 %v3693, %v3653
    %v4294 = vpack.c.b16 %v3694, %v3654
    %v4295 = vpack.c.b16 %v3695, %v3655
    %v4296 = vpack.c.b16 %v3696, %v3656
    %v4297 = vpack.c.b16 %v3697, %v3657
    %v4298 = vpack.c.b16 %v3698, %v3658
    %v4299 = vpack.c.b16 %v3699, %v3659
    %v4300 = vpack.c.b16 %v3700, %v3660
    %v4301 = vpack.c.b16 %v3701, %v3661
    %v4302 = vpack.c.b16 %v3702, %v3662
    %v4303 = vpack.c.b16 %v3703, %v3663
    %v4304 = vpack.c.b16 %v3704, %v3664
    %v4305 = vpack.c.b16 %v3705, %v3665
    %v4306 = vpack.c.b16 %v3706, %v3666
    %v4307 = vpack.c.b16 %v3707, %v3667
    %v4308 = vpack.c.b16 %v3708, %v3668
    %v4309 = vpack.c.b16 %v3709, %v3669
    %v4310 = vpack.c.b16 %v3710, %v3670
    %v4311 = vpack.c.b16 %v3711, %v3671
    %v4312 = vpack.c.b16 %v3712, %v3672
    %v4313 = vpack.c.b16 %v3713, %v3673
    %v4314 = vpack.c.b16 %v3714, %v3674
    %v4315 = vpack.c.b16 %v3715, %v3675
    %v4316 = vpack.c.b16 %v3716, %v3676
    %v4317 = vpack.c.b16 %v3717, %v3677
    %v4318 = vpack.c.b16 %v3718, %v3678
    %v4319 = vpack.c.b16 %v3719, %v3679
    %v4320 = vpack.c.b16 %v3720, %v3680
    %v4321 = vpack.c.b16 %v3721, %v3681
    %v4322 = vpack.c.b16 %v3722, %v3682
    %v4323 = vpack.c.b16 %v3723, %v3683
    %v4324 = vpack.c.b16 %v3724, %v3684
    %v4325 = vpack.c.b16 %v3725, %v3685
    %v4326 = vpack.c.b16 %v3726, %v3686
    %v4327 = vpack.c.b16 %v3727, %v3687
    %v4328 = vpack.c.b16 %v3728, %v3688
    %v4329 = vpack.c.b16 %v3729, %v3689
    %v4330 = vpack.c.b16 %v3770, %v3730
    %v4331 = vpack.c.b16 %v3771, %v3731
    %v4332 = vpack.c.b16 %v3772, %v3732
    %v4333 = vpack.c.b16 %v3773, %v3733
    %v4334 = vpack.c.b16 %v3774, %v3734
    %v4335 = vpack.c.b16 %v3775, %v3735
    %v4336 = vpack.c.b16 %v3776, %v3736
    %v4337 = vpack.c.b16 %v3777, %v3737
    %v4338 = vpack.c.b16 %v3778, %v3738
    %v4339 = vpack.c.b16 %v3779, %v3739
    %v4340 = vpack.c.b16 %v3780, %v3740
    %v4341 = vpack.c.b16 %v3781, %v3741
    %v4342 = vpack.c.b16 %v3782, %v3742
    %v4343 = vpack.c.b16 %v3783, %v3743
    %v4344 = vpack.c.b16 %v3784, %v3744
    %v4345 = vpack.c.b16 %v3785, %v3745
    %v4346 = vpack.c.b16 %v3786, %v3746
    %v4347 = vpack.c.b16 %v3787, %v3747
    %v4348 = vpack.c.b16 %v3788, %v3748
    %v4349 = vpack.c.b16 %v3789, %v3749
    %v4350 = vpack.c.b16 %v3790, %v3750
    %v4351 = vpack.c.b16 %v3791, %v3751
    %v4352 = vpack.c.b16 %v3792, %v3752
    %v4353 = vpack.c.b16 %v3793, %v3753
    %v4354 = vpack.c.b16 %v3794, %v3754
    %v4355 = vpack.c.b16 %v3795, %v3755
    %v4356 = vpack.c.b16 %v3796, %v3756
    %v4357 = vpack.c.b16 %v3797, %v3757
    %v4358 = vpack.c.b16 %v3798, %v3758
    %v4359 = vpack.c.b16 %v3799, %v3759
    %v4360 = vpack.c.b16 %v3800, %v3760
    %v4361 = vpack.c.b16 %v3801, %v3761
    %v4362 = vpack.c.b16 %v3802, %v3762
    %v4363 = vpack.c.b16 %v3803, %v3763
    %v4364 = vpack.c.b16 %v3804, %v3764
    %v4365 = vpack.c.b16 %v3805, %v3765
    %v4366 = vpack.c.b16 %v3806, %v3766
    %v4367 = vpack.c.b16 %v3807, %v3767
    %v4368 = vpack.c.b16 %v3808, %v3768
    %v4369 = vpack.c.b16 %v3809, %v3769
    %v4370 = vpack.c.b16 %v3850, %v3810
    %v4371 = vpack.c.b16 %v3851, %v3811
    %v4372 = vpack.c.b16 %v3852, %v3812
    %v4373 = vpack.c.b16 %v3853, %v3813
    %v4374 = vpack.c.b16 %v3854, %v3814
    %v4375 = vpack.c.b16 %v3855, %v3815
    %v4376 = vpack.c.b16 %v3856, %v3816
    %v4377 = vpack.c.b16 %v3857, %v3817
    %v4378 = vpack.c.b16 %v3858, %v3818
    %v4379 = vpack.c.b16 %v3859, %v3819
    %v4380 = vpack.c.b16 %v3860, %v3820
    %v4381 = vpack.c.b16 %v3861, %v3821
    %v4382 = vpack.c.b16 %v3862, %v3822
    %v4383 = vpack.c.b16 %v3863, %v3823
    %v4384 = vpack.c.b16 %v3864, %v3824
    %v4385 = vpack.c.b16 %v3865, %v3825
    %v4386 = vpack.c.b16 %v3866, %v3826
    %v4387 = vpack.c.b16 %v3867, %v3827
    %v4388 = vpack.c.b16 %v3868, %v3828
    %v4389 = vpack.c.b16 %v3869, %v3829
    %v4390 = vpack.c.b16 %v3870, %v3830
    %v4391 = vpack.c.b16 %v3871, %v3831
    %v4392 = vpack.c.b16 %v3872, %v3832
    %v4393 = vpack.c.b16 %v3873, %v3833
    %v4394 = vpack.c.b16 %v3874, %v3834
    %v4395 = vpack.c.b16 %v3875, %v3835
    %v4396 = vpack.c.b16 %v3876, %v3836
    %v4397 = vpack.c.b16 %v3877, %v3837
    %v4398 = vpack.c.b16 %v3878, %v3838
    %v4399 = vpack.c.b16 %v3879, %v3839
    %v4400 = vpack.c.b16 %v3880, %v3840
    %v4401 = vpack.c.b16 %v3881, %v3841
    %v4402 = vpack.c.b16 %v3882, %v3842
    %v4403 = vpack.c.b16 %v3883, %v3843
    %v4404 = vpack.c.b16 %v3884, %v3844
    %v4405 = vpack.c.b16 %v3885, %v3845
    %v4406 = vpack.c.b16 %v3886, %v3846
    %v4407 = vpack.c.b16 %v3887, %v3847
    %v4408 = vpack.c.b16 %v3888, %v3848
    %v4409 = vpack.c.b16 %v3889, %v3849
    %v4410 = vpack.c.b16 %v3930, %v3890
    %v4411 = vpack.c.b16 %v3931, %v3891
    %v4412 = vpack.c.b16 %v3932, %v3892
    %v4413 = vpack.c.b16 %v3933, %v3893
    %v4414 = vpack.c.b16 %v3934, %v3894
    %v4415 = vpack.c.b16 %v3935, %v3895
    %v4416 = vpack.c.b16 %v3936, %v3896
    %v4417 = vpack.c.b16 %v3937, %v3897
    %v4418 = vpack.c.b16 %v3938, %v3898
    %v4419 = vpack.c.b16 %v3939, %v3899
    %v4420 = vpack.c.b16 %v3940, %v3900
    %v4421 = vpack.c.b16 %v3941, %v3901
    %v4422 = vpack.c.b16 %v3942, %v3902
    %v4423 = vpack.c.b16 %v3943, %v3903
    %v4424 = vpack.c.b16 %v3944, %v3904
    %v4425 = vpack.c.b16 %v3945, %v3905
    %v4426 = vpack.c.b16 %v3946, %v3906
    %v4427 = vpack.c.b16 %v3947, %v3907
    %v4428 = vpack.c.b16 %v3948, %v3908
    %v4429 = vpack.c.b16 %v3949, %v3909
    %v4430 = vpack.c.b16 %v3950, %v3910
    %v4431 = vpack.c.b16 %v3951, %v3911
    %v4432 = vpack.c.b16 %v3952, %v3912
    %v4433 = vpack.c.b16 %v3953, %v3913
    %v4434 = vpack.c.b16 %v3954, %v3914
    %v4435 = vpack.c.b16 %v3955, %v3915
    %v4436 = vpack.c.b16 %v3956, %v3916
    %v4437 = vpack.c.b16 %v3957, %v3917
    %v4438 = vpack.c.b16 %v3958, %v3918
    %v4439 = vpack.c.b16 %v3959, %v3919
    %v4440 = vpack.c.b16 %v3960, %v3920
    %v4441 = vpack.c.b16 %v3961, %v3921
    %v4442 = vpack.c.b16 %v3962, %v3922
    %v4443 = vpack.c.b16 %v3963, %v3923
    %v4444 = vpack.c.b16 %v3964, %v3924
    %v4445 = vpack.c.b16 %v3965, %v3925
    %v4446 = vpack.c.b16 %v3966, %v3926
    %v4447 = vpack.c.b16 %v3967, %v3927
    %v4448 = vpack.c.b16 %v3968, %v3928
    %v4449 = vpack.c.b16 %v3969, %v3929
    %v4450 = vpack.c.b16 %v4010, %v3970
    %v4451 = vpack.c.b16 %v4011, %v3971
    %v4452 = vpack.c.b16 %v4012, %v3972
    %v4453 = vpack.c.b16 %v4013, %v3973
    %v4454 = vpack.c.b16 %v4014, %v3974
    %v4455 = vpack.c.b16 %v4015, %v3975
    %v4456 = vpack.c.b16 %v4016, %v3976
    %v4457 = vpack.c.b16 %v4017, %v3977
    %v4458 = vpack.c.b16 %v4018, %v3978
    %v4459 = vpack.c.b16 %v4019, %v3979
    %v4460 = vpack.c.b16 %v4020, %v3980
    %v4461 = vpack.c.b16 %v4021, %v3981
    %v4462 = vpack.c.b16 %v4022, %v3982
    %v4463 = vpack.c.b16 %v4023, %v3983
    %v4464 = vpack.c.b16 %v4024, %v3984
    %v4465 = vpack.c.b16 %v4025, %v3985
    %v4466 = vpack.c.b16 %v4026, %v3986
    %v4467 = vpack.c.b16 %v4027, %v3987
    %v4468 = vpack.c.b16 %v4028, %v3988
    %v4469 = vpack.c.b16 %v4029, %v3989
    %v4470 = vpack.c.b16 %v4030, %v3990
    %v4471 = vpack.c.b16 %v4031, %v3991
    %v4472 = vpack.c.b16 %v4032, %v3992
    %v4473 = vpack.c.b16 %v4033, %v3993
    %v4474 = vpack.c.b16 %v4034, %v3994
    %v4475 = vpack.c.b16 %v4035, %v3995
    %v4476 = vpack.c.b16 %v4036, %v3996
    %v4477 = vpack.c.b16 %v4037, %v3997
    %v4478 = vpack.c.b16 %v4038, %v3998
    %v4479 = vpack.c.b16 %v4039, %v3999
    %v4480 = vpack.c.b16 %v4040, %v4000
    %v4481 = vpack.c.b16 %v4041, %v4001
    %v4482 = vpack.c.b16 %v4042, %v4002
    %v4483 = vpack.c.b16 %v4043, %v4003
    %v4484 = vpack.c.b16 %v4044, %v4004
    %v4485 = vpack.c.b16 %v4045, %v4005
    %v4486 = vpack.c.b16 %v4046, %v4006
    %v4487 = vpack.c.b16 %v4047, %v4007
    %v4488 = vpack.c.b16 %v4048, %v4008
    %v4489 = vpack.c.b16 %v4049, %v4009
    %v4490 = vpack.c.b16 %v4090, %v4050
    %v4491 = vpack.c.b16 %v4091, %v4051
    %v4492 = vpack.c.b16 %v4092, %v4052
    %v4493 = vpack.c.b16 %v4093, %v4053
    %v4494 = vpack.c.b16 %v4094, %v4054
    %v4495 = vpack.c.b16 %v4095, %v4055
    %v4496 = vpack.c.b16 %v4096, %v4056
    %v4497 = vpack.c.b16 %v4097, %v4057
    %v4498 = vpack.c.b16 %v4098, %v4058
    %v4499 = vpack.c.b16 %v4099, %v4059
    %v4500 = vpack.c.b16 %v4100, %v4060
    %v4501 = vpack.c.b16 %v4101, %v4061
    %v4502 = vpack.c.b16 %v4102, %v4062
    %v4503 = vpack.c.b16 %v4103, %v4063
    %v4504 = vpack.c.b16 %v4104, %v4064
    %v4505 = vpack.c.b16 %v4105, %v4065
    %v4506 = vpack.c.b16 %v4106, %v4066
    %v4507 = vpack.c.b16 %v4107, %v4067
    %v4508 = vpack.c.b16 %v4108, %v4068
    %v4509 = vpack.c.b16 %v4109, %v4069
    %v4510 = vpack.c.b16 %v4110, %v4070
    %v4511 = vpack.c.b16 %v4111, %v4071
    %v4512 = vpack.c.b16 %v4112, %v4072
    %v4513 = vpack.c.b16 %v4113, %v4073
    %v4514 = vpack.c.b16 %v4114, %v4074
    %v4515 = vpack.c.b16 %v4115, %v4075
    %v4516 = vpack.c.b16 %v4116, %v4076
    %v4517 = vpack.c.b16 %v4117, %v4077
    %v4518 = vpack.c.b16 %v4118, %v4078
    %v4519 = vpack.c.b16 %v4119, %v4079
    %v4520 = vpack.c.b16 %v4120, %v4080
    %v4521 = vpack.c.b16 %v4121, %v4081
    %v4522 = vpack.c.b16 %v4122, %v4082
    %v4523 = vpack.c.b16 %v4123, %v4083
    %v4524 = vpack.c.b16 %v4124, %v4084
    %v4525 = vpack.c.b16 %v4125, %v4085
    %v4526 = vpack.c.b16 %v4126, %v4086
    %v4527 = vpack.c.b16 %v4127, %v4087
    %v4528 = vpack.c.b16 %v4128, %v4088
    %v4529 = vpack.c.b16 %v4129, %v4089
    %v4530 = vpack.c.b16 %v4170, %v4130
    %v4531 = vpack.c.b16 %v4171, %v4131
    %v4532 = vpack.c.b16 %v4172, %v4132
    %v4533 = vpack.c.b16 %v4173, %v4133
    %v4534 = vpack.c.b16 %v4174, %v4134
    %v4535 = vpack.c.b16 %v4175, %v4135
    %v4536 = vpack.c.b16 %v4176, %v4136
    %v4537 = vpack.c.b16 %v4177, %v4137
    %v4538 = vpack.c.b16 %v4178, %v4138
    %v4539 = vpack.c.b16 %v4179, %v4139
    %v4540 = vpack.c.b16 %v4180, %v4140
    %v4541 = vpack.c.b16 %v4181, %v4141
    %v4542 = vpack.c.b16 %v4182, %v4142
    %v4543 = vpack.c.b16 %v4183, %v4143
    %v4544 = vpack.c.b16 %v4184, %v4144
    %v4545 = vpack.c.b16 %v4185, %v4145
    %v4546 = vpack.c.b16 %v4186, %v4146
    %v4547 = vpack.c.b16 %v4187, %v4147
    %v4548 = vpack.c.b16 %v4188, %v4148
    %v4549 = vpack.c.b16 %v4189, %v4149
    %v4550 = vpack.c.b16 %v4190, %v4150
    %v4551 = vpack.c.b16 %v4191, %v4151
    %v4552 = vpack.c.b16 %v4192, %v4152
    %v4553 = vpack.c.b16 %v4193, %v4153
    %v4554 = vpack.c.b16 %v4194, %v4154
    %v4555 = vpack.c.b16 %v4195, %v4155
    %v4556 = vpack.c.b16 %v4196, %v4156
    %v4557 = vpack.c.b16 %v4197, %v4157
    %v4558 = vpack.c.b16 %v4198, %v4158
    %v4559 = vpack.c.b16 %v4199, %v4159
    %v4560 = vpack.c.b16 %v4200, %v4160
    %v4561 = vpack.c.b16 %v4201, %v4161
    %v4562 = vpack.c.b16 %v4202, %v4162
    %v4563 = vpack.c.b16 %v4203, %v4163
    %v4564 = vpack.c.b16 %v4204, %v4164
    %v4565 = vpack.c.b16 %v4205, %v4165
    %v4566 = vpack.c.b16 %v4206, %v4166
    %v4567 = vpack.c.b16 %v4207, %v4167
    %v4568 = vpack.c.b16 %v4208, %v4168
    %v4569 = vpack.c.b16 %v4209, %v4169
    %v4570 = vpack.c.b16 %v4250, %v4210
    %v4571 = vpack.c.b16 %v4251, %v4211
    %v4572 = vpack.c.b16 %v4252, %v4212
    %v4573 = vpack.c.b16 %v4253, %v4213
    %v4574 = vpack.c.b16 %v4254, %v4214
    %v4575 = vpack.c.b16 %v4255, %v4215
    %v4576 = vpack.c.b16 %v4256, %v4216
    %v4577 = vpack.c.b16 %v4257, %v4217
    %v4578 = vpack.c.b16 %v4258, %v4218
    %v4579 = vpack.c.b16 %v4259, %v4219
    %v4580 = vpack.c.b16 %v4260, %v4220
    %v4581 = vpack.c.b16 %v4261, %v4221
    %v4582 = vpack.c.b16 %v4262, %v4222
    %v4583 = vpack.c.b16 %v4263, %v4223
    %v4584 = vpack.c.b16 %v4264, %v4224
    %v4585 = vpack.c.b16 %v4265, %v4225
    %v4586 = vpack.c.b16 %v4266, %v4226
    %v4587 = vpack.c.b16 %v4267, %v4227
    %v4588 = vpack.c.b16 %v4268, %v4228
    %v4589 = vpack.c.b16 %v4269, %v4229
    %v4590 = vpack.c.b16 %v4270, %v4230
    %v4591 = vpack.c.b16 %v4271, %v4231
    %v4592 = vpack.c.b16 %v4272, %v4232
    %v4593 = vpack.c.b16 %v4273, %v4233
    %v4594 = vpack.c.b16 %v4274, %v4234
    %v4595 = vpack.c.b16 %v4275, %v4235
    %v4596 = vpack.c.b16 %v4276, %v4236
    %v4597 = vpack.c.b16 %v4277, %v4237
    %v4598 = vpack.c.b16 %v4278, %v4238
    %v4599 = vpack.c.b16 %v4279, %v4239
    %v4600 = vpack.c.b16 %v4280, %v4240
    %v4601 = vpack.c.b16 %v4281, %v4241
    %v4602 = vpack.c.b16 %v4282, %v4242
    %v4603 = vpack.c.b16 %v4283, %v4243
    %v4604 = vpack.c.b16 %v4284, %v4244
    %v4605 = vpack.c.b16 %v4285, %v4245
    %v4606 = vpack.c.b16 %v4286, %v4246
    %v4607 = vpack.c.b16 %v4287, %v4247
    %v4608 = vpack.c.b16 %v4288, %v4248
    %v4609 = vpack.c.b16 %v4289, %v4249
    %4930 = vmatprep.subr.bf16.mxu0 %v4571
    %4931 = vmatpush1.bf16.msra.mxu0 %v4570
    %4932 = vmatprep.subr.bf16.mxu0 %v4531
    %4933 = vmatpush1.bf16.msra.mxu0 %v4530
    %4934 = vmatprep.subr.bf16.mxu0 %v4491
    %4935 = vmatpush1.bf16.msra.mxu0 %v4490
    %4936 = vmatprep.subr.bf16.mxu0 %v4451
    %4937 = vmatpush1.bf16.msra.mxu0 %v4450
    %4938 = vmatprep.subr.bf16.mxu0 %v4411
    %4939 = vmatpush1.bf16.msra.mxu0 %v4410
    %4940 = vmatprep.subr.bf16.mxu0 %v4371
    %4941 = vmatpush1.bf16.msra.mxu0 %v4370
    %4942 = vmatprep.subr.bf16.mxu0 %v4331
    %4943 = vmatpush1.bf16.msra.mxu0 %v4330
    %4944 = vmatprep.subr.bf16.mxu0 %v4291
    %4945 = vmatpush1.bf16.msra.mxu0 %v4290
    %4946 = vmatprep.subr.bf16.mxu0 0
    %4947 = vmatpush2.bf16.msra.mxu0 0
    %4948 = vmatprep.subr.bf16.mxu0 0
    %4949 = vmatpush2.bf16.msra.mxu0 0
    %4950 = vmatprep.subr.bf16.mxu0 0
    %4951 = vmatpush2.bf16.msra.mxu0 0
    %4952 = vmatprep.subr.bf16.mxu0 0
    %4953 = vmatpush2.bf16.msra.mxu0 0
    %4954 = vmatprep.subr.bf16.mxu0 0
    %4955 = vmatpush2.bf16.msra.mxu0 0
    %4956 = vmatprep.subr.bf16.mxu0 0
    %4957 = vmatpush2.bf16.msra.mxu0 0
    %4958 = vmatprep.subr.bf16.mxu0 0
    %4959 = vmatpush2.bf16.msra.mxu0 0
    %4960 = vmatprep.subr.bf16.mxu0 0
    %4961 = vmatpush2.bf16.msra.mxu0 0
    %4962 = vmatprep.mubr.bf16.mxu0 0
    %4963 = vmatmul.mubr.bf16.gmra.mxu0 %v2799
    %v4964 = vpop.f32.mrf.mxu0
    %v4965 = vadd.f32 %v3133, %v4964
    %v4966 = vpop.f32.mrf.mxu0
    %v4967 = vadd.f32 %v3137, %v4966
    %v4968 = vpop.f32.mrf.mxu0
    %v4969 = vpop.f32.mrf.mxu0
    %4970 = vdwg.mxu0
    %4971 = vmatprep.subr.bf16.mxu0 %v4573
    %4972 = vmatpush1.bf16.msra.mxu0 %v4572
    %4973 = vmatprep.subr.bf16.mxu0 %v4533
    %4974 = vmatpush1.bf16.msra.mxu0 %v4532
    %4975 = vmatprep.subr.bf16.mxu0 %v4493
    %4976 = vmatpush1.bf16.msra.mxu0 %v4492
    %4977 = vmatprep.subr.bf16.mxu0 %v4453
    %4978 = vmatpush1.bf16.msra.mxu0 %v4452
    %4979 = vmatprep.subr.bf16.mxu0 %v4413
    %4980 = vmatpush1.bf16.msra.mxu0 %v4412
    %4981 = vmatprep.subr.bf16.mxu0 %v4373
    %4982 = vmatpush1.bf16.msra.mxu0 %v4372
    %4983 = vmatprep.subr.bf16.mxu0 %v4333
    %4984 = vmatpush1.bf16.msra.mxu0 %v4332
    %4985 = vmatprep.subr.bf16.mxu0 %v4293
    %4986 = vmatpush1.bf16.msra.mxu0 %v4292
    %4987 = vmatprep.subr.bf16.mxu0 0
    %4988 = vmatpush2.bf16.msra.mxu0 0
    %4989 = vmatprep.subr.bf16.mxu0 0
    %4990 = vmatpush2.bf16.msra.mxu0 0
    %4991 = vmatprep.subr.bf16.mxu0 0
    %4992 = vmatpush2.bf16.msra.mxu0 0
    %4993 = vmatprep.subr.bf16.mxu0 0
    %4994 = vmatpush2.bf16.msra.mxu0 0
    %4995 = vmatprep.subr.bf16.mxu0 0
    %4996 = vmatpush2.bf16.msra.mxu0 0
    %4997 = vmatprep.subr.bf16.mxu0 0
    %4998 = vmatpush2.bf16.msra.mxu0 0
    %4999 = vmatprep.subr.bf16.mxu0 0
    %5000 = vmatpush2.bf16.msra.mxu0 0
    %5001 = vmatprep.subr.bf16.mxu0 0
    %5002 = vmatpush2.bf16.msra.mxu0 0
    %5003 = vmatprep.mubr.bf16.mxu0 0
    %5004 = vmatmul.mubr.bf16.gmra.mxu0 %v2799
    %v5005 = vpop.f32.mrf.mxu0
    %v5006 = vadd.f32 %v3141, %v5005
    %v5007 = vpop.f32.mrf.mxu0
    %v5008 = vadd.f32 %v3145, %v5007
    %v5009 = vpop.f32.mrf.mxu0
    %v5010 = vpop.f32.mrf.mxu0
    %5011 = vdwg.mxu0
    %5012 = vmatprep.subr.bf16.mxu0 %v4575
    %5013 = vmatpush1.bf16.msra.mxu0 %v4574
    %5014 = vmatprep.subr.bf16.mxu0 %v4535
    %5015 = vmatpush1.bf16.msra.mxu0 %v4534
    %5016 = vmatprep.subr.bf16.mxu0 %v4495
    %5017 = vmatpush1.bf16.msra.mxu0 %v4494
    %5018 = vmatprep.subr.bf16.mxu0 %v4455
    %5019 = vmatpush1.bf16.msra.mxu0 %v4454
    %5020 = vmatprep.subr.bf16.mxu0 %v4415
    %5021 = vmatpush1.bf16.msra.mxu0 %v4414
    %5022 = vmatprep.subr.bf16.mxu0 %v4375
    %5023 = vmatpush1.bf16.msra.mxu0 %v4374
    %5024 = vmatprep.subr.bf16.mxu0 %v4335
    %5025 = vmatpush1.bf16.msra.mxu0 %v4334
    %5026 = vmatprep.subr.bf16.mxu0 %v4295
    %5027 = vmatpush1.bf16.msra.mxu0 %v4294
    %5028 = vmatprep.subr.bf16.mxu0 0
    %5029 = vmatpush2.bf16.msra.mxu0 0
    %5030 = vmatprep.subr.bf16.mxu0 0
    %5031 = vmatpush2.bf16.msra.mxu0 0
    %5032 = vmatprep.subr.bf16.mxu0 0
    %5033 = vmatpush2.bf16.msra.mxu0 0
    %5034 = vmatprep.subr.bf16.mxu0 0
    %5035 = vmatpush2.bf16.msra.mxu0 0
    %5036 = vmatprep.subr.bf16.mxu0 0
    %5037 = vmatpush2.bf16.msra.mxu0 0
    %5038 = vmatprep.subr.bf16.mxu0 0
    %5039 = vmatpush2.bf16.msra.mxu0 0
    %5040 = vmatprep.subr.bf16.mxu0 0
    %5041 = vmatpush2.bf16.msra.mxu0 0
    %5042 = vmatprep.subr.bf16.mxu0 0
    %5043 = vmatpush2.bf16.msra.mxu0 0
    %5044 = vmatprep.mubr.bf16.mxu0 0
    %5045 = vmatmul.mubr.bf16.gmra.mxu0 %v2799
    %v5046 = vpop.f32.mrf.mxu0
    %v5047 = vadd.f32 %v3149, %v5046
    %v5048 = vpop.f32.mrf.mxu0
    %v5049 = vadd.f32 %v3153, %v5048
    %v5050 = vpop.f32.mrf.mxu0
    %v5051 = vpop.f32.mrf.mxu0
    %5052 = vdwg.mxu0
    %5053 = vmatprep.subr.bf16.mxu0 %v4577
    %5054 = vmatpush1.bf16.msra.mxu0 %v4576
    %5055 = vmatprep.subr.bf16.mxu0 %v4537
    %5056 = vmatpush1.bf16.msra.mxu0 %v4536
    %5057 = vmatprep.subr.bf16.mxu0 %v4497
    %5058 = vmatpush1.bf16.msra.mxu0 %v4496
    %5059 = vmatprep.subr.bf16.mxu0 %v4457
    %5060 = vmatpush1.bf16.msra.mxu0 %v4456
    %5061 = vmatprep.subr.bf16.mxu0 %v4417
    %5062 = vmatpush1.bf16.msra.mxu0 %v4416
    %5063 = vmatprep.subr.bf16.mxu0 %v4377
    %5064 = vmatpush1.bf16.msra.mxu0 %v4376
    %5065 = vmatprep.subr.bf16.mxu0 %v4337
    %5066 = vmatpush1.bf16.msra.mxu0 %v4336
    %5067 = vmatprep.subr.bf16.mxu0 %v4297
    %5068 = vmatpush1.bf16.msra.mxu0 %v4296
    %5069 = vmatprep.subr.bf16.mxu0 0
    %5070 = vmatpush2.bf16.msra.mxu0 0
    %5071 = vmatprep.subr.bf16.mxu0 0
    %5072 = vmatpush2.bf16.msra.mxu0 0
    %5073 = vmatprep.subr.bf16.mxu0 0
    %5074 = vmatpush2.bf16.msra.mxu0 0
    %5075 = vmatprep.subr.bf16.mxu0 0
    %5076 = vmatpush2.bf16.msra.mxu0 0
    %5077 = vmatprep.subr.bf16.mxu0 0
    %5078 = vmatpush2.bf16.msra.mxu0 0
    %5079 = vmatprep.subr.bf16.mxu0 0
    %5080 = vmatpush2.bf16.msra.mxu0 0
    %5081 = vmatprep.subr.bf16.mxu0 0
    %5082 = vmatpush2.bf16.msra.mxu0 0
    %5083 = vmatprep.subr.bf16.mxu0 0
    %5084 = vmatpush2.bf16.msra.mxu0 0
    %5085 = vmatprep.mubr.bf16.mxu0 0
    %5086 = vmatmul.mubr.bf16.gmra.mxu0 %v2799
    %v5087 = vpop.f32.mrf.mxu0
    %v5088 = vadd.f32 %v3157, %v5087
    %v5089 = vpop.f32.mrf.mxu0
    %v5090 = vadd.f32 %v3161, %v5089
    %v5091 = vpop.f32.mrf.mxu0
    %v5092 = vpop.f32.mrf.mxu0
    %5093 = vdwg.mxu0
    %5094 = vmatprep.subr.bf16.mxu0 %v4579
    %5095 = vmatpush1.bf16.msra.mxu0 %v4578
    %5096 = vmatprep.subr.bf16.mxu0 %v4539
    %5097 = vmatpush1.bf16.msra.mxu0 %v4538
    %5098 = vmatprep.subr.bf16.mxu0 %v4499
    %5099 = vmatpush1.bf16.msra.mxu0 %v4498
    %5100 = vmatprep.subr.bf16.mxu0 %v4459
    %5101 = vmatpush1.bf16.msra.mxu0 %v4458
    %5102 = vmatprep.subr.bf16.mxu0 %v4419
    %5103 = vmatpush1.bf16.msra.mxu0 %v4418
    %5104 = vmatprep.subr.bf16.mxu0 %v4379
    %5105 = vmatpush1.bf16.msra.mxu0 %v4378
    %5106 = vmatprep.subr.bf16.mxu0 %v4339
    %5107 = vmatpush1.bf16.msra.mxu0 %v4338
    %5108 = vmatprep.subr.bf16.mxu0 %v4299
    %5109 = vmatpush1.bf16.msra.mxu0 %v4298
    %5110 = vmatprep.subr.bf16.mxu0 0
    %5111 = vmatpush2.bf16.msra.mxu0 0
    %5112 = vmatprep.subr.bf16.mxu0 0
    %5113 = vmatpush2.bf16.msra.mxu0 0
    %5114 = vmatprep.subr.bf16.mxu0 0
    %5115 = vmatpush2.bf16.msra.mxu0 0
    %5116 = vmatprep.subr.bf16.mxu0 0
    %5117 = vmatpush2.bf16.msra.mxu0 0
    %5118 = vmatprep.subr.bf16.mxu0 0
    %5119 = vmatpush2.bf16.msra.mxu0 0
    %5120 = vmatprep.subr.bf16.mxu0 0
    %5121 = vmatpush2.bf16.msra.mxu0 0
    %5122 = vmatprep.subr.bf16.mxu0 0
    %5123 = vmatpush2.bf16.msra.mxu0 0
    %5124 = vmatprep.subr.bf16.mxu0 0
    %5125 = vmatpush2.bf16.msra.mxu0 0
    %5126 = vmatprep.mubr.bf16.mxu0 0
    %5127 = vmatmul.mubr.bf16.gmra.mxu0 %v2799
    %v5128 = vpop.f32.mrf.mxu0
    %v5129 = vadd.f32 %v3165, %v5128
    %v5130 = vpop.f32.mrf.mxu0
    %v5131 = vadd.f32 %v3169, %v5130
    %v5132 = vpop.f32.mrf.mxu0
    %v5133 = vpop.f32.mrf.mxu0
    %5134 = vdwg.mxu0
    %5135 = vmatprep.subr.bf16.mxu0 %v4581
    %5136 = vmatpush1.bf16.msra.mxu0 %v4580
    %5137 = vmatprep.subr.bf16.mxu0 %v4541
    %5138 = vmatpush1.bf16.msra.mxu0 %v4540
    %5139 = vmatprep.subr.bf16.mxu0 %v4501
    %5140 = vmatpush1.bf16.msra.mxu0 %v4500
    %5141 = vmatprep.subr.bf16.mxu0 %v4461
    %5142 = vmatpush1.bf16.msra.mxu0 %v4460
    %5143 = vmatprep.subr.bf16.mxu0 %v4421
    %5144 = vmatpush1.bf16.msra.mxu0 %v4420
    %5145 = vmatprep.subr.bf16.mxu0 %v4381
    %5146 = vmatpush1.bf16.msra.mxu0 %v4380
    %5147 = vmatprep.subr.bf16.mxu0 %v4341
    %5148 = vmatpush1.bf16.msra.mxu0 %v4340
    %5149 = vmatprep.subr.bf16.mxu0 %v4301
    %5150 = vmatpush1.bf16.msra.mxu0 %v4300
    %5151 = vmatprep.subr.bf16.mxu0 0
    %5152 = vmatpush2.bf16.msra.mxu0 0
    %5153 = vmatprep.subr.bf16.mxu0 0
    %5154 = vmatpush2.bf16.msra.mxu0 0
    %5155 = vmatprep.subr.bf16.mxu0 0
    %5156 = vmatpush2.bf16.msra.mxu0 0
    %5157 = vmatprep.subr.bf16.mxu0 0
    %5158 = vmatpush2.bf16.msra.mxu0 0
    %5159 = vmatprep.subr.bf16.mxu0 0
    %5160 = vmatpush2.bf16.msra.mxu0 0
    %5161 = vmatprep.subr.bf16.mxu0 0
    %5162 = vmatpush2.bf16.msra.mxu0 0
    %5163 = vmatprep.subr.bf16.mxu0 0
    %5164 = vmatpush2.bf16.msra.mxu0 0
    %5165 = vmatprep.subr.bf16.mxu0 0
    %5166 = vmatpush2.bf16.msra.mxu0 0
    %5167 = vmatprep.mubr.bf16.mxu0 0
    %5168 = vmatmul.mubr.bf16.gmra.mxu0 %v2799
    %v5169 = vpop.f32.mrf.mxu0
    %v5170 = vadd.f32 %v3173, %v5169
    %v5171 = vpop.f32.mrf.mxu0
    %v5172 = vadd.f32 %v3177, %v5171
    %v5173 = vpop.f32.mrf.mxu0
    %v5174 = vpop.f32.mrf.mxu0
    %5175 = vdwg.mxu0
    %5176 = vmatprep.subr.bf16.mxu0 %v4583
    %5177 = vmatpush1.bf16.msra.mxu0 %v4582
    %5178 = vmatprep.subr.bf16.mxu0 %v4543
    %5179 = vmatpush1.bf16.msra.mxu0 %v4542
    %5180 = vmatprep.subr.bf16.mxu0 %v4503
    %5181 = vmatpush1.bf16.msra.mxu0 %v4502
    %5182 = vmatprep.subr.bf16.mxu0 %v4463
    %5183 = vmatpush1.bf16.msra.mxu0 %v4462
    %5184 = vmatprep.subr.bf16.mxu0 %v4423
    %5185 = vmatpush1.bf16.msra.mxu0 %v4422
    %5186 = vmatprep.subr.bf16.mxu0 %v4383
    %5187 = vmatpush1.bf16.msra.mxu0 %v4382
    %5188 = vmatprep.subr.bf16.mxu0 %v4343
    %5189 = vmatpush1.bf16.msra.mxu0 %v4342
    %5190 = vmatprep.subr.bf16.mxu0 %v4303
    %5191 = vmatpush1.bf16.msra.mxu0 %v4302
    %5192 = vmatprep.subr.bf16.mxu0 0
    %5193 = vmatpush2.bf16.msra.mxu0 0
    %5194 = vmatprep.subr.bf16.mxu0 0
    %5195 = vmatpush2.bf16.msra.mxu0 0
    %5196 = vmatprep.subr.bf16.mxu0 0
    %5197 = vmatpush2.bf16.msra.mxu0 0
    %5198 = vmatprep.subr.bf16.mxu0 0
    %5199 = vmatpush2.bf16.msra.mxu0 0
    %5200 = vmatprep.subr.bf16.mxu0 0
    %5201 = vmatpush2.bf16.msra.mxu0 0
    %5202 = vmatprep.subr.bf16.mxu0 0
    %5203 = vmatpush2.bf16.msra.mxu0 0
    %5204 = vmatprep.subr.bf16.mxu0 0
    %5205 = vmatpush2.bf16.msra.mxu0 0
    %5206 = vmatprep.subr.bf16.mxu0 0
    %5207 = vmatpush2.bf16.msra.mxu0 0
    %5208 = vmatprep.mubr.bf16.mxu0 0
    %5209 = vmatmul.mubr.bf16.gmra.mxu0 %v2799
    %v5210 = vpop.f32.mrf.mxu0
    %v5211 = vadd.f32 %v3181, %v5210
    %v5212 = vpop.f32.mrf.mxu0
    %v5213 = vadd.f32 %v3185, %v5212
    %v5214 = vpop.f32.mrf.mxu0
    %v5215 = vpop.f32.mrf.mxu0
    %5216 = vdwg.mxu0
    %5217 = vmatprep.subr.bf16.mxu0 %v4585
    %5218 = vmatpush1.bf16.msra.mxu0 %v4584
    %5219 = vmatprep.subr.bf16.mxu0 %v4545
    %5220 = vmatpush1.bf16.msra.mxu0 %v4544
    %5221 = vmatprep.subr.bf16.mxu0 %v4505
    %5222 = vmatpush1.bf16.msra.mxu0 %v4504
    %5223 = vmatprep.subr.bf16.mxu0 %v4465
    %5224 = vmatpush1.bf16.msra.mxu0 %v4464
    %5225 = vmatprep.subr.bf16.mxu0 %v4425
    %5226 = vmatpush1.bf16.msra.mxu0 %v4424
    %5227 = vmatprep.subr.bf16.mxu0 %v4385
    %5228 = vmatpush1.bf16.msra.mxu0 %v4384
    %5229 = vmatprep.subr.bf16.mxu0 %v4345
    %5230 = vmatpush1.bf16.msra.mxu0 %v4344
    %5231 = vmatprep.subr.bf16.mxu0 %v4305
    %5232 = vmatpush1.bf16.msra.mxu0 %v4304
    %5233 = vmatprep.subr.bf16.mxu0 0
    %5234 = vmatpush2.bf16.msra.mxu0 0
    %5235 = vmatprep.subr.bf16.mxu0 0
    %5236 = vmatpush2.bf16.msra.mxu0 0
    %5237 = vmatprep.subr.bf16.mxu0 0
    %5238 = vmatpush2.bf16.msra.mxu0 0
    %5239 = vmatprep.subr.bf16.mxu0 0
    %5240 = vmatpush2.bf16.msra.mxu0 0
    %5241 = vmatprep.subr.bf16.mxu0 0
    %5242 = vmatpush2.bf16.msra.mxu0 0
    %5243 = vmatprep.subr.bf16.mxu0 0
    %5244 = vmatpush2.bf16.msra.mxu0 0
    %5245 = vmatprep.subr.bf16.mxu0 0
    %5246 = vmatpush2.bf16.msra.mxu0 0
    %5247 = vmatprep.subr.bf16.mxu0 0
    %5248 = vmatpush2.bf16.msra.mxu0 0
    %5249 = vmatprep.mubr.bf16.mxu0 0
    %5250 = vmatmul.mubr.bf16.gmra.mxu0 %v2799
    %v5251 = vpop.f32.mrf.mxu0
    %v5252 = vadd.f32 %v3189, %v5251
    %v5253 = vpop.f32.mrf.mxu0
    %v5254 = vadd.f32 %v3193, %v5253
    %v5255 = vpop.f32.mrf.mxu0
    %v5256 = vpop.f32.mrf.mxu0
    %5257 = vdwg.mxu0
    %5258 = vmatprep.subr.bf16.mxu0 %v4587
    %5259 = vmatpush1.bf16.msra.mxu0 %v4586
    %5260 = vmatprep.subr.bf16.mxu0 %v4547
    %5261 = vmatpush1.bf16.msra.mxu0 %v4546
    %5262 = vmatprep.subr.bf16.mxu0 %v4507
    %5263 = vmatpush1.bf16.msra.mxu0 %v4506
    %5264 = vmatprep.subr.bf16.mxu0 %v4467
    %5265 = vmatpush1.bf16.msra.mxu0 %v4466
    %5266 = vmatprep.subr.bf16.mxu0 %v4427
    %5267 = vmatpush1.bf16.msra.mxu0 %v4426
    %5268 = vmatprep.subr.bf16.mxu0 %v4387
    %5269 = vmatpush1.bf16.msra.mxu0 %v4386
    %5270 = vmatprep.subr.bf16.mxu0 %v4347
    %5271 = vmatpush1.bf16.msra.mxu0 %v4346
    %5272 = vmatprep.subr.bf16.mxu0 %v4307
    %5273 = vmatpush1.bf16.msra.mxu0 %v4306
    %5274 = vmatprep.subr.bf16.mxu0 0
    %5275 = vmatpush2.bf16.msra.mxu0 0
    %5276 = vmatprep.subr.bf16.mxu0 0
    %5277 = vmatpush2.bf16.msra.mxu0 0
    %5278 = vmatprep.subr.bf16.mxu0 0
    %5279 = vmatpush2.bf16.msra.mxu0 0
    %5280 = vmatprep.subr.bf16.mxu0 0
    %5281 = vmatpush2.bf16.msra.mxu0 0
    %5282 = vmatprep.subr.bf16.mxu0 0
    %5283 = vmatpush2.bf16.msra.mxu0 0
    %5284 = vmatprep.subr.bf16.mxu0 0
    %5285 = vmatpush2.bf16.msra.mxu0 0
    %5286 = vmatprep.subr.bf16.mxu0 0
    %5287 = vmatpush2.bf16.msra.mxu0 0
    %5288 = vmatprep.subr.bf16.mxu0 0
    %5289 = vmatpush2.bf16.msra.mxu0 0
    %5290 = vmatprep.mubr.bf16.mxu0 0
    %5291 = vmatmul.mubr.bf16.gmra.mxu0 %v2799
    %v5292 = vpop.f32.mrf.mxu0
    %v5293 = vadd.f32 %v3197, %v5292
    %v5294 = vpop.f32.mrf.mxu0
    %v5295 = vadd.f32 %v3201, %v5294
    %v5296 = vpop.f32.mrf.mxu0
    %v5297 = vpop.f32.mrf.mxu0
    %5298 = vdwg.mxu0
    %5299 = vmatprep.subr.bf16.mxu0 %v4589
    %5300 = vmatpush1.bf16.msra.mxu0 %v4588
    %5301 = vmatprep.subr.bf16.mxu0 %v4549
    %5302 = vmatpush1.bf16.msra.mxu0 %v4548
    %5303 = vmatprep.subr.bf16.mxu0 %v4509
    %5304 = vmatpush1.bf16.msra.mxu0 %v4508
    %5305 = vmatprep.subr.bf16.mxu0 %v4469
    %5306 = vmatpush1.bf16.msra.mxu0 %v4468
    %5307 = vmatprep.subr.bf16.mxu0 %v4429
    %5308 = vmatpush1.bf16.msra.mxu0 %v4428
    %5309 = vmatprep.subr.bf16.mxu0 %v4389
    %5310 = vmatpush1.bf16.msra.mxu0 %v4388
    %5311 = vmatprep.subr.bf16.mxu0 %v4349
    %5312 = vmatpush1.bf16.msra.mxu0 %v4348
    %5313 = vmatprep.subr.bf16.mxu0 %v4309
    %5314 = vmatpush1.bf16.msra.mxu0 %v4308
    %5315 = vmatprep.subr.bf16.mxu0 0
    %5316 = vmatpush2.bf16.msra.mxu0 0
    %5317 = vmatprep.subr.bf16.mxu0 0
    %5318 = vmatpush2.bf16.msra.mxu0 0
    %5319 = vmatprep.subr.bf16.mxu0 0
    %5320 = vmatpush2.bf16.msra.mxu0 0
    %5321 = vmatprep.subr.bf16.mxu0 0
    %5322 = vmatpush2.bf16.msra.mxu0 0
    %5323 = vmatprep.subr.bf16.mxu0 0
    %5324 = vmatpush2.bf16.msra.mxu0 0
    %5325 = vmatprep.subr.bf16.mxu0 0
    %5326 = vmatpush2.bf16.msra.mxu0 0
    %5327 = vmatprep.subr.bf16.mxu0 0
    %5328 = vmatpush2.bf16.msra.mxu0 0
    %5329 = vmatprep.subr.bf16.mxu0 0
    %5330 = vmatpush2.bf16.msra.mxu0 0
    %5331 = vmatprep.mubr.bf16.mxu0 0
    %5332 = vmatmul.mubr.bf16.gmra.mxu0 %v2799
    %v5333 = vpop.f32.mrf.mxu0
    %v5334 = vadd.f32 %v3205, %v5333
    %v5335 = vpop.f32.mrf.mxu0
    %v5336 = vadd.f32 %v3209, %v5335
    %v5337 = vpop.f32.mrf.mxu0
    %v5338 = vpop.f32.mrf.mxu0
    %5339 = vdwg.mxu0
    %5340 = vmatprep.subr.bf16.mxu0 %v4591
    %5341 = vmatpush1.bf16.msra.mxu0 %v4590
    %5342 = vmatprep.subr.bf16.mxu0 %v4551
    %5343 = vmatpush1.bf16.msra.mxu0 %v4550
    %5344 = vmatprep.subr.bf16.mxu0 %v4511
    %5345 = vmatpush1.bf16.msra.mxu0 %v4510
    %5346 = vmatprep.subr.bf16.mxu0 %v4471
    %5347 = vmatpush1.bf16.msra.mxu0 %v4470
    %5348 = vmatprep.subr.bf16.mxu0 %v4431
    %5349 = vmatpush1.bf16.msra.mxu0 %v4430
    %5350 = vmatprep.subr.bf16.mxu0 %v4391
    %5351 = vmatpush1.bf16.msra.mxu0 %v4390
    %5352 = vmatprep.subr.bf16.mxu0 %v4351
    %5353 = vmatpush1.bf16.msra.mxu0 %v4350
    %5354 = vmatprep.subr.bf16.mxu0 %v4311
    %5355 = vmatpush1.bf16.msra.mxu0 %v4310
    %5356 = vmatprep.subr.bf16.mxu0 0
    %5357 = vmatpush2.bf16.msra.mxu0 0
    %5358 = vmatprep.subr.bf16.mxu0 0
    %5359 = vmatpush2.bf16.msra.mxu0 0
    %5360 = vmatprep.subr.bf16.mxu0 0
    %5361 = vmatpush2.bf16.msra.mxu0 0
    %5362 = vmatprep.subr.bf16.mxu0 0
    %5363 = vmatpush2.bf16.msra.mxu0 0
    %5364 = vmatprep.subr.bf16.mxu0 0
    %5365 = vmatpush2.bf16.msra.mxu0 0
    %5366 = vmatprep.subr.bf16.mxu0 0
    %5367 = vmatpush2.bf16.msra.mxu0 0
    %5368 = vmatprep.subr.bf16.mxu0 0
    %5369 = vmatpush2.bf16.msra.mxu0 0
    %5370 = vmatprep.subr.bf16.mxu0 0
    %5371 = vmatpush2.bf16.msra.mxu0 0
    %5372 = vmatprep.mubr.bf16.mxu0 0
    %5373 = vmatmul.mubr.bf16.gmra.mxu0 %v2799
    %v5374 = vpop.f32.mrf.mxu0
    %v5375 = vadd.f32 %v3213, %v5374
    %v5376 = vpop.f32.mrf.mxu0
    %v5377 = vadd.f32 %v3217, %v5376
    %v5378 = vpop.f32.mrf.mxu0
    %v5379 = vpop.f32.mrf.mxu0
    %5380 = vdwg.mxu0
    %5381 = vmatprep.subr.bf16.mxu0 %v4593
    %5382 = vmatpush1.bf16.msra.mxu0 %v4592
    %5383 = vmatprep.subr.bf16.mxu0 %v4553
    %5384 = vmatpush1.bf16.msra.mxu0 %v4552
    %5385 = vmatprep.subr.bf16.mxu0 %v4513
    %5386 = vmatpush1.bf16.msra.mxu0 %v4512
    %5387 = vmatprep.subr.bf16.mxu0 %v4473
    %5388 = vmatpush1.bf16.msra.mxu0 %v4472
    %5389 = vmatprep.subr.bf16.mxu0 %v4433
    %5390 = vmatpush1.bf16.msra.mxu0 %v4432
    %5391 = vmatprep.subr.bf16.mxu0 %v4393
    %5392 = vmatpush1.bf16.msra.mxu0 %v4392
    %5393 = vmatprep.subr.bf16.mxu0 %v4353
    %5394 = vmatpush1.bf16.msra.mxu0 %v4352
    %5395 = vmatprep.subr.bf16.mxu0 %v4313
    %5396 = vmatpush1.bf16.msra.mxu0 %v4312
    %5397 = vmatprep.subr.bf16.mxu0 0
    %5398 = vmatpush2.bf16.msra.mxu0 0
    %5399 = vmatprep.subr.bf16.mxu0 0
    %5400 = vmatpush2.bf16.msra.mxu0 0
    %5401 = vmatprep.subr.bf16.mxu0 0
    %5402 = vmatpush2.bf16.msra.mxu0 0
    %5403 = vmatprep.subr.bf16.mxu0 0
    %5404 = vmatpush2.bf16.msra.mxu0 0
    %5405 = vmatprep.subr.bf16.mxu0 0
    %5406 = vmatpush2.bf16.msra.mxu0 0
    %5407 = vmatprep.subr.bf16.mxu0 0
    %5408 = vmatpush2.bf16.msra.mxu0 0
    %5409 = vmatprep.subr.bf16.mxu0 0
    %5410 = vmatpush2.bf16.msra.mxu0 0
    %5411 = vmatprep.subr.bf16.mxu0 0
    %5412 = vmatpush2.bf16.msra.mxu0 0
    %5413 = vmatprep.mubr.bf16.mxu0 0
    %5414 = vmatmul.mubr.bf16.gmra.mxu0 %v2799
    %v5415 = vpop.f32.mrf.mxu0
    %v5416 = vadd.f32 %v3221, %v5415
    %v5417 = vpop.f32.mrf.mxu0
    %v5418 = vadd.f32 %v3225, %v5417
    %v5419 = vpop.f32.mrf.mxu0
    %v5420 = vpop.f32.mrf.mxu0
    %5421 = vdwg.mxu0
    %5422 = vmatprep.subr.bf16.mxu0 %v4595
    %5423 = vmatpush1.bf16.msra.mxu0 %v4594
    %5424 = vmatprep.subr.bf16.mxu0 %v4555
    %5425 = vmatpush1.bf16.msra.mxu0 %v4554
    %5426 = vmatprep.subr.bf16.mxu0 %v4515
    %5427 = vmatpush1.bf16.msra.mxu0 %v4514
    %5428 = vmatprep.subr.bf16.mxu0 %v4475
    %5429 = vmatpush1.bf16.msra.mxu0 %v4474
    %5430 = vmatprep.subr.bf16.mxu0 %v4435
    %5431 = vmatpush1.bf16.msra.mxu0 %v4434
    %5432 = vmatprep.subr.bf16.mxu0 %v4395
    %5433 = vmatpush1.bf16.msra.mxu0 %v4394
    %5434 = vmatprep.subr.bf16.mxu0 %v4355
    %5435 = vmatpush1.bf16.msra.mxu0 %v4354
    %5436 = vmatprep.subr.bf16.mxu0 %v4315
    %5437 = vmatpush1.bf16.msra.mxu0 %v4314
    %5438 = vmatprep.subr.bf16.mxu0 0
    %5439 = vmatpush2.bf16.msra.mxu0 0
    %5440 = vmatprep.subr.bf16.mxu0 0
    %5441 = vmatpush2.bf16.msra.mxu0 0
    %5442 = vmatprep.subr.bf16.mxu0 0
    %5443 = vmatpush2.bf16.msra.mxu0 0
    %5444 = vmatprep.subr.bf16.mxu0 0
    %5445 = vmatpush2.bf16.msra.mxu0 0
    %5446 = vmatprep.subr.bf16.mxu0 0
    %5447 = vmatpush2.bf16.msra.mxu0 0
    %5448 = vmatprep.subr.bf16.mxu0 0
    %5449 = vmatpush2.bf16.msra.mxu0 0
    %5450 = vmatprep.subr.bf16.mxu0 0
    %5451 = vmatpush2.bf16.msra.mxu0 0
    %5452 = vmatprep.subr.bf16.mxu0 0
    %5453 = vmatpush2.bf16.msra.mxu0 0
    %5454 = vmatprep.mubr.bf16.mxu0 0
    %5455 = vmatmul.mubr.bf16.gmra.mxu0 %v2799
    %v5456 = vpop.f32.mrf.mxu0
    %v5457 = vadd.f32 %v3229, %v5456
    %v5458 = vpop.f32.mrf.mxu0
    %v5459 = vadd.f32 %v3233, %v5458
    %v5460 = vpop.f32.mrf.mxu0
    %v5461 = vpop.f32.mrf.mxu0
    %5462 = vdwg.mxu0
    %5463 = vmatprep.subr.bf16.mxu0 %v4597
    %5464 = vmatpush1.bf16.msra.mxu0 %v4596
    %5465 = vmatprep.subr.bf16.mxu0 %v4557
    %5466 = vmatpush1.bf16.msra.mxu0 %v4556
    %5467 = vmatprep.subr.bf16.mxu0 %v4517
    %5468 = vmatpush1.bf16.msra.mxu0 %v4516
    %5469 = vmatprep.subr.bf16.mxu0 %v4477
    %5470 = vmatpush1.bf16.msra.mxu0 %v4476
    %5471 = vmatprep.subr.bf16.mxu0 %v4437
    %5472 = vmatpush1.bf16.msra.mxu0 %v4436
    %5473 = vmatprep.subr.bf16.mxu0 %v4397
    %5474 = vmatpush1.bf16.msra.mxu0 %v4396
    %5475 = vmatprep.subr.bf16.mxu0 %v4357
    %5476 = vmatpush1.bf16.msra.mxu0 %v4356
    %5477 = vmatprep.subr.bf16.mxu0 %v4317
    %5478 = vmatpush1.bf16.msra.mxu0 %v4316
    %5479 = vmatprep.subr.bf16.mxu0 0
    %5480 = vmatpush2.bf16.msra.mxu0 0
    %5481 = vmatprep.subr.bf16.mxu0 0
    %5482 = vmatpush2.bf16.msra.mxu0 0
    %5483 = vmatprep.subr.bf16.mxu0 0
    %5484 = vmatpush2.bf16.msra.mxu0 0
    %5485 = vmatprep.subr.bf16.mxu0 0
    %5486 = vmatpush2.bf16.msra.mxu0 0
    %5487 = vmatprep.subr.bf16.mxu0 0
    %5488 = vmatpush2.bf16.msra.mxu0 0
    %5489 = vmatprep.subr.bf16.mxu0 0
    %5490 = vmatpush2.bf16.msra.mxu0 0
    %5491 = vmatprep.subr.bf16.mxu0 0
    %5492 = vmatpush2.bf16.msra.mxu0 0
    %5493 = vmatprep.subr.bf16.mxu0 0
    %5494 = vmatpush2.bf16.msra.mxu0 0
    %5495 = vmatprep.mubr.bf16.mxu0 0
    %5496 = vmatmul.mubr.bf16.gmra.mxu0 %v2799
    %v5497 = vpop.f32.mrf.mxu0
    %v5498 = vadd.f32 %v3237, %v5497
    %v5499 = vpop.f32.mrf.mxu0
    %v5500 = vadd.f32 %v3241, %v5499
    %v5501 = vpop.f32.mrf.mxu0
    %v5502 = vpop.f32.mrf.mxu0
    %5503 = vdwg.mxu0
    %5504 = vmatprep.subr.bf16.mxu0 %v4599
    %5505 = vmatpush1.bf16.msra.mxu0 %v4598
    %5506 = vmatprep.subr.bf16.mxu0 %v4559
    %5507 = vmatpush1.bf16.msra.mxu0 %v4558
    %5508 = vmatprep.subr.bf16.mxu0 %v4519
    %5509 = vmatpush1.bf16.msra.mxu0 %v4518
    %5510 = vmatprep.subr.bf16.mxu0 %v4479
    %5511 = vmatpush1.bf16.msra.mxu0 %v4478
    %5512 = vmatprep.subr.bf16.mxu0 %v4439
    %5513 = vmatpush1.bf16.msra.mxu0 %v4438
    %5514 = vmatprep.subr.bf16.mxu0 %v4399
    %5515 = vmatpush1.bf16.msra.mxu0 %v4398
    %5516 = vmatprep.subr.bf16.mxu0 %v4359
    %5517 = vmatpush1.bf16.msra.mxu0 %v4358
    %5518 = vmatprep.subr.bf16.mxu0 %v4319
    %5519 = vmatpush1.bf16.msra.mxu0 %v4318
    %5520 = vmatprep.subr.bf16.mxu0 0
    %5521 = vmatpush2.bf16.msra.mxu0 0
    %5522 = vmatprep.subr.bf16.mxu0 0
    %5523 = vmatpush2.bf16.msra.mxu0 0
    %5524 = vmatprep.subr.bf16.mxu0 0
    %5525 = vmatpush2.bf16.msra.mxu0 0
    %5526 = vmatprep.subr.bf16.mxu0 0
    %5527 = vmatpush2.bf16.msra.mxu0 0
    %5528 = vmatprep.subr.bf16.mxu0 0
    %5529 = vmatpush2.bf16.msra.mxu0 0
    %5530 = vmatprep.subr.bf16.mxu0 0
    %5531 = vmatpush2.bf16.msra.mxu0 0
    %5532 = vmatprep.subr.bf16.mxu0 0
    %5533 = vmatpush2.bf16.msra.mxu0 0
    %5534 = vmatprep.subr.bf16.mxu0 0
    %5535 = vmatpush2.bf16.msra.mxu0 0
    %5536 = vmatprep.mubr.bf16.mxu0 0
    %5537 = vmatmul.mubr.bf16.gmra.mxu0 %v2799
    %v5538 = vpop.f32.mrf.mxu0
    %v5539 = vadd.f32 %v3245, %v5538
    %v5540 = vpop.f32.mrf.mxu0
    %v5541 = vadd.f32 %v3249, %v5540
    %v5542 = vpop.f32.mrf.mxu0
    %v5543 = vpop.f32.mrf.mxu0
    %5544 = vdwg.mxu0
    %5545 = vmatprep.subr.bf16.mxu0 %v4601
    %5546 = vmatpush1.bf16.msra.mxu0 %v4600
    %5547 = vmatprep.subr.bf16.mxu0 %v4561
    %5548 = vmatpush1.bf16.msra.mxu0 %v4560
    %5549 = vmatprep.subr.bf16.mxu0 %v4521
    %5550 = vmatpush1.bf16.msra.mxu0 %v4520
    %5551 = vmatprep.subr.bf16.mxu0 %v4481
    %5552 = vmatpush1.bf16.msra.mxu0 %v4480
    %5553 = vmatprep.subr.bf16.mxu0 %v4441
    %5554 = vmatpush1.bf16.msra.mxu0 %v4440
    %5555 = vmatprep.subr.bf16.mxu0 %v4401
    %5556 = vmatpush1.bf16.msra.mxu0 %v4400
    %5557 = vmatprep.subr.bf16.mxu0 %v4361
    %5558 = vmatpush1.bf16.msra.mxu0 %v4360
    %5559 = vmatprep.subr.bf16.mxu0 %v4321
    %5560 = vmatpush1.bf16.msra.mxu0 %v4320
    %5561 = vmatprep.subr.bf16.mxu0 0
    %5562 = vmatpush2.bf16.msra.mxu0 0
    %5563 = vmatprep.subr.bf16.mxu0 0
    %5564 = vmatpush2.bf16.msra.mxu0 0
    %5565 = vmatprep.subr.bf16.mxu0 0
    %5566 = vmatpush2.bf16.msra.mxu0 0
    %5567 = vmatprep.subr.bf16.mxu0 0
    %5568 = vmatpush2.bf16.msra.mxu0 0
    %5569 = vmatprep.subr.bf16.mxu0 0
    %5570 = vmatpush2.bf16.msra.mxu0 0
    %5571 = vmatprep.subr.bf16.mxu0 0
    %5572 = vmatpush2.bf16.msra.mxu0 0
    %5573 = vmatprep.subr.bf16.mxu0 0
    %5574 = vmatpush2.bf16.msra.mxu0 0
    %5575 = vmatprep.subr.bf16.mxu0 0
    %5576 = vmatpush2.bf16.msra.mxu0 0
    %5577 = vmatprep.mubr.bf16.mxu0 0
    %5578 = vmatmul.mubr.bf16.gmra.mxu0 %v2799
    %v5579 = vpop.f32.mrf.mxu0
    %v5580 = vadd.f32 %v3253, %v5579
    %v5581 = vpop.f32.mrf.mxu0
    %v5582 = vadd.f32 %v3257, %v5581
    %v5583 = vpop.f32.mrf.mxu0
    %v5584 = vpop.f32.mrf.mxu0
    %5585 = vdwg.mxu0
    %5586 = vmatprep.subr.bf16.mxu0 %v4603
    %5587 = vmatpush1.bf16.msra.mxu0 %v4602
    %5588 = vmatprep.subr.bf16.mxu0 %v4563
    %5589 = vmatpush1.bf16.msra.mxu0 %v4562
    %5590 = vmatprep.subr.bf16.mxu0 %v4523
    %5591 = vmatpush1.bf16.msra.mxu0 %v4522
    %5592 = vmatprep.subr.bf16.mxu0 %v4483
    %5593 = vmatpush1.bf16.msra.mxu0 %v4482
    %5594 = vmatprep.subr.bf16.mxu0 %v4443
    %5595 = vmatpush1.bf16.msra.mxu0 %v4442
    %5596 = vmatprep.subr.bf16.mxu0 %v4403
    %5597 = vmatpush1.bf16.msra.mxu0 %v4402
    %5598 = vmatprep.subr.bf16.mxu0 %v4363
    %5599 = vmatpush1.bf16.msra.mxu0 %v4362
    %5600 = vmatprep.subr.bf16.mxu0 %v4323
    %5601 = vmatpush1.bf16.msra.mxu0 %v4322
    %5602 = vmatprep.subr.bf16.mxu0 0
    %5603 = vmatpush2.bf16.msra.mxu0 0
    %5604 = vmatprep.subr.bf16.mxu0 0
    %5605 = vmatpush2.bf16.msra.mxu0 0
    %5606 = vmatprep.subr.bf16.mxu0 0
    %5607 = vmatpush2.bf16.msra.mxu0 0
    %5608 = vmatprep.subr.bf16.mxu0 0
    %5609 = vmatpush2.bf16.msra.mxu0 0
    %5610 = vmatprep.subr.bf16.mxu0 0
    %5611 = vmatpush2.bf16.msra.mxu0 0
    %5612 = vmatprep.subr.bf16.mxu0 0
    %5613 = vmatpush2.bf16.msra.mxu0 0
    %5614 = vmatprep.subr.bf16.mxu0 0
    %5615 = vmatpush2.bf16.msra.mxu0 0
    %5616 = vmatprep.subr.bf16.mxu0 0
    %5617 = vmatpush2.bf16.msra.mxu0 0
    %5618 = vmatprep.mubr.bf16.mxu0 0
    %5619 = vmatmul.mubr.bf16.gmra.mxu0 %v2799
    %v5620 = vpop.f32.mrf.mxu0
    %v5621 = vadd.f32 %v3261, %v5620
    %v5622 = vpop.f32.mrf.mxu0
    %v5623 = vadd.f32 %v3265, %v5622
    %v5624 = vpop.f32.mrf.mxu0
    %v5625 = vpop.f32.mrf.mxu0
    %5626 = vdwg.mxu0
    %5627 = vmatprep.subr.bf16.mxu0 %v4605
    %5628 = vmatpush1.bf16.msra.mxu0 %v4604
    %5629 = vmatprep.subr.bf16.mxu0 %v4565
    %5630 = vmatpush1.bf16.msra.mxu0 %v4564
    %5631 = vmatprep.subr.bf16.mxu0 %v4525
    %5632 = vmatpush1.bf16.msra.mxu0 %v4524
    %5633 = vmatprep.subr.bf16.mxu0 %v4485
    %5634 = vmatpush1.bf16.msra.mxu0 %v4484
    %5635 = vmatprep.subr.bf16.mxu0 %v4445
    %5636 = vmatpush1.bf16.msra.mxu0 %v4444
    %5637 = vmatprep.subr.bf16.mxu0 %v4405
    %5638 = vmatpush1.bf16.msra.mxu0 %v4404
    %5639 = vmatprep.subr.bf16.mxu0 %v4365
    %5640 = vmatpush1.bf16.msra.mxu0 %v4364
    %5641 = vmatprep.subr.bf16.mxu0 %v4325
    %5642 = vmatpush1.bf16.msra.mxu0 %v4324
    %5643 = vmatprep.subr.bf16.mxu0 0
    %5644 = vmatpush2.bf16.msra.mxu0 0
    %5645 = vmatprep.subr.bf16.mxu0 0
    %5646 = vmatpush2.bf16.msra.mxu0 0
    %5647 = vmatprep.subr.bf16.mxu0 0
    %5648 = vmatpush2.bf16.msra.mxu0 0
    %5649 = vmatprep.subr.bf16.mxu0 0
    %5650 = vmatpush2.bf16.msra.mxu0 0
    %5651 = vmatprep.subr.bf16.mxu0 0
    %5652 = vmatpush2.bf16.msra.mxu0 0
    %5653 = vmatprep.subr.bf16.mxu0 0
    %5654 = vmatpush2.bf16.msra.mxu0 0
    %5655 = vmatprep.subr.bf16.mxu0 0
    %5656 = vmatpush2.bf16.msra.mxu0 0
    %5657 = vmatprep.subr.bf16.mxu0 0
    %5658 = vmatpush2.bf16.msra.mxu0 0
    %5659 = vmatprep.mubr.bf16.mxu0 0
    %5660 = vmatmul.mubr.bf16.gmra.mxu0 %v2799
    %v5661 = vpop.f32.mrf.mxu0
    %v5662 = vadd.f32 %v3269, %v5661
    %v5663 = vpop.f32.mrf.mxu0
    %v5664 = vadd.f32 %v3273, %v5663
    %v5665 = vpop.f32.mrf.mxu0
    %v5666 = vpop.f32.mrf.mxu0
    %5667 = vdwg.mxu0
    %5668 = vmatprep.subr.bf16.mxu0 %v4607
    %5669 = vmatpush1.bf16.msra.mxu0 %v4606
    %5670 = vmatprep.subr.bf16.mxu0 %v4567
    %5671 = vmatpush1.bf16.msra.mxu0 %v4566
    %5672 = vmatprep.subr.bf16.mxu0 %v4527
    %5673 = vmatpush1.bf16.msra.mxu0 %v4526
    %5674 = vmatprep.subr.bf16.mxu0 %v4487
    %5675 = vmatpush1.bf16.msra.mxu0 %v4486
    %5676 = vmatprep.subr.bf16.mxu0 %v4447
    %5677 = vmatpush1.bf16.msra.mxu0 %v4446
    %5678 = vmatprep.subr.bf16.mxu0 %v4407
    %5679 = vmatpush1.bf16.msra.mxu0 %v4406
    %5680 = vmatprep.subr.bf16.mxu0 %v4367
    %5681 = vmatpush1.bf16.msra.mxu0 %v4366
    %5682 = vmatprep.subr.bf16.mxu0 %v4327
    %5683 = vmatpush1.bf16.msra.mxu0 %v4326
    %5684 = vmatprep.subr.bf16.mxu0 0
    %5685 = vmatpush2.bf16.msra.mxu0 0
    %5686 = vmatprep.subr.bf16.mxu0 0
    %5687 = vmatpush2.bf16.msra.mxu0 0
    %5688 = vmatprep.subr.bf16.mxu0 0
    %5689 = vmatpush2.bf16.msra.mxu0 0
    %5690 = vmatprep.subr.bf16.mxu0 0
    %5691 = vmatpush2.bf16.msra.mxu0 0
    %5692 = vmatprep.subr.bf16.mxu0 0
    %5693 = vmatpush2.bf16.msra.mxu0 0
    %5694 = vmatprep.subr.bf16.mxu0 0
    %5695 = vmatpush2.bf16.msra.mxu0 0
    %5696 = vmatprep.subr.bf16.mxu0 0
    %5697 = vmatpush2.bf16.msra.mxu0 0
    %5698 = vmatprep.subr.bf16.mxu0 0
    %5699 = vmatpush2.bf16.msra.mxu0 0
    %5700 = vmatprep.mubr.bf16.mxu0 0
    %5701 = vmatmul.mubr.bf16.gmra.mxu0 %v2799
    %v5702 = vpop.f32.mrf.mxu0
    %v5703 = vadd.f32 %v3277, %v5702
    %v5704 = vpop.f32.mrf.mxu0
    %v5705 = vadd.f32 %v3281, %v5704
    %v5706 = vpop.f32.mrf.mxu0
    %v5707 = vpop.f32.mrf.mxu0
    %5708 = vdwg.mxu0
    %5709 = vmatprep.subr.bf16.mxu0 %v4609
    %5710 = vmatpush1.bf16.msra.mxu0 %v4608
    %5711 = vmatprep.subr.bf16.mxu0 %v4569
    %5712 = vmatpush1.bf16.msra.mxu0 %v4568
    %5713 = vmatprep.subr.bf16.mxu0 %v4529
    %5714 = vmatpush1.bf16.msra.mxu0 %v4528
    %5715 = vmatprep.subr.bf16.mxu0 %v4489
    %5716 = vmatpush1.bf16.msra.mxu0 %v4488
    %5717 = vmatprep.subr.bf16.mxu0 %v4449
    %5718 = vmatpush1.bf16.msra.mxu0 %v4448
    %5719 = vmatprep.subr.bf16.mxu0 %v4409
    %5720 = vmatpush1.bf16.msra.mxu0 %v4408
    %5721 = vmatprep.subr.bf16.mxu0 %v4369
    %5722 = vmatpush1.bf16.msra.mxu0 %v4368
    %5723 = vmatprep.subr.bf16.mxu0 %v4329
    %5724 = vmatpush1.bf16.msra.mxu0 %v4328
    %5725 = vmatprep.subr.bf16.mxu0 0
    %5726 = vmatpush2.bf16.msra.mxu0 0
    %5727 = vmatprep.subr.bf16.mxu0 0
    %5728 = vmatpush2.bf16.msra.mxu0 0
    %5729 = vmatprep.subr.bf16.mxu0 0
    %5730 = vmatpush2.bf16.msra.mxu0 0
    %5731 = vmatprep.subr.bf16.mxu0 0
    %5732 = vmatpush2.bf16.msra.mxu0 0
    %5733 = vmatprep.subr.bf16.mxu0 0
    %5734 = vmatpush2.bf16.msra.mxu0 0
    %5735 = vmatprep.subr.bf16.mxu0 0
    %5736 = vmatpush2.bf16.msra.mxu0 0
    %5737 = vmatprep.subr.bf16.mxu0 0
    %5738 = vmatpush2.bf16.msra.mxu0 0
    %5739 = vmatprep.subr.bf16.mxu0 0
    %5740 = vmatpush2.bf16.msra.mxu0 0
    %5741 = vmatprep.mubr.bf16.mxu0 0
    %5742 = vmatmul.mubr.bf16.gmra.mxu0 %v2799
    %v5743 = vpop.f32.mrf.mxu0
    %v5744 = vadd.f32 %v3285, %v5743
    %v5745 = vpop.f32.mrf.mxu0
    %v5746 = vadd.f32 %v3289, %v5745
    %v5747 = vpop.f32.mrf.mxu0
    %v5748 = vpop.f32.mrf.mxu0
    %5749 = vdwg.mxu0
    %v5750 = vpack.c.bf16 %v2798, %v2798
    %v5751 = vld [vmem:[#allocation13] sm:$0xff]
    %v5752 = vld [vmem:[#allocation13 + $0x8] sm:$0xff]
    %v5753 = vld [vmem:[#allocation13 + $0x10] sm:$0xff]
    %v5754 = vld [vmem:[#allocation13 + $0x18] sm:$0xff]
    %v5755 = vld [vmem:[#allocation13 + $0x20] sm:$0xff]
    %v5756 = vld [vmem:[#allocation13 + $0x28] sm:$0xff]
    %v5757 = vld [vmem:[#allocation13 + $0x30] sm:$0xff]
    %v5758 = vld [vmem:[#allocation13 + $0x38] sm:$0xff]
    %v5759 = vld [vmem:[#allocation13 + $0x40] sm:$0xff]
    %v5760 = vld [vmem:[#allocation13 + $0x48] sm:$0xff]
    %v5761 = vld [vmem:[#allocation13 + $0x50] sm:$0xff]
    %v5762 = vld [vmem:[#allocation13 + $0x58] sm:$0xff]
    %v5763 = vld [vmem:[#allocation13 + $0x60] sm:$0xff]
    %v5764 = vld [vmem:[#allocation13 + $0x68] sm:$0xff]
    %v5765 = vld [vmem:[#allocation13 + $0x70] sm:$0xff]
    %v5766 = vld [vmem:[#allocation13 + $0x78] sm:$0xff]
    %v5767 = vld [vmem:[#allocation13 + $0x80] sm:$0xff]
    %v5768 = vld [vmem:[#allocation13 + $0x88] sm:$0xff]
    %v5769 = vld [vmem:[#allocation13 + $0x90] sm:$0xff]
    %v5770 = vld [vmem:[#allocation13 + $0x98] sm:$0xff]
    %v5771 = vld [vmem:[#allocation13 + $0xa0] sm:$0xff]
    %v5772 = vld [vmem:[#allocation13 + $0xa8] sm:$0xff]
    %v5773 = vld [vmem:[#allocation13 + $0xb0] sm:$0xff]
    %v5774 = vld [vmem:[#allocation13 + $0xb8] sm:$0xff]
    %v5775 = vld [vmem:[#allocation13 + $0xc0] sm:$0xff]
    %v5776 = vld [vmem:[#allocation13 + $0xc8] sm:$0xff]
    %v5777 = vld [vmem:[#allocation13 + $0xd0] sm:$0xff]
    %v5778 = vld [vmem:[#allocation13 + $0xd8] sm:$0xff]
    %v5779 = vld [vmem:[#allocation13 + $0xe0] sm:$0xff]
    %v5780 = vld [vmem:[#allocation13 + $0xe8] sm:$0xff]
    %v5781 = vld [vmem:[#allocation13 + $0xf0] sm:$0xff]
    %v5782 = vld [vmem:[#allocation13 + $0xf8] sm:$0xff]
    %v5783 = vld [vmem:[#allocation13 + $0x100] sm:$0xff]
    %v5784 = vld [vmem:[#allocation13 + $0x108] sm:$0xff]
    %v5785 = vld [vmem:[#allocation13 + $0x110] sm:$0xff]
    %v5786 = vld [vmem:[#allocation13 + $0x118] sm:$0xff]
    %v5787 = vld [vmem:[#allocation13 + $0x120] sm:$0xff]
    %v5788 = vld [vmem:[#allocation13 + $0x128] sm:$0xff]
    %v5789 = vld [vmem:[#allocation13 + $0x130] sm:$0xff]
    %v5790 = vld [vmem:[#allocation13 + $0x138] sm:$0xff]
    %v5791 = vld [vmem:[#allocation13 + $0x140] sm:$0xff]
    %v5792 = vld [vmem:[#allocation13 + $0x148] sm:$0xff]
    %v5793 = vld [vmem:[#allocation13 + $0x150] sm:$0xff]
    %v5794 = vld [vmem:[#allocation13 + $0x158] sm:$0xff]
    %v5795 = vld [vmem:[#allocation13 + $0x160] sm:$0xff]
    %v5796 = vld [vmem:[#allocation13 + $0x168] sm:$0xff]
    %v5797 = vld [vmem:[#allocation13 + $0x170] sm:$0xff]
    %v5798 = vld [vmem:[#allocation13 + $0x178] sm:$0xff]
    %v5799 = vld [vmem:[#allocation13 + $0x180] sm:$0xff]
    %v5800 = vld [vmem:[#allocation13 + $0x188] sm:$0xff]
    %v5801 = vld [vmem:[#allocation13 + $0x190] sm:$0xff]
    %v5802 = vld [vmem:[#allocation13 + $0x198] sm:$0xff]
    %v5803 = vld [vmem:[#allocation13 + $0x1a0] sm:$0xff]
    %v5804 = vld [vmem:[#allocation13 + $0x1a8] sm:$0xff]
    %v5805 = vld [vmem:[#allocation13 + $0x1b0] sm:$0xff]
    %v5806 = vld [vmem:[#allocation13 + $0x1b8] sm:$0xff]
    %v5807 = vld [vmem:[#allocation13 + $0x1c0] sm:$0xff]
    %v5808 = vld [vmem:[#allocation13 + $0x1c8] sm:$0xff]
    %v5809 = vld [vmem:[#allocation13 + $0x1d0] sm:$0xff]
    %v5810 = vld [vmem:[#allocation13 + $0x1d8] sm:$0xff]
    %v5811 = vld [vmem:[#allocation13 + $0x1e0] sm:$0xff]
    %v5812 = vld [vmem:[#allocation13 + $0x1e8] sm:$0xff]
    %v5813 = vld [vmem:[#allocation13 + $0x1f0] sm:$0xff]
    %v5814 = vld [vmem:[#allocation13 + $0x1f8] sm:$0xff]
    %v5815 = vld [vmem:[#allocation13 + $0x200] sm:$0xff]
    %v5816 = vld [vmem:[#allocation13 + $0x208] sm:$0xff]
    %v5817 = vld [vmem:[#allocation13 + $0x210] sm:$0xff]
    %v5818 = vld [vmem:[#allocation13 + $0x218] sm:$0xff]
    %v5819 = vld [vmem:[#allocation13 + $0x220] sm:$0xff]
    %v5820 = vld [vmem:[#allocation13 + $0x228] sm:$0xff]
    %v5821 = vld [vmem:[#allocation13 + $0x230] sm:$0xff]
    %v5822 = vld [vmem:[#allocation13 + $0x238] sm:$0xff]
    %v5823 = vld [vmem:[#allocation13 + $0x240] sm:$0xff]
    %v5824 = vld [vmem:[#allocation13 + $0x248] sm:$0xff]
    %v5825 = vld [vmem:[#allocation13 + $0x250] sm:$0xff]
    %v5826 = vld [vmem:[#allocation13 + $0x258] sm:$0xff]
    %v5827 = vld [vmem:[#allocation13 + $0x260] sm:$0xff]
    %v5828 = vld [vmem:[#allocation13 + $0x268] sm:$0xff]
    %v5829 = vld [vmem:[#allocation13 + $0x270] sm:$0xff]
    %v5830 = vld [vmem:[#allocation13 + $0x278] sm:$0xff]
    %v5831 = vld [vmem:[#allocation13 + $0x280] sm:$0xff]
    %v5832 = vld [vmem:[#allocation13 + $0x288] sm:$0xff]
    %v5833 = vld [vmem:[#allocation13 + $0x290] sm:$0xff]
    %v5834 = vld [vmem:[#allocation13 + $0x298] sm:$0xff]
    %v5835 = vld [vmem:[#allocation13 + $0x2a0] sm:$0xff]
    %v5836 = vld [vmem:[#allocation13 + $0x2a8] sm:$0xff]
    %v5837 = vld [vmem:[#allocation13 + $0x2b0] sm:$0xff]
    %v5838 = vld [vmem:[#allocation13 + $0x2b8] sm:$0xff]
    %v5839 = vld [vmem:[#allocation13 + $0x2c0] sm:$0xff]
    %v5840 = vld [vmem:[#allocation13 + $0x2c8] sm:$0xff]
    %v5841 = vld [vmem:[#allocation13 + $0x2d0] sm:$0xff]
    %v5842 = vld [vmem:[#allocation13 + $0x2d8] sm:$0xff]
    %v5843 = vld [vmem:[#allocation13 + $0x2e0] sm:$0xff]
    %v5844 = vld [vmem:[#allocation13 + $0x2e8] sm:$0xff]
    %v5845 = vld [vmem:[#allocation13 + $0x2f0] sm:$0xff]
    %v5846 = vld [vmem:[#allocation13 + $0x2f8] sm:$0xff]
    %v5847 = vld [vmem:[#allocation13 + $0x300] sm:$0xff]
    %v5848 = vld [vmem:[#allocation13 + $0x308] sm:$0xff]
    %v5849 = vld [vmem:[#allocation13 + $0x310] sm:$0xff]
    %v5850 = vld [vmem:[#allocation13 + $0x318] sm:$0xff]
    %v5851 = vld [vmem:[#allocation13 + $0x320] sm:$0xff]
    %v5852 = vld [vmem:[#allocation13 + $0x328] sm:$0xff]
    %v5853 = vld [vmem:[#allocation13 + $0x330] sm:$0xff]
    %v5854 = vld [vmem:[#allocation13 + $0x338] sm:$0xff]
    %v5855 = vld [vmem:[#allocation13 + $0x340] sm:$0xff]
    %v5856 = vld [vmem:[#allocation13 + $0x348] sm:$0xff]
    %v5857 = vld [vmem:[#allocation13 + $0x350] sm:$0xff]
    %v5858 = vld [vmem:[#allocation13 + $0x358] sm:$0xff]
    %v5859 = vld [vmem:[#allocation13 + $0x360] sm:$0xff]
    %v5860 = vld [vmem:[#allocation13 + $0x368] sm:$0xff]
    %v5861 = vld [vmem:[#allocation13 + $0x370] sm:$0xff]
    %v5862 = vld [vmem:[#allocation13 + $0x378] sm:$0xff]
    %v5863 = vld [vmem:[#allocation13 + $0x380] sm:$0xff]
    %v5864 = vld [vmem:[#allocation13 + $0x388] sm:$0xff]
    %v5865 = vld [vmem:[#allocation13 + $0x390] sm:$0xff]
    %v5866 = vld [vmem:[#allocation13 + $0x398] sm:$0xff]
    %v5867 = vld [vmem:[#allocation13 + $0x3a0] sm:$0xff]
    %v5868 = vld [vmem:[#allocation13 + $0x3a8] sm:$0xff]
    %v5869 = vld [vmem:[#allocation13 + $0x3b0] sm:$0xff]
    %v5870 = vld [vmem:[#allocation13 + $0x3b8] sm:$0xff]
    %v5871 = vld [vmem:[#allocation13 + $0x3c0] sm:$0xff]
    %v5872 = vld [vmem:[#allocation13 + $0x3c8] sm:$0xff]
    %v5873 = vld [vmem:[#allocation13 + $0x3d0] sm:$0xff]
    %v5874 = vld [vmem:[#allocation13 + $0x3d8] sm:$0xff]
    %v5875 = vld [vmem:[#allocation13 + $0x3e0] sm:$0xff]
    %v5876 = vld [vmem:[#allocation13 + $0x3e8] sm:$0xff]
    %v5877 = vld [vmem:[#allocation13 + $0x3f0] sm:$0xff]
    %v5878 = vld [vmem:[#allocation13 + $0x3f8] sm:$0xff]
    %v5879 = vld [vmem:[#allocation13 + $0x400] sm:$0xff]
    %v5880 = vld [vmem:[#allocation13 + $0x408] sm:$0xff]
    %v5881 = vld [vmem:[#allocation13 + $0x410] sm:$0xff]
    %v5882 = vld [vmem:[#allocation13 + $0x418] sm:$0xff]
    %v5883 = vld [vmem:[#allocation13 + $0x420] sm:$0xff]
    %v5884 = vld [vmem:[#allocation13 + $0x428] sm:$0xff]
    %v5885 = vld [vmem:[#allocation13 + $0x430] sm:$0xff]
    %v5886 = vld [vmem:[#allocation13 + $0x438] sm:$0xff]
    %v5887 = vld [vmem:[#allocation13 + $0x440] sm:$0xff]
    %v5888 = vld [vmem:[#allocation13 + $0x448] sm:$0xff]
    %v5889 = vld [vmem:[#allocation13 + $0x450] sm:$0xff]
    %v5890 = vld [vmem:[#allocation13 + $0x458] sm:$0xff]
    %v5891 = vld [vmem:[#allocation13 + $0x460] sm:$0xff]
    %v5892 = vld [vmem:[#allocation13 + $0x468] sm:$0xff]
    %v5893 = vld [vmem:[#allocation13 + $0x470] sm:$0xff]
    %v5894 = vld [vmem:[#allocation13 + $0x478] sm:$0xff]
    %v5895 = vld [vmem:[#allocation13 + $0x480] sm:$0xff]
    %v5896 = vld [vmem:[#allocation13 + $0x488] sm:$0xff]
    %v5897 = vld [vmem:[#allocation13 + $0x490] sm:$0xff]
    %v5898 = vld [vmem:[#allocation13 + $0x498] sm:$0xff]
    %v5899 = vld [vmem:[#allocation13 + $0x4a0] sm:$0xff]
    %v5900 = vld [vmem:[#allocation13 + $0x4a8] sm:$0xff]
    %v5901 = vld [vmem:[#allocation13 + $0x4b0] sm:$0xff]
    %v5902 = vld [vmem:[#allocation13 + $0x4b8] sm:$0xff]
    %v5903 = vld [vmem:[#allocation13 + $0x4c0] sm:$0xff]
    %v5904 = vld [vmem:[#allocation13 + $0x4c8] sm:$0xff]
    %v5905 = vld [vmem:[#allocation13 + $0x4d0] sm:$0xff]
    %v5906 = vld [vmem:[#allocation13 + $0x4d8] sm:$0xff]
    %v5907 = vld [vmem:[#allocation13 + $0x4e0] sm:$0xff]
    %v5908 = vld [vmem:[#allocation13 + $0x4e8] sm:$0xff]
    %v5909 = vld [vmem:[#allocation13 + $0x4f0] sm:$0xff]
    %v5910 = vld [vmem:[#allocation13 + $0x4f8] sm:$0xff]
    %v5911 = vld [vmem:[#allocation15] sm:$0xff]
    %v5912 = vld [vmem:[#allocation15 + $0x8] sm:$0xff]
    %v5913 = vld [vmem:[#allocation15 + $0x10] sm:$0xff]
    %v5914 = vld [vmem:[#allocation15 + $0x18] sm:$0xff]
    %v5915 = vld [vmem:[#allocation15 + $0x20] sm:$0xff]
    %v5921 = vlaneseq
    %v5922 = vshrl.u32 %v5921, 7
    %v5923 = vsub.s32 0, %v5922
    %v5924 = vrot.slane %v5911, %v5923
    %v5925 = vlaneseq
    %v5926 = vshrl.u32 %v5925, 7
    %v5927 = vsub.s32 1, %v5926
    %v5928 = vrot.slane %v5911, %v5927
    %v5929 = vlaneseq
    %v5930 = vshrl.u32 %v5929, 7
    %v5931 = vsub.s32 2, %v5930
    %v5932 = vrot.slane %v5911, %v5931
    %v5933 = vlaneseq
    %v5934 = vshrl.u32 %v5933, 7
    %v5935 = vsub.s32 3, %v5934
    %v5936 = vrot.slane %v5911, %v5935
    %v5937 = vlaneseq
    %v5938 = vshrl.u32 %v5937, 7
    %v5939 = vsub.s32 4, %v5938
    %v5940 = vrot.slane %v5911, %v5939
    %v5941 = vlaneseq
    %v5942 = vshrl.u32 %v5941, 7
    %v5943 = vsub.s32 5, %v5942
    %v5944 = vrot.slane %v5911, %v5943
    %v5945 = vlaneseq
    %v5946 = vshrl.u32 %v5945, 7
    %v5947 = vsub.s32 6, %v5946
    %v5948 = vrot.slane %v5911, %v5947
    %v5949 = vlaneseq
    %v5950 = vshrl.u32 %v5949, 7
    %v5951 = vsub.s32 7, %v5950
    %v5952 = vrot.slane %v5911, %v5951
    %v5953 = vlaneseq
    %v5954 = vshrl.u32 %v5953, 7
    %v5955 = vsub.s32 0, %v5954
    %v5956 = vrot.slane %v5912, %v5955
    %v5957 = vlaneseq
    %v5958 = vshrl.u32 %v5957, 7
    %v5959 = vsub.s32 1, %v5958
    %v5960 = vrot.slane %v5912, %v5959
    %v5961 = vlaneseq
    %v5962 = vshrl.u32 %v5961, 7
    %v5963 = vsub.s32 2, %v5962
    %v5964 = vrot.slane %v5912, %v5963
    %v5965 = vlaneseq
    %v5966 = vshrl.u32 %v5965, 7
    %v5967 = vsub.s32 3, %v5966
    %v5968 = vrot.slane %v5912, %v5967
    %v5969 = vlaneseq
    %v5970 = vshrl.u32 %v5969, 7
    %v5971 = vsub.s32 4, %v5970
    %v5972 = vrot.slane %v5912, %v5971
    %v5973 = vlaneseq
    %v5974 = vshrl.u32 %v5973, 7
    %v5975 = vsub.s32 5, %v5974
    %v5976 = vrot.slane %v5912, %v5975
    %v5977 = vlaneseq
    %v5978 = vshrl.u32 %v5977, 7
    %v5979 = vsub.s32 6, %v5978
    %v5980 = vrot.slane %v5912, %v5979
    %v5981 = vlaneseq
    %v5982 = vshrl.u32 %v5981, 7
    %v5983 = vsub.s32 7, %v5982
    %v5984 = vrot.slane %v5912, %v5983
    %v5985 = vlaneseq
    %v5986 = vshrl.u32 %v5985, 7
    %v5987 = vsub.s32 0, %v5986
    %v5988 = vrot.slane %v5913, %v5987
    %v5989 = vlaneseq
    %v5990 = vshrl.u32 %v5989, 7
    %v5991 = vsub.s32 1, %v5990
    %v5992 = vrot.slane %v5913, %v5991
    %v5993 = vlaneseq
    %v5994 = vshrl.u32 %v5993, 7
    %v5995 = vsub.s32 2, %v5994
    %v5996 = vrot.slane %v5913, %v5995
    %v5997 = vlaneseq
    %v5998 = vshrl.u32 %v5997, 7
    %v5999 = vsub.s32 3, %v5998
    %v6000 = vrot.slane %v5913, %v5999
    %v6001 = vlaneseq
    %v6002 = vshrl.u32 %v6001, 7
    %v6003 = vsub.s32 4, %v6002
    %v6004 = vrot.slane %v5913, %v6003
    %v6005 = vlaneseq
    %v6006 = vshrl.u32 %v6005, 7
    %v6007 = vsub.s32 5, %v6006
    %v6008 = vrot.slane %v5913, %v6007
    %v6009 = vlaneseq
    %v6010 = vshrl.u32 %v6009, 7
    %v6011 = vsub.s32 6, %v6010
    %v6012 = vrot.slane %v5913, %v6011
    %v6013 = vlaneseq
    %v6014 = vshrl.u32 %v6013, 7
    %v6015 = vsub.s32 7, %v6014
    %v6016 = vrot.slane %v5913, %v6015
    %v6017 = vlaneseq
    %v6018 = vshrl.u32 %v6017, 7
    %v6019 = vsub.s32 0, %v6018
    %v6020 = vrot.slane %v5914, %v6019
    %v6021 = vlaneseq
    %v6022 = vshrl.u32 %v6021, 7
    %v6023 = vsub.s32 1, %v6022
    %v6024 = vrot.slane %v5914, %v6023
    %v6025 = vlaneseq
    %v6026 = vshrl.u32 %v6025, 7
    %v6027 = vsub.s32 2, %v6026
    %v6028 = vrot.slane %v5914, %v6027
    %v6029 = vlaneseq
    %v6030 = vshrl.u32 %v6029, 7
    %v6031 = vsub.s32 3, %v6030
    %v6032 = vrot.slane %v5914, %v6031
    %v6033 = vlaneseq
    %v6034 = vshrl.u32 %v6033, 7
    %v6035 = vsub.s32 4, %v6034
    %v6036 = vrot.slane %v5914, %v6035
    %v6037 = vlaneseq
    %v6038 = vshrl.u32 %v6037, 7
    %v6039 = vsub.s32 5, %v6038
    %v6040 = vrot.slane %v5914, %v6039
    %v6041 = vlaneseq
    %v6042 = vshrl.u32 %v6041, 7
    %v6043 = vsub.s32 6, %v6042
    %v6044 = vrot.slane %v5914, %v6043
    %v6045 = vlaneseq
    %v6046 = vshrl.u32 %v6045, 7
    %v6047 = vsub.s32 7, %v6046
    %v6048 = vrot.slane %v5914, %v6047
    %v6049 = vlaneseq
    %v6050 = vshrl.u32 %v6049, 7
    %v6051 = vsub.s32 0, %v6050
    %v6052 = vrot.slane %v5915, %v6051
    %v6053 = vlaneseq
    %v6054 = vshrl.u32 %v6053, 7
    %v6055 = vsub.s32 1, %v6054
    %v6056 = vrot.slane %v5915, %v6055
    %v6057 = vlaneseq
    %v6058 = vshrl.u32 %v6057, 7
    %v6059 = vsub.s32 2, %v6058
    %v6060 = vrot.slane %v5915, %v6059
    %v6061 = vlaneseq
    %v6062 = vshrl.u32 %v6061, 7
    %v6063 = vsub.s32 3, %v6062
    %v6064 = vrot.slane %v5915, %v6063
    %v6065 = vlaneseq
    %v6066 = vshrl.u32 %v6065, 7
    %v6067 = vsub.s32 4, %v6066
    %v6068 = vrot.slane %v5915, %v6067
    %v6069 = vlaneseq
    %v6070 = vshrl.u32 %v6069, 7
    %v6071 = vsub.s32 5, %v6070
    %v6072 = vrot.slane %v5915, %v6071
    %v6073 = vlaneseq
    %v6074 = vshrl.u32 %v6073, 7
    %v6075 = vsub.s32 6, %v6074
    %v6076 = vrot.slane %v5915, %v6075
    %v6077 = vlaneseq
    %v6078 = vshrl.u32 %v6077, 7
    %v6079 = vsub.s32 7, %v6078
    %v6080 = vrot.slane %v5915, %v6079
    %v6281 = vunpack.c.l.b16 %v5751
    %v6282 = vunpack.c.h.b16 %v5751
    %v6283 = vunpack.c.l.b16 %v5752
    %v6284 = vunpack.c.h.b16 %v5752
    %v6285 = vunpack.c.l.b16 %v5753
    %v6286 = vunpack.c.h.b16 %v5753
    %v6287 = vunpack.c.l.b16 %v5754
    %v6288 = vunpack.c.h.b16 %v5754
    %v6289 = vunpack.c.l.b16 %v5755
    %v6290 = vunpack.c.h.b16 %v5755
    %v6291 = vunpack.c.l.b16 %v5756
    %v6292 = vunpack.c.h.b16 %v5756
    %v6293 = vunpack.c.l.b16 %v5757
    %v6294 = vunpack.c.h.b16 %v5757
    %v6295 = vunpack.c.l.b16 %v5758
    %v6296 = vunpack.c.h.b16 %v5758
    %v6297 = vunpack.c.l.b16 %v5759
    %v6298 = vunpack.c.h.b16 %v5759
    %v6299 = vunpack.c.l.b16 %v5760
    %v6300 = vunpack.c.h.b16 %v5760
    %v6301 = vunpack.c.l.b16 %v5761
    %v6302 = vunpack.c.h.b16 %v5761
    %v6303 = vunpack.c.l.b16 %v5762
    %v6304 = vunpack.c.h.b16 %v5762
    %v6305 = vunpack.c.l.b16 %v5763
    %v6306 = vunpack.c.h.b16 %v5763
    %v6307 = vunpack.c.l.b16 %v5764
    %v6308 = vunpack.c.h.b16 %v5764
    %v6309 = vunpack.c.l.b16 %v5765
    %v6310 = vunpack.c.h.b16 %v5765
    %v6311 = vunpack.c.l.b16 %v5766
    %v6312 = vunpack.c.h.b16 %v5766
    %v6313 = vunpack.c.l.b16 %v5767
    %v6314 = vunpack.c.h.b16 %v5767
    %v6315 = vunpack.c.l.b16 %v5768
    %v6316 = vunpack.c.h.b16 %v5768
    %v6317 = vunpack.c.l.b16 %v5769
    %v6318 = vunpack.c.h.b16 %v5769
    %v6319 = vunpack.c.l.b16 %v5770
    %v6320 = vunpack.c.h.b16 %v5770
    %v6321 = vunpack.c.l.b16 %v5771
    %v6322 = vunpack.c.h.b16 %v5771
    %v6323 = vunpack.c.l.b16 %v5772
    %v6324 = vunpack.c.h.b16 %v5772
    %v6325 = vunpack.c.l.b16 %v5773
    %v6326 = vunpack.c.h.b16 %v5773
    %v6327 = vunpack.c.l.b16 %v5774
    %v6328 = vunpack.c.h.b16 %v5774
    %v6329 = vunpack.c.l.b16 %v5775
    %v6330 = vunpack.c.h.b16 %v5775
    %v6331 = vunpack.c.l.b16 %v5776
    %v6332 = vunpack.c.h.b16 %v5776
    %v6333 = vunpack.c.l.b16 %v5777
    %v6334 = vunpack.c.h.b16 %v5777
    %v6335 = vunpack.c.l.b16 %v5778
    %v6336 = vunpack.c.h.b16 %v5778
    %v6337 = vunpack.c.l.b16 %v5779
    %v6338 = vunpack.c.h.b16 %v5779
    %v6339 = vunpack.c.l.b16 %v5780
    %v6340 = vunpack.c.h.b16 %v5780
    %v6341 = vunpack.c.l.b16 %v5781
    %v6342 = vunpack.c.h.b16 %v5781
    %v6343 = vunpack.c.l.b16 %v5782
    %v6344 = vunpack.c.h.b16 %v5782
    %v6345 = vunpack.c.l.b16 %v5783
    %v6346 = vunpack.c.h.b16 %v5783
    %v6347 = vunpack.c.l.b16 %v5784
    %v6348 = vunpack.c.h.b16 %v5784
    %v6349 = vunpack.c.l.b16 %v5785
    %v6350 = vunpack.c.h.b16 %v5785
    %v6351 = vunpack.c.l.b16 %v5786
    %v6352 = vunpack.c.h.b16 %v5786
    %v6353 = vunpack.c.l.b16 %v5787
    %v6354 = vunpack.c.h.b16 %v5787
    %v6355 = vunpack.c.l.b16 %v5788
    %v6356 = vunpack.c.h.b16 %v5788
    %v6357 = vunpack.c.l.b16 %v5789
    %v6358 = vunpack.c.h.b16 %v5789
    %v6359 = vunpack.c.l.b16 %v5790
    %v6360 = vunpack.c.h.b16 %v5790
    %v6361 = vunpack.c.l.b16 %v5791
    %v6362 = vunpack.c.h.b16 %v5791
    %v6363 = vunpack.c.l.b16 %v5792
    %v6364 = vunpack.c.h.b16 %v5792
    %v6365 = vunpack.c.l.b16 %v5793
    %v6366 = vunpack.c.h.b16 %v5793
    %v6367 = vunpack.c.l.b16 %v5794
    %v6368 = vunpack.c.h.b16 %v5794
    %v6369 = vunpack.c.l.b16 %v5795
    %v6370 = vunpack.c.h.b16 %v5795
    %v6371 = vunpack.c.l.b16 %v5796
    %v6372 = vunpack.c.h.b16 %v5796
    %v6373 = vunpack.c.l.b16 %v5797
    %v6374 = vunpack.c.h.b16 %v5797
    %v6375 = vunpack.c.l.b16 %v5798
    %v6376 = vunpack.c.h.b16 %v5798
    %v6377 = vunpack.c.l.b16 %v5799
    %v6378 = vunpack.c.h.b16 %v5799
    %v6379 = vunpack.c.l.b16 %v5800
    %v6380 = vunpack.c.h.b16 %v5800
    %v6381 = vunpack.c.l.b16 %v5801
    %v6382 = vunpack.c.h.b16 %v5801
    %v6383 = vunpack.c.l.b16 %v5802
    %v6384 = vunpack.c.h.b16 %v5802
    %v6385 = vunpack.c.l.b16 %v5803
    %v6386 = vunpack.c.h.b16 %v5803
    %v6387 = vunpack.c.l.b16 %v5804
    %v6388 = vunpack.c.h.b16 %v5804
    %v6389 = vunpack.c.l.b16 %v5805
    %v6390 = vunpack.c.h.b16 %v5805
    %v6391 = vunpack.c.l.b16 %v5806
    %v6392 = vunpack.c.h.b16 %v5806
    %v6393 = vunpack.c.l.b16 %v5807
    %v6394 = vunpack.c.h.b16 %v5807
    %v6395 = vunpack.c.l.b16 %v5808
    %v6396 = vunpack.c.h.b16 %v5808
    %v6397 = vunpack.c.l.b16 %v5809
    %v6398 = vunpack.c.h.b16 %v5809
    %v6399 = vunpack.c.l.b16 %v5810
    %v6400 = vunpack.c.h.b16 %v5810
    %v6401 = vunpack.c.l.b16 %v5811
    %v6402 = vunpack.c.h.b16 %v5811
    %v6403 = vunpack.c.l.b16 %v5812
    %v6404 = vunpack.c.h.b16 %v5812
    %v6405 = vunpack.c.l.b16 %v5813
    %v6406 = vunpack.c.h.b16 %v5813
    %v6407 = vunpack.c.l.b16 %v5814
    %v6408 = vunpack.c.h.b16 %v5814
    %v6409 = vunpack.c.l.b16 %v5815
    %v6410 = vunpack.c.h.b16 %v5815
    %v6411 = vunpack.c.l.b16 %v5816
    %v6412 = vunpack.c.h.b16 %v5816
    %v6413 = vunpack.c.l.b16 %v5817
    %v6414 = vunpack.c.h.b16 %v5817
    %v6415 = vunpack.c.l.b16 %v5818
    %v6416 = vunpack.c.h.b16 %v5818
    %v6417 = vunpack.c.l.b16 %v5819
    %v6418 = vunpack.c.h.b16 %v5819
    %v6419 = vunpack.c.l.b16 %v5820
    %v6420 = vunpack.c.h.b16 %v5820
    %v6421 = vunpack.c.l.b16 %v5821
    %v6422 = vunpack.c.h.b16 %v5821
    %v6423 = vunpack.c.l.b16 %v5822
    %v6424 = vunpack.c.h.b16 %v5822
    %v6425 = vunpack.c.l.b16 %v5823
    %v6426 = vunpack.c.h.b16 %v5823
    %v6427 = vunpack.c.l.b16 %v5824
    %v6428 = vunpack.c.h.b16 %v5824
    %v6429 = vunpack.c.l.b16 %v5825
    %v6430 = vunpack.c.h.b16 %v5825
    %v6431 = vunpack.c.l.b16 %v5826
    %v6432 = vunpack.c.h.b16 %v5826
    %v6433 = vunpack.c.l.b16 %v5827
    %v6434 = vunpack.c.h.b16 %v5827
    %v6435 = vunpack.c.l.b16 %v5828
    %v6436 = vunpack.c.h.b16 %v5828
    %v6437 = vunpack.c.l.b16 %v5829
    %v6438 = vunpack.c.h.b16 %v5829
    %v6439 = vunpack.c.l.b16 %v5830
    %v6440 = vunpack.c.h.b16 %v5830
    %v6441 = vunpack.c.l.b16 %v5831
    %v6442 = vunpack.c.h.b16 %v5831
    %v6443 = vunpack.c.l.b16 %v5832
    %v6444 = vunpack.c.h.b16 %v5832
    %v6445 = vunpack.c.l.b16 %v5833
    %v6446 = vunpack.c.h.b16 %v5833
    %v6447 = vunpack.c.l.b16 %v5834
    %v6448 = vunpack.c.h.b16 %v5834
    %v6449 = vunpack.c.l.b16 %v5835
    %v6450 = vunpack.c.h.b16 %v5835
    %v6451 = vunpack.c.l.b16 %v5836
    %v6452 = vunpack.c.h.b16 %v5836
    %v6453 = vunpack.c.l.b16 %v5837
    %v6454 = vunpack.c.h.b16 %v5837
    %v6455 = vunpack.c.l.b16 %v5838
    %v6456 = vunpack.c.h.b16 %v5838
    %v6457 = vunpack.c.l.b16 %v5839
    %v6458 = vunpack.c.h.b16 %v5839
    %v6459 = vunpack.c.l.b16 %v5840
    %v6460 = vunpack.c.h.b16 %v5840
    %v6461 = vunpack.c.l.b16 %v5841
    %v6462 = vunpack.c.h.b16 %v5841
    %v6463 = vunpack.c.l.b16 %v5842
    %v6464 = vunpack.c.h.b16 %v5842
    %v6465 = vunpack.c.l.b16 %v5843
    %v6466 = vunpack.c.h.b16 %v5843
    %v6467 = vunpack.c.l.b16 %v5844
    %v6468 = vunpack.c.h.b16 %v5844
    %v6469 = vunpack.c.l.b16 %v5845
    %v6470 = vunpack.c.h.b16 %v5845
    %v6471 = vunpack.c.l.b16 %v5846
    %v6472 = vunpack.c.h.b16 %v5846
    %v6473 = vunpack.c.l.b16 %v5847
    %v6474 = vunpack.c.h.b16 %v5847
    %v6475 = vunpack.c.l.b16 %v5848
    %v6476 = vunpack.c.h.b16 %v5848
    %v6477 = vunpack.c.l.b16 %v5849
    %v6478 = vunpack.c.h.b16 %v5849
    %v6479 = vunpack.c.l.b16 %v5850
    %v6480 = vunpack.c.h.b16 %v5850
    %v6481 = vunpack.c.l.b16 %v5851
    %v6482 = vunpack.c.h.b16 %v5851
    %v6483 = vunpack.c.l.b16 %v5852
    %v6484 = vunpack.c.h.b16 %v5852
    %v6485 = vunpack.c.l.b16 %v5853
    %v6486 = vunpack.c.h.b16 %v5853
    %v6487 = vunpack.c.l.b16 %v5854
    %v6488 = vunpack.c.h.b16 %v5854
    %v6489 = vunpack.c.l.b16 %v5855
    %v6490 = vunpack.c.h.b16 %v5855
    %v6491 = vunpack.c.l.b16 %v5856
    %v6492 = vunpack.c.h.b16 %v5856
    %v6493 = vunpack.c.l.b16 %v5857
    %v6494 = vunpack.c.h.b16 %v5857
    %v6495 = vunpack.c.l.b16 %v5858
    %v6496 = vunpack.c.h.b16 %v5858
    %v6497 = vunpack.c.l.b16 %v5859
    %v6498 = vunpack.c.h.b16 %v5859
    %v6499 = vunpack.c.l.b16 %v5860
    %v6500 = vunpack.c.h.b16 %v5860
    %v6501 = vunpack.c.l.b16 %v5861
    %v6502 = vunpack.c.h.b16 %v5861
    %v6503 = vunpack.c.l.b16 %v5862
    %v6504 = vunpack.c.h.b16 %v5862
    %v6505 = vunpack.c.l.b16 %v5863
    %v6506 = vunpack.c.h.b16 %v5863
    %v6507 = vunpack.c.l.b16 %v5864
    %v6508 = vunpack.c.h.b16 %v5864
    %v6509 = vunpack.c.l.b16 %v5865
    %v6510 = vunpack.c.h.b16 %v5865
    %v6511 = vunpack.c.l.b16 %v5866
    %v6512 = vunpack.c.h.b16 %v5866
    %v6513 = vunpack.c.l.b16 %v5867
    %v6514 = vunpack.c.h.b16 %v5867
    %v6515 = vunpack.c.l.b16 %v5868
    %v6516 = vunpack.c.h.b16 %v5868
    %v6517 = vunpack.c.l.b16 %v5869
    %v6518 = vunpack.c.h.b16 %v5869
    %v6519 = vunpack.c.l.b16 %v5870
    %v6520 = vunpack.c.h.b16 %v5870
    %v6521 = vunpack.c.l.b16 %v5871
    %v6522 = vunpack.c.h.b16 %v5871
    %v6523 = vunpack.c.l.b16 %v5872
    %v6524 = vunpack.c.h.b16 %v5872
    %v6525 = vunpack.c.l.b16 %v5873
    %v6526 = vunpack.c.h.b16 %v5873
    %v6527 = vunpack.c.l.b16 %v5874
    %v6528 = vunpack.c.h.b16 %v5874
    %v6529 = vunpack.c.l.b16 %v5875
    %v6530 = vunpack.c.h.b16 %v5875
    %v6531 = vunpack.c.l.b16 %v5876
    %v6532 = vunpack.c.h.b16 %v5876
    %v6533 = vunpack.c.l.b16 %v5877
    %v6534 = vunpack.c.h.b16 %v5877
    %v6535 = vunpack.c.l.b16 %v5878
    %v6536 = vunpack.c.h.b16 %v5878
    %v6537 = vunpack.c.l.b16 %v5879
    %v6538 = vunpack.c.h.b16 %v5879
    %v6539 = vunpack.c.l.b16 %v5880
    %v6540 = vunpack.c.h.b16 %v5880
    %v6541 = vunpack.c.l.b16 %v5881
    %v6542 = vunpack.c.h.b16 %v5881
    %v6543 = vunpack.c.l.b16 %v5882
    %v6544 = vunpack.c.h.b16 %v5882
    %v6545 = vunpack.c.l.b16 %v5883
    %v6546 = vunpack.c.h.b16 %v5883
    %v6547 = vunpack.c.l.b16 %v5884
    %v6548 = vunpack.c.h.b16 %v5884
    %v6549 = vunpack.c.l.b16 %v5885
    %v6550 = vunpack.c.h.b16 %v5885
    %v6551 = vunpack.c.l.b16 %v5886
    %v6552 = vunpack.c.h.b16 %v5886
    %v6553 = vunpack.c.l.b16 %v5887
    %v6554 = vunpack.c.h.b16 %v5887
    %v6555 = vunpack.c.l.b16 %v5888
    %v6556 = vunpack.c.h.b16 %v5888
    %v6557 = vunpack.c.l.b16 %v5889
    %v6558 = vunpack.c.h.b16 %v5889
    %v6559 = vunpack.c.l.b16 %v5890
    %v6560 = vunpack.c.h.b16 %v5890
    %v6561 = vunpack.c.l.b16 %v5891
    %v6562 = vunpack.c.h.b16 %v5891
    %v6563 = vunpack.c.l.b16 %v5892
    %v6564 = vunpack.c.h.b16 %v5892
    %v6565 = vunpack.c.l.b16 %v5893
    %v6566 = vunpack.c.h.b16 %v5893
    %v6567 = vunpack.c.l.b16 %v5894
    %v6568 = vunpack.c.h.b16 %v5894
    %v6569 = vunpack.c.l.b16 %v5895
    %v6570 = vunpack.c.h.b16 %v5895
    %v6571 = vunpack.c.l.b16 %v5896
    %v6572 = vunpack.c.h.b16 %v5896
    %v6573 = vunpack.c.l.b16 %v5897
    %v6574 = vunpack.c.h.b16 %v5897
    %v6575 = vunpack.c.l.b16 %v5898
    %v6576 = vunpack.c.h.b16 %v5898
    %v6577 = vunpack.c.l.b16 %v5899
    %v6578 = vunpack.c.h.b16 %v5899
    %v6579 = vunpack.c.l.b16 %v5900
    %v6580 = vunpack.c.h.b16 %v5900
    %v6581 = vunpack.c.l.b16 %v5901
    %v6582 = vunpack.c.h.b16 %v5901
    %v6583 = vunpack.c.l.b16 %v5902
    %v6584 = vunpack.c.h.b16 %v5902
    %v6585 = vunpack.c.l.b16 %v5903
    %v6586 = vunpack.c.h.b16 %v5903
    %v6587 = vunpack.c.l.b16 %v5904
    %v6588 = vunpack.c.h.b16 %v5904
    %v6589 = vunpack.c.l.b16 %v5905
    %v6590 = vunpack.c.h.b16 %v5905
    %v6591 = vunpack.c.l.b16 %v5906
    %v6592 = vunpack.c.h.b16 %v5906
    %v6593 = vunpack.c.l.b16 %v5907
    %v6594 = vunpack.c.h.b16 %v5907
    %v6595 = vunpack.c.l.b16 %v5908
    %v6596 = vunpack.c.h.b16 %v5908
    %v6597 = vunpack.c.l.b16 %v5909
    %v6598 = vunpack.c.h.b16 %v5909
    %v6599 = vunpack.c.l.b16 %v5910
    %v6600 = vunpack.c.h.b16 %v5910
    %v6601 = vpack.c.b16 %v6321, %v6281
    %v6602 = vpack.c.b16 %v6322, %v6282
    %v6603 = vpack.c.b16 %v6323, %v6283
    %v6604 = vpack.c.b16 %v6324, %v6284
    %v6605 = vpack.c.b16 %v6325, %v6285
    %v6606 = vpack.c.b16 %v6326, %v6286
    %v6607 = vpack.c.b16 %v6327, %v6287
    %v6608 = vpack.c.b16 %v6328, %v6288
    %v6609 = vpack.c.b16 %v6329, %v6289
    %v6610 = vpack.c.b16 %v6330, %v6290
    %v6611 = vpack.c.b16 %v6331, %v6291
    %v6612 = vpack.c.b16 %v6332, %v6292
    %v6613 = vpack.c.b16 %v6333, %v6293
    %v6614 = vpack.c.b16 %v6334, %v6294
    %v6615 = vpack.c.b16 %v6335, %v6295
    %v6616 = vpack.c.b16 %v6336, %v6296
    %v6617 = vpack.c.b16 %v6337, %v6297
    %v6618 = vpack.c.b16 %v6338, %v6298
    %v6619 = vpack.c.b16 %v6339, %v6299
    %v6620 = vpack.c.b16 %v6340, %v6300
    %v6621 = vpack.c.b16 %v6341, %v6301
    %v6622 = vpack.c.b16 %v6342, %v6302
    %v6623 = vpack.c.b16 %v6343, %v6303
    %v6624 = vpack.c.b16 %v6344, %v6304
    %v6625 = vpack.c.b16 %v6345, %v6305
    %v6626 = vpack.c.b16 %v6346, %v6306
    %v6627 = vpack.c.b16 %v6347, %v6307
    %v6628 = vpack.c.b16 %v6348, %v6308
    %v6629 = vpack.c.b16 %v6349, %v6309
    %v6630 = vpack.c.b16 %v6350, %v6310
    %v6631 = vpack.c.b16 %v6351, %v6311
    %v6632 = vpack.c.b16 %v6352, %v6312
    %v6633 = vpack.c.b16 %v6353, %v6313
    %v6634 = vpack.c.b16 %v6354, %v6314
    %v6635 = vpack.c.b16 %v6355, %v6315
    %v6636 = vpack.c.b16 %v6356, %v6316
    %v6637 = vpack.c.b16 %v6357, %v6317
    %v6638 = vpack.c.b16 %v6358, %v6318
    %v6639 = vpack.c.b16 %v6359, %v6319
    %v6640 = vpack.c.b16 %v6360, %v6320
    %v6641 = vpack.c.b16 %v6401, %v6361
    %v6642 = vpack.c.b16 %v6402, %v6362
    %v6643 = vpack.c.b16 %v6403, %v6363
    %v6644 = vpack.c.b16 %v6404, %v6364
    %v6645 = vpack.c.b16 %v6405, %v6365
    %v6646 = vpack.c.b16 %v6406, %v6366
    %v6647 = vpack.c.b16 %v6407, %v6367
    %v6648 = vpack.c.b16 %v6408, %v6368
    %v6649 = vpack.c.b16 %v6409, %v6369
    %v6650 = vpack.c.b16 %v6410, %v6370
    %v6651 = vpack.c.b16 %v6411, %v6371
    %v6652 = vpack.c.b16 %v6412, %v6372
    %v6653 = vpack.c.b16 %v6413, %v6373
    %v6654 = vpack.c.b16 %v6414, %v6374
    %v6655 = vpack.c.b16 %v6415, %v6375
    %v6656 = vpack.c.b16 %v6416, %v6376
    %v6657 = vpack.c.b16 %v6417, %v6377
    %v6658 = vpack.c.b16 %v6418, %v6378
    %v6659 = vpack.c.b16 %v6419, %v6379
    %v6660 = vpack.c.b16 %v6420, %v6380
    %v6661 = vpack.c.b16 %v6421, %v6381
    %v6662 = vpack.c.b16 %v6422, %v6382
    %v6663 = vpack.c.b16 %v6423, %v6383
    %v6664 = vpack.c.b16 %v6424, %v6384
    %v6665 = vpack.c.b16 %v6425, %v6385
    %v6666 = vpack.c.b16 %v6426, %v6386
    %v6667 = vpack.c.b16 %v6427, %v6387
    %v6668 = vpack.c.b16 %v6428, %v6388
    %v6669 = vpack.c.b16 %v6429, %v6389
    %v6670 = vpack.c.b16 %v6430, %v6390
    %v6671 = vpack.c.b16 %v6431, %v6391
    %v6672 = vpack.c.b16 %v6432, %v6392
    %v6673 = vpack.c.b16 %v6433, %v6393
    %v6674 = vpack.c.b16 %v6434, %v6394
    %v6675 = vpack.c.b16 %v6435, %v6395
    %v6676 = vpack.c.b16 %v6436, %v6396
    %v6677 = vpack.c.b16 %v6437, %v6397
    %v6678 = vpack.c.b16 %v6438, %v6398
    %v6679 = vpack.c.b16 %v6439, %v6399
    %v6680 = vpack.c.b16 %v6440, %v6400
    %v6681 = vpack.c.b16 %v6481, %v6441
    %v6682 = vpack.c.b16 %v6482, %v6442
    %v6683 = vpack.c.b16 %v6483, %v6443
    %v6684 = vpack.c.b16 %v6484, %v6444
    %v6685 = vpack.c.b16 %v6485, %v6445
    %v6686 = vpack.c.b16 %v6486, %v6446
    %v6687 = vpack.c.b16 %v6487, %v6447
    %v6688 = vpack.c.b16 %v6488, %v6448
    %v6689 = vpack.c.b16 %v6489, %v6449
    %v6690 = vpack.c.b16 %v6490, %v6450
    %v6691 = vpack.c.b16 %v6491, %v6451
    %v6692 = vpack.c.b16 %v6492, %v6452
    %v6693 = vpack.c.b16 %v6493, %v6453
    %v6694 = vpack.c.b16 %v6494, %v6454
    %v6695 = vpack.c.b16 %v6495, %v6455
    %v6696 = vpack.c.b16 %v6496, %v6456
    %v6697 = vpack.c.b16 %v6497, %v6457
    %v6698 = vpack.c.b16 %v6498, %v6458
    %v6699 = vpack.c.b16 %v6499, %v6459
    %v6700 = vpack.c.b16 %v6500, %v6460
    %v6701 = vpack.c.b16 %v6501, %v6461
    %v6702 = vpack.c.b16 %v6502, %v6462
    %v6703 = vpack.c.b16 %v6503, %v6463
    %v6704 = vpack.c.b16 %v6504, %v6464
    %v6705 = vpack.c.b16 %v6505, %v6465
    %v6706 = vpack.c.b16 %v6506, %v6466
    %v6707 = vpack.c.b16 %v6507, %v6467
    %v6708 = vpack.c.b16 %v6508, %v6468
    %v6709 = vpack.c.b16 %v6509, %v6469
    %v6710 = vpack.c.b16 %v6510, %v6470
    %v6711 = vpack.c.b16 %v6511, %v6471
    %v6712 = vpack.c.b16 %v6512, %v6472
    %v6713 = vpack.c.b16 %v6513, %v6473
    %v6714 = vpack.c.b16 %v6514, %v6474
    %v6715 = vpack.c.b16 %v6515, %v6475
    %v6716 = vpack.c.b16 %v6516, %v6476
    %v6717 = vpack.c.b16 %v6517, %v6477
    %v6718 = vpack.c.b16 %v6518, %v6478
    %v6719 = vpack.c.b16 %v6519, %v6479
    %v6720 = vpack.c.b16 %v6520, %v6480
    %v6721 = vpack.c.b16 %v6561, %v6521
    %v6722 = vpack.c.b16 %v6562, %v6522
    %v6723 = vpack.c.b16 %v6563, %v6523
    %v6724 = vpack.c.b16 %v6564, %v6524
    %v6725 = vpack.c.b16 %v6565, %v6525
    %v6726 = vpack.c.b16 %v6566, %v6526
    %v6727 = vpack.c.b16 %v6567, %v6527
    %v6728 = vpack.c.b16 %v6568, %v6528
    %v6729 = vpack.c.b16 %v6569, %v6529
    %v6730 = vpack.c.b16 %v6570, %v6530
    %v6731 = vpack.c.b16 %v6571, %v6531
    %v6732 = vpack.c.b16 %v6572, %v6532
    %v6733 = vpack.c.b16 %v6573, %v6533
    %v6734 = vpack.c.b16 %v6574, %v6534
    %v6735 = vpack.c.b16 %v6575, %v6535
    %v6736 = vpack.c.b16 %v6576, %v6536
    %v6737 = vpack.c.b16 %v6577, %v6537
    %v6738 = vpack.c.b16 %v6578, %v6538
    %v6739 = vpack.c.b16 %v6579, %v6539
    %v6740 = vpack.c.b16 %v6580, %v6540
    %v6741 = vpack.c.b16 %v6581, %v6541
    %v6742 = vpack.c.b16 %v6582, %v6542
    %v6743 = vpack.c.b16 %v6583, %v6543
    %v6744 = vpack.c.b16 %v6584, %v6544
    %v6745 = vpack.c.b16 %v6585, %v6545
    %v6746 = vpack.c.b16 %v6586, %v6546
    %v6747 = vpack.c.b16 %v6587, %v6547
    %v6748 = vpack.c.b16 %v6588, %v6548
    %v6749 = vpack.c.b16 %v6589, %v6549
    %v6750 = vpack.c.b16 %v6590, %v6550
    %v6751 = vpack.c.b16 %v6591, %v6551
    %v6752 = vpack.c.b16 %v6592, %v6552
    %v6753 = vpack.c.b16 %v6593, %v6553
    %v6754 = vpack.c.b16 %v6594, %v6554
    %v6755 = vpack.c.b16 %v6595, %v6555
    %v6756 = vpack.c.b16 %v6596, %v6556
    %v6757 = vpack.c.b16 %v6597, %v6557
    %v6758 = vpack.c.b16 %v6598, %v6558
    %v6759 = vpack.c.b16 %v6599, %v6559
    %v6760 = vpack.c.b16 %v6600, %v6560
    %vm6921 = vcmask 523264
    %v6923 = vsel %vm6921, %v5750, 0
    %6925 = vmatprep.subr.bf16.mxu0 0
    %6926 = vmatpush1.bf16.msra.mxu0 0
    %6927 = vmatprep.subr.bf16.mxu0 0
    %6928 = vmatpush1.bf16.msra.mxu0 0
    %6929 = vmatprep.subr.bf16.mxu0 0
    %6930 = vmatpush1.bf16.msra.mxu0 0
    %6931 = vmatprep.subr.bf16.mxu0 0
    %6932 = vmatpush1.bf16.msra.mxu0 0
    %6933 = vmatprep.subr.bf16.mxu0 %v6722
    %6934 = vmatpush1.bf16.msra.mxu0 %v6721
    %6935 = vmatprep.subr.bf16.mxu0 %v6682
    %6936 = vmatpush1.bf16.msra.mxu0 %v6681
    %6937 = vmatprep.subr.bf16.mxu0 %v6642
    %6938 = vmatpush1.bf16.msra.mxu0 %v6641
    %6939 = vmatprep.subr.bf16.mxu0 %v6602
    %6940 = vmatpush1.bf16.msra.mxu0 %v6601
    %6941 = vmatprep.subr.bf16.mxu0 0
    %6942 = vmatpush2.bf16.msra.mxu0 0
    %6943 = vmatprep.subr.bf16.mxu0 0
    %6944 = vmatpush2.bf16.msra.mxu0 0
    %6945 = vmatprep.subr.bf16.mxu0 0
    %6946 = vmatpush2.bf16.msra.mxu0 0
    %6947 = vmatprep.subr.bf16.mxu0 0
    %6948 = vmatpush2.bf16.msra.mxu0 0
    %6949 = vmatprep.subr.bf16.mxu0 0
    %6950 = vmatpush2.bf16.msra.mxu0 0
    %6951 = vmatprep.subr.bf16.mxu0 0
    %6952 = vmatpush2.bf16.msra.mxu0 0
    %6953 = vmatprep.subr.bf16.mxu0 0
    %6954 = vmatpush2.bf16.msra.mxu0 0
    %6955 = vmatprep.subr.bf16.mxu0 0
    %6956 = vmatpush2.bf16.msra.mxu0 0
    %6957 = vmatprep.mubr.bf16.mxu0 0
    %6958 = vmatmul.mubr.bf16.gmra.mxu0 %v6923
    %v6959 = vpop.f32.mrf.mxu0
    %v6960 = vadd.f32 %v5924, %v6959
    %v6961 = vpop.f32.mrf.mxu0
    %v6962 = vadd.f32 %v5928, %v6961
    %v6963 = vpop.f32.mrf.mxu0
    %v6964 = vpop.f32.mrf.mxu0
    %6965 = vdwg.mxu0
    %6966 = vmatprep.subr.bf16.mxu0 0
    %6967 = vmatpush1.bf16.msra.mxu0 0
    %6968 = vmatprep.subr.bf16.mxu0 0
    %6969 = vmatpush1.bf16.msra.mxu0 0
    %6970 = vmatprep.subr.bf16.mxu0 0
    %6971 = vmatpush1.bf16.msra.mxu0 0
    %6972 = vmatprep.subr.bf16.mxu0 0
    %6973 = vmatpush1.bf16.msra.mxu0 0
    %6974 = vmatprep.subr.bf16.mxu0 %v6724
    %6975 = vmatpush1.bf16.msra.mxu0 %v6723
    %6976 = vmatprep.subr.bf16.mxu0 %v6684
    %6977 = vmatpush1.bf16.msra.mxu0 %v6683
    %6978 = vmatprep.subr.bf16.mxu0 %v6644
    %6979 = vmatpush1.bf16.msra.mxu0 %v6643
    %6980 = vmatprep.subr.bf16.mxu0 %v6604
    %6981 = vmatpush1.bf16.msra.mxu0 %v6603
    %6982 = vmatprep.subr.bf16.mxu0 0
    %6983 = vmatpush2.bf16.msra.mxu0 0
    %6984 = vmatprep.subr.bf16.mxu0 0
    %6985 = vmatpush2.bf16.msra.mxu0 0
    %6986 = vmatprep.subr.bf16.mxu0 0
    %6987 = vmatpush2.bf16.msra.mxu0 0
    %6988 = vmatprep.subr.bf16.mxu0 0
    %6989 = vmatpush2.bf16.msra.mxu0 0
    %6990 = vmatprep.subr.bf16.mxu0 0
    %6991 = vmatpush2.bf16.msra.mxu0 0
    %6992 = vmatprep.subr.bf16.mxu0 0
    %6993 = vmatpush2.bf16.msra.mxu0 0
    %6994 = vmatprep.subr.bf16.mxu0 0
    %6995 = vmatpush2.bf16.msra.mxu0 0
    %6996 = vmatprep.subr.bf16.mxu0 0
    %6997 = vmatpush2.bf16.msra.mxu0 0
    %6998 = vmatprep.mubr.bf16.mxu0 0
    %6999 = vmatmul.mubr.bf16.gmra.mxu0 %v6923
    %v7000 = vpop.f32.mrf.mxu0
    %v7001 = vadd.f32 %v5932, %v7000
    %v7002 = vpop.f32.mrf.mxu0
    %v7003 = vadd.f32 %v5936, %v7002
    %v7004 = vpop.f32.mrf.mxu0
    %v7005 = vpop.f32.mrf.mxu0
    %7006 = vdwg.mxu0
    %7007 = vmatprep.subr.bf16.mxu0 0
    %7008 = vmatpush1.bf16.msra.mxu0 0
    %7009 = vmatprep.subr.bf16.mxu0 0
    %7010 = vmatpush1.bf16.msra.mxu0 0
    %7011 = vmatprep.subr.bf16.mxu0 0
    %7012 = vmatpush1.bf16.msra.mxu0 0
    %7013 = vmatprep.subr.bf16.mxu0 0
    %7014 = vmatpush1.bf16.msra.mxu0 0
    %7015 = vmatprep.subr.bf16.mxu0 %v6726
    %7016 = vmatpush1.bf16.msra.mxu0 %v6725
    %7017 = vmatprep.subr.bf16.mxu0 %v6686
    %7018 = vmatpush1.bf16.msra.mxu0 %v6685
    %7019 = vmatprep.subr.bf16.mxu0 %v6646
    %7020 = vmatpush1.bf16.msra.mxu0 %v6645
    %7021 = vmatprep.subr.bf16.mxu0 %v6606
    %7022 = vmatpush1.bf16.msra.mxu0 %v6605
    %7023 = vmatprep.subr.bf16.mxu0 0
    %7024 = vmatpush2.bf16.msra.mxu0 0
    %7025 = vmatprep.subr.bf16.mxu0 0
    %7026 = vmatpush2.bf16.msra.mxu0 0
    %7027 = vmatprep.subr.bf16.mxu0 0
    %7028 = vmatpush2.bf16.msra.mxu0 0
    %7029 = vmatprep.subr.bf16.mxu0 0
    %7030 = vmatpush2.bf16.msra.mxu0 0
    %7031 = vmatprep.subr.bf16.mxu0 0
    %7032 = vmatpush2.bf16.msra.mxu0 0
    %7033 = vmatprep.subr.bf16.mxu0 0
    %7034 = vmatpush2.bf16.msra.mxu0 0
    %7035 = vmatprep.subr.bf16.mxu0 0
    %7036 = vmatpush2.bf16.msra.mxu0 0
    %7037 = vmatprep.subr.bf16.mxu0 0
    %7038 = vmatpush2.bf16.msra.mxu0 0
    %7039 = vmatprep.mubr.bf16.mxu0 0
    %7040 = vmatmul.mubr.bf16.gmra.mxu0 %v6923
    %v7041 = vpop.f32.mrf.mxu0
    %v7042 = vadd.f32 %v5940, %v7041
    %v7043 = vpop.f32.mrf.mxu0
    %v7044 = vadd.f32 %v5944, %v7043
    %v7045 = vpop.f32.mrf.mxu0
    %v7046 = vpop.f32.mrf.mxu0
    %7047 = vdwg.mxu0
    %7048 = vmatprep.subr.bf16.mxu0 0
    %7049 = vmatpush1.bf16.msra.mxu0 0
    %7050 = vmatprep.subr.bf16.mxu0 0
    %7051 = vmatpush1.bf16.msra.mxu0 0
    %7052 = vmatprep.subr.bf16.mxu0 0
    %7053 = vmatpush1.bf16.msra.mxu0 0
    %7054 = vmatprep.subr.bf16.mxu0 0
    %7055 = vmatpush1.bf16.msra.mxu0 0
    %7056 = vmatprep.subr.bf16.mxu0 %v6728
    %7057 = vmatpush1.bf16.msra.mxu0 %v6727
    %7058 = vmatprep.subr.bf16.mxu0 %v6688
    %7059 = vmatpush1.bf16.msra.mxu0 %v6687
    %7060 = vmatprep.subr.bf16.mxu0 %v6648
    %7061 = vmatpush1.bf16.msra.mxu0 %v6647
    %7062 = vmatprep.subr.bf16.mxu0 %v6608
    %7063 = vmatpush1.bf16.msra.mxu0 %v6607
    %7064 = vmatprep.subr.bf16.mxu0 0
    %7065 = vmatpush2.bf16.msra.mxu0 0
    %7066 = vmatprep.subr.bf16.mxu0 0
    %7067 = vmatpush2.bf16.msra.mxu0 0
    %7068 = vmatprep.subr.bf16.mxu0 0
    %7069 = vmatpush2.bf16.msra.mxu0 0
    %7070 = vmatprep.subr.bf16.mxu0 0
    %7071 = vmatpush2.bf16.msra.mxu0 0
    %7072 = vmatprep.subr.bf16.mxu0 0
    %7073 = vmatpush2.bf16.msra.mxu0 0
    %7074 = vmatprep.subr.bf16.mxu0 0
    %7075 = vmatpush2.bf16.msra.mxu0 0
    %7076 = vmatprep.subr.bf16.mxu0 0
    %7077 = vmatpush2.bf16.msra.mxu0 0
    %7078 = vmatprep.subr.bf16.mxu0 0
    %7079 = vmatpush2.bf16.msra.mxu0 0
    %7080 = vmatprep.mubr.bf16.mxu0 0
    %7081 = vmatmul.mubr.bf16.gmra.mxu0 %v6923
    %v7082 = vpop.f32.mrf.mxu0
    %v7083 = vadd.f32 %v5948, %v7082
    %v7084 = vpop.f32.mrf.mxu0
    %v7085 = vadd.f32 %v5952, %v7084
    %v7086 = vpop.f32.mrf.mxu0
    %v7087 = vpop.f32.mrf.mxu0
    %7088 = vdwg.mxu0
    %7089 = vmatprep.subr.bf16.mxu0 0
    %7090 = vmatpush1.bf16.msra.mxu0 0
    %7091 = vmatprep.subr.bf16.mxu0 0
    %7092 = vmatpush1.bf16.msra.mxu0 0
    %7093 = vmatprep.subr.bf16.mxu0 0
    %7094 = vmatpush1.bf16.msra.mxu0 0
    %7095 = vmatprep.subr.bf16.mxu0 0
    %7096 = vmatpush1.bf16.msra.mxu0 0
    %7097 = vmatprep.subr.bf16.mxu0 %v6730
    %7098 = vmatpush1.bf16.msra.mxu0 %v6729
    %7099 = vmatprep.subr.bf16.mxu0 %v6690
    %7100 = vmatpush1.bf16.msra.mxu0 %v6689
    %7101 = vmatprep.subr.bf16.mxu0 %v6650
    %7102 = vmatpush1.bf16.msra.mxu0 %v6649
    %7103 = vmatprep.subr.bf16.mxu0 %v6610
    %7104 = vmatpush1.bf16.msra.mxu0 %v6609
    %7105 = vmatprep.subr.bf16.mxu0 0
    %7106 = vmatpush2.bf16.msra.mxu0 0
    %7107 = vmatprep.subr.bf16.mxu0 0
    %7108 = vmatpush2.bf16.msra.mxu0 0
    %7109 = vmatprep.subr.bf16.mxu0 0
    %7110 = vmatpush2.bf16.msra.mxu0 0
    %7111 = vmatprep.subr.bf16.mxu0 0
    %7112 = vmatpush2.bf16.msra.mxu0 0
    %7113 = vmatprep.subr.bf16.mxu0 0
    %7114 = vmatpush2.bf16.msra.mxu0 0
    %7115 = vmatprep.subr.bf16.mxu0 0
    %7116 = vmatpush2.bf16.msra.mxu0 0
    %7117 = vmatprep.subr.bf16.mxu0 0
    %7118 = vmatpush2.bf16.msra.mxu0 0
    %7119 = vmatprep.subr.bf16.mxu0 0
    %7120 = vmatpush2.bf16.msra.mxu0 0
    %7121 = vmatprep.mubr.bf16.mxu0 0
    %7122 = vmatmul.mubr.bf16.gmra.mxu0 %v6923
    %v7123 = vpop.f32.mrf.mxu0
    %v7124 = vadd.f32 %v5956, %v7123
    %v7125 = vpop.f32.mrf.mxu0
    %v7126 = vadd.f32 %v5960, %v7125
    %v7127 = vpop.f32.mrf.mxu0
    %v7128 = vpop.f32.mrf.mxu0
    %7129 = vdwg.mxu0
    %7130 = vmatprep.subr.bf16.mxu0 0
    %7131 = vmatpush1.bf16.msra.mxu0 0
    %7132 = vmatprep.subr.bf16.mxu0 0
    %7133 = vmatpush1.bf16.msra.mxu0 0
    %7134 = vmatprep.subr.bf16.mxu0 0
    %7135 = vmatpush1.bf16.msra.mxu0 0
    %7136 = vmatprep.subr.bf16.mxu0 0
    %7137 = vmatpush1.bf16.msra.mxu0 0
    %7138 = vmatprep.subr.bf16.mxu0 %v6732
    %7139 = vmatpush1.bf16.msra.mxu0 %v6731
    %7140 = vmatprep.subr.bf16.mxu0 %v6692
    %7141 = vmatpush1.bf16.msra.mxu0 %v6691
    %7142 = vmatprep.subr.bf16.mxu0 %v6652
    %7143 = vmatpush1.bf16.msra.mxu0 %v6651
    %7144 = vmatprep.subr.bf16.mxu0 %v6612
    %7145 = vmatpush1.bf16.msra.mxu0 %v6611
    %7146 = vmatprep.subr.bf16.mxu0 0
    %7147 = vmatpush2.bf16.msra.mxu0 0
    %7148 = vmatprep.subr.bf16.mxu0 0
    %7149 = vmatpush2.bf16.msra.mxu0 0
    %7150 = vmatprep.subr.bf16.mxu0 0
    %7151 = vmatpush2.bf16.msra.mxu0 0
    %7152 = vmatprep.subr.bf16.mxu0 0
    %7153 = vmatpush2.bf16.msra.mxu0 0
    %7154 = vmatprep.subr.bf16.mxu0 0
    %7155 = vmatpush2.bf16.msra.mxu0 0
    %7156 = vmatprep.subr.bf16.mxu0 0
    %7157 = vmatpush2.bf16.msra.mxu0 0
    %7158 = vmatprep.subr.bf16.mxu0 0
    %7159 = vmatpush2.bf16.msra.mxu0 0
    %7160 = vmatprep.subr.bf16.mxu0 0
    %7161 = vmatpush2.bf16.msra.mxu0 0
    %7162 = vmatprep.mubr.bf16.mxu0 0
    %7163 = vmatmul.mubr.bf16.gmra.mxu0 %v6923
    %v7164 = vpop.f32.mrf.mxu0
    %v7165 = vadd.f32 %v5964, %v7164
    %v7166 = vpop.f32.mrf.mxu0
    %v7167 = vadd.f32 %v5968, %v7166
    %v7168 = vpop.f32.mrf.mxu0
    %v7169 = vpop.f32.mrf.mxu0
    %7170 = vdwg.mxu0
    %7171 = vmatprep.subr.bf16.mxu0 0
    %7172 = vmatpush1.bf16.msra.mxu0 0
    %7173 = vmatprep.subr.bf16.mxu0 0
    %7174 = vmatpush1.bf16.msra.mxu0 0
    %7175 = vmatprep.subr.bf16.mxu0 0
    %7176 = vmatpush1.bf16.msra.mxu0 0
    %7177 = vmatprep.subr.bf16.mxu0 0
    %7178 = vmatpush1.bf16.msra.mxu0 0
    %7179 = vmatprep.subr.bf16.mxu0 %v6734
    %7180 = vmatpush1.bf16.msra.mxu0 %v6733
    %7181 = vmatprep.subr.bf16.mxu0 %v6694
    %7182 = vmatpush1.bf16.msra.mxu0 %v6693
    %7183 = vmatprep.subr.bf16.mxu0 %v6654
    %7184 = vmatpush1.bf16.msra.mxu0 %v6653
    %7185 = vmatprep.subr.bf16.mxu0 %v6614
    %7186 = vmatpush1.bf16.msra.mxu0 %v6613
    %7187 = vmatprep.subr.bf16.mxu0 0
    %7188 = vmatpush2.bf16.msra.mxu0 0
    %7189 = vmatprep.subr.bf16.mxu0 0
    %7190 = vmatpush2.bf16.msra.mxu0 0
    %7191 = vmatprep.subr.bf16.mxu0 0
    %7192 = vmatpush2.bf16.msra.mxu0 0
    %7193 = vmatprep.subr.bf16.mxu0 0
    %7194 = vmatpush2.bf16.msra.mxu0 0
    %7195 = vmatprep.subr.bf16.mxu0 0
    %7196 = vmatpush2.bf16.msra.mxu0 0
    %7197 = vmatprep.subr.bf16.mxu0 0
    %7198 = vmatpush2.bf16.msra.mxu0 0
    %7199 = vmatprep.subr.bf16.mxu0 0
    %7200 = vmatpush2.bf16.msra.mxu0 0
    %7201 = vmatprep.subr.bf16.mxu0 0
    %7202 = vmatpush2.bf16.msra.mxu0 0
    %7203 = vmatprep.mubr.bf16.mxu0 0
    %7204 = vmatmul.mubr.bf16.gmra.mxu0 %v6923
    %v7205 = vpop.f32.mrf.mxu0
    %v7206 = vadd.f32 %v5972, %v7205
    %v7207 = vpop.f32.mrf.mxu0
    %v7208 = vadd.f32 %v5976, %v7207
    %v7209 = vpop.f32.mrf.mxu0
    %v7210 = vpop.f32.mrf.mxu0
    %7211 = vdwg.mxu0
    %7212 = vmatprep.subr.bf16.mxu0 0
    %7213 = vmatpush1.bf16.msra.mxu0 0
    %7214 = vmatprep.subr.bf16.mxu0 0
    %7215 = vmatpush1.bf16.msra.mxu0 0
    %7216 = vmatprep.subr.bf16.mxu0 0
    %7217 = vmatpush1.bf16.msra.mxu0 0
    %7218 = vmatprep.subr.bf16.mxu0 0
    %7219 = vmatpush1.bf16.msra.mxu0 0
    %7220 = vmatprep.subr.bf16.mxu0 %v6736
    %7221 = vmatpush1.bf16.msra.mxu0 %v6735
    %7222 = vmatprep.subr.bf16.mxu0 %v6696
    %7223 = vmatpush1.bf16.msra.mxu0 %v6695
    %7224 = vmatprep.subr.bf16.mxu0 %v6656
    %7225 = vmatpush1.bf16.msra.mxu0 %v6655
    %7226 = vmatprep.subr.bf16.mxu0 %v6616
    %7227 = vmatpush1.bf16.msra.mxu0 %v6615
    %7228 = vmatprep.subr.bf16.mxu0 0
    %7229 = vmatpush2.bf16.msra.mxu0 0
    %7230 = vmatprep.subr.bf16.mxu0 0
    %7231 = vmatpush2.bf16.msra.mxu0 0
    %7232 = vmatprep.subr.bf16.mxu0 0
    %7233 = vmatpush2.bf16.msra.mxu0 0
    %7234 = vmatprep.subr.bf16.mxu0 0
    %7235 = vmatpush2.bf16.msra.mxu0 0
    %7236 = vmatprep.subr.bf16.mxu0 0
    %7237 = vmatpush2.bf16.msra.mxu0 0
    %7238 = vmatprep.subr.bf16.mxu0 0
    %7239 = vmatpush2.bf16.msra.mxu0 0
    %7240 = vmatprep.subr.bf16.mxu0 0
    %7241 = vmatpush2.bf16.msra.mxu0 0
    %7242 = vmatprep.subr.bf16.mxu0 0
    %7243 = vmatpush2.bf16.msra.mxu0 0
    %7244 = vmatprep.mubr.bf16.mxu0 0
    %7245 = vmatmul.mubr.bf16.gmra.mxu0 %v6923
    %v7246 = vpop.f32.mrf.mxu0
    %v7247 = vadd.f32 %v5980, %v7246
    %v7248 = vpop.f32.mrf.mxu0
    %v7249 = vadd.f32 %v5984, %v7248
    %v7250 = vpop.f32.mrf.mxu0
    %v7251 = vpop.f32.mrf.mxu0
    %7252 = vdwg.mxu0
    %7253 = vmatprep.subr.bf16.mxu0 0
    %7254 = vmatpush1.bf16.msra.mxu0 0
    %7255 = vmatprep.subr.bf16.mxu0 0
    %7256 = vmatpush1.bf16.msra.mxu0 0
    %7257 = vmatprep.subr.bf16.mxu0 0
    %7258 = vmatpush1.bf16.msra.mxu0 0
    %7259 = vmatprep.subr.bf16.mxu0 0
    %7260 = vmatpush1.bf16.msra.mxu0 0
    %7261 = vmatprep.subr.bf16.mxu0 %v6738
    %7262 = vmatpush1.bf16.msra.mxu0 %v6737
    %7263 = vmatprep.subr.bf16.mxu0 %v6698
    %7264 = vmatpush1.bf16.msra.mxu0 %v6697
    %7265 = vmatprep.subr.bf16.mxu0 %v6658
    %7266 = vmatpush1.bf16.msra.mxu0 %v6657
    %7267 = vmatprep.subr.bf16.mxu0 %v6618
    %7268 = vmatpush1.bf16.msra.mxu0 %v6617
    %7269 = vmatprep.subr.bf16.mxu0 0
    %7270 = vmatpush2.bf16.msra.mxu0 0
    %7271 = vmatprep.subr.bf16.mxu0 0
    %7272 = vmatpush2.bf16.msra.mxu0 0
    %7273 = vmatprep.subr.bf16.mxu0 0
    %7274 = vmatpush2.bf16.msra.mxu0 0
    %7275 = vmatprep.subr.bf16.mxu0 0
    %7276 = vmatpush2.bf16.msra.mxu0 0
    %7277 = vmatprep.subr.bf16.mxu0 0
    %7278 = vmatpush2.bf16.msra.mxu0 0
    %7279 = vmatprep.subr.bf16.mxu0 0
    %7280 = vmatpush2.bf16.msra.mxu0 0
    %7281 = vmatprep.subr.bf16.mxu0 0
    %7282 = vmatpush2.bf16.msra.mxu0 0
    %7283 = vmatprep.subr.bf16.mxu0 0
    %7284 = vmatpush2.bf16.msra.mxu0 0
    %7285 = vmatprep.mubr.bf16.mxu0 0
    %7286 = vmatmul.mubr.bf16.gmra.mxu0 %v6923
    %v7287 = vpop.f32.mrf.mxu0
    %v7288 = vadd.f32 %v5988, %v7287
    %v7289 = vpop.f32.mrf.mxu0
    %v7290 = vadd.f32 %v5992, %v7289
    %v7291 = vpop.f32.mrf.mxu0
    %v7292 = vpop.f32.mrf.mxu0
    %7293 = vdwg.mxu0
    %7294 = vmatprep.subr.bf16.mxu0 0
    %7295 = vmatpush1.bf16.msra.mxu0 0
    %7296 = vmatprep.subr.bf16.mxu0 0
    %7297 = vmatpush1.bf16.msra.mxu0 0
    %7298 = vmatprep.subr.bf16.mxu0 0
    %7299 = vmatpush1.bf16.msra.mxu0 0
    %7300 = vmatprep.subr.bf16.mxu0 0
    %7301 = vmatpush1.bf16.msra.mxu0 0
    %7302 = vmatprep.subr.bf16.mxu0 %v6740
    %7303 = vmatpush1.bf16.msra.mxu0 %v6739
    %7304 = vmatprep.subr.bf16.mxu0 %v6700
    %7305 = vmatpush1.bf16.msra.mxu0 %v6699
    %7306 = vmatprep.subr.bf16.mxu0 %v6660
    %7307 = vmatpush1.bf16.msra.mxu0 %v6659
    %7308 = vmatprep.subr.bf16.mxu0 %v6620
    %7309 = vmatpush1.bf16.msra.mxu0 %v6619
    %7310 = vmatprep.subr.bf16.mxu0 0
    %7311 = vmatpush2.bf16.msra.mxu0 0
    %7312 = vmatprep.subr.bf16.mxu0 0
    %7313 = vmatpush2.bf16.msra.mxu0 0
    %7314 = vmatprep.subr.bf16.mxu0 0
    %7315 = vmatpush2.bf16.msra.mxu0 0
    %7316 = vmatprep.subr.bf16.mxu0 0
    %7317 = vmatpush2.bf16.msra.mxu0 0
    %7318 = vmatprep.subr.bf16.mxu0 0
    %7319 = vmatpush2.bf16.msra.mxu0 0
    %7320 = vmatprep.subr.bf16.mxu0 0
    %7321 = vmatpush2.bf16.msra.mxu0 0
    %7322 = vmatprep.subr.bf16.mxu0 0
    %7323 = vmatpush2.bf16.msra.mxu0 0
    %7324 = vmatprep.subr.bf16.mxu0 0
    %7325 = vmatpush2.bf16.msra.mxu0 0
    %7326 = vmatprep.mubr.bf16.mxu0 0
    %7327 = vmatmul.mubr.bf16.gmra.mxu0 %v6923
    %v7328 = vpop.f32.mrf.mxu0
    %v7329 = vadd.f32 %v5996, %v7328
    %v7330 = vpop.f32.mrf.mxu0
    %v7331 = vadd.f32 %v6000, %v7330
    %v7332 = vpop.f32.mrf.mxu0
    %v7333 = vpop.f32.mrf.mxu0
    %7334 = vdwg.mxu0
    %7335 = vmatprep.subr.bf16.mxu0 0
    %7336 = vmatpush1.bf16.msra.mxu0 0
    %7337 = vmatprep.subr.bf16.mxu0 0
    %7338 = vmatpush1.bf16.msra.mxu0 0
    %7339 = vmatprep.subr.bf16.mxu0 0
    %7340 = vmatpush1.bf16.msra.mxu0 0
    %7341 = vmatprep.subr.bf16.mxu0 0
    %7342 = vmatpush1.bf16.msra.mxu0 0
    %7343 = vmatprep.subr.bf16.mxu0 %v6742
    %7344 = vmatpush1.bf16.msra.mxu0 %v6741
    %7345 = vmatprep.subr.bf16.mxu0 %v6702
    %7346 = vmatpush1.bf16.msra.mxu0 %v6701
    %7347 = vmatprep.subr.bf16.mxu0 %v6662
    %7348 = vmatpush1.bf16.msra.mxu0 %v6661
    %7349 = vmatprep.subr.bf16.mxu0 %v6622
    %7350 = vmatpush1.bf16.msra.mxu0 %v6621
    %7351 = vmatprep.subr.bf16.mxu0 0
    %7352 = vmatpush2.bf16.msra.mxu0 0
    %7353 = vmatprep.subr.bf16.mxu0 0
    %7354 = vmatpush2.bf16.msra.mxu0 0
    %7355 = vmatprep.subr.bf16.mxu0 0
    %7356 = vmatpush2.bf16.msra.mxu0 0
    %7357 = vmatprep.subr.bf16.mxu0 0
    %7358 = vmatpush2.bf16.msra.mxu0 0
    %7359 = vmatprep.subr.bf16.mxu0 0
    %7360 = vmatpush2.bf16.msra.mxu0 0
    %7361 = vmatprep.subr.bf16.mxu0 0
    %7362 = vmatpush2.bf16.msra.mxu0 0
    %7363 = vmatprep.subr.bf16.mxu0 0
    %7364 = vmatpush2.bf16.msra.mxu0 0
    %7365 = vmatprep.subr.bf16.mxu0 0
    %7366 = vmatpush2.bf16.msra.mxu0 0
    %7367 = vmatprep.mubr.bf16.mxu0 0
    %7368 = vmatmul.mubr.bf16.gmra.mxu0 %v6923
    %v7369 = vpop.f32.mrf.mxu0
    %v7370 = vadd.f32 %v6004, %v7369
    %v7371 = vpop.f32.mrf.mxu0
    %v7372 = vadd.f32 %v6008, %v7371
    %v7373 = vpop.f32.mrf.mxu0
    %v7374 = vpop.f32.mrf.mxu0
    %7375 = vdwg.mxu0
    %7376 = vmatprep.subr.bf16.mxu0 0
    %7377 = vmatpush1.bf16.msra.mxu0 0
    %7378 = vmatprep.subr.bf16.mxu0 0
    %7379 = vmatpush1.bf16.msra.mxu0 0
    %7380 = vmatprep.subr.bf16.mxu0 0
    %7381 = vmatpush1.bf16.msra.mxu0 0
    %7382 = vmatprep.subr.bf16.mxu0 0
    %7383 = vmatpush1.bf16.msra.mxu0 0
    %7384 = vmatprep.subr.bf16.mxu0 %v6744
    %7385 = vmatpush1.bf16.msra.mxu0 %v6743
    %7386 = vmatprep.subr.bf16.mxu0 %v6704
    %7387 = vmatpush1.bf16.msra.mxu0 %v6703
    %7388 = vmatprep.subr.bf16.mxu0 %v6664
    %7389 = vmatpush1.bf16.msra.mxu0 %v6663
    %7390 = vmatprep.subr.bf16.mxu0 %v6624
    %7391 = vmatpush1.bf16.msra.mxu0 %v6623
    %7392 = vmatprep.subr.bf16.mxu0 0
    %7393 = vmatpush2.bf16.msra.mxu0 0
    %7394 = vmatprep.subr.bf16.mxu0 0
    %7395 = vmatpush2.bf16.msra.mxu0 0
    %7396 = vmatprep.subr.bf16.mxu0 0
    %7397 = vmatpush2.bf16.msra.mxu0 0
    %7398 = vmatprep.subr.bf16.mxu0 0
    %7399 = vmatpush2.bf16.msra.mxu0 0
    %7400 = vmatprep.subr.bf16.mxu0 0
    %7401 = vmatpush2.bf16.msra.mxu0 0
    %7402 = vmatprep.subr.bf16.mxu0 0
    %7403 = vmatpush2.bf16.msra.mxu0 0
    %7404 = vmatprep.subr.bf16.mxu0 0
    %7405 = vmatpush2.bf16.msra.mxu0 0
    %7406 = vmatprep.subr.bf16.mxu0 0
    %7407 = vmatpush2.bf16.msra.mxu0 0
    %7408 = vmatprep.mubr.bf16.mxu0 0
    %7409 = vmatmul.mubr.bf16.gmra.mxu0 %v6923
    %v7410 = vpop.f32.mrf.mxu0
    %v7411 = vadd.f32 %v6012, %v7410
    %v7412 = vpop.f32.mrf.mxu0
    %v7413 = vadd.f32 %v6016, %v7412
    %v7414 = vpop.f32.mrf.mxu0
    %v7415 = vpop.f32.mrf.mxu0
    %7416 = vdwg.mxu0
    %7417 = vmatprep.subr.bf16.mxu0 0
    %7418 = vmatpush1.bf16.msra.mxu0 0
    %7419 = vmatprep.subr.bf16.mxu0 0
    %7420 = vmatpush1.bf16.msra.mxu0 0
    %7421 = vmatprep.subr.bf16.mxu0 0
    %7422 = vmatpush1.bf16.msra.mxu0 0
    %7423 = vmatprep.subr.bf16.mxu0 0
    %7424 = vmatpush1.bf16.msra.mxu0 0
    %7425 = vmatprep.subr.bf16.mxu0 %v6746
    %7426 = vmatpush1.bf16.msra.mxu0 %v6745
    %7427 = vmatprep.subr.bf16.mxu0 %v6706
    %7428 = vmatpush1.bf16.msra.mxu0 %v6705
    %7429 = vmatprep.subr.bf16.mxu0 %v6666
    %7430 = vmatpush1.bf16.msra.mxu0 %v6665
    %7431 = vmatprep.subr.bf16.mxu0 %v6626
    %7432 = vmatpush1.bf16.msra.mxu0 %v6625
    %7433 = vmatprep.subr.bf16.mxu0 0
    %7434 = vmatpush2.bf16.msra.mxu0 0
    %7435 = vmatprep.subr.bf16.mxu0 0
    %7436 = vmatpush2.bf16.msra.mxu0 0
    %7437 = vmatprep.subr.bf16.mxu0 0
    %7438 = vmatpush2.bf16.msra.mxu0 0
    %7439 = vmatprep.subr.bf16.mxu0 0
    %7440 = vmatpush2.bf16.msra.mxu0 0
    %7441 = vmatprep.subr.bf16.mxu0 0
    %7442 = vmatpush2.bf16.msra.mxu0 0
    %7443 = vmatprep.subr.bf16.mxu0 0
    %7444 = vmatpush2.bf16.msra.mxu0 0
    %7445 = vmatprep.subr.bf16.mxu0 0
    %7446 = vmatpush2.bf16.msra.mxu0 0
    %7447 = vmatprep.subr.bf16.mxu0 0
    %7448 = vmatpush2.bf16.msra.mxu0 0
    %7449 = vmatprep.mubr.bf16.mxu0 0
    %7450 = vmatmul.mubr.bf16.gmra.mxu0 %v6923
    %v7451 = vpop.f32.mrf.mxu0
    %v7452 = vadd.f32 %v6020, %v7451
    %v7453 = vpop.f32.mrf.mxu0
    %v7454 = vadd.f32 %v6024, %v7453
    %v7455 = vpop.f32.mrf.mxu0
    %v7456 = vpop.f32.mrf.mxu0
    %7457 = vdwg.mxu0
    %7458 = vmatprep.subr.bf16.mxu0 0
    %7459 = vmatpush1.bf16.msra.mxu0 0
    %7460 = vmatprep.subr.bf16.mxu0 0
    %7461 = vmatpush1.bf16.msra.mxu0 0
    %7462 = vmatprep.subr.bf16.mxu0 0
    %7463 = vmatpush1.bf16.msra.mxu0 0
    %7464 = vmatprep.subr.bf16.mxu0 0
    %7465 = vmatpush1.bf16.msra.mxu0 0
    %7466 = vmatprep.subr.bf16.mxu0 %v6748
    %7467 = vmatpush1.bf16.msra.mxu0 %v6747
    %7468 = vmatprep.subr.bf16.mxu0 %v6708
    %7469 = vmatpush1.bf16.msra.mxu0 %v6707
    %7470 = vmatprep.subr.bf16.mxu0 %v6668
    %7471 = vmatpush1.bf16.msra.mxu0 %v6667
    %7472 = vmatprep.subr.bf16.mxu0 %v6628
    %7473 = vmatpush1.bf16.msra.mxu0 %v6627
    %7474 = vmatprep.subr.bf16.mxu0 0
    %7475 = vmatpush2.bf16.msra.mxu0 0
    %7476 = vmatprep.subr.bf16.mxu0 0
    %7477 = vmatpush2.bf16.msra.mxu0 0
    %7478 = vmatprep.subr.bf16.mxu0 0
    %7479 = vmatpush2.bf16.msra.mxu0 0
    %7480 = vmatprep.subr.bf16.mxu0 0
    %7481 = vmatpush2.bf16.msra.mxu0 0
    %7482 = vmatprep.subr.bf16.mxu0 0
    %7483 = vmatpush2.bf16.msra.mxu0 0
    %7484 = vmatprep.subr.bf16.mxu0 0
    %7485 = vmatpush2.bf16.msra.mxu0 0
    %7486 = vmatprep.subr.bf16.mxu0 0
    %7487 = vmatpush2.bf16.msra.mxu0 0
    %7488 = vmatprep.subr.bf16.mxu0 0
    %7489 = vmatpush2.bf16.msra.mxu0 0
    %7490 = vmatprep.mubr.bf16.mxu0 0
    %7491 = vmatmul.mubr.bf16.gmra.mxu0 %v6923
    %v7492 = vpop.f32.mrf.mxu0
    %v7493 = vadd.f32 %v6028, %v7492
    %v7494 = vpop.f32.mrf.mxu0
    %v7495 = vadd.f32 %v6032, %v7494
    %v7496 = vpop.f32.mrf.mxu0
    %v7497 = vpop.f32.mrf.mxu0
    %7498 = vdwg.mxu0
    %7499 = vmatprep.subr.bf16.mxu0 0
    %7500 = vmatpush1.bf16.msra.mxu0 0
    %7501 = vmatprep.subr.bf16.mxu0 0
    %7502 = vmatpush1.bf16.msra.mxu0 0
    %7503 = vmatprep.subr.bf16.mxu0 0
    %7504 = vmatpush1.bf16.msra.mxu0 0
    %7505 = vmatprep.subr.bf16.mxu0 0
    %7506 = vmatpush1.bf16.msra.mxu0 0
    %7507 = vmatprep.subr.bf16.mxu0 %v6750
    %7508 = vmatpush1.bf16.msra.mxu0 %v6749
    %7509 = vmatprep.subr.bf16.mxu0 %v6710
    %7510 = vmatpush1.bf16.msra.mxu0 %v6709
    %7511 = vmatprep.subr.bf16.mxu0 %v6670
    %7512 = vmatpush1.bf16.msra.mxu0 %v6669
    %7513 = vmatprep.subr.bf16.mxu0 %v6630
    %7514 = vmatpush1.bf16.msra.mxu0 %v6629
    %7515 = vmatprep.subr.bf16.mxu0 0
    %7516 = vmatpush2.bf16.msra.mxu0 0
    %7517 = vmatprep.subr.bf16.mxu0 0
    %7518 = vmatpush2.bf16.msra.mxu0 0
    %7519 = vmatprep.subr.bf16.mxu0 0
    %7520 = vmatpush2.bf16.msra.mxu0 0
    %7521 = vmatprep.subr.bf16.mxu0 0
    %7522 = vmatpush2.bf16.msra.mxu0 0
    %7523 = vmatprep.subr.bf16.mxu0 0
    %7524 = vmatpush2.bf16.msra.mxu0 0
    %7525 = vmatprep.subr.bf16.mxu0 0
    %7526 = vmatpush2.bf16.msra.mxu0 0
    %7527 = vmatprep.subr.bf16.mxu0 0
    %7528 = vmatpush2.bf16.msra.mxu0 0
    %7529 = vmatprep.subr.bf16.mxu0 0
    %7530 = vmatpush2.bf16.msra.mxu0 0
    %7531 = vmatprep.mubr.bf16.mxu0 0
    %7532 = vmatmul.mubr.bf16.gmra.mxu0 %v6923
    %v7533 = vpop.f32.mrf.mxu0
    %v7534 = vadd.f32 %v6036, %v7533
    %v7535 = vpop.f32.mrf.mxu0
    %v7536 = vadd.f32 %v6040, %v7535
    %v7537 = vpop.f32.mrf.mxu0
    %v7538 = vpop.f32.mrf.mxu0
    %7539 = vdwg.mxu0
    %7540 = vmatprep.subr.bf16.mxu0 0
    %7541 = vmatpush1.bf16.msra.mxu0 0
    %7542 = vmatprep.subr.bf16.mxu0 0
    %7543 = vmatpush1.bf16.msra.mxu0 0
    %7544 = vmatprep.subr.bf16.mxu0 0
    %7545 = vmatpush1.bf16.msra.mxu0 0
    %7546 = vmatprep.subr.bf16.mxu0 0
    %7547 = vmatpush1.bf16.msra.mxu0 0
    %7548 = vmatprep.subr.bf16.mxu0 %v6752
    %7549 = vmatpush1.bf16.msra.mxu0 %v6751
    %7550 = vmatprep.subr.bf16.mxu0 %v6712
    %7551 = vmatpush1.bf16.msra.mxu0 %v6711
    %7552 = vmatprep.subr.bf16.mxu0 %v6672
    %7553 = vmatpush1.bf16.msra.mxu0 %v6671
    %7554 = vmatprep.subr.bf16.mxu0 %v6632
    %7555 = vmatpush1.bf16.msra.mxu0 %v6631
    %7556 = vmatprep.subr.bf16.mxu0 0
    %7557 = vmatpush2.bf16.msra.mxu0 0
    %7558 = vmatprep.subr.bf16.mxu0 0
    %7559 = vmatpush2.bf16.msra.mxu0 0
    %7560 = vmatprep.subr.bf16.mxu0 0
    %7561 = vmatpush2.bf16.msra.mxu0 0
    %7562 = vmatprep.subr.bf16.mxu0 0
    %7563 = vmatpush2.bf16.msra.mxu0 0
    %7564 = vmatprep.subr.bf16.mxu0 0
    %7565 = vmatpush2.bf16.msra.mxu0 0
    %7566 = vmatprep.subr.bf16.mxu0 0
    %7567 = vmatpush2.bf16.msra.mxu0 0
    %7568 = vmatprep.subr.bf16.mxu0 0
    %7569 = vmatpush2.bf16.msra.mxu0 0
    %7570 = vmatprep.subr.bf16.mxu0 0
    %7571 = vmatpush2.bf16.msra.mxu0 0
    %7572 = vmatprep.mubr.bf16.mxu0 0
    %7573 = vmatmul.mubr.bf16.gmra.mxu0 %v6923
    %v7574 = vpop.f32.mrf.mxu0
    %v7575 = vadd.f32 %v6044, %v7574
    %v7576 = vpop.f32.mrf.mxu0
    %v7577 = vadd.f32 %v6048, %v7576
    %v7578 = vpop.f32.mrf.mxu0
    %v7579 = vpop.f32.mrf.mxu0
    %7580 = vdwg.mxu0
    %7581 = vmatprep.subr.bf16.mxu0 0
    %7582 = vmatpush1.bf16.msra.mxu0 0
    %7583 = vmatprep.subr.bf16.mxu0 0
    %7584 = vmatpush1.bf16.msra.mxu0 0
    %7585 = vmatprep.subr.bf16.mxu0 0
    %7586 = vmatpush1.bf16.msra.mxu0 0
    %7587 = vmatprep.subr.bf16.mxu0 0
    %7588 = vmatpush1.bf16.msra.mxu0 0
    %7589 = vmatprep.subr.bf16.mxu0 %v6754
    %7590 = vmatpush1.bf16.msra.mxu0 %v6753
    %7591 = vmatprep.subr.bf16.mxu0 %v6714
    %7592 = vmatpush1.bf16.msra.mxu0 %v6713
    %7593 = vmatprep.subr.bf16.mxu0 %v6674
    %7594 = vmatpush1.bf16.msra.mxu0 %v6673
    %7595 = vmatprep.subr.bf16.mxu0 %v6634
    %7596 = vmatpush1.bf16.msra.mxu0 %v6633
    %7597 = vmatprep.subr.bf16.mxu0 0
    %7598 = vmatpush2.bf16.msra.mxu0 0
    %7599 = vmatprep.subr.bf16.mxu0 0
    %7600 = vmatpush2.bf16.msra.mxu0 0
    %7601 = vmatprep.subr.bf16.mxu0 0
    %7602 = vmatpush2.bf16.msra.mxu0 0
    %7603 = vmatprep.subr.bf16.mxu0 0
    %7604 = vmatpush2.bf16.msra.mxu0 0
    %7605 = vmatprep.subr.bf16.mxu0 0
    %7606 = vmatpush2.bf16.msra.mxu0 0
    %7607 = vmatprep.subr.bf16.mxu0 0
    %7608 = vmatpush2.bf16.msra.mxu0 0
    %7609 = vmatprep.subr.bf16.mxu0 0
    %7610 = vmatpush2.bf16.msra.mxu0 0
    %7611 = vmatprep.subr.bf16.mxu0 0
    %7612 = vmatpush2.bf16.msra.mxu0 0
    %7613 = vmatprep.mubr.bf16.mxu0 0
    %7614 = vmatmul.mubr.bf16.gmra.mxu0 %v6923
    %v7615 = vpop.f32.mrf.mxu0
    %v7616 = vadd.f32 %v6052, %v7615
    %v7617 = vpop.f32.mrf.mxu0
    %v7618 = vadd.f32 %v6056, %v7617
    %v7619 = vpop.f32.mrf.mxu0
    %v7620 = vpop.f32.mrf.mxu0
    %7621 = vdwg.mxu0
    %7622 = vmatprep.subr.bf16.mxu0 0
    %7623 = vmatpush1.bf16.msra.mxu0 0
    %7624 = vmatprep.subr.bf16.mxu0 0
    %7625 = vmatpush1.bf16.msra.mxu0 0
    %7626 = vmatprep.subr.bf16.mxu0 0
    %7627 = vmatpush1.bf16.msra.mxu0 0
    %7628 = vmatprep.subr.bf16.mxu0 0
    %7629 = vmatpush1.bf16.msra.mxu0 0
    %7630 = vmatprep.subr.bf16.mxu0 %v6756
    %7631 = vmatpush1.bf16.msra.mxu0 %v6755
    %7632 = vmatprep.subr.bf16.mxu0 %v6716
    %7633 = vmatpush1.bf16.msra.mxu0 %v6715
    %7634 = vmatprep.subr.bf16.mxu0 %v6676
    %7635 = vmatpush1.bf16.msra.mxu0 %v6675
    %7636 = vmatprep.subr.bf16.mxu0 %v6636
    %7637 = vmatpush1.bf16.msra.mxu0 %v6635
    %7638 = vmatprep.subr.bf16.mxu0 0
    %7639 = vmatpush2.bf16.msra.mxu0 0
    %7640 = vmatprep.subr.bf16.mxu0 0
    %7641 = vmatpush2.bf16.msra.mxu0 0
    %7642 = vmatprep.subr.bf16.mxu0 0
    %7643 = vmatpush2.bf16.msra.mxu0 0
    %7644 = vmatprep.subr.bf16.mxu0 0
    %7645 = vmatpush2.bf16.msra.mxu0 0
    %7646 = vmatprep.subr.bf16.mxu0 0
    %7647 = vmatpush2.bf16.msra.mxu0 0
    %7648 = vmatprep.subr.bf16.mxu0 0
    %7649 = vmatpush2.bf16.msra.mxu0 0
    %7650 = vmatprep.subr.bf16.mxu0 0
    %7651 = vmatpush2.bf16.msra.mxu0 0
    %7652 = vmatprep.subr.bf16.mxu0 0
    %7653 = vmatpush2.bf16.msra.mxu0 0
    %7654 = vmatprep.mubr.bf16.mxu0 0
    %7655 = vmatmul.mubr.bf16.gmra.mxu0 %v6923
    %v7656 = vpop.f32.mrf.mxu0
    %v7657 = vadd.f32 %v6060, %v7656
    %v7658 = vpop.f32.mrf.mxu0
    %v7659 = vadd.f32 %v6064, %v7658
    %v7660 = vpop.f32.mrf.mxu0
    %v7661 = vpop.f32.mrf.mxu0
    %7662 = vdwg.mxu0
    %7663 = vmatprep.subr.bf16.mxu0 0
    %7664 = vmatpush1.bf16.msra.mxu0 0
    %7665 = vmatprep.subr.bf16.mxu0 0
    %7666 = vmatpush1.bf16.msra.mxu0 0
    %7667 = vmatprep.subr.bf16.mxu0 0
    %7668 = vmatpush1.bf16.msra.mxu0 0
    %7669 = vmatprep.subr.bf16.mxu0 0
    %7670 = vmatpush1.bf16.msra.mxu0 0
    %7671 = vmatprep.subr.bf16.mxu0 %v6758
    %7672 = vmatpush1.bf16.msra.mxu0 %v6757
    %7673 = vmatprep.subr.bf16.mxu0 %v6718
    %7674 = vmatpush1.bf16.msra.mxu0 %v6717
    %7675 = vmatprep.subr.bf16.mxu0 %v6678
    %7676 = vmatpush1.bf16.msra.mxu0 %v6677
    %7677 = vmatprep.subr.bf16.mxu0 %v6638
    %7678 = vmatpush1.bf16.msra.mxu0 %v6637
    %7679 = vmatprep.subr.bf16.mxu0 0
    %7680 = vmatpush2.bf16.msra.mxu0 0
    %7681 = vmatprep.subr.bf16.mxu0 0
    %7682 = vmatpush2.bf16.msra.mxu0 0
    %7683 = vmatprep.subr.bf16.mxu0 0
    %7684 = vmatpush2.bf16.msra.mxu0 0
    %7685 = vmatprep.subr.bf16.mxu0 0
    %7686 = vmatpush2.bf16.msra.mxu0 0
    %7687 = vmatprep.subr.bf16.mxu0 0
    %7688 = vmatpush2.bf16.msra.mxu0 0
    %7689 = vmatprep.subr.bf16.mxu0 0
    %7690 = vmatpush2.bf16.msra.mxu0 0
    %7691 = vmatprep.subr.bf16.mxu0 0
    %7692 = vmatpush2.bf16.msra.mxu0 0
    %7693 = vmatprep.subr.bf16.mxu0 0
    %7694 = vmatpush2.bf16.msra.mxu0 0
    %7695 = vmatprep.mubr.bf16.mxu0 0
    %7696 = vmatmul.mubr.bf16.gmra.mxu0 %v6923
    %v7697 = vpop.f32.mrf.mxu0
    %v7698 = vadd.f32 %v6068, %v7697
    %v7699 = vpop.f32.mrf.mxu0
    %v7700 = vadd.f32 %v6072, %v7699
    %v7701 = vpop.f32.mrf.mxu0
    %v7702 = vpop.f32.mrf.mxu0
    %7703 = vdwg.mxu0
    %7704 = vmatprep.subr.bf16.mxu0 0
    %7705 = vmatpush1.bf16.msra.mxu0 0
    %7706 = vmatprep.subr.bf16.mxu0 0
    %7707 = vmatpush1.bf16.msra.mxu0 0
    %7708 = vmatprep.subr.bf16.mxu0 0
    %7709 = vmatpush1.bf16.msra.mxu0 0
    %7710 = vmatprep.subr.bf16.mxu0 0
    %7711 = vmatpush1.bf16.msra.mxu0 0
    %7712 = vmatprep.subr.bf16.mxu0 %v6760
    %7713 = vmatpush1.bf16.msra.mxu0 %v6759
    %7714 = vmatprep.subr.bf16.mxu0 %v6720
    %7715 = vmatpush1.bf16.msra.mxu0 %v6719
    %7716 = vmatprep.subr.bf16.mxu0 %v6680
    %7717 = vmatpush1.bf16.msra.mxu0 %v6679
    %7718 = vmatprep.subr.bf16.mxu0 %v6640
    %7719 = vmatpush1.bf16.msra.mxu0 %v6639
    %7720 = vmatprep.subr.bf16.mxu0 0
    %7721 = vmatpush2.bf16.msra.mxu0 0
    %7722 = vmatprep.subr.bf16.mxu0 0
    %7723 = vmatpush2.bf16.msra.mxu0 0
    %7724 = vmatprep.subr.bf16.mxu0 0
    %7725 = vmatpush2.bf16.msra.mxu0 0
    %7726 = vmatprep.subr.bf16.mxu0 0
    %7727 = vmatpush2.bf16.msra.mxu0 0
    %7728 = vmatprep.subr.bf16.mxu0 0
    %7729 = vmatpush2.bf16.msra.mxu0 0
    %7730 = vmatprep.subr.bf16.mxu0 0
    %7731 = vmatpush2.bf16.msra.mxu0 0
    %7732 = vmatprep.subr.bf16.mxu0 0
    %7733 = vmatpush2.bf16.msra.mxu0 0
    %7734 = vmatprep.subr.bf16.mxu0 0
    %7735 = vmatpush2.bf16.msra.mxu0 0
    %7736 = vmatprep.mubr.bf16.mxu0 0
    %7737 = vmatmul.mubr.bf16.gmra.mxu0 %v6923
    %v7738 = vpop.f32.mrf.mxu0
    %v7739 = vadd.f32 %v6076, %v7738
    %v7740 = vpop.f32.mrf.mxu0
    %v7741 = vadd.f32 %v6080, %v7740
    %v7742 = vpop.f32.mrf.mxu0
    %v7743 = vpop.f32.mrf.mxu0
    %7744 = vdwg.mxu0
    %v7745 = vmul.f32 %v4965, %v6960
    %v7746 = vmul.f32 %v4967, %v6962
    %v7747 = vmul.f32 %v5006, %v7001
    %v7748 = vmul.f32 %v5008, %v7003
    %v7749 = vmul.f32 %v5047, %v7042
    %v7750 = vmul.f32 %v5049, %v7044
    %v7751 = vmul.f32 %v5088, %v7083
    %v7752 = vmul.f32 %v5090, %v7085
    %v7753 = vmul.f32 %v5129, %v7124
    %v7754 = vmul.f32 %v5131, %v7126
    %v7755 = vmul.f32 %v5170, %v7165
    %v7756 = vmul.f32 %v5172, %v7167
    %v7757 = vmul.f32 %v5211, %v7206
    %v7758 = vmul.f32 %v5213, %v7208
    %v7759 = vmul.f32 %v5252, %v7247
    %v7760 = vmul.f32 %v5254, %v7249
    %v7761 = vmul.f32 %v5293, %v7288
    %v7762 = vmul.f32 %v5295, %v7290
    %v7763 = vmul.f32 %v5334, %v7329
    %v7764 = vmul.f32 %v5336, %v7331
    %v7765 = vmul.f32 %v5375, %v7370
    %v7766 = vmul.f32 %v5377, %v7372
    %v7767 = vmul.f32 %v5416, %v7411
    %v7768 = vmul.f32 %v5418, %v7413
    %v7769 = vmul.f32 %v5457, %v7452
    %v7770 = vmul.f32 %v5459, %v7454
    %v7771 = vmul.f32 %v5498, %v7493
    %v7772 = vmul.f32 %v5500, %v7495
    %v7773 = vmul.f32 %v5539, %v7534
    %v7774 = vmul.f32 %v5541, %v7536
    %v7775 = vmul.f32 %v5580, %v7575
    %v7776 = vmul.f32 %v5582, %v7577
    %v7777 = vmul.f32 %v5621, %v7616
    %v7778 = vmul.f32 %v5623, %v7618
    %v7779 = vmul.f32 %v5662, %v7657
    %v7780 = vmul.f32 %v5664, %v7659
    %v7781 = vmul.f32 %v5703, %v7698
    %v7782 = vmul.f32 %v5705, %v7700
    %v7783 = vmul.f32 %v5744, %v7739
    %v7784 = vmul.f32 %v5746, %v7741
    %v7785 = vadd.f32 %v7745, %v7753
    %v7786 = vadd.f32 %v7746, %v7754
    %v7787 = vadd.f32 %v7747, %v7755
    %v7788 = vadd.f32 %v7748, %v7756
    %v7789 = vadd.f32 %v7749, %v7757
    %v7790 = vadd.f32 %v7750, %v7758
    %v7791 = vadd.f32 %v7751, %v7759
    %v7792 = vadd.f32 %v7752, %v7760
    %v7793 = vadd.f32 %v7785, %v7761
    %v7794 = vadd.f32 %v7786, %v7762
    %v7795 = vadd.f32 %v7787, %v7763
    %v7796 = vadd.f32 %v7788, %v7764
    %v7797 = vadd.f32 %v7789, %v7765
    %v7798 = vadd.f32 %v7790, %v7766
    %v7799 = vadd.f32 %v7791, %v7767
    %v7800 = vadd.f32 %v7792, %v7768
    %v7801 = vadd.f32 %v7793, %v7769
    %v7802 = vadd.f32 %v7794, %v7770
    %v7803 = vadd.f32 %v7795, %v7771
    %v7804 = vadd.f32 %v7796, %v7772
    %v7805 = vadd.f32 %v7797, %v7773
    %v7806 = vadd.f32 %v7798, %v7774
    %v7807 = vadd.f32 %v7799, %v7775
    %v7808 = vadd.f32 %v7800, %v7776
    %v7809 = vadd.f32 %v7801, %v7777
    %v7810 = vadd.f32 %v7802, %v7778
    %v7811 = vadd.f32 %v7803, %v7779
    %v7812 = vadd.f32 %v7804, %v7780
    %v7813 = vadd.f32 %v7805, %v7781
    %v7814 = vadd.f32 %v7806, %v7782
    %v7815 = vadd.f32 %v7807, %v7783
    %v7816 = vadd.f32 %v7808, %v7784
    %v7817 = vmax.f32 %v7809, 0.0
    %v7818 = vmax.f32 %v7810, 0.0
    %v7819 = vmax.f32 %v7811, 0.0
    %v7820 = vmax.f32 %v7812, 0.0
    %v7821 = vmax.f32 %v7813, 0.0
    %v7822 = vmax.f32 %v7814, 0.0
    %v7823 = vmax.f32 %v7815, 0.0
    %v7824 = vmax.f32 %v7816, 0.0
    %v7825 = vrsqrt.pop %v7817
    %v7826 = vmul.f32 %v7817, %v7825
    %vm7827 = vcmp.eq.f32.partialorder %v7817, inf
    %v7828 = vsel %vm7827, %v7817, %v7826
    %vm7829 = vcmp.eq.f32.partialorder %v7817, 0.0
    %v7830 = vand.u32 %v7817, 2147483648
    %v7831 = vsel %vm7829, %v7830, %v7828
    %v7832 = vrsqrt.pop %v7818
    %v7833 = vmul.f32 %v7818, %v7832
    %vm7834 = vcmp.eq.f32.partialorder %v7818, inf
    %v7835 = vsel %vm7834, %v7818, %v7833
    %vm7836 = vcmp.eq.f32.partialorder %v7818, 0.0
    %v7837 = vand.u32 %v7818, 2147483648
    %v7838 = vsel %vm7836, %v7837, %v7835
    %v7839 = vrsqrt.pop %v7819
    %v7840 = vmul.f32 %v7819, %v7839
    %vm7841 = vcmp.eq.f32.partialorder %v7819, inf
    %v7842 = vsel %vm7841, %v7819, %v7840
    %vm7843 = vcmp.eq.f32.partialorder %v7819, 0.0
    %v7844 = vand.u32 %v7819, 2147483648
    %v7845 = vsel %vm7843, %v7844, %v7842
    %v7846 = vrsqrt.pop %v7820
    %v7847 = vmul.f32 %v7820, %v7846
    %vm7848 = vcmp.eq.f32.partialorder %v7820, inf
    %v7849 = vsel %vm7848, %v7820, %v7847
    %vm7850 = vcmp.eq.f32.partialorder %v7820, 0.0
    %v7851 = vand.u32 %v7820, 2147483648
    %v7852 = vsel %vm7850, %v7851, %v7849
    %v7853 = vrsqrt.pop %v7821
    %v7854 = vmul.f32 %v7821, %v7853
    %vm7855 = vcmp.eq.f32.partialorder %v7821, inf
    %v7856 = vsel %vm7855, %v7821, %v7854
    %vm7857 = vcmp.eq.f32.partialorder %v7821, 0.0
    %v7858 = vand.u32 %v7821, 2147483648
    %v7859 = vsel %vm7857, %v7858, %v7856
    %v7860 = vrsqrt.pop %v7822
    %v7861 = vmul.f32 %v7822, %v7860
    %vm7862 = vcmp.eq.f32.partialorder %v7822, inf
    %v7863 = vsel %vm7862, %v7822, %v7861
    %vm7864 = vcmp.eq.f32.partialorder %v7822, 0.0
    %v7865 = vand.u32 %v7822, 2147483648
    %v7866 = vsel %vm7864, %v7865, %v7863
    %v7867 = vrsqrt.pop %v7823
    %v7868 = vmul.f32 %v7823, %v7867
    %vm7869 = vcmp.eq.f32.partialorder %v7823, inf
    %v7870 = vsel %vm7869, %v7823, %v7868
    %vm7871 = vcmp.eq.f32.partialorder %v7823, 0.0
    %v7872 = vand.u32 %v7823, 2147483648
    %v7873 = vsel %vm7871, %v7872, %v7870
    %v7874 = vrsqrt.pop %v7824
    %v7875 = vmul.f32 %v7824, %v7874
    %vm7876 = vcmp.eq.f32.partialorder %v7824, inf
    %v7877 = vsel %vm7876, %v7824, %v7875
    %vm7878 = vcmp.eq.f32.partialorder %v7824, 0.0
    %v7879 = vand.u32 %v7824, 2147483648
    %v7880 = vsel %vm7878, %v7879, %v7877
    %v7881 = vsub.f32 0.0, %v7809
    %v7882 = vsub.f32 0.0, %v7810
    %v7883 = vsub.f32 0.0, %v7811
    %v7884 = vsub.f32 0.0, %v7812
    %v7885 = vsub.f32 0.0, %v7813
    %v7886 = vsub.f32 0.0, %v7814
    %v7887 = vsub.f32 0.0, %v7815
    %v7888 = vsub.f32 0.0, %v7816
    %v7889 = vmax.f32 %v7881, 0.0
    %v7890 = vmax.f32 %v7882, 0.0
    %v7891 = vmax.f32 %v7883, 0.0
    %v7892 = vmax.f32 %v7884, 0.0
    %v7893 = vmax.f32 %v7885, 0.0
    %v7894 = vmax.f32 %v7886, 0.0
    %v7895 = vmax.f32 %v7887, 0.0
    %v7896 = vmax.f32 %v7888, 0.0
    %v7897 = vrsqrt.pop %v7889
    %v7898 = vmul.f32 %v7889, %v7897
    %vm7899 = vcmp.eq.f32.partialorder %v7889, inf
    %v7900 = vsel %vm7899, %v7889, %v7898
    %vm7901 = vcmp.eq.f32.partialorder %v7889, 0.0
    %v7902 = vand.u32 %v7889, 2147483648
    %v7903 = vsel %vm7901, %v7902, %v7900
    %v7904 = vrsqrt.pop %v7890
    %v7905 = vmul.f32 %v7890, %v7904
    %vm7906 = vcmp.eq.f32.partialorder %v7890, inf
    %v7907 = vsel %vm7906, %v7890, %v7905
    %vm7908 = vcmp.eq.f32.partialorder %v7890, 0.0
    %v7909 = vand.u32 %v7890, 2147483648
    %v7910 = vsel %vm7908, %v7909, %v7907
    %v7911 = vrsqrt.pop %v7891
    %v7912 = vmul.f32 %v7891, %v7911
    %vm7913 = vcmp.eq.f32.partialorder %v7891, inf
    %v7914 = vsel %vm7913, %v7891, %v7912
    %vm7915 = vcmp.eq.f32.partialorder %v7891, 0.0
    %v7916 = vand.u32 %v7891, 2147483648
    %v7917 = vsel %vm7915, %v7916, %v7914
    %v7918 = vrsqrt.pop %v7892
    %v7919 = vmul.f32 %v7892, %v7918
    %vm7920 = vcmp.eq.f32.partialorder %v7892, inf
    %v7921 = vsel %vm7920, %v7892, %v7919
    %vm7922 = vcmp.eq.f32.partialorder %v7892, 0.0
    %v7923 = vand.u32 %v7892, 2147483648
    %v7924 = vsel %vm7922, %v7923, %v7921
    %v7925 = vrsqrt.pop %v7893
    %v7926 = vmul.f32 %v7893, %v7925
    %vm7927 = vcmp.eq.f32.partialorder %v7893, inf
    %v7928 = vsel %vm7927, %v7893, %v7926
    %vm7929 = vcmp.eq.f32.partialorder %v7893, 0.0
    %v7930 = vand.u32 %v7893, 2147483648
    %v7931 = vsel %vm7929, %v7930, %v7928
    %v7932 = vrsqrt.pop %v7894
    %v7933 = vmul.f32 %v7894, %v7932
    %vm7934 = vcmp.eq.f32.partialorder %v7894, inf
    %v7935 = vsel %vm7934, %v7894, %v7933
    %vm7936 = vcmp.eq.f32.partialorder %v7894, 0.0
    %v7937 = vand.u32 %v7894, 2147483648
    %v7938 = vsel %vm7936, %v7937, %v7935
    %v7939 = vrsqrt.pop %v7895
    %v7940 = vmul.f32 %v7895, %v7939
    %vm7941 = vcmp.eq.f32.partialorder %v7895, inf
    %v7942 = vsel %vm7941, %v7895, %v7940
    %vm7943 = vcmp.eq.f32.partialorder %v7895, 0.0
    %v7944 = vand.u32 %v7895, 2147483648
    %v7945 = vsel %vm7943, %v7944, %v7942
    %v7946 = vrsqrt.pop %v7896
    %v7947 = vmul.f32 %v7896, %v7946
    %vm7948 = vcmp.eq.f32.partialorder %v7896, inf
    %v7949 = vsel %vm7948, %v7896, %v7947
    %vm7950 = vcmp.eq.f32.partialorder %v7896, 0.0
    %v7951 = vand.u32 %v7896, 2147483648
    %v7952 = vsel %vm7950, %v7951, %v7949
    %v7953 = vsub.f32 %v7831, %v7903
    %v7954 = vsub.f32 %v7838, %v7910
    %v7955 = vsub.f32 %v7845, %v7917
    %v7956 = vsub.f32 %v7852, %v7924
    %v7957 = vsub.f32 %v7859, %v7931
    %v7958 = vsub.f32 %v7866, %v7938
    %v7959 = vsub.f32 %v7873, %v7945
    %v7960 = vsub.f32 %v7880, %v7952
    %v7961 = vmul.f32 %v7953, %v7953
    %v7962 = vmul.f32 %v7954, %v7954
    %v7963 = vmul.f32 %v7955, %v7955
    %v7964 = vmul.f32 %v7956, %v7956
    %v7965 = vmul.f32 %v7957, %v7957
    %v7966 = vmul.f32 %v7958, %v7958
    %v7967 = vmul.f32 %v7959, %v7959
    %v7968 = vmul.f32 %v7960, %v7960
    %v7969 = vadd.f32 %v7961, %v7962
    %v7970 = vadd.f32 %v7969, %v7963
    %v7971 = vadd.f32 %v7970, %v7964
    %v7972 = vadd.f32 %v7971, %v7965
    %v7973 = vadd.f32 %v7972, %v7966
    %v7974 = vadd.f32 %v7973, %v7967
    %v7975 = vadd.f32 %v7974, %v7968
    %7976 = vadd.xlane.f32.xlu0 %v7975
    %v7977 = vpop.xlane.xlu0 %7976
    %v7978 = vmax.f32 %v7977, 1e-24
    %v7979 = vrsqrt.pop %v7978
    %v7980 = vmul.f32 %v7953, %v7979
    %v7981 = vmul.f32 %v7954, %v7979
    %v7982 = vmul.f32 %v7955, %v7979
    %v7983 = vmul.f32 %v7956, %v7979
    %v7984 = vmul.f32 %v7957, %v7979
    %v7985 = vmul.f32 %v7958, %v7979
    %v7986 = vmul.f32 %v7959, %v7979
    %v7987 = vmul.f32 %v7960, %v7979
    %v7988 = vpack.c.bf16 %v7980, %v7980
    %v7989 = vpack.c.bf16 %v7981, %v7981
    %v7990 = vpack.c.bf16 %v7982, %v7982
    %v7991 = vpack.c.bf16 %v7983, %v7983
    %v7992 = vpack.c.bf16 %v7984, %v7984
    %v7993 = vpack.c.bf16 %v7985, %v7985
    %v7994 = vpack.c.bf16 %v7986, %v7986
    %v7995 = vpack.c.bf16 %v7987, %v7987
    %v7996 = vld [vmem:[#allocation16] sm:$0xf]
    %v7997 = vld [vmem:[#allocation16 + $0x4] sm:$0xf]
    %v7998 = vld [vmem:[#allocation16 + $0x8] sm:$0xf]
    %v7999 = vld [vmem:[#allocation16 + $0xc] sm:$0xf]
    %v8000 = vld [vmem:[#allocation16 + $0x10] sm:$0xf]
    %v8001 = vld [vmem:[#allocation16 + $0x14] sm:$0xf]
    %v8002 = vld [vmem:[#allocation16 + $0x18] sm:$0xf]
    %v8003 = vld [vmem:[#allocation16 + $0x1c] sm:$0xf]
    %v8004 = vld [vmem:[#allocation16 + $0x20] sm:$0xf]
    %v8005 = vld [vmem:[#allocation16 + $0x24] sm:$0xf]
    %v8006 = vld [vmem:[#allocation16 + $0x28] sm:$0xf]
    %v8007 = vld [vmem:[#allocation16 + $0x2c] sm:$0xf]
    %v8008 = vld [vmem:[#allocation16 + $0x30] sm:$0xf]
    %v8009 = vld [vmem:[#allocation16 + $0x34] sm:$0xf]
    %v8010 = vld [vmem:[#allocation16 + $0x38] sm:$0xf]
    %v8011 = vld [vmem:[#allocation16 + $0x3c] sm:$0xf]
    %v8012 = vld [vmem:[#allocation16 + $0x40] sm:$0xf]
    %v8013 = vld [vmem:[#allocation16 + $0x44] sm:$0xf]
    %v8014 = vld [vmem:[#allocation16 + $0x48] sm:$0xf]
    %v8015 = vld [vmem:[#allocation16 + $0x4c] sm:$0xf]
    %v8016 = vld [vmem:[#allocation16 + $0x50] sm:$0xf]
    %v8017 = vld [vmem:[#allocation16 + $0x54] sm:$0xf]
    %v8018 = vld [vmem:[#allocation16 + $0x58] sm:$0xf]
    %v8019 = vld [vmem:[#allocation16 + $0x5c] sm:$0xf]
    %v8020 = vld [vmem:[#allocation16 + $0x60] sm:$0xf]
    %v8021 = vld [vmem:[#allocation16 + $0x64] sm:$0xf]
    %v8022 = vld [vmem:[#allocation16 + $0x68] sm:$0xf]
    %v8023 = vld [vmem:[#allocation16 + $0x6c] sm:$0xf]
    %v8024 = vld [vmem:[#allocation16 + $0x70] sm:$0xf]
    %v8025 = vld [vmem:[#allocation16 + $0x74] sm:$0xf]
    %v8026 = vld [vmem:[#allocation16 + $0x78] sm:$0xf]
    %v8027 = vld [vmem:[#allocation16 + $0x7c] sm:$0xf]
    %v8028 = vld [vmem:[#allocation16 + $0x80] sm:$0xf]
    %v8029 = vld [vmem:[#allocation16 + $0x84] sm:$0xf]
    %v8030 = vld [vmem:[#allocation16 + $0x88] sm:$0xf]
    %v8031 = vld [vmem:[#allocation16 + $0x8c] sm:$0xf]
    %v8032 = vld [vmem:[#allocation16 + $0x90] sm:$0xf]
    %v8033 = vld [vmem:[#allocation16 + $0x94] sm:$0xf]
    %v8034 = vld [vmem:[#allocation16 + $0x98] sm:$0xf]
    %v8035 = vld [vmem:[#allocation16 + $0x9c] sm:$0xf]
    %v8036 = vld [vmem:[#allocation16 + $0xa0] sm:$0xf]
    %v8037 = vld [vmem:[#allocation16 + $0xa4] sm:$0xf]
    %v8038 = vld [vmem:[#allocation16 + $0xa8] sm:$0xf]
    %v8039 = vld [vmem:[#allocation16 + $0xac] sm:$0xf]
    %v8040 = vld [vmem:[#allocation16 + $0xb0] sm:$0xf]
    %v8041 = vld [vmem:[#allocation16 + $0xb4] sm:$0xf]
    %v8042 = vld [vmem:[#allocation16 + $0xb8] sm:$0xf]
    %v8043 = vld [vmem:[#allocation16 + $0xbc] sm:$0xf]
    %v8044 = vld [vmem:[#allocation16 + $0xc0] sm:$0xf]
    %v8045 = vld [vmem:[#allocation16 + $0xc4] sm:$0xf]
    %v8046 = vld [vmem:[#allocation16 + $0xc8] sm:$0xf]
    %v8047 = vld [vmem:[#allocation16 + $0xcc] sm:$0xf]
    %v8048 = vld [vmem:[#allocation16 + $0xd0] sm:$0xf]
    %v8049 = vld [vmem:[#allocation16 + $0xd4] sm:$0xf]
    %v8050 = vld [vmem:[#allocation16 + $0xd8] sm:$0xf]
    %v8051 = vld [vmem:[#allocation16 + $0xdc] sm:$0xf]
    %v8052 = vld [vmem:[#allocation16 + $0xe0] sm:$0xf]
    %v8053 = vld [vmem:[#allocation16 + $0xe4] sm:$0xf]
    %v8054 = vld [vmem:[#allocation16 + $0xe8] sm:$0xf]
    %v8055 = vld [vmem:[#allocation16 + $0xec] sm:$0xf]
    %v8056 = vld [vmem:[#allocation16 + $0xf0] sm:$0xf]
    %v8057 = vld [vmem:[#allocation16 + $0xf4] sm:$0xf]
    %v8058 = vld [vmem:[#allocation16 + $0xf8] sm:$0xf]
    %v8059 = vld [vmem:[#allocation16 + $0xfc] sm:$0xf]
    %v8060 = vld [vmem:[#allocation16 + $0x100] sm:$0xf]
    %v8061 = vld [vmem:[#allocation16 + $0x104] sm:$0xf]
    %v8062 = vld [vmem:[#allocation16 + $0x108] sm:$0xf]
    %v8063 = vld [vmem:[#allocation16 + $0x10c] sm:$0xf]
    %v8064 = vld [vmem:[#allocation16 + $0x110] sm:$0xf]
    %v8065 = vld [vmem:[#allocation16 + $0x114] sm:$0xf]
    %v8066 = vld [vmem:[#allocation16 + $0x118] sm:$0xf]
    %v8067 = vld [vmem:[#allocation16 + $0x11c] sm:$0xf]
    %v8068 = vld [vmem:[#allocation16 + $0x120] sm:$0xf]
    %v8069 = vld [vmem:[#allocation16 + $0x124] sm:$0xf]
    %v8070 = vld [vmem:[#allocation16 + $0x128] sm:$0xf]
    %v8071 = vld [vmem:[#allocation16 + $0x12c] sm:$0xf]
    %v8072 = vld [vmem:[#allocation16 + $0x130] sm:$0xf]
    %v8073 = vld [vmem:[#allocation16 + $0x134] sm:$0xf]
    %v8074 = vld [vmem:[#allocation16 + $0x138] sm:$0xf]
    %v8075 = vld [vmem:[#allocation16 + $0x13c] sm:$0xf]
    %v8076 = vld [vmem:[#allocation16 + $0x140] sm:$0xf]
    %v8077 = vld [vmem:[#allocation16 + $0x144] sm:$0xf]
    %v8078 = vld [vmem:[#allocation16 + $0x148] sm:$0xf]
    %v8079 = vld [vmem:[#allocation16 + $0x14c] sm:$0xf]
    %v8080 = vld [vmem:[#allocation16 + $0x150] sm:$0xf]
    %v8081 = vld [vmem:[#allocation16 + $0x154] sm:$0xf]
    %v8082 = vld [vmem:[#allocation16 + $0x158] sm:$0xf]
    %v8083 = vld [vmem:[#allocation16 + $0x15c] sm:$0xf]
    %v8084 = vld [vmem:[#allocation16 + $0x160] sm:$0xf]
    %v8085 = vld [vmem:[#allocation16 + $0x164] sm:$0xf]
    %v8086 = vld [vmem:[#allocation16 + $0x168] sm:$0xf]
    %v8087 = vld [vmem:[#allocation16 + $0x16c] sm:$0xf]
    %v8088 = vld [vmem:[#allocation16 + $0x170] sm:$0xf]
    %v8089 = vld [vmem:[#allocation16 + $0x174] sm:$0xf]
    %v8090 = vld [vmem:[#allocation16 + $0x178] sm:$0xf]
    %v8091 = vld [vmem:[#allocation16 + $0x17c] sm:$0xf]
    %v8092 = vld [vmem:[#allocation16 + $0x180] sm:$0xf]
    %v8093 = vld [vmem:[#allocation16 + $0x184] sm:$0xf]
    %v8094 = vld [vmem:[#allocation16 + $0x188] sm:$0xf]
    %v8095 = vld [vmem:[#allocation16 + $0x18c] sm:$0xf]
    %v8096 = vld [vmem:[#allocation16 + $0x190] sm:$0xf]
    %v8097 = vld [vmem:[#allocation16 + $0x194] sm:$0xf]
    %v8098 = vld [vmem:[#allocation16 + $0x198] sm:$0xf]
    %v8099 = vld [vmem:[#allocation16 + $0x19c] sm:$0xf]
    %v8100 = vld [vmem:[#allocation16 + $0x1a0] sm:$0xf]
    %v8101 = vld [vmem:[#allocation16 + $0x1a4] sm:$0xf]
    %v8102 = vld [vmem:[#allocation16 + $0x1a8] sm:$0xf]
    %v8103 = vld [vmem:[#allocation16 + $0x1ac] sm:$0xf]
    %v8104 = vld [vmem:[#allocation16 + $0x1b0] sm:$0xf]
    %v8105 = vld [vmem:[#allocation16 + $0x1b4] sm:$0xf]
    %v8106 = vld [vmem:[#allocation16 + $0x1b8] sm:$0xf]
    %v8107 = vld [vmem:[#allocation16 + $0x1bc] sm:$0xf]
    %v8108 = vld [vmem:[#allocation16 + $0x1c0] sm:$0xf]
    %v8109 = vld [vmem:[#allocation16 + $0x1c4] sm:$0xf]
    %v8110 = vld [vmem:[#allocation16 + $0x1c8] sm:$0xf]
    %v8111 = vld [vmem:[#allocation16 + $0x1cc] sm:$0xf]
    %v8112 = vld [vmem:[#allocation16 + $0x1d0] sm:$0xf]
    %v8113 = vld [vmem:[#allocation16 + $0x1d4] sm:$0xf]
    %v8114 = vld [vmem:[#allocation16 + $0x1d8] sm:$0xf]
    %v8115 = vld [vmem:[#allocation16 + $0x1dc] sm:$0xf]
    %v8116 = vld [vmem:[#allocation16 + $0x1e0] sm:$0xf]
    %v8117 = vld [vmem:[#allocation16 + $0x1e4] sm:$0xf]
    %v8118 = vld [vmem:[#allocation16 + $0x1e8] sm:$0xf]
    %v8119 = vld [vmem:[#allocation16 + $0x1ec] sm:$0xf]
    %v8120 = vld [vmem:[#allocation16 + $0x1f0] sm:$0xf]
    %v8121 = vld [vmem:[#allocation16 + $0x1f4] sm:$0xf]
    %v8122 = vld [vmem:[#allocation16 + $0x1f8] sm:$0xf]
    %v8123 = vld [vmem:[#allocation16 + $0x1fc] sm:$0xf]
    %v8124 = vld [vmem:[#allocation18] sm:$0x1]
    %v8126 = vlaneseq
    %v8127 = vshrl.u32 %v8126, 7
    %v8128 = vsub.s32 0, %v8127
    %v8129 = vrot.slane %v8124, %v8128
    %v8259 = vunpack.c.l.b16 %v7996
    %v8260 = vunpack.c.l.b16 %v7997
    %v8261 = vunpack.c.l.b16 %v7998
    %v8262 = vunpack.c.l.b16 %v7999
    %v8263 = vunpack.c.l.b16 %v8000
    %v8264 = vunpack.c.l.b16 %v8001
    %v8265 = vunpack.c.l.b16 %v8002
    %v8266 = vunpack.c.l.b16 %v8003
    %v8267 = vunpack.c.l.b16 %v8004
    %v8268 = vunpack.c.l.b16 %v8005
    %v8269 = vunpack.c.l.b16 %v8006
    %v8270 = vunpack.c.l.b16 %v8007
    %v8271 = vunpack.c.l.b16 %v8008
    %v8272 = vunpack.c.l.b16 %v8009
    %v8273 = vunpack.c.l.b16 %v8010
    %v8274 = vunpack.c.l.b16 %v8011
    %v8275 = vunpack.c.l.b16 %v8012
    %v8276 = vunpack.c.l.b16 %v8013
    %v8277 = vunpack.c.l.b16 %v8014
    %v8278 = vunpack.c.l.b16 %v8015
    %v8279 = vunpack.c.l.b16 %v8016
    %v8280 = vunpack.c.l.b16 %v8017
    %v8281 = vunpack.c.l.b16 %v8018
    %v8282 = vunpack.c.l.b16 %v8019
    %v8283 = vunpack.c.l.b16 %v8020
    %v8284 = vunpack.c.l.b16 %v8021
    %v8285 = vunpack.c.l.b16 %v8022
    %v8286 = vunpack.c.l.b16 %v8023
    %v8287 = vunpack.c.l.b16 %v8024
    %v8288 = vunpack.c.l.b16 %v8025
    %v8289 = vunpack.c.l.b16 %v8026
    %v8290 = vunpack.c.l.b16 %v8027
    %v8291 = vunpack.c.l.b16 %v8028
    %v8292 = vunpack.c.l.b16 %v8029
    %v8293 = vunpack.c.l.b16 %v8030
    %v8294 = vunpack.c.l.b16 %v8031
    %v8295 = vunpack.c.l.b16 %v8032
    %v8296 = vunpack.c.l.b16 %v8033
    %v8297 = vunpack.c.l.b16 %v8034
    %v8298 = vunpack.c.l.b16 %v8035
    %v8299 = vunpack.c.l.b16 %v8036
    %v8300 = vunpack.c.l.b16 %v8037
    %v8301 = vunpack.c.l.b16 %v8038
    %v8302 = vunpack.c.l.b16 %v8039
    %v8303 = vunpack.c.l.b16 %v8040
    %v8304 = vunpack.c.l.b16 %v8041
    %v8305 = vunpack.c.l.b16 %v8042
    %v8306 = vunpack.c.l.b16 %v8043
    %v8307 = vunpack.c.l.b16 %v8044
    %v8308 = vunpack.c.l.b16 %v8045
    %v8309 = vunpack.c.l.b16 %v8046
    %v8310 = vunpack.c.l.b16 %v8047
    %v8311 = vunpack.c.l.b16 %v8048
    %v8312 = vunpack.c.l.b16 %v8049
    %v8313 = vunpack.c.l.b16 %v8050
    %v8314 = vunpack.c.l.b16 %v8051
    %v8315 = vunpack.c.l.b16 %v8052
    %v8316 = vunpack.c.l.b16 %v8053
    %v8317 = vunpack.c.l.b16 %v8054
    %v8318 = vunpack.c.l.b16 %v8055
    %v8319 = vunpack.c.l.b16 %v8056
    %v8320 = vunpack.c.l.b16 %v8057
    %v8321 = vunpack.c.l.b16 %v8058
    %v8322 = vunpack.c.l.b16 %v8059
    %v8323 = vunpack.c.l.b16 %v8060
    %v8324 = vunpack.c.l.b16 %v8061
    %v8325 = vunpack.c.l.b16 %v8062
    %v8326 = vunpack.c.l.b16 %v8063
    %v8327 = vunpack.c.l.b16 %v8064
    %v8328 = vunpack.c.l.b16 %v8065
    %v8329 = vunpack.c.l.b16 %v8066
    %v8330 = vunpack.c.l.b16 %v8067
    %v8331 = vunpack.c.l.b16 %v8068
    %v8332 = vunpack.c.l.b16 %v8069
    %v8333 = vunpack.c.l.b16 %v8070
    %v8334 = vunpack.c.l.b16 %v8071
    %v8335 = vunpack.c.l.b16 %v8072
    %v8336 = vunpack.c.l.b16 %v8073
    %v8337 = vunpack.c.l.b16 %v8074
    %v8338 = vunpack.c.l.b16 %v8075
    %v8339 = vunpack.c.l.b16 %v8076
    %v8340 = vunpack.c.l.b16 %v8077
    %v8341 = vunpack.c.l.b16 %v8078
    %v8342 = vunpack.c.l.b16 %v8079
    %v8343 = vunpack.c.l.b16 %v8080
    %v8344 = vunpack.c.l.b16 %v8081
    %v8345 = vunpack.c.l.b16 %v8082
    %v8346 = vunpack.c.l.b16 %v8083
    %v8347 = vunpack.c.l.b16 %v8084
    %v8348 = vunpack.c.l.b16 %v8085
    %v8349 = vunpack.c.l.b16 %v8086
    %v8350 = vunpack.c.l.b16 %v8087
    %v8351 = vunpack.c.l.b16 %v8088
    %v8352 = vunpack.c.l.b16 %v8089
    %v8353 = vunpack.c.l.b16 %v8090
    %v8354 = vunpack.c.l.b16 %v8091
    %v8355 = vunpack.c.l.b16 %v8092
    %v8356 = vunpack.c.l.b16 %v8093
    %v8357 = vunpack.c.l.b16 %v8094
    %v8358 = vunpack.c.l.b16 %v8095
    %v8359 = vunpack.c.l.b16 %v8096
    %v8360 = vunpack.c.l.b16 %v8097
    %v8361 = vunpack.c.l.b16 %v8098
    %v8362 = vunpack.c.l.b16 %v8099
    %v8363 = vunpack.c.l.b16 %v8100
    %v8364 = vunpack.c.l.b16 %v8101
    %v8365 = vunpack.c.l.b16 %v8102
    %v8366 = vunpack.c.l.b16 %v8103
    %v8367 = vunpack.c.l.b16 %v8104
    %v8368 = vunpack.c.l.b16 %v8105
    %v8369 = vunpack.c.l.b16 %v8106
    %v8370 = vunpack.c.l.b16 %v8107
    %v8371 = vunpack.c.l.b16 %v8108
    %v8372 = vunpack.c.l.b16 %v8109
    %v8373 = vunpack.c.l.b16 %v8110
    %v8374 = vunpack.c.l.b16 %v8111
    %v8375 = vunpack.c.l.b16 %v8112
    %v8376 = vunpack.c.l.b16 %v8113
    %v8377 = vunpack.c.l.b16 %v8114
    %v8378 = vunpack.c.l.b16 %v8115
    %v8379 = vunpack.c.l.b16 %v8116
    %v8380 = vunpack.c.l.b16 %v8117
    %v8381 = vunpack.c.l.b16 %v8118
    %v8382 = vunpack.c.l.b16 %v8119
    %v8383 = vunpack.c.l.b16 %v8120
    %v8384 = vunpack.c.l.b16 %v8121
    %v8385 = vunpack.c.l.b16 %v8122
    %v8386 = vunpack.c.l.b16 %v8123
    %v8387 = vpack.c.b16 %v8260, %v8259
    %v8388 = vpack.c.b16 %v8262, %v8261
    %v8389 = vpack.c.b16 %v8264, %v8263
    %v8390 = vpack.c.b16 %v8266, %v8265
    %v8391 = vpack.c.b16 %v8268, %v8267
    %v8392 = vpack.c.b16 %v8270, %v8269
    %v8393 = vpack.c.b16 %v8272, %v8271
    %v8394 = vpack.c.b16 %v8274, %v8273
    %v8395 = vpack.c.b16 %v8276, %v8275
    %v8396 = vpack.c.b16 %v8278, %v8277
    %v8397 = vpack.c.b16 %v8280, %v8279
    %v8398 = vpack.c.b16 %v8282, %v8281
    %v8399 = vpack.c.b16 %v8284, %v8283
    %v8400 = vpack.c.b16 %v8286, %v8285
    %v8401 = vpack.c.b16 %v8288, %v8287
    %v8402 = vpack.c.b16 %v8290, %v8289
    %v8403 = vpack.c.b16 %v8292, %v8291
    %v8404 = vpack.c.b16 %v8294, %v8293
    %v8405 = vpack.c.b16 %v8296, %v8295
    %v8406 = vpack.c.b16 %v8298, %v8297
    %v8407 = vpack.c.b16 %v8300, %v8299
    %v8408 = vpack.c.b16 %v8302, %v8301
    %v8409 = vpack.c.b16 %v8304, %v8303
    %v8410 = vpack.c.b16 %v8306, %v8305
    %v8411 = vpack.c.b16 %v8308, %v8307
    %v8412 = vpack.c.b16 %v8310, %v8309
    %v8413 = vpack.c.b16 %v8312, %v8311
    %v8414 = vpack.c.b16 %v8314, %v8313
    %v8415 = vpack.c.b16 %v8316, %v8315
    %v8416 = vpack.c.b16 %v8318, %v8317
    %v8417 = vpack.c.b16 %v8320, %v8319
    %v8418 = vpack.c.b16 %v8322, %v8321
    %v8419 = vpack.c.b16 %v8324, %v8323
    %v8420 = vpack.c.b16 %v8326, %v8325
    %v8421 = vpack.c.b16 %v8328, %v8327
    %v8422 = vpack.c.b16 %v8330, %v8329
    %v8423 = vpack.c.b16 %v8332, %v8331
    %v8424 = vpack.c.b16 %v8334, %v8333
    %v8425 = vpack.c.b16 %v8336, %v8335
    %v8426 = vpack.c.b16 %v8338, %v8337
    %v8427 = vpack.c.b16 %v8340, %v8339
    %v8428 = vpack.c.b16 %v8342, %v8341
    %v8429 = vpack.c.b16 %v8344, %v8343
    %v8430 = vpack.c.b16 %v8346, %v8345
    %v8431 = vpack.c.b16 %v8348, %v8347
    %v8432 = vpack.c.b16 %v8350, %v8349
    %v8433 = vpack.c.b16 %v8352, %v8351
    %v8434 = vpack.c.b16 %v8354, %v8353
    %v8435 = vpack.c.b16 %v8356, %v8355
    %v8436 = vpack.c.b16 %v8358, %v8357
    %v8437 = vpack.c.b16 %v8360, %v8359
    %v8438 = vpack.c.b16 %v8362, %v8361
    %v8439 = vpack.c.b16 %v8364, %v8363
    %v8440 = vpack.c.b16 %v8366, %v8365
    %v8441 = vpack.c.b16 %v8368, %v8367
    %v8442 = vpack.c.b16 %v8370, %v8369
    %v8443 = vpack.c.b16 %v8372, %v8371
    %v8444 = vpack.c.b16 %v8374, %v8373
    %v8445 = vpack.c.b16 %v8376, %v8375
    %v8446 = vpack.c.b16 %v8378, %v8377
    %v8447 = vpack.c.b16 %v8380, %v8379
    %v8448 = vpack.c.b16 %v8382, %v8381
    %v8449 = vpack.c.b16 %v8384, %v8383
    %v8450 = vpack.c.b16 %v8386, %v8385
    %8515 = vmatprep.subr.bf16.mxu0 0
    %8516 = vmatpush1.bf16.msra.mxu0 %v8394
    %8517 = vmatprep.subr.bf16.mxu0 0
    %8518 = vmatpush1.bf16.msra.mxu0 %v8393
    %8519 = vmatprep.subr.bf16.mxu0 0
    %8520 = vmatpush1.bf16.msra.mxu0 %v8392
    %8521 = vmatprep.subr.bf16.mxu0 0
    %8522 = vmatpush1.bf16.msra.mxu0 %v8391
    %8523 = vmatprep.subr.bf16.mxu0 0
    %8524 = vmatpush1.bf16.msra.mxu0 %v8390
    %8525 = vmatprep.subr.bf16.mxu0 0
    %8526 = vmatpush1.bf16.msra.mxu0 %v8389
    %8527 = vmatprep.subr.bf16.mxu0 0
    %8528 = vmatpush1.bf16.msra.mxu0 %v8388
    %8529 = vmatprep.subr.bf16.mxu0 0
    %8530 = vmatpush1.bf16.msra.mxu0 %v8387
    %8531 = vmatprep.subr.bf16.mxu0 0
    %8532 = vmatpush2.bf16.msra.mxu0 %v8402
    %8533 = vmatprep.subr.bf16.mxu0 0
    %8534 = vmatpush2.bf16.msra.mxu0 %v8401
    %8535 = vmatprep.subr.bf16.mxu0 0
    %8536 = vmatpush2.bf16.msra.mxu0 %v8400
    %8537 = vmatprep.subr.bf16.mxu0 0
    %8538 = vmatpush2.bf16.msra.mxu0 %v8399
    %8539 = vmatprep.subr.bf16.mxu0 0
    %8540 = vmatpush2.bf16.msra.mxu0 %v8398
    %8541 = vmatprep.subr.bf16.mxu0 0
    %8542 = vmatpush2.bf16.msra.mxu0 %v8397
    %8543 = vmatprep.subr.bf16.mxu0 0
    %8544 = vmatpush2.bf16.msra.mxu0 %v8396
    %8545 = vmatprep.subr.bf16.mxu0 0
    %8546 = vmatpush2.bf16.msra.mxu0 %v8395
    %8547 = vmatprep.mubr.bf16.mxu0 %v7989
    %8548 = vmatmul.mubr.bf16.gmra.mxu0 %v7988
    %v8549 = vpop.f32.mrf.mxu0
    %v8550 = vadd.f32 %v8129, %v8549
    %v8551 = vpop.f32.mrf.mxu0
    %v8552 = vpop.f32.mrf.mxu0
    %v8553 = vpop.f32.mrf.mxu0
    %8554 = vdwg.mxu0
    %8555 = vmatprep.subr.bf16.mxu0 0
    %8556 = vmatpush1.bf16.msra.mxu0 %v8410
    %8557 = vmatprep.subr.bf16.mxu0 0
    %8558 = vmatpush1.bf16.msra.mxu0 %v8409
    %8559 = vmatprep.subr.bf16.mxu0 0
    %8560 = vmatpush1.bf16.msra.mxu0 %v8408
    %8561 = vmatprep.subr.bf16.mxu0 0
    %8562 = vmatpush1.bf16.msra.mxu0 %v8407
    %8563 = vmatprep.subr.bf16.mxu0 0
    %8564 = vmatpush1.bf16.msra.mxu0 %v8406
    %8565 = vmatprep.subr.bf16.mxu0 0
    %8566 = vmatpush1.bf16.msra.mxu0 %v8405
    %8567 = vmatprep.subr.bf16.mxu0 0
    %8568 = vmatpush1.bf16.msra.mxu0 %v8404
    %8569 = vmatprep.subr.bf16.mxu0 0
    %8570 = vmatpush1.bf16.msra.mxu0 %v8403
    %8571 = vmatprep.subr.bf16.mxu0 0
    %8572 = vmatpush2.bf16.msra.mxu0 %v8418
    %8573 = vmatprep.subr.bf16.mxu0 0
    %8574 = vmatpush2.bf16.msra.mxu0 %v8417
    %8575 = vmatprep.subr.bf16.mxu0 0
    %8576 = vmatpush2.bf16.msra.mxu0 %v8416
    %8577 = vmatprep.subr.bf16.mxu0 0
    %8578 = vmatpush2.bf16.msra.mxu0 %v8415
    %8579 = vmatprep.subr.bf16.mxu0 0
    %8580 = vmatpush2.bf16.msra.mxu0 %v8414
    %8581 = vmatprep.subr.bf16.mxu0 0
    %8582 = vmatpush2.bf16.msra.mxu0 %v8413
    %8583 = vmatprep.subr.bf16.mxu0 0
    %8584 = vmatpush2.bf16.msra.mxu0 %v8412
    %8585 = vmatprep.subr.bf16.mxu0 0
    %8586 = vmatpush2.bf16.msra.mxu0 %v8411
    %8587 = vmatprep.mubr.bf16.mxu0 %v7991
    %8588 = vmatmul.mubr.bf16.gmra.mxu0 %v7990
    %v8589 = vpop.f32.mrf.mxu0
    %v8590 = vadd.f32 %v8550, %v8589
    %v8591 = vpop.f32.mrf.mxu0
    %v8592 = vpop.f32.mrf.mxu0
    %v8593 = vpop.f32.mrf.mxu0
    %8594 = vdwg.mxu0
    %8595 = vmatprep.subr.bf16.mxu0 0
    %8596 = vmatpush1.bf16.msra.mxu0 %v8426
    %8597 = vmatprep.subr.bf16.mxu0 0
    %8598 = vmatpush1.bf16.msra.mxu0 %v8425
    %8599 = vmatprep.subr.bf16.mxu0 0
    %8600 = vmatpush1.bf16.msra.mxu0 %v8424
    %8601 = vmatprep.subr.bf16.mxu0 0
    %8602 = vmatpush1.bf16.msra.mxu0 %v8423
    %8603 = vmatprep.subr.bf16.mxu0 0
    %8604 = vmatpush1.bf16.msra.mxu0 %v8422
    %8605 = vmatprep.subr.bf16.mxu0 0
    %8606 = vmatpush1.bf16.msra.mxu0 %v8421
    %8607 = vmatprep.subr.bf16.mxu0 0
    %8608 = vmatpush1.bf16.msra.mxu0 %v8420
    %8609 = vmatprep.subr.bf16.mxu0 0
    %8610 = vmatpush1.bf16.msra.mxu0 %v8419
    %8611 = vmatprep.subr.bf16.mxu0 0
    %8612 = vmatpush2.bf16.msra.mxu0 %v8434
    %8613 = vmatprep.subr.bf16.mxu0 0
    %8614 = vmatpush2.bf16.msra.mxu0 %v8433
    %8615 = vmatprep.subr.bf16.mxu0 0
    %8616 = vmatpush2.bf16.msra.mxu0 %v8432
    %8617 = vmatprep.subr.bf16.mxu0 0
    %8618 = vmatpush2.bf16.msra.mxu0 %v8431
    %8619 = vmatprep.subr.bf16.mxu0 0
    %8620 = vmatpush2.bf16.msra.mxu0 %v8430
    %8621 = vmatprep.subr.bf16.mxu0 0
    %8622 = vmatpush2.bf16.msra.mxu0 %v8429
    %8623 = vmatprep.subr.bf16.mxu0 0
    %8624 = vmatpush2.bf16.msra.mxu0 %v8428
    %8625 = vmatprep.subr.bf16.mxu0 0
    %8626 = vmatpush2.bf16.msra.mxu0 %v8427
    %8627 = vmatprep.mubr.bf16.mxu0 %v7993
    %8628 = vmatmul.mubr.bf16.gmra.mxu0 %v7992
    %v8629 = vpop.f32.mrf.mxu0
    %v8630 = vadd.f32 %v8590, %v8629
    %v8631 = vpop.f32.mrf.mxu0
    %v8632 = vpop.f32.mrf.mxu0
    %v8633 = vpop.f32.mrf.mxu0
    %8634 = vdwg.mxu0
    %8635 = vmatprep.subr.bf16.mxu0 0
    %8636 = vmatpush1.bf16.msra.mxu0 %v8442
    %8637 = vmatprep.subr.bf16.mxu0 0
    %8638 = vmatpush1.bf16.msra.mxu0 %v8441
    %8639 = vmatprep.subr.bf16.mxu0 0
    %8640 = vmatpush1.bf16.msra.mxu0 %v8440
    %8641 = vmatprep.subr.bf16.mxu0 0
    %8642 = vmatpush1.bf16.msra.mxu0 %v8439
    %8643 = vmatprep.subr.bf16.mxu0 0
    %8644 = vmatpush1.bf16.msra.mxu0 %v8438
    %8645 = vmatprep.subr.bf16.mxu0 0
    %8646 = vmatpush1.bf16.msra.mxu0 %v8437
    %8647 = vmatprep.subr.bf16.mxu0 0
    %8648 = vmatpush1.bf16.msra.mxu0 %v8436
    %8649 = vmatprep.subr.bf16.mxu0 0
    %8650 = vmatpush1.bf16.msra.mxu0 %v8435
    %8651 = vmatprep.subr.bf16.mxu0 0
    %8652 = vmatpush2.bf16.msra.mxu0 %v8450
    %8653 = vmatprep.subr.bf16.mxu0 0
    %8654 = vmatpush2.bf16.msra.mxu0 %v8449
    %8655 = vmatprep.subr.bf16.mxu0 0
    %8656 = vmatpush2.bf16.msra.mxu0 %v8448
    %8657 = vmatprep.subr.bf16.mxu0 0
    %8658 = vmatpush2.bf16.msra.mxu0 %v8447
    %8659 = vmatprep.subr.bf16.mxu0 0
    %8660 = vmatpush2.bf16.msra.mxu0 %v8446
    %8661 = vmatprep.subr.bf16.mxu0 0
    %8662 = vmatpush2.bf16.msra.mxu0 %v8445
    %8663 = vmatprep.subr.bf16.mxu0 0
    %8664 = vmatpush2.bf16.msra.mxu0 %v8444
    %8665 = vmatprep.subr.bf16.mxu0 0
    %8666 = vmatpush2.bf16.msra.mxu0 %v8443
    %8667 = vmatprep.mubr.bf16.mxu0 %v7995
    %8668 = vmatmul.mubr.bf16.gmra.mxu0 %v7994
    %v8669 = vpop.f32.mrf.mxu0
    %v8670 = vadd.f32 %v8630, %v8669
    %v8671 = vpop.f32.mrf.mxu0
    %v8672 = vpop.f32.mrf.mxu0
    %v8673 = vpop.f32.mrf.mxu0
    %8674 = vdwg.mxu0
    %8675 = vmax.xlane.f32.xlu0 %v8670
    %v8676 = vpop.xlane.xlu0 %8675
    %v8677 = vsub.f32 %v8670, %v8676
    %v8678 = vmul.f32 %v8677, 1.442695
    %v8679 = vpow.pop %v8678
    %8680 = vadd.xlane.f32.xlu0 %v8679
    %v8681 = vpop.xlane.xlu0 %8680
    %v8682 = vrcp.pop %v8681
    %v8683 = vmul.f32 %v8679, %v8682
    %8684 = vst [vmem:[%s13] sm:$0xff] %v8683
    // Predicated region
    $region98: #{mfb_baseline_forward.1} parent=1 // pred_check
      _
    $region99: #{mfb_baseline_forward.1} parent=1 // pred_check_branch
      %8686 = sbr.rel (0) target = $region101
    $region100: #{mfb_baseline_forward.1} parent=1 // pred_region
      _
    $region101: #{mfb_baseline_forward.1} parent=1 // pred_fallthru
      _
    // Predicated region
    $region102: #{mfb_baseline_forward.1} parent=1 // pred_check
      _
    $region103: #{mfb_baseline_forward.1} parent=1 // pred_check_branch
      %8688 = sbr.rel (0) target = $region105
    $region104: #{mfb_baseline_forward.1} parent=1 // pred_region
      _
    $region105: #{mfb_baseline_forward.1} parent=1 // pred_fallthru
      _
    %8689 = vsyncpa [#allocation3], 1
    %8690 = vsyncpa [#allocation5], 1
    %8691 = vsyncpa [#allocation8], 1
    %8692 = vsyncpa [#allocation11], 1
    %8693 = vsyncpa [#allocation14], 1
    %8694 = vsyncpa [#allocation17], 1

</llo_original>
